<compile_context>
chip_gen: v7x
topology: tpu7x:2x2x1
jax: 0.10.0
libtpu: 0.0.40
codegen_flags: <defaults>
</compile_context>

<pallas_src>
import functools

import numpy as np
import jax
import jax.numpy as jnp
from jax.experimental import pallas as pl
from jax.experimental.pallas import tpu as pltpu

BN_EPS = 1e-5
ASPP_DILATIONS = (12, 24, 36)   # deeplabv3plus_mobilenet default (OS=8)


def _round_up(v, m):
    return ((v + m - 1) // m) * m


# ----------------------------------------------------------------------------
# Tiled matmul + bias + optional ReLU (the conv hot path)
# ----------------------------------------------------------------------------
def _matmul_kernel(x_ref, w_ref, b_ref, o_ref, acc_ref, *, n_k, relu):
    k = pl.program_id(2)

    @pl.when(k == 0)
    def _():
        acc_ref[...] = jnp.zeros_like(acc_ref)

    acc_ref[...] += jnp.dot(x_ref[...], w_ref[...],
                            preferred_element_type=jnp.float32)

    @pl.when(k == n_k - 1)
    def _():
        out = acc_ref[...] + b_ref[...]
        if relu:
            out = jnp.maximum(out, 0.0)
        o_ref[...] = out.astype(o_ref.dtype)


def matmul_bias_act(x, w, b, relu=False, out_dtype=jnp.bfloat16,
                    tm=512, tn=256, tk=512):
    """(M,K) @ (K,N) + b with f32 accumulation, bf16 MXU operands."""
    M, K = x.shape
    K2, N = w.shape
    assert K == K2
    tm_e = min(tm, _round_up(M, 8))
    tn_e = min(tn, _round_up(N, 128))     # lane-dense output tiles
    tk_e = min(tk, _round_up(K, 128))
    Mp, Np, Kp = _round_up(M, tm_e), _round_up(N, tn_e), _round_up(K, tk_e)

    xp = jnp.pad(x.astype(jnp.bfloat16), ((0, Mp - M), (0, Kp - K)))
    wp = jnp.pad(w.astype(jnp.bfloat16), ((0, Kp - K), (0, Np - N)))
    bp = jnp.pad(b.reshape(1, N).astype(jnp.float32), ((0, 0), (0, Np - N)))

    n_k = Kp // tk_e
    grid = (Mp // tm_e, Np // tn_e, n_k)

    out = pl.pallas_call(
        functools.partial(_matmul_kernel, n_k=n_k, relu=relu),
        out_shape=jax.ShapeDtypeStruct((Mp, Np), out_dtype),
        grid=grid,
        in_specs=[
            pl.BlockSpec((tm_e, tk_e), lambda i, j, k: (i, k)),
            pl.BlockSpec((tk_e, tn_e), lambda i, j, k: (k, j)),
            pl.BlockSpec((1, tn_e), lambda i, j, k: (0, j)),
        ],
        out_specs=pl.BlockSpec((tm_e, tn_e), lambda i, j, k: (i, j)),
        scratch_shapes=[pltpu.VMEM((tm_e, tn_e), jnp.float32)],
        compiler_params=pltpu.CompilerParams(
            dimension_semantics=("parallel", "parallel", "arbitrary")),
        cost_estimate=pl.CostEstimate(
            flops=int(2 * Mp * Np * Kp),
            transcendentals=0,
            bytes_accessed=int((Mp * Kp + Kp * Np) * 2 + Mp * Np * 2)),
    )(xp, wp, bp)
    return out[:M, :N]


# ----------------------------------------------------------------------------
# Global average pool (spatially tiled, f32 accumulator)
# ----------------------------------------------------------------------------
def _gap_kernel(x_ref, o_ref, acc_ref, *, n_chunks, inv_count):
    c = pl.program_id(1)

    @pl.when(c == 0)
    def _():
        acc_ref[...] = jnp.zeros_like(acc_ref)

    acc_ref[...] += jnp.sum(x_ref[0].astype(jnp.float32), axis=0, keepdims=True)

    @pl.when(c == n_chunks - 1)
    def _():
        o_ref[0] = (acc_ref[...] * inv_count).astype(o_ref.dtype)


def global_avg_pool(x_nhwc):
    """AdaptiveAvgPool2d(1): (N,H,W,C) -> (N,1,1,C)."""
    N, H, W, C = x_nhwc.shape
    S = H * W
    ts = min(512, _round_up(S, 8))
    Sp = _round_up(S, ts)
    x2 = jnp.pad(x_nhwc.reshape(N, S, C).astype(jnp.bfloat16),
                 ((0, 0), (0, Sp - S), (0, 0)))
    n_chunks = Sp // ts
    out = pl.pallas_call(
        functools.partial(_gap_kernel, n_chunks=n_chunks, inv_count=1.0 / S),
        out_shape=jax.ShapeDtypeStruct((N, 1, C), jnp.float32),
        grid=(N, n_chunks),
        in_specs=[pl.BlockSpec((1, ts, C), lambda n, c: (n, c, 0))],
        out_specs=pl.BlockSpec((1, 1, C), lambda n, c: (n, 0, 0)),
        scratch_shapes=[pltpu.VMEM((1, C), jnp.float32)],
        compiler_params=pltpu.CompilerParams(
            dimension_semantics=("parallel", "arbitrary")),
    )(x2)
    return out.reshape(N, 1, 1, C)


# ----------------------------------------------------------------------------
# Fused ASPP projection: 1x1 conv over the virtual concat of the 4 spatial
# branches + image-pool branch, without materializing the 1280-ch tensor or
# broadcasting the pooled branch.
# ----------------------------------------------------------------------------
def _aspp_proj_kernel(b0_ref, b1_ref, b2_ref, b3_ref, pb_ref, w_ref, o_ref):
    acc = jnp.dot(b0_ref[0], w_ref[0], preferred_element_type=jnp.float32)
    acc += jnp.dot(b1_ref[0], w_ref[1], preferred_element_type=jnp.float32)
    acc += jnp.dot(b2_ref[0], w_ref[2], preferred_element_type=jnp.float32)
    acc += jnp.dot(b3_ref[0], w_ref[3], preferred_element_type=jnp.float32)
    acc = acc + pb_ref[0]     # (1, C): pooled-branch projection + folded bias
    o_ref[0] = jnp.maximum(acc, 0.0).astype(o_ref.dtype)


def aspp_project(branches, pool_proj_bias, w4):
    """branches: 4 x (N,h,w,C); pool_proj_bias: (N,1,C) f32; w4: (4,C,C)."""
    N, hh, hw, C = branches[0].shape
    S = hh * hw
    ts = min(512, _round_up(S, 8))
    Sp = _round_up(S, ts)
    flat = [jnp.pad(br.reshape(N, S, C).astype(jnp.bfloat16),
                    ((0, 0), (0, Sp - S), (0, 0))) for br in branches]
    out = pl.pallas_call(
        _aspp_proj_kernel,
        out_shape=jax.ShapeDtypeStruct((N, Sp, C), jnp.bfloat16),
        grid=(N, Sp // ts),
        in_specs=[pl.BlockSpec((1, ts, C), lambda n, s: (n, s, 0))] * 4
                 + [pl.BlockSpec((1, 1, C), lambda n, s: (n, 0, 0)),
                    pl.BlockSpec((4, C, C), lambda n, s: (0, 0, 0))],
        out_specs=pl.BlockSpec((1, ts, C), lambda n, s: (n, s, 0)),
        compiler_params=pltpu.CompilerParams(
            dimension_semantics=("parallel", "parallel")),
    )(*flat, pool_proj_bias.astype(jnp.float32), w4.astype(jnp.bfloat16))
    return out[:, :S, :].reshape(N, hh, hw, C)


# ----------------------------------------------------------------------------
# Bilinear resize (align_corners=False), transpose-free, C kept on lanes
# ----------------------------------------------------------------------------
def _resize_kernel(m_ref, x_ref, o_ref, *, tb):
    m = m_ref[...]
    for b in range(tb):          # small static unroll
        o_ref[b] = jnp.dot(m, x_ref[b],
                           preferred_element_type=jnp.float32).astype(o_ref.dtype)


def _resize_axis1(m, x):
    """x: (B, Li, D) -> (B, Lo, D) with out[b] = m @ x[b]."""
    B, Li, D = x.shape
    Lo = m.shape[0]
    tb = min(8, B)
    Bp = _round_up(B, tb)
    if D <= 512:
        td, Dp = D, D
    else:
        Dp = _round_up(D, 128)
        td = 128
        for cand in (512, 384, 256):
            if Dp % cand == 0:
                td = cand
                break
    xp = jnp.pad(x.astype(jnp.bfloat16), ((0, Bp - B), (0, 0), (0, Dp - D)))
    out = pl.pallas_call(
        functools.partial(_resize_kernel, tb=tb),
        out_shape=jax.ShapeDtypeStruct((Bp, Lo, Dp), jnp.bfloat16),
        grid=(Bp // tb, Dp // td),
        in_specs=[pl.BlockSpec((Lo, Li), lambda b, d: (0, 0)),
                  pl.BlockSpec((tb, Li, td), lambda b, d: (b, 0, d))],
        out_specs=pl.BlockSpec((tb, Lo, td), lambda b, d: (b, 0, d)),
        compiler_params=pltpu.CompilerParams(
            dimension_semantics=("parallel", "parallel")),
    )(m.astype(jnp.bfloat16), xp)
    return out[:B, :, :D]


def _bilinear_matrix(out_size, in_size):
    """Matches F.interpolate(mode='bilinear', align_corners=False)."""
    scale = in_size / out_size
    src = (np.arange(out_size) + 0.5) * scale - 0.5
    src = np.clip(src, 0.0, in_size - 1)
    i0 = np.clip(np.floor(src).astype(np.int64), 0, in_size - 1)
    i1 = np.minimum(i0 + 1, in_size - 1)
    w1 = src - i0
    w0 = 1.0 - w1
    m = np.zeros((out_size, in_size), dtype=np.float32)
    rows = np.arange(out_size)
    np.add.at(m, (rows, i0), w0)
    np.add.at(m, (rows, i1), w1)
    return jnp.asarray(m)


def bilinear_resize(x, out_h, out_w):
    N, Hi, Wi, C = x.shape
    y = x
    if out_h != Hi:
        mh = _bilinear_matrix(out_h, Hi)
        y = _resize_axis1(mh, y.reshape(N, Hi, Wi * C)).reshape(N, out_h, Wi, C)
    if out_w != Wi:
        mw = _bilinear_matrix(out_w, Wi)
        hc = y.shape[1]
        y = _resize_axis1(mw, y.reshape(N * hc, Wi, C)).reshape(N, hc, out_w, C)
    return y


# ----------------------------------------------------------------------------
# ConvGRU gate kernels (fused sigmoid / tanh / lerp, lane-dense flattening)
# ----------------------------------------------------------------------------
def _gru_reset_kernel(r_ref, h_ref, o_ref):
    r = jax.nn.sigmoid(r_ref[...].astype(jnp.float32))
    o_ref[...] = (r * h_ref[...].astype(jnp.float32)).astype(o_ref.dtype)


def _gru_update_kernel(z_ref, h_ref, c_ref, o_ref):
    z = jax.nn.sigmoid(z_ref[...].astype(jnp.float32))
    h = h_ref[...].astype(jnp.float32)
    c = jnp.tanh(c_ref[...].astype(jnp.float32))
    o_ref[...] = ((1.0 - z) * h + z * c).astype(o_ref.dtype)


def _elementwise_call(kernel, *arrays, out_dtype=jnp.bfloat16):
    R, L = arrays[0].shape
    tr = min(256, _round_up(R, 8))
    Rp = _round_up(R, tr)
    padded = [jnp.pad(a, ((0, Rp - R), (0, 0))) for a in arrays]
    out = pl.pallas_call(
        kernel,
        out_shape=jax.ShapeDtypeStruct((Rp, L), out_dtype),
        grid=(Rp // tr,),
        in_specs=[pl.BlockSpec((tr, L), lambda i: (i, 0))] * len(arrays),
        out_specs=pl.BlockSpec((tr, L), lambda i: (i, 0)),
        compiler_params=pltpu.CompilerParams(dimension_semantics=("parallel",)),
    )(*padded)
    return out[:R]


# ----------------------------------------------------------------------------
# Conv glue: im2col, BN folding
# ----------------------------------------------------------------------------
def extract_patches(x, k, stride, pad, dilation):
    """im2col for NHWC input; patch channel order = (ki, kj, cin), cin fastest."""
    N, H, W, C = x.shape
    xp = jnp.pad(x, ((0, 0), (pad, pad), (pad, pad), (0, 0)))
    Ho = (H + 2 * pad - dilation * (k - 1) - 1) // stride + 1
    Wo = (W + 2 * pad - dilation * (k - 1) - 1) // stride + 1
    cols = []
    for i in range(k):
        for j in range(k):
            hs, ws = i * dilation, j * dilation
            cols.append(xp[:, hs:hs + (Ho - 1) * stride + 1:stride,
                              ws:ws + (Wo - 1) * stride + 1:stride, :])
    return jnp.concatenate(cols, axis=-1)


def conv2d(x, w_pt, b, stride=1, pad=0, dilation=1, relu=False):
    """Conv2d with PyTorch-layout weight (Cout, Cin, kh, kw); NHWC activations."""
    Cout, Cin, kh, kw = w_pt.shape
    if kh == 1 and kw == 1 and stride == 1 and pad == 0:
        patches = x
    else:
        patches = extract_patches(x, kh, stride, pad, dilation)
    N, Ho, Wo, K = patches.shape
    wmat = jnp.transpose(w_pt, (2, 3, 1, 0)).reshape(kh * kw * Cin, Cout)
    y = matmul_bias_act(patches.reshape(N * Ho * Wo, K), wmat, b, relu=relu)
    return y.reshape(N, Ho, Wo, Cout)


def fold_bn(w_pt, bn):
    gamma, beta, mean, var = bn
    scale = gamma / jnp.sqrt(var + BN_EPS)
    return w_pt * scale[:, None, None, None], beta - mean * scale


# ----------------------------------------------------------------------------
# ConvGRU cell (input_dim=2, hidden_dim=2, 3x3, bias)
# ----------------------------------------------------------------------------
def conv_gru_cell(gp, x, h):
    N, H, W, C = x.shape
    comb = jnp.concatenate([x, h], axis=-1)                          # (N,H,W,4)
    gates = conv2d(comb, gp["w_gates"], gp["b_gates"], pad=1)        # (N,H,W,4)
    r_pre, z_pre = gates[..., :C], gates[..., C:]

    def flat(t):
        return t.reshape(N * H, W * C)

    rh = _elementwise_call(_gru_reset_kernel,
                           flat(r_pre), flat(h)).reshape(N, H, W, C)
    comb2 = jnp.concatenate([x, rh], axis=-1)
    cand = conv2d(comb2, gp["w_can"], gp["b_can"], pad=1)            # (N,H,W,2)
    h_next = _elementwise_call(_gru_update_kernel,
                               flat(z_pre), flat(h), flat(cand)).reshape(N, H, W, C)
    return h_next


# ----------------------------------------------------------------------------
# Deterministic synthetic parameters
# ----------------------------------------------------------------------------
def init_params(key):
    keys = iter(jax.random.split(key, 32))

    def cbn(cout, cin, k):
        k1, k2 = jax.random.split(next(keys))
        w = jax.random.normal(k1, (cout, cin, k, k), jnp.float32) * 0.05
        kg, kb, km, kv = jax.random.split(k2, 4)
        bn = (1.0 + 0.1 * jax.random.normal(kg, (cout,), jnp.float32),
              0.1 * jax.random.normal(kb, (cout,), jnp.float32),
              0.1 * jax.random.normal(km, (cout,), jnp.float32),
              1.0 + 0.1 * jnp.abs(jax.random.normal(kv, (cout,), jnp.float32)))
        return {"w": w, "bn": bn}

    p = {}
    # synthetic backbone (stride 8), low-level=24ch @ OS4, high-level=320ch @ OS8
    p["bb1"] = cbn(16, 3, 3)
    p["bb2"] = cbn(24, 16, 3)
    p["bb3"] = cbn(320, 24, 3)
    # ASPP
    p["aspp0"] = cbn(256, 320, 1)
    p["aspp1"] = cbn(256, 320, 3)
    p["aspp2"] = cbn(256, 320, 3)
    p["aspp3"] = cbn(256, 320, 3)
    p["aspp_pool"] = cbn(256, 320, 1)
    p["aspp_proj"] = cbn(256, 1280, 1)
    # decoder
    p["low_proj"] = cbn(48, 24, 1)
    p["dec1"] = cbn(256, 304, 3)
    kc1, kc2 = jax.random.split(next(keys))
    p["cls_w"] = jax.random.normal(kc1, (2, 256, 1, 1), jnp.float32) * 0.05
    p["cls_b"] = 0.05 * jax.random.normal(kc2, (2,), jnp.float32)
    # ConvGRU (input_dim=2, hidden_dim=2, 3x3, bias)
    kg1, kg2, kg3, kg4 = jax.random.split(next(keys), 4)
    p["gru"] = {
        "w_gates": jax.random.normal(kg1, (4, 4, 3, 3), jnp.float32) * 0.1,
        "b_gates": 0.1 * jax.random.normal(kg2, (4,), jnp.float32),
        "w_can": jax.random.normal(kg3, (2, 4, 3, 3), jnp.float32) * 0.1,
        "b_can": 0.1 * jax.random.normal(kg4, (2,), jnp.float32),
    }
    return p


# ----------------------------------------------------------------------------
# Forward pass (Deeplabv3Plus_gruV2.forward, first call with fresh state)
# ----------------------------------------------------------------------------
def deeplabv3plus_gru_forward(params, x_nchw):
    x = jnp.transpose(x_nchw, (0, 2, 3, 1)).astype(jnp.bfloat16)     # NCHW -> NHWC
    N, H, W, _ = x.shape

    def conv_bn_relu(name, inp, stride=1, pad=0, dilation=1):
        w, b = fold_bn(params[name]["w"], params[name]["bn"])
        return conv2d(inp, w, b, stride=stride, pad=pad, dilation=dilation, relu=True)

    # ---- backbone ----
    f = conv_bn_relu("bb1", x, stride=2, pad=1)          # (N, H/2,  W/2,  16)
    low = conv_bn_relu("bb2", f, stride=2, pad=1)        # (N, H/4,  W/4,  24)
    high = conv_bn_relu("bb3", low, stride=2, pad=1)     # (N, H/8,  W/8, 320)

    # ---- ASPP ----
    a0 = conv_bn_relu("aspp0", high)                                   # 1x1
    dil = [conv_bn_relu(f"aspp{i + 1}", high, pad=d, dilation=d)
           for i, d in enumerate(ASPP_DILATIONS)]                      # 3x3 dilated
    gap = global_avg_pool(high)                                        # (N,1,1,320)
    pooled = conv_bn_relu("aspp_pool", gap)                            # (N,1,1,256)

    # 1x1 projection over the *virtual* concat [a0, d12, d24, d36, pool]:
    # the 1280-ch tensor and the pooled-branch broadcast are never materialized.
    wp, bp = fold_bn(params["aspp_proj"]["w"], params["aspp_proj"]["bn"])
    w5 = jnp.transpose(wp[:, :, 0, 0]).reshape(5, 256, 256)            # (1280,256)->(5,256,256)
    pool_pb = matmul_bias_act(pooled.reshape(N, 256), w5[4], bp,
                              relu=False, out_dtype=jnp.float32).reshape(N, 1, 256)
    aspp = aspp_project([a0] + dil, pool_pb, w5[:4])                   # (N,H/8,W/8,256), ReLU
    # Dropout(0.5): identity in eval mode.

    # ---- decoder ----
    low_p = conv_bn_relu("low_proj", low)                              # (N,H/4,W/4,48)
    aspp_up = bilinear_resize(aspp, low_p.shape[1], low_p.shape[2])
    dec = jnp.concatenate([low_p, aspp_up], axis=-1)                   # 304ch
    dec = conv_bn_relu("dec1", dec, pad=1)                             # (N,H/4,W/4,256)
    logits = conv2d(dec, params["cls_w"], params["cls_b"])             # (N,H/4,W/4,2)
    base_out = bilinear_resize(logits, H, W)                           # (N,H,W,2)

    # ---- ConvGRU head: sequence [0, 0, base_out], zero initial hidden ----
    # TODO(synk): cross-call state (self.hidden / self.old_pred persistence,
    # detach bookkeeping) is host-side; only the fresh-state forward is modeled.
    h = jnp.zeros((N, H, W, 2), jnp.bfloat16)
    zero_in = jnp.zeros((N, H, W, 2), jnp.bfloat16)
    for x_t in (zero_in, zero_in, base_out):
        h = conv_gru_cell(params["gru"], x_t, h)

    out = h.astype(jnp.float32)
    return jnp.transpose(out, (0, 3, 1, 2))                            # back to NCHW


if __name__ == "__main__":
    key = jax.random.PRNGKey(0)
    pkey, xkey = jax.random.split(key)
    params = init_params(pkey)
    x = jax.random.normal(xkey, (2, 3, 16, 16), jnp.float32)

    out = jax.jit(deeplabv3plus_gru_forward)(params, x)
    out = jax.block_until_ready(out)

    assert out.shape == (2, 2, 16, 16), out.shape
    assert jnp.all(jnp.isfinite(out))
    print("KERNEL_OK")
</pallas_src>

<mosaic_0001>
module attributes {stable_mosaic.version = 11 : i64} {
  func.func @_matmul_kernel(%arg0: i32, %arg1: i32, %arg2: i32, %arg3: memref<128x128xbf16, #tpu.memory_space<vmem>>, %arg4: memref<128x128xbf16, #tpu.memory_space<vmem>>, %arg5: memref<1x128xf32, #tpu.memory_space<vmem>>, %arg6: memref<128x128xbf16, #tpu.memory_space<vmem>>, %arg7: memref<128x128xf32, #tpu.memory_space<vmem>>) attributes {dimension_semantics = [#tpu.dimension_semantics<parallel>, #tpu.dimension_semantics<parallel>, #tpu.dimension_semantics<arbitrary>], iteration_bounds = array<i64: 1, 1, 1>, scalar_prefetch = 0 : i64, scratch_operands = 1 : i64, tpu.core_type = #tpu.core_type<tc>, window_params = [{transform_indices = @transform_0, window_bounds = array<i64: 128, 128>}, {transform_indices = @transform_1, window_bounds = array<i64: 128, 128>}, {transform_indices = @transform_2, window_bounds = array<i64: 1, 128>}, {transform_indices = @transform_3, window_bounds = array<i64: 128, 128>}]} {
    %c0_i32 = arith.constant 0 : i32
    %0 = arith.cmpi eq, %arg2, %c0_i32 : i32
    %1 = arith.extui %0 : i1 to i32
    %c0_i32_0 = arith.constant 0 : i32
    %2 = arith.cmpi ne, %1, %c0_i32_0 : i32
    scf.if %2 {
      %cst_10 = arith.constant 0.000000e+00 : f32
      %12 = vector.broadcast %cst_10 : f32 to vector<128x128xf32>
      %c0_11 = arith.constant 0 : index
      %c0_12 = arith.constant 0 : index
      %13 = vector.load %arg7[%c0_11, %c0_12] : memref<128x128xf32, #tpu.memory_space<vmem>>, vector<128x128xf32>
      tpu.vector_store %arg7[%c0_11, %c0_12], %12 {strides = array<i32>} : memref<128x128xf32, #tpu.memory_space<vmem>>, vector<128x128xf32>,
    } else {
    }
    %c0 = arith.constant 0 : index
    %c0_1 = arith.constant 0 : index
    %3 = vector.load %arg7[%c0, %c0_1] : memref<128x128xf32, #tpu.memory_space<vmem>>, vector<128x128xf32>
    %c0_2 = arith.constant 0 : index
    %c0_3 = arith.constant 0 : index
    %4 = vector.load %arg3[%c0_2, %c0_3] : memref<128x128xbf16, #tpu.memory_space<vmem>>, vector<128x128xbf16>
    %c0_4 = arith.constant 0 : index
    %c0_5 = arith.constant 0 : index
    %5 = vector.load %arg4[%c0_4, %c0_5] : memref<128x128xbf16, #tpu.memory_space<vmem>>, vector<128x128xbf16>
    %cst = arith.constant dense<0.000000e+00> : vector<128x128xf32>
    %6 = tpu.matmul %4, %5, %cst {dimension_numbers = #tpu.dot_dimension_numbers<[1], [0], [0], [1], [0, 0, 1, 1], [], []>} : vector<128x128xbf16>, vector<128x128xbf16>, vector<128x128xf32> -> vector<128x128xf32>
    %7 = arith.addf %3, %6 : vector<128x128xf32>
    %c0_6 = arith.constant 0 : index
    %c0_7 = arith.constant 0 : index
    %8 = vector.load %arg7[%c0_6, %c0_7] : memref<128x128xf32, #tpu.memory_space<vmem>>, vector<128x128xf32>
    tpu.vector_store %arg7[%c0_6, %c0_7], %7 {strides = array<i32>} : memref<128x128xf32, #tpu.memory_space<vmem>>, vector<128x128xf32>,
    %c0_i32_8 = arith.constant 0 : i32
    %9 = arith.cmpi eq, %arg2, %c0_i32_8 : i32
    %10 = arith.extui %9 : i1 to i32
    %c0_i32_9 = arith.constant 0 : i32
    %11 = arith.cmpi ne, %10, %c0_i32_9 : i32
    scf.if %11 {
      %c0_10 = arith.constant 0 : index
      %c0_11 = arith.constant 0 : index
      %12 = vector.load %arg7[%c0_10, %c0_11] : memref<128x128xf32, #tpu.memory_space<vmem>>, vector<128x128xf32>
      %c0_12 = arith.constant 0 : index
      %c0_13 = arith.constant 0 : index
      %13 = vector.load %arg5[%c0_12, %c0_13] : memref<1x128xf32, #tpu.memory_space<vmem>>, vector<1x128xf32>
      %14 = vector.broadcast %13 : vector<1x128xf32> to vector<128x128xf32>
      %15 = arith.addf %12, %14 : vector<128x128xf32>
      %cst_14 = arith.constant 0.000000e+00 : f32
      %16 = vector.broadcast %cst_14 : f32 to vector<128x128xf32>
      %17 = arith.maximumf %15, %16 : vector<128x128xf32>
      %18 = arith.truncf %17 : vector<128x128xf32> to vector<128x128xbf16>
      %c0_15 = arith.constant 0 : index
      %c0_16 = arith.constant 0 : index
      %19 = vector.load %arg6[%c0_15, %c0_16] : memref<128x128xbf16, #tpu.memory_space<vmem>>, vector<128x128xbf16>
      tpu.vector_store %arg6[%c0_15, %c0_16], %18 {strides = array<i32>} : memref<128x128xbf16, #tpu.memory_space<vmem>>, vector<128x128xbf16>,
    } else {
    }
    return
  }
  func.func @transform_0(%arg0: i32, %arg1: i32, %arg2: i32) -> (i32, i32) {
    %c0_i32 = arith.constant 0 : i32
    return %arg0, %arg2 : i32, i32
  }
  func.func @transform_1(%arg0: i32, %arg1: i32, %arg2: i32) -> (i32, i32) {
    %c0_i32 = arith.constant 0 : i32
    return %arg2, %arg1 : i32, i32
  }
  func.func @transform_2(%arg0: i32, %arg1: i32, %arg2: i32) -> (i32, i32) {
    %c0_i32 = arith.constant 0 : i32
    %c0_i32_0 = arith.constant 0 : i32
    return %c0_i32, %arg1 : i32, i32
  }
  func.func @transform_3(%arg0: i32, %arg1: i32, %arg2: i32) -> (i32, i32) {
    %c0_i32 = arith.constant 0 : i32
    return %arg0, %arg1 : i32, i32
  }
}

module attributes {stable_mosaic.version = 11 : i64} {
  func.func @_matmul_kernel(%arg0: i32, %arg1: i32, %arg2: i32, %arg3: memref<32x256xbf16, #tpu.memory_space<vmem>>, %arg4: memref<256x128xbf16, #tpu.memory_space<vmem>>, %arg5: memref<1x128xf32, #tpu.memory_space<vmem>>, %arg6: memref<32x128xbf16, #tpu.memory_space<vmem>>, %arg7: memref<32x128xf32, #tpu.memory_space<vmem>>) attributes {dimension_semantics = [#tpu.dimension_semantics<parallel>, #tpu.dimension_semantics<parallel>, #tpu.dimension_semantics<arbitrary>], iteration_bounds = array<i64: 1, 1, 1>, scalar_prefetch = 0 : i64, scratch_operands = 1 : i64, tpu.core_type = #tpu.core_type<tc>, window_params = [{transform_indices = @transform_0, window_bounds = array<i64: 32, 256>}, {transform_indices = @transform_1, window_bounds = array<i64: 256, 128>}, {transform_indices = @transform_2, window_bounds = array<i64: 1, 128>}, {transform_indices = @transform_3, window_bounds = array<i64: 32, 128>}]} {
    %c0_i32 = arith.constant 0 : i32
    %0 = arith.cmpi eq, %arg2, %c0_i32 : i32
    %1 = arith.extui %0 : i1 to i32
    %c0_i32_0 = arith.constant 0 : i32
    %2 = arith.cmpi ne, %1, %c0_i32_0 : i32
    scf.if %2 {
      %cst_10 = arith.constant 0.000000e+00 : f32
      %12 = vector.broadcast %cst_10 : f32 to vector<32x128xf32>
      %c0_11 = arith.constant 0 : index
      %c0_12 = arith.constant 0 : index
      %13 = vector.load %arg7[%c0_11, %c0_12] : memref<32x128xf32, #tpu.memory_space<vmem>>, vector<32x128xf32>
      tpu.vector_store %arg7[%c0_11, %c0_12], %12 {strides = array<i32>} : memref<32x128xf32, #tpu.memory_space<vmem>>, vector<32x128xf32>,
    } else {
    }
    %c0 = arith.constant 0 : index
    %c0_1 = arith.constant 0 : index
    %3 = vector.load %arg7[%c0, %c0_1] : memref<32x128xf32, #tpu.memory_space<vmem>>, vector<32x128xf32>
    %c0_2 = arith.constant 0 : index
    %c0_3 = arith.constant 0 : index
    %4 = vector.load %arg3[%c0_2, %c0_3] : memref<32x256xbf16, #tpu.memory_space<vmem>>, vector<32x256xbf16>
    %c0_4 = arith.constant 0 : index
    %c0_5 = arith.constant 0 : index
    %5 = vector.load %arg4[%c0_4, %c0_5] : memref<256x128xbf16, #tpu.memory_space<vmem>>, vector<256x128xbf16>
    %cst = arith.constant dense<0.000000e+00> : vector<32x128xf32>
    %6 = tpu.matmul %4, %5, %cst {dimension_numbers = #tpu.dot_dimension_numbers<[1], [0], [0], [1], [0, 0, 1, 1], [], []>} : vector<32x256xbf16>, vector<256x128xbf16>, vector<32x128xf32> -> vector<32x128xf32>
    %7 = arith.addf %3, %6 : vector<32x128xf32>
    %c0_6 = arith.constant 0 : index
    %c0_7 = arith.constant 0 : index
    %8 = vector.load %arg7[%c0_6, %c0_7] : memref<32x128xf32, #tpu.memory_space<vmem>>, vector<32x128xf32>
    tpu.vector_store %arg7[%c0_6, %c0_7], %7 {strides = array<i32>} : memref<32x128xf32, #tpu.memory_space<vmem>>, vector<32x128xf32>,
    %c0_i32_8 = arith.constant 0 : i32
    %9 = arith.cmpi eq, %arg2, %c0_i32_8 : i32
    %10 = arith.extui %9 : i1 to i32
    %c0_i32_9 = arith.constant 0 : i32
    %11 = arith.cmpi ne, %10, %c0_i32_9 : i32
    scf.if %11 {
      %c0_10 = arith.constant 0 : index
      %c0_11 = arith.constant 0 : index
      %12 = vector.load %arg7[%c0_10, %c0_11] : memref<32x128xf32, #tpu.memory_space<vmem>>, vector<32x128xf32>
      %c0_12 = arith.constant 0 : index
      %c0_13 = arith.constant 0 : index
      %13 = vector.load %arg5[%c0_12, %c0_13] : memref<1x128xf32, #tpu.memory_space<vmem>>, vector<1x128xf32>
      %14 = vector.broadcast %13 : vector<1x128xf32> to vector<32x128xf32>
      %15 = arith.addf %12, %14 : vector<32x128xf32>
      %cst_14 = arith.constant 0.000000e+00 : f32
      %16 = vector.broadcast %cst_14 : f32 to vector<32x128xf32>
      %17 = arith.maximumf %15, %16 : vector<32x128xf32>
      %18 = arith.truncf %17 : vector<32x128xf32> to vector<32x128xbf16>
      %c0_15 = arith.constant 0 : index
      %c0_16 = arith.constant 0 : index
      %19 = vector.load %arg6[%c0_15, %c0_16] : memref<32x128xbf16, #tpu.memory_space<vmem>>, vector<32x128xbf16>
      tpu.vector_store %arg6[%c0_15, %c0_16], %18 {strides = array<i32>} : memref<32x128xbf16, #tpu.memory_space<vmem>>, vector<32x128xbf16>,
    } else {
    }
    return
  }
  func.func @transform_0(%arg0: i32, %arg1: i32, %arg2: i32) -> (i32, i32) {
    %c0_i32 = arith.constant 0 : i32
    return %arg0, %arg2 : i32, i32
  }
  func.func @transform_1(%arg0: i32, %arg1: i32, %arg2: i32) -> (i32, i32) {
    %c0_i32 = arith.constant 0 : i32
    return %arg2, %arg1 : i32, i32
  }
  func.func @transform_2(%arg0: i32, %arg1: i32, %arg2: i32) -> (i32, i32) {
    %c0_i32 = arith.constant 0 : i32
    %c0_i32_0 = arith.constant 0 : i32
    return %c0_i32, %arg1 : i32, i32
  }
  func.func @transform_3(%arg0: i32, %arg1: i32, %arg2: i32) -> (i32, i32) {
    %c0_i32 = arith.constant 0 : i32
    return %arg0, %arg1 : i32, i32
  }
}

module attributes {stable_mosaic.version = 11 : i64} {
  func.func @_matmul_kernel(%arg0: i32, %arg1: i32, %arg2: i32, %arg3: memref<8x256xbf16, #tpu.memory_space<vmem>>, %arg4: memref<256x256xbf16, #tpu.memory_space<vmem>>, %arg5: memref<1x256xf32, #tpu.memory_space<vmem>>, %arg6: memref<8x256xbf16, #tpu.memory_space<vmem>>, %arg7: memref<8x256xf32, #tpu.memory_space<vmem>>) attributes {dimension_semantics = [#tpu.dimension_semantics<parallel>, #tpu.dimension_semantics<parallel>, #tpu.dimension_semantics<arbitrary>], iteration_bounds = array<i64: 1, 2, 1>, scalar_prefetch = 0 : i64, scratch_operands = 1 : i64, tpu.core_type = #tpu.core_type<tc>, window_params = [{transform_indices = @transform_0, window_bounds = array<i64: 8, 256>}, {transform_indices = @transform_1, window_bounds = array<i64: 256, 256>}, {transform_indices = @transform_2, window_bounds = array<i64: 1, 256>}, {transform_indices = @transform_3, window_bounds = array<i64: 8, 256>}]} {
    %c0_i32 = arith.constant 0 : i32
    %0 = arith.cmpi eq, %arg2, %c0_i32 : i32
    %1 = arith.extui %0 : i1 to i32
    %c0_i32_0 = arith.constant 0 : i32
    %2 = arith.cmpi ne, %1, %c0_i32_0 : i32
    scf.if %2 {
      %cst_10 = arith.constant 0.000000e+00 : f32
      %12 = vector.broadcast %cst_10 : f32 to vector<8x256xf32>
      %c0_11 = arith.constant 0 : index
      %c0_12 = arith.constant 0 : index
      %13 = vector.load %arg7[%c0_11, %c0_12] : memref<8x256xf32, #tpu.memory_space<vmem>>, vector<8x256xf32>
      tpu.vector_store %arg7[%c0_11, %c0_12], %12 {strides = array<i32>} : memref<8x256xf32, #tpu.memory_space<vmem>>, vector<8x256xf32>,
    } else {
    }
    %c0 = arith.constant 0 : index
    %c0_1 = arith.constant 0 : index
    %3 = vector.load %arg7[%c0, %c0_1] : memref<8x256xf32, #tpu.memory_space<vmem>>, vector<8x256xf32>
    %c0_2 = arith.constant 0 : index
    %c0_3 = arith.constant 0 : index
    %4 = vector.load %arg3[%c0_2, %c0_3] : memref<8x256xbf16, #tpu.memory_space<vmem>>, vector<8x256xbf16>
    %c0_4 = arith.constant 0 : index
    %c0_5 = arith.constant 0 : index
    %5 = vector.load %arg4[%c0_4, %c0_5] : memref<256x256xbf16, #tpu.memory_space<vmem>>, vector<256x256xbf16>
    %cst = arith.constant dense<0.000000e+00> : vector<8x256xf32>
    %6 = tpu.matmul %4, %5, %cst {dimension_numbers = #tpu.dot_dimension_numbers<[1], [0], [0], [1], [0, 0, 1, 1], [], []>} : vector<8x256xbf16>, vector<256x256xbf16>, vector<8x256xf32> -> vector<8x256xf32>
    %7 = arith.addf %3, %6 : vector<8x256xf32>
    %c0_6 = arith.constant 0 : index
    %c0_7 = arith.constant 0 : index
    %8 = vector.load %arg7[%c0_6, %c0_7] : memref<8x256xf32, #tpu.memory_space<vmem>>, vector<8x256xf32>
    tpu.vector_store %arg7[%c0_6, %c0_7], %7 {strides = array<i32>} : memref<8x256xf32, #tpu.memory_space<vmem>>, vector<8x256xf32>,
    %c0_i32_8 = arith.constant 0 : i32
    %9 = arith.cmpi eq, %arg2, %c0_i32_8 : i32
    %10 = arith.extui %9 : i1 to i32
    %c0_i32_9 = arith.constant 0 : i32
    %11 = arith.cmpi ne, %10, %c0_i32_9 : i32
    scf.if %11 {
      %c0_10 = arith.constant 0 : index
      %c0_11 = arith.constant 0 : index
      %12 = vector.load %arg7[%c0_10, %c0_11] : memref<8x256xf32, #tpu.memory_space<vmem>>, vector<8x256xf32>
      %c0_12 = arith.constant 0 : index
      %c0_13 = arith.constant 0 : index
      %13 = vector.load %arg5[%c0_12, %c0_13] : memref<1x256xf32, #tpu.memory_space<vmem>>, vector<1x256xf32>
      %14 = vector.broadcast %13 : vector<1x256xf32> to vector<8x256xf32>
      %15 = arith.addf %12, %14 : vector<8x256xf32>
      %cst_14 = arith.constant 0.000000e+00 : f32
      %16 = vector.broadcast %cst_14 : f32 to vector<8x256xf32>
      %17 = arith.maximumf %15, %16 : vector<8x256xf32>
      %18 = arith.truncf %17 : vector<8x256xf32> to vector<8x256xbf16>
      %c0_15 = arith.constant 0 : index
      %c0_16 = arith.constant 0 : index
      %19 = vector.load %arg6[%c0_15, %c0_16] : memref<8x256xbf16, #tpu.memory_space<vmem>>, vector<8x256xbf16>
      tpu.vector_store %arg6[%c0_15, %c0_16], %18 {strides = array<i32>} : memref<8x256xbf16, #tpu.memory_space<vmem>>, vector<8x256xbf16>,
    } else {
    }
    return
  }
  func.func @transform_0(%arg0: i32, %arg1: i32, %arg2: i32) -> (i32, i32) {
    %c0_i32 = arith.constant 0 : i32
    return %arg0, %arg2 : i32, i32
  }
  func.func @transform_1(%arg0: i32, %arg1: i32, %arg2: i32) -> (i32, i32) {
    %c0_i32 = arith.constant 0 : i32
    return %arg2, %arg1 : i32, i32
  }
  func.func @transform_2(%arg0: i32, %arg1: i32, %arg2: i32) -> (i32, i32) {
    %c0_i32 = arith.constant 0 : i32
    %c0_i32_0 = arith.constant 0 : i32
    return %c0_i32, %arg1 : i32, i32
  }
  func.func @transform_3(%arg0: i32, %arg1: i32, %arg2: i32) -> (i32, i32) {
    %c0_i32 = arith.constant 0 : i32
    return %arg0, %arg1 : i32, i32
  }
}

module attributes {stable_mosaic.version = 11 : i64} {
  func.func @_matmul_kernel(%arg0: i32, %arg1: i32, %arg2: i32, %arg3: memref<8x512xbf16, #tpu.memory_space<vmem>>, %arg4: memref<512x256xbf16, #tpu.memory_space<vmem>>, %arg5: memref<1x256xf32, #tpu.memory_space<vmem>>, %arg6: memref<8x256xbf16, #tpu.memory_space<vmem>>, %arg7: memref<8x256xf32, #tpu.memory_space<vmem>>) attributes {dimension_semantics = [#tpu.dimension_semantics<parallel>, #tpu.dimension_semantics<parallel>, #tpu.dimension_semantics<arbitrary>], iteration_bounds = array<i64: 1, 1, 6>, scalar_prefetch = 0 : i64, scratch_operands = 1 : i64, tpu.core_type = #tpu.core_type<tc>, window_params = [{transform_indices = @transform_0, window_bounds = array<i64: 8, 512>}, {transform_indices = @transform_1, window_bounds = array<i64: 512, 256>}, {transform_indices = @transform_2, window_bounds = array<i64: 1, 256>}, {transform_indices = @transform_3, window_bounds = array<i64: 8, 256>}]} {
    %c0_i32 = arith.constant 0 : i32
    %0 = arith.cmpi eq, %arg2, %c0_i32 : i32
    %1 = arith.extui %0 : i1 to i32
    %c0_i32_0 = arith.constant 0 : i32
    %2 = arith.cmpi ne, %1, %c0_i32_0 : i32
    scf.if %2 {
      %cst_9 = arith.constant 0.000000e+00 : f32
      %12 = vector.broadcast %cst_9 : f32 to vector<8x256xf32>
      %c0_10 = arith.constant 0 : index
      %c0_11 = arith.constant 0 : index
      %13 = vector.load %arg7[%c0_10, %c0_11] : memref<8x256xf32, #tpu.memory_space<vmem>>, vector<8x256xf32>
      tpu.vector_store %arg7[%c0_10, %c0_11], %12 {strides = array<i32>} : memref<8x256xf32, #tpu.memory_space<vmem>>, vector<8x256xf32>,
    } else {
    }
    %c0 = arith.constant 0 : index
    %c0_1 = arith.constant 0 : index
    %3 = vector.load %arg7[%c0, %c0_1] : memref<8x256xf32, #tpu.memory_space<vmem>>, vector<8x256xf32>
    %c0_2 = arith.constant 0 : index
    %c0_3 = arith.constant 0 : index
    %4 = vector.load %arg3[%c0_2, %c0_3] : memref<8x512xbf16, #tpu.memory_space<vmem>>, vector<8x512xbf16>
    %c0_4 = arith.constant 0 : index
    %c0_5 = arith.constant 0 : index
    %5 = vector.load %arg4[%c0_4, %c0_5] : memref<512x256xbf16, #tpu.memory_space<vmem>>, vector<512x256xbf16>
    %cst = arith.constant dense<0.000000e+00> : vector<8x256xf32>
    %6 = tpu.matmul %4, %5, %cst {dimension_numbers = #tpu.dot_dimension_numbers<[1], [0], [0], [1], [0, 0, 1, 1], [], []>} : vector<8x512xbf16>, vector<512x256xbf16>, vector<8x256xf32> -> vector<8x256xf32>
    %7 = arith.addf %3, %6 : vector<8x256xf32>
    %c0_6 = arith.constant 0 : index
    %c0_7 = arith.constant 0 : index
    %8 = vector.load %arg7[%c0_6, %c0_7] : memref<8x256xf32, #tpu.memory_space<vmem>>, vector<8x256xf32>
    tpu.vector_store %arg7[%c0_6, %c0_7], %7 {strides = array<i32>} : memref<8x256xf32, #tpu.memory_space<vmem>>, vector<8x256xf32>,
    %c5_i32 = arith.constant 5 : i32
    %9 = arith.cmpi eq, %arg2, %c5_i32 : i32
    %10 = arith.extui %9 : i1 to i32
    %c0_i32_8 = arith.constant 0 : i32
    %11 = arith.cmpi ne, %10, %c0_i32_8 : i32
    scf.if %11 {
      %c0_9 = arith.constant 0 : index
      %c0_10 = arith.constant 0 : index
      %12 = vector.load %arg7[%c0_9, %c0_10] : memref<8x256xf32, #tpu.memory_space<vmem>>, vector<8x256xf32>
      %c0_11 = arith.constant 0 : index
      %c0_12 = arith.constant 0 : index
      %13 = vector.load %arg5[%c0_11, %c0_12] : memref<1x256xf32, #tpu.memory_space<vmem>>, vector<1x256xf32>
      %14 = vector.broadcast %13 : vector<1x256xf32> to vector<8x256xf32>
      %15 = arith.addf %12, %14 : vector<8x256xf32>
      %cst_13 = arith.constant 0.000000e+00 : f32
      %16 = vector.broadcast %cst_13 : f32 to vector<8x256xf32>
      %17 = arith.maximumf %15, %16 : vector<8x256xf32>
      %18 = arith.truncf %17 : vector<8x256xf32> to vector<8x256xbf16>
      %c0_14 = arith.constant 0 : index
      %c0_15 = arith.constant 0 : index
      %19 = vector.load %arg6[%c0_14, %c0_15] : memref<8x256xbf16, #tpu.memory_space<vmem>>, vector<8x256xbf16>
      tpu.vector_store %arg6[%c0_14, %c0_15], %18 {strides = array<i32>} : memref<8x256xbf16, #tpu.memory_space<vmem>>, vector<8x256xbf16>,
    } else {
    }
    return
  }
  func.func @transform_0(%arg0: i32, %arg1: i32, %arg2: i32) -> (i32, i32) {
    %c0_i32 = arith.constant 0 : i32
    return %arg0, %arg2 : i32, i32
  }
  func.func @transform_1(%arg0: i32, %arg1: i32, %arg2: i32) -> (i32, i32) {
    %c0_i32 = arith.constant 0 : i32
    return %arg2, %arg1 : i32, i32
  }
  func.func @transform_2(%arg0: i32, %arg1: i32, %arg2: i32) -> (i32, i32) {
    %c0_i32 = arith.constant 0 : i32
    %c0_i32_0 = arith.constant 0 : i32
    return %c0_i32, %arg1 : i32, i32
  }
  func.func @transform_3(%arg0: i32, %arg1: i32, %arg2: i32) -> (i32, i32) {
    %c0_i32 = arith.constant 0 : i32
    return %arg0, %arg1 : i32, i32
  }
}

module attributes {stable_mosaic.version = 11 : i64} {
  func.func @_gap_kernel(%arg0: i32, %arg1: i32, %arg2: memref<1x8x320xbf16, #tpu.memory_space<vmem>>, %arg3: memref<1x1x320xf32, #tpu.memory_space<vmem>>, %arg4: memref<1x320xf32, #tpu.memory_space<vmem>>) attributes {dimension_semantics = [#tpu.dimension_semantics<parallel>, #tpu.dimension_semantics<arbitrary>], iteration_bounds = array<i64: 2, 1>, scalar_prefetch = 0 : i64, scratch_operands = 1 : i64, tpu.core_type = #tpu.core_type<tc>, window_params = [{transform_indices = @transform_0, window_bounds = array<i64: 1, 8, 320>}, {transform_indices = @transform_1, window_bounds = array<i64: 1, 1, 320>}]} {
    %c0_i32 = arith.constant 0 : i32
    %0 = arith.cmpi eq, %arg1, %c0_i32 : i32
    %1 = arith.extui %0 : i1 to i32
    %c0_i32_0 = arith.constant 0 : i32
    %2 = arith.cmpi ne, %1, %c0_i32_0 : i32
    scf.if %2 {
      %cst_9 = arith.constant 0.000000e+00 : f32
      %14 = vector.broadcast %cst_9 : f32 to vector<1x320xf32>
      %c0_10 = arith.constant 0 : index
      %c0_11 = arith.constant 0 : index
      %15 = vector.load %arg4[%c0_10, %c0_11] : memref<1x320xf32, #tpu.memory_space<vmem>>, vector<1x320xf32>
      tpu.vector_store %arg4[%c0_10, %c0_11], %14 {strides = array<i32>} : memref<1x320xf32, #tpu.memory_space<vmem>>, vector<1x320xf32>,
    } else {
    }
    %c0 = arith.constant 0 : index
    %c0_1 = arith.constant 0 : index
    %3 = vector.load %arg4[%c0, %c0_1] : memref<1x320xf32, #tpu.memory_space<vmem>>, vector<1x320xf32>
    %c0_2 = arith.constant 0 : index
    %c0_3 = arith.constant 0 : index
    %c0_4 = arith.constant 0 : index
    %4 = vector.load %arg2[%c0_2, %c0_3, %c0_4] : memref<1x8x320xbf16, #tpu.memory_space<vmem>>, vector<1x8x320xbf16>
    %5 = vector.shape_cast %4 : vector<1x8x320xbf16> to vector<8x320xbf16>
    %6 = arith.extf %5 : vector<8x320xbf16> to vector<8x320xf32>
    %cst = arith.constant dense<0.000000e+00> : vector<320xf32>
    %7 = vector.multi_reduction <add>, %6, %cst [0] : vector<8x320xf32> to vector<320xf32>
    %8 = vector.shape_cast %7 : vector<320xf32> to vector<1x320xf32>
    %9 = arith.addf %3, %8 : vector<1x320xf32>
    %c0_5 = arith.constant 0 : index
    %c0_6 = arith.constant 0 : index
    %10 = vector.load %arg4[%c0_5, %c0_6] : memref<1x320xf32, #tpu.memory_space<vmem>>, vector<1x320xf32>
    tpu.vector_store %arg4[%c0_5, %c0_6], %9 {strides = array<i32>} : memref<1x320xf32, #tpu.memory_space<vmem>>, vector<1x320xf32>,
    %c0_i32_7 = arith.constant 0 : i32
    %11 = arith.cmpi eq, %arg1, %c0_i32_7 : i32
    %12 = arith.extui %11 : i1 to i32
    %c0_i32_8 = arith.constant 0 : i32
    %13 = arith.cmpi ne, %12, %c0_i32_8 : i32
    scf.if %13 {
      %c0_9 = arith.constant 0 : index
      %c0_10 = arith.constant 0 : index
      %14 = vector.load %arg4[%c0_9, %c0_10] : memref<1x320xf32, #tpu.memory_space<vmem>>, vector<1x320xf32>
      %cst_11 = arith.constant 2.500000e-01 : f32
      %15 = vector.broadcast %cst_11 : f32 to vector<1x320xf32>
      %16 = arith.mulf %14, %15 : vector<1x320xf32>
      %c0_12 = arith.constant 0 : index
      %c0_13 = arith.constant 0 : index
      %c0_14 = arith.constant 0 : index
      %17 = vector.load %arg3[%c0_12, %c0_13, %c0_14] : memref<1x1x320xf32, #tpu.memory_space<vmem>>, vector<1x1x320xf32>
      %18 = vector.shape_cast %17 : vector<1x1x320xf32> to vector<1x320xf32>
      %19 = vector.shape_cast %16 : vector<1x320xf32> to vector<1x1x320xf32>
      tpu.vector_store %arg3[%c0_12, %c0_13, %c0_14], %19 {strides = array<i32>} : memref<1x1x320xf32, #tpu.memory_space<vmem>>, vector<1x1x320xf32>,
    } else {
    }
    return
  }
  func.func @transform_0(%arg0: i32, %arg1: i32) -> (i32, i32, i32) {
    %c0_i32 = arith.constant 0 : i32
    %c0_i32_0 = arith.constant 0 : i32
    return %arg0, %arg1, %c0_i32 : i32, i32, i32
  }
  func.func @transform_1(%arg0: i32, %arg1: i32) -> (i32, i32, i32) {
    %c0_i32 = arith.constant 0 : i32
    %c0_i32_0 = arith.constant 0 : i32
    %c0_i32_1 = arith.constant 0 : i32
    return %arg0, %c0_i32, %c0_i32_0 : i32, i32, i32
  }
}

module attributes {stable_mosaic.version = 11 : i64} {
  func.func @_matmul_kernel(%arg0: i32, %arg1: i32, %arg2: i32, %arg3: memref<8x384xbf16, #tpu.memory_space<vmem>>, %arg4: memref<384x256xbf16, #tpu.memory_space<vmem>>, %arg5: memref<1x256xf32, #tpu.memory_space<vmem>>, %arg6: memref<8x256xbf16, #tpu.memory_space<vmem>>, %arg7: memref<8x256xf32, #tpu.memory_space<vmem>>) attributes {dimension_semantics = [#tpu.dimension_semantics<parallel>, #tpu.dimension_semantics<parallel>, #tpu.dimension_semantics<arbitrary>], iteration_bounds = array<i64: 1, 1, 1>, scalar_prefetch = 0 : i64, scratch_operands = 1 : i64, tpu.core_type = #tpu.core_type<tc>, window_params = [{transform_indices = @transform_0, window_bounds = array<i64: 8, 384>}, {transform_indices = @transform_1, window_bounds = array<i64: 384, 256>}, {transform_indices = @transform_2, window_bounds = array<i64: 1, 256>}, {transform_indices = @transform_3, window_bounds = array<i64: 8, 256>}]} {
    %c0_i32 = arith.constant 0 : i32
    %0 = arith.cmpi eq, %arg2, %c0_i32 : i32
    %1 = arith.extui %0 : i1 to i32
    %c0_i32_0 = arith.constant 0 : i32
    %2 = arith.cmpi ne, %1, %c0_i32_0 : i32
    scf.if %2 {
      %cst_10 = arith.constant 0.000000e+00 : f32
      %12 = vector.broadcast %cst_10 : f32 to vector<8x256xf32>
      %c0_11 = arith.constant 0 : index
      %c0_12 = arith.constant 0 : index
      %13 = vector.load %arg7[%c0_11, %c0_12] : memref<8x256xf32, #tpu.memory_space<vmem>>, vector<8x256xf32>
      tpu.vector_store %arg7[%c0_11, %c0_12], %12 {strides = array<i32>} : memref<8x256xf32, #tpu.memory_space<vmem>>, vector<8x256xf32>,
    } else {
    }
    %c0 = arith.constant 0 : index
    %c0_1 = arith.constant 0 : index
    %3 = vector.load %arg7[%c0, %c0_1] : memref<8x256xf32, #tpu.memory_space<vmem>>, vector<8x256xf32>
    %c0_2 = arith.constant 0 : index
    %c0_3 = arith.constant 0 : index
    %4 = vector.load %arg3[%c0_2, %c0_3] : memref<8x384xbf16, #tpu.memory_space<vmem>>, vector<8x384xbf16>
    %c0_4 = arith.constant 0 : index
    %c0_5 = arith.constant 0 : index
    %5 = vector.load %arg4[%c0_4, %c0_5] : memref<384x256xbf16, #tpu.memory_space<vmem>>, vector<384x256xbf16>
    %cst = arith.constant dense<0.000000e+00> : vector<8x256xf32>
    %6 = tpu.matmul %4, %5, %cst {dimension_numbers = #tpu.dot_dimension_numbers<[1], [0], [0], [1], [0, 0, 1, 1], [], []>} : vector<8x384xbf16>, vector<384x256xbf16>, vector<8x256xf32> -> vector<8x256xf32>
    %7 = arith.addf %3, %6 : vector<8x256xf32>
    %c0_6 = arith.constant 0 : index
    %c0_7 = arith.constant 0 : index
    %8 = vector.load %arg7[%c0_6, %c0_7] : memref<8x256xf32, #tpu.memory_space<vmem>>, vector<8x256xf32>
    tpu.vector_store %arg7[%c0_6, %c0_7], %7 {strides = array<i32>} : memref<8x256xf32, #tpu.memory_space<vmem>>, vector<8x256xf32>,
    %c0_i32_8 = arith.constant 0 : i32
    %9 = arith.cmpi eq, %arg2, %c0_i32_8 : i32
    %10 = arith.extui %9 : i1 to i32
    %c0_i32_9 = arith.constant 0 : i32
    %11 = arith.cmpi ne, %10, %c0_i32_9 : i32
    scf.if %11 {
      %c0_10 = arith.constant 0 : index
      %c0_11 = arith.constant 0 : index
      %12 = vector.load %arg7[%c0_10, %c0_11] : memref<8x256xf32, #tpu.memory_space<vmem>>, vector<8x256xf32>
      %c0_12 = arith.constant 0 : index
      %c0_13 = arith.constant 0 : index
      %13 = vector.load %arg5[%c0_12, %c0_13] : memref<1x256xf32, #tpu.memory_space<vmem>>, vector<1x256xf32>
      %14 = vector.broadcast %13 : vector<1x256xf32> to vector<8x256xf32>
      %15 = arith.addf %12, %14 : vector<8x256xf32>
      %cst_14 = arith.constant 0.000000e+00 : f32
      %16 = vector.broadcast %cst_14 : f32 to vector<8x256xf32>
      %17 = arith.maximumf %15, %16 : vector<8x256xf32>
      %18 = arith.truncf %17 : vector<8x256xf32> to vector<8x256xbf16>
      %c0_15 = arith.constant 0 : index
      %c0_16 = arith.constant 0 : index
      %19 = vector.load %arg6[%c0_15, %c0_16] : memref<8x256xbf16, #tpu.memory_space<vmem>>, vector<8x256xbf16>
      tpu.vector_store %arg6[%c0_15, %c0_16], %18 {strides = array<i32>} : memref<8x256xbf16, #tpu.memory_space<vmem>>, vector<8x256xbf16>,
    } else {
    }
    return
  }
  func.func @transform_0(%arg0: i32, %arg1: i32, %arg2: i32) -> (i32, i32) {
    %c0_i32 = arith.constant 0 : i32
    return %arg0, %arg2 : i32, i32
  }
  func.func @transform_1(%arg0: i32, %arg1: i32, %arg2: i32) -> (i32, i32) {
    %c0_i32 = arith.constant 0 : i32
    return %arg2, %arg1 : i32, i32
  }
  func.func @transform_2(%arg0: i32, %arg1: i32, %arg2: i32) -> (i32, i32) {
    %c0_i32 = arith.constant 0 : i32
    %c0_i32_0 = arith.constant 0 : i32
    return %c0_i32, %arg1 : i32, i32
  }
  func.func @transform_3(%arg0: i32, %arg1: i32, %arg2: i32) -> (i32, i32) {
    %c0_i32 = arith.constant 0 : i32
    return %arg0, %arg1 : i32, i32
  }
}

module attributes {stable_mosaic.version = 11 : i64} {
  func.func @_matmul_kernel(%arg0: i32, %arg1: i32, %arg2: i32, %arg3: memref<8x256xbf16, #tpu.memory_space<vmem>>, %arg4: memref<256x256xbf16, #tpu.memory_space<vmem>>, %arg5: memref<1x256xf32, #tpu.memory_space<vmem>>, %arg6: memref<8x256xf32, #tpu.memory_space<vmem>>, %arg7: memref<8x256xf32, #tpu.memory_space<vmem>>) attributes {dimension_semantics = [#tpu.dimension_semantics<parallel>, #tpu.dimension_semantics<parallel>, #tpu.dimension_semantics<arbitrary>], iteration_bounds = array<i64: 1, 1, 1>, scalar_prefetch = 0 : i64, scratch_operands = 1 : i64, tpu.core_type = #tpu.core_type<tc>, window_params = [{transform_indices = @transform_0, window_bounds = array<i64: 8, 256>}, {transform_indices = @transform_1, window_bounds = array<i64: 256, 256>}, {transform_indices = @transform_2, window_bounds = array<i64: 1, 256>}, {transform_indices = @transform_3, window_bounds = array<i64: 8, 256>}]} {
    %c0_i32 = arith.constant 0 : i32
    %0 = arith.cmpi eq, %arg2, %c0_i32 : i32
    %1 = arith.extui %0 : i1 to i32
    %c0_i32_0 = arith.constant 0 : i32
    %2 = arith.cmpi ne, %1, %c0_i32_0 : i32
    scf.if %2 {
      %cst_10 = arith.constant 0.000000e+00 : f32
      %12 = vector.broadcast %cst_10 : f32 to vector<8x256xf32>
      %c0_11 = arith.constant 0 : index
      %c0_12 = arith.constant 0 : index
      %13 = vector.load %arg7[%c0_11, %c0_12] : memref<8x256xf32, #tpu.memory_space<vmem>>, vector<8x256xf32>
      tpu.vector_store %arg7[%c0_11, %c0_12], %12 {strides = array<i32>} : memref<8x256xf32, #tpu.memory_space<vmem>>, vector<8x256xf32>,
    } else {
    }
    %c0 = arith.constant 0 : index
    %c0_1 = arith.constant 0 : index
    %3 = vector.load %arg7[%c0, %c0_1] : memref<8x256xf32, #tpu.memory_space<vmem>>, vector<8x256xf32>
    %c0_2 = arith.constant 0 : index
    %c0_3 = arith.constant 0 : index
    %4 = vector.load %arg3[%c0_2, %c0_3] : memref<8x256xbf16, #tpu.memory_space<vmem>>, vector<8x256xbf16>
    %c0_4 = arith.constant 0 : index
    %c0_5 = arith.constant 0 : index
    %5 = vector.load %arg4[%c0_4, %c0_5] : memref<256x256xbf16, #tpu.memory_space<vmem>>, vector<256x256xbf16>
    %cst = arith.constant dense<0.000000e+00> : vector<8x256xf32>
    %6 = tpu.matmul %4, %5, %cst {dimension_numbers = #tpu.dot_dimension_numbers<[1], [0], [0], [1], [0, 0, 1, 1], [], []>} : vector<8x256xbf16>, vector<256x256xbf16>, vector<8x256xf32> -> vector<8x256xf32>
    %7 = arith.addf %3, %6 : vector<8x256xf32>
    %c0_6 = arith.constant 0 : index
    %c0_7 = arith.constant 0 : index
    %8 = vector.load %arg7[%c0_6, %c0_7] : memref<8x256xf32, #tpu.memory_space<vmem>>, vector<8x256xf32>
    tpu.vector_store %arg7[%c0_6, %c0_7], %7 {strides = array<i32>} : memref<8x256xf32, #tpu.memory_space<vmem>>, vector<8x256xf32>,
    %c0_i32_8 = arith.constant 0 : i32
    %9 = arith.cmpi eq, %arg2, %c0_i32_8 : i32
    %10 = arith.extui %9 : i1 to i32
    %c0_i32_9 = arith.constant 0 : i32
    %11 = arith.cmpi ne, %10, %c0_i32_9 : i32
    scf.if %11 {
      %c0_10 = arith.constant 0 : index
      %c0_11 = arith.constant 0 : index
      %12 = vector.load %arg7[%c0_10, %c0_11] : memref<8x256xf32, #tpu.memory_space<vmem>>, vector<8x256xf32>
      %c0_12 = arith.constant 0 : index
      %c0_13 = arith.constant 0 : index
      %13 = vector.load %arg5[%c0_12, %c0_13] : memref<1x256xf32, #tpu.memory_space<vmem>>, vector<1x256xf32>
      %14 = vector.broadcast %13 : vector<1x256xf32> to vector<8x256xf32>
      %15 = arith.addf %12, %14 : vector<8x256xf32>
      %c0_14 = arith.constant 0 : index
      %c0_15 = arith.constant 0 : index
      %16 = vector.load %arg6[%c0_14, %c0_15] : memref<8x256xf32, #tpu.memory_space<vmem>>, vector<8x256xf32>
      tpu.vector_store %arg6[%c0_14, %c0_15], %15 {strides = array<i32>} : memref<8x256xf32, #tpu.memory_space<vmem>>, vector<8x256xf32>,
    } else {
    }
    return
  }
  func.func @transform_0(%arg0: i32, %arg1: i32, %arg2: i32) -> (i32, i32) {
    %c0_i32 = arith.constant 0 : i32
    return %arg0, %arg2 : i32, i32
  }
  func.func @transform_1(%arg0: i32, %arg1: i32, %arg2: i32) -> (i32, i32) {
    %c0_i32 = arith.constant 0 : i32
    return %arg2, %arg1 : i32, i32
  }
  func.func @transform_2(%arg0: i32, %arg1: i32, %arg2: i32) -> (i32, i32) {
    %c0_i32 = arith.constant 0 : i32
    %c0_i32_0 = arith.constant 0 : i32
    return %c0_i32, %arg1 : i32, i32
  }
  func.func @transform_3(%arg0: i32, %arg1: i32, %arg2: i32) -> (i32, i32) {
    %c0_i32 = arith.constant 0 : i32
    return %arg0, %arg1 : i32, i32
  }
}

module attributes {stable_mosaic.version = 11 : i64} {
  func.func @_aspp_proj_kernel(%arg0: i32, %arg1: i32, %arg2: memref<1x8x256xbf16, #tpu.memory_space<vmem>>, %arg3: memref<1x8x256xbf16, #tpu.memory_space<vmem>>, %arg4: memref<1x8x256xbf16, #tpu.memory_space<vmem>>, %arg5: memref<1x8x256xbf16, #tpu.memory_space<vmem>>, %arg6: memref<1x1x256xf32, #tpu.memory_space<vmem>>, %arg7: memref<4x256x256xbf16, #tpu.memory_space<vmem>>, %arg8: memref<1x8x256xbf16, #tpu.memory_space<vmem>>) attributes {dimension_semantics = [#tpu.dimension_semantics<parallel>, #tpu.dimension_semantics<parallel>], iteration_bounds = array<i64: 2, 1>, scalar_prefetch = 0 : i64, scratch_operands = 0 : i64, tpu.core_type = #tpu.core_type<tc>, window_params = [{transform_indices = @transform_0, window_bounds = array<i64: 1, 8, 256>}, {transform_indices = @transform_1, window_bounds = array<i64: 1, 8, 256>}, {transform_indices = @transform_2, window_bounds = array<i64: 1, 8, 256>}, {transform_indices = @transform_3, window_bounds = array<i64: 1, 8, 256>}, {transform_indices = @transform_4, window_bounds = array<i64: 1, 1, 256>}, {pipeline_mode = #tpu.pipeline_mode<synchronous>, transform_indices = @transform_5, window_bounds = array<i64: 4, 256, 256>}, {transform_indices = @transform_6, window_bounds = array<i64: 1, 8, 256>}]} {
    %c0 = arith.constant 0 : index
    %c0_0 = arith.constant 0 : index
    %c0_1 = arith.constant 0 : index
    %0 = vector.load %arg2[%c0, %c0_0, %c0_1] : memref<1x8x256xbf16, #tpu.memory_space<vmem>>, vector<1x8x256xbf16>
    %1 = vector.shape_cast %0 : vector<1x8x256xbf16> to vector<8x256xbf16>
    %c0_2 = arith.constant 0 : index
    %c0_3 = arith.constant 0 : index
    %c0_4 = arith.constant 0 : index
    %2 = vector.load %arg7[%c0_2, %c0_3, %c0_4] : memref<4x256x256xbf16, #tpu.memory_space<vmem>>, vector<1x256x256xbf16>
    %3 = vector.shape_cast %2 : vector<1x256x256xbf16> to vector<256x256xbf16>
    %cst = arith.constant dense<0.000000e+00> : vector<8x256xf32>
    %4 = tpu.matmul %1, %3, %cst {dimension_numbers = #tpu.dot_dimension_numbers<[1], [0], [0], [1], [0, 0, 1, 1], [], []>} : vector<8x256xbf16>, vector<256x256xbf16>, vector<8x256xf32> -> vector<8x256xf32>
    %c0_5 = arith.constant 0 : index
    %c0_6 = arith.constant 0 : index
    %c0_7 = arith.constant 0 : index
    %5 = vector.load %arg3[%c0_5, %c0_6, %c0_7] : memref<1x8x256xbf16, #tpu.memory_space<vmem>>, vector<1x8x256xbf16>
    %6 = vector.shape_cast %5 : vector<1x8x256xbf16> to vector<8x256xbf16>
    %c1 = arith.constant 1 : index
    %c0_8 = arith.constant 0 : index
    %c0_9 = arith.constant 0 : index
    %7 = vector.load %arg7[%c1, %c0_8, %c0_9] : memref<4x256x256xbf16, #tpu.memory_space<vmem>>, vector<1x256x256xbf16>
    %8 = vector.shape_cast %7 : vector<1x256x256xbf16> to vector<256x256xbf16>
    %cst_10 = arith.constant dense<0.000000e+00> : vector<8x256xf32>
    %9 = tpu.matmul %6, %8, %cst_10 {dimension_numbers = #tpu.dot_dimension_numbers<[1], [0], [0], [1], [0, 0, 1, 1], [], []>} : vector<8x256xbf16>, vector<256x256xbf16>, vector<8x256xf32> -> vector<8x256xf32>
    %10 = arith.addf %4, %9 : vector<8x256xf32>
    %c0_11 = arith.constant 0 : index
    %c0_12 = arith.constant 0 : index
    %c0_13 = arith.constant 0 : index
    %11 = vector.load %arg4[%c0_11, %c0_12, %c0_13] : memref<1x8x256xbf16, #tpu.memory_space<vmem>>, vector<1x8x256xbf16>
    %12 = vector.shape_cast %11 : vector<1x8x256xbf16> to vector<8x256xbf16>
    %c2 = arith.constant 2 : index
    %c0_14 = arith.constant 0 : index
    %c0_15 = arith.constant 0 : index
    %13 = vector.load %arg7[%c2, %c0_14, %c0_15] : memref<4x256x256xbf16, #tpu.memory_space<vmem>>, vector<1x256x256xbf16>
    %14 = vector.shape_cast %13 : vector<1x256x256xbf16> to vector<256x256xbf16>
    %cst_16 = arith.constant dense<0.000000e+00> : vector<8x256xf32>
    %15 = tpu.matmul %12, %14, %cst_16 {dimension_numbers = #tpu.dot_dimension_numbers<[1], [0], [0], [1], [0, 0, 1, 1], [], []>} : vector<8x256xbf16>, vector<256x256xbf16>, vector<8x256xf32> -> vector<8x256xf32>
    %16 = arith.addf %10, %15 : vector<8x256xf32>
    %c0_17 = arith.constant 0 : index
    %c0_18 = arith.constant 0 : index
    %c0_19 = arith.constant 0 : index
    %17 = vector.load %arg5[%c0_17, %c0_18, %c0_19] : memref<1x8x256xbf16, #tpu.memory_space<vmem>>, vector<1x8x256xbf16>
    %18 = vector.shape_cast %17 : vector<1x8x256xbf16> to vector<8x256xbf16>
    %c3 = arith.constant 3 : index
    %c0_20 = arith.constant 0 : index
    %c0_21 = arith.constant 0 : index
    %19 = vector.load %arg7[%c3, %c0_20, %c0_21] : memref<4x256x256xbf16, #tpu.memory_space<vmem>>, vector<1x256x256xbf16>
    %20 = vector.shape_cast %19 : vector<1x256x256xbf16> to vector<256x256xbf16>
    %cst_22 = arith.constant dense<0.000000e+00> : vector<8x256xf32>
    %21 = tpu.matmul %18, %20, %cst_22 {dimension_numbers = #tpu.dot_dimension_numbers<[1], [0], [0], [1], [0, 0, 1, 1], [], []>} : vector<8x256xbf16>, vector<256x256xbf16>, vector<8x256xf32> -> vector<8x256xf32>
    %22 = arith.addf %16, %21 : vector<8x256xf32>
    %c0_23 = arith.constant 0 : index
    %c0_24 = arith.constant 0 : index
    %c0_25 = arith.constant 0 : index
    %23 = vector.load %arg6[%c0_23, %c0_24, %c0_25] : memref<1x1x256xf32, #tpu.memory_space<vmem>>, vector<1x1x256xf32>
    %24 = vector.shape_cast %23 : vector<1x1x256xf32> to vector<1x256xf32>
    %25 = vector.broadcast %24 : vector<1x256xf32> to vector<8x256xf32>
    %26 = arith.addf %22, %25 : vector<8x256xf32>
    %cst_26 = arith.constant 0.000000e+00 : f32
    %27 = vector.broadcast %cst_26 : f32 to vector<8x256xf32>
    %28 = arith.maximumf %26, %27 : vector<8x256xf32>
    %29 = arith.truncf %28 : vector<8x256xf32> to vector<8x256xbf16>
    %c0_27 = arith.constant 0 : index
    %c0_28 = arith.constant 0 : index
    %c0_29 = arith.constant 0 : index
    %30 = vector.load %arg8[%c0_27, %c0_28, %c0_29] : memref<1x8x256xbf16, #tpu.memory_space<vmem>>, vector<1x8x256xbf16>
    %31 = vector.shape_cast %30 : vector<1x8x256xbf16> to vector<8x256xbf16>
    %32 = vector.shape_cast %29 : vector<8x256xbf16> to vector<1x8x256xbf16>
    tpu.vector_store %arg8[%c0_27, %c0_28, %c0_29], %32 {strides = array<i32>} : memref<1x8x256xbf16, #tpu.memory_space<vmem>>, vector<1x8x256xbf16>,
    return
  }
  func.func @transform_0(%arg0: i32, %arg1: i32) -> (i32, i32, i32) {
    %c0_i32 = arith.constant 0 : i32
    %c0_i32_0 = arith.constant 0 : i32
    return %arg0, %arg1, %c0_i32 : i32, i32, i32
  }
  func.func @transform_1(%arg0: i32, %arg1: i32) -> (i32, i32, i32) {
    %c0_i32 = arith.constant 0 : i32
    %c0_i32_0 = arith.constant 0 : i32
    return %arg0, %arg1, %c0_i32 : i32, i32, i32
  }
  func.func @transform_2(%arg0: i32, %arg1: i32) -> (i32, i32, i32) {
    %c0_i32 = arith.constant 0 : i32
    %c0_i32_0 = arith.constant 0 : i32
    return %arg0, %arg1, %c0_i32 : i32, i32, i32
  }
  func.func @transform_3(%arg0: i32, %arg1: i32) -> (i32, i32, i32) {
    %c0_i32 = arith.constant 0 : i32
    %c0_i32_0 = arith.constant 0 : i32
    return %arg0, %arg1, %c0_i32 : i32, i32, i32
  }
  func.func @transform_4(%arg0: i32, %arg1: i32) -> (i32, i32, i32) {
    %c0_i32 = arith.constant 0 : i32
    %c0_i32_0 = arith.constant 0 : i32
    %c0_i32_1 = arith.constant 0 : i32
    return %arg0, %c0_i32, %c0_i32_0 : i32, i32, i32
  }
  func.func @transform_5(%arg0: i32, %arg1: i32) -> (i32, i32, i32) {
    %c0_i32 = arith.constant 0 : i32
    %c0_i32_0 = arith.constant 0 : i32
    %c0_i32_1 = arith.constant 0 : i32
    %c0_i32_2 = arith.constant 0 : i32
    return %c0_i32, %c0_i32_0, %c0_i32_1 : i32, i32, i32
  }
  func.func @transform_6(%arg0: i32, %arg1: i32) -> (i32, i32, i32) {
    %c0_i32 = arith.constant 0 : i32
    %c0_i32_0 = arith.constant 0 : i32
    return %arg0, %arg1, %c0_i32 : i32, i32, i32
  }
}

module attributes {stable_mosaic.version = 11 : i64} {
  func.func @_resize_kernel(%arg0: i32, %arg1: i32, %arg2: memref<4x2xbf16, #tpu.memory_space<vmem>>, %arg3: memref<2x2x512xbf16, #tpu.memory_space<vmem>>, %arg4: memref<2x4x512xbf16, #tpu.memory_space<vmem>>) attributes {dimension_semantics = [#tpu.dimension_semantics<parallel>, #tpu.dimension_semantics<parallel>], iteration_bounds = array<i64: 1, 1>, scalar_prefetch = 0 : i64, scratch_operands = 0 : i64, tpu.core_type = #tpu.core_type<tc>, window_params = [{pipeline_mode = #tpu.pipeline_mode<synchronous>, transform_indices = @transform_0, window_bounds = array<i64: 4, 2>}, {transform_indices = @transform_1, window_bounds = array<i64: 2, 2, 512>}, {transform_indices = @transform_2, window_bounds = array<i64: 2, 4, 512>}]} {
    %c0 = arith.constant 0 : index
    %c0_0 = arith.constant 0 : index
    %0 = vector.load %arg2[%c0, %c0_0] : memref<4x2xbf16, #tpu.memory_space<vmem>>, vector<4x2xbf16>
    %c0_1 = arith.constant 0 : index
    %c0_2 = arith.constant 0 : index
    %c0_3 = arith.constant 0 : index
    %1 = vector.load %arg3[%c0_1, %c0_2, %c0_3] : memref<2x2x512xbf16, #tpu.memory_space<vmem>>, vector<1x2x512xbf16>
    %2 = vector.shape_cast %1 : vector<1x2x512xbf16> to vector<2x512xbf16>
    %cst = arith.constant dense<0.000000e+00> : vector<4x512xf32>
    %3 = tpu.matmul %0, %2, %cst {dimension_numbers = #tpu.dot_dimension_numbers<[1], [0], [0], [1], [0, 0, 1, 1], [], []>} : vector<4x2xbf16>, vector<2x512xbf16>, vector<4x512xf32> -> vector<4x512xf32>
    %4 = arith.truncf %3 : vector<4x512xf32> to vector<4x512xbf16>
    %c0_4 = arith.constant 0 : index
    %c0_5 = arith.constant 0 : index
    %c0_6 = arith.constant 0 : index
    %5 = vector.load %arg4[%c0_4, %c0_5, %c0_6] : memref<2x4x512xbf16, #tpu.memory_space<vmem>>, vector<1x4x512xbf16>
    %6 = vector.shape_cast %5 : vector<1x4x512xbf16> to vector<4x512xbf16>
    %7 = vector.shape_cast %4 : vector<4x512xbf16> to vector<1x4x512xbf16>
    tpu.vector_store %arg4[%c0_4, %c0_5, %c0_6], %7 {strides = array<i32>} : memref<2x4x512xbf16, #tpu.memory_space<vmem>>, vector<1x4x512xbf16>,
    %c1 = arith.constant 1 : index
    %c0_7 = arith.constant 0 : index
    %c0_8 = arith.constant 0 : index
    %8 = vector.load %arg3[%c1, %c0_7, %c0_8] : memref<2x2x512xbf16, #tpu.memory_space<vmem>>, vector<1x2x512xbf16>
    %9 = vector.shape_cast %8 : vector<1x2x512xbf16> to vector<2x512xbf16>
    %cst_9 = arith.constant dense<0.000000e+00> : vector<4x512xf32>
    %10 = tpu.matmul %0, %9, %cst_9 {dimension_numbers = #tpu.dot_dimension_numbers<[1], [0], [0], [1], [0, 0, 1, 1], [], []>} : vector<4x2xbf16>, vector<2x512xbf16>, vector<4x512xf32> -> vector<4x512xf32>
    %11 = arith.truncf %10 : vector<4x512xf32> to vector<4x512xbf16>
    %c1_10 = arith.constant 1 : index
    %c0_11 = arith.constant 0 : index
    %c0_12 = arith.constant 0 : index
    %12 = vector.load %arg4[%c1_10, %c0_11, %c0_12] : memref<2x4x512xbf16, #tpu.memory_space<vmem>>, vector<1x4x512xbf16>
    %13 = vector.shape_cast %12 : vector<1x4x512xbf16> to vector<4x512xbf16>
    %14 = vector.shape_cast %11 : vector<4x512xbf16> to vector<1x4x512xbf16>
    tpu.vector_store %arg4[%c1_10, %c0_11, %c0_12], %14 {strides = array<i32>} : memref<2x4x512xbf16, #tpu.memory_space<vmem>>, vector<1x4x512xbf16>,
    return
  }
  func.func @transform_0(%arg0: i32, %arg1: i32) -> (i32, i32) {
    %c0_i32 = arith.constant 0 : i32
    %c0_i32_0 = arith.constant 0 : i32
    %c0_i32_1 = arith.constant 0 : i32
    return %c0_i32, %c0_i32_0 : i32, i32
  }
  func.func @transform_1(%arg0: i32, %arg1: i32) -> (i32, i32, i32) {
    %c0_i32 = arith.constant 0 : i32
    %c0_i32_0 = arith.constant 0 : i32
    return %arg0, %c0_i32, %arg1 : i32, i32, i32
  }
  func.func @transform_2(%arg0: i32, %arg1: i32) -> (i32, i32, i32) {
    %c0_i32 = arith.constant 0 : i32
    %c0_i32_0 = arith.constant 0 : i32
    return %arg0, %c0_i32, %arg1 : i32, i32, i32
  }
}

module attributes {stable_mosaic.version = 11 : i64} {
  func.func @_resize_kernel(%arg0: i32, %arg1: i32, %arg2: memref<4x2xbf16, #tpu.memory_space<vmem>>, %arg3: memref<8x2x256xbf16, #tpu.memory_space<vmem>>, %arg4: memref<8x4x256xbf16, #tpu.memory_space<vmem>>) attributes {dimension_semantics = [#tpu.dimension_semantics<parallel>, #tpu.dimension_semantics<parallel>], iteration_bounds = array<i64: 1, 1>, scalar_prefetch = 0 : i64, scratch_operands = 0 : i64, tpu.core_type = #tpu.core_type<tc>, window_params = [{pipeline_mode = #tpu.pipeline_mode<synchronous>, transform_indices = @transform_0, window_bounds = array<i64: 4, 2>}, {transform_indices = @transform_1, window_bounds = array<i64: 8, 2, 256>}, {transform_indices = @transform_2, window_bounds = array<i64: 8, 4, 256>}]} {
    %c0 = arith.constant 0 : index
    %c0_0 = arith.constant 0 : index
    %0 = vector.load %arg2[%c0, %c0_0] : memref<4x2xbf16, #tpu.memory_space<vmem>>, vector<4x2xbf16>
    %c0_1 = arith.constant 0 : index
    %c0_2 = arith.constant 0 : index
    %c0_3 = arith.constant 0 : index
    %1 = vector.load %arg3[%c0_1, %c0_2, %c0_3] : memref<8x2x256xbf16, #tpu.memory_space<vmem>>, vector<1x2x256xbf16>
    %2 = vector.shape_cast %1 : vector<1x2x256xbf16> to vector<2x256xbf16>
    %cst = arith.constant dense<0.000000e+00> : vector<4x256xf32>
    %3 = tpu.matmul %0, %2, %cst {dimension_numbers = #tpu.dot_dimension_numbers<[1], [0], [0], [1], [0, 0, 1, 1], [], []>} : vector<4x2xbf16>, vector<2x256xbf16>, vector<4x256xf32> -> vector<4x256xf32>
    %4 = arith.truncf %3 : vector<4x256xf32> to vector<4x256xbf16>
    %c0_4 = arith.constant 0 : index
    %c0_5 = arith.constant 0 : index
    %c0_6 = arith.constant 0 : index
    %5 = vector.load %arg4[%c0_4, %c0_5, %c0_6] : memref<8x4x256xbf16, #tpu.memory_space<vmem>>, vector<1x4x256xbf16>
    %6 = vector.shape_cast %5 : vector<1x4x256xbf16> to vector<4x256xbf16>
    %7 = vector.shape_cast %4 : vector<4x256xbf16> to vector<1x4x256xbf16>
    tpu.vector_store %arg4[%c0_4, %c0_5, %c0_6], %7 {strides = array<i32>} : memref<8x4x256xbf16, #tpu.memory_space<vmem>>, vector<1x4x256xbf16>,
    %c1 = arith.constant 1 : index
    %c0_7 = arith.constant 0 : index
    %c0_8 = arith.constant 0 : index
    %8 = vector.load %arg3[%c1, %c0_7, %c0_8] : memref<8x2x256xbf16, #tpu.memory_space<vmem>>, vector<1x2x256xbf16>
    %9 = vector.shape_cast %8 : vector<1x2x256xbf16> to vector<2x256xbf16>
    %cst_9 = arith.constant dense<0.000000e+00> : vector<4x256xf32>
    %10 = tpu.matmul %0, %9, %cst_9 {dimension_numbers = #tpu.dot_dimension_numbers<[1], [0], [0], [1], [0, 0, 1, 1], [], []>} : vector<4x2xbf16>, vector<2x256xbf16>, vector<4x256xf32> -> vector<4x256xf32>
    %11 = arith.truncf %10 : vector<4x256xf32> to vector<4x256xbf16>
    %c1_10 = arith.constant 1 : index
    %c0_11 = arith.constant 0 : index
    %c0_12 = arith.constant 0 : index
    %12 = vector.load %arg4[%c1_10, %c0_11, %c0_12] : memref<8x4x256xbf16, #tpu.memory_space<vmem>>, vector<1x4x256xbf16>
    %13 = vector.shape_cast %12 : vector<1x4x256xbf16> to vector<4x256xbf16>
    %14 = vector.shape_cast %11 : vector<4x256xbf16> to vector<1x4x256xbf16>
    tpu.vector_store %arg4[%c1_10, %c0_11, %c0_12], %14 {strides = array<i32>} : memref<8x4x256xbf16, #tpu.memory_space<vmem>>, vector<1x4x256xbf16>,
    %c2 = arith.constant 2 : index
    %c0_13 = arith.constant 0 : index
    %c0_14 = arith.constant 0 : index
    %15 = vector.load %arg3[%c2, %c0_13, %c0_14] : memref<8x2x256xbf16, #tpu.memory_space<vmem>>, vector<1x2x256xbf16>
    %16 = vector.shape_cast %15 : vector<1x2x256xbf16> to vector<2x256xbf16>
    %cst_15 = arith.constant dense<0.000000e+00> : vector<4x256xf32>
    %17 = tpu.matmul %0, %16, %cst_15 {dimension_numbers = #tpu.dot_dimension_numbers<[1], [0], [0], [1], [0, 0, 1, 1], [], []>} : vector<4x2xbf16>, vector<2x256xbf16>, vector<4x256xf32> -> vector<4x256xf32>
    %18 = arith.truncf %17 : vector<4x256xf32> to vector<4x256xbf16>
    %c2_16 = arith.constant 2 : index
    %c0_17 = arith.constant 0 : index
    %c0_18 = arith.constant 0 : index
    %19 = vector.load %arg4[%c2_16, %c0_17, %c0_18] : memref<8x4x256xbf16, #tpu.memory_space<vmem>>, vector<1x4x256xbf16>
    %20 = vector.shape_cast %19 : vector<1x4x256xbf16> to vector<4x256xbf16>
    %21 = vector.shape_cast %18 : vector<4x256xbf16> to vector<1x4x256xbf16>
    tpu.vector_store %arg4[%c2_16, %c0_17, %c0_18], %21 {strides = array<i32>} : memref<8x4x256xbf16, #tpu.memory_space<vmem>>, vector<1x4x256xbf16>,
    %c3 = arith.constant 3 : index
    %c0_19 = arith.constant 0 : index
    %c0_20 = arith.constant 0 : index
    %22 = vector.load %arg3[%c3, %c0_19, %c0_20] : memref<8x2x256xbf16, #tpu.memory_space<vmem>>, vector<1x2x256xbf16>
    %23 = vector.shape_cast %22 : vector<1x2x256xbf16> to vector<2x256xbf16>
    %cst_21 = arith.constant dense<0.000000e+00> : vector<4x256xf32>
    %24 = tpu.matmul %0, %23, %cst_21 {dimension_numbers = #tpu.dot_dimension_numbers<[1], [0], [0], [1], [0, 0, 1, 1], [], []>} : vector<4x2xbf16>, vector<2x256xbf16>, vector<4x256xf32> -> vector<4x256xf32>
    %25 = arith.truncf %24 : vector<4x256xf32> to vector<4x256xbf16>
    %c3_22 = arith.constant 3 : index
    %c0_23 = arith.constant 0 : index
    %c0_24 = arith.constant 0 : index
    %26 = vector.load %arg4[%c3_22, %c0_23, %c0_24] : memref<8x4x256xbf16, #tpu.memory_space<vmem>>, vector<1x4x256xbf16>
    %27 = vector.shape_cast %26 : vector<1x4x256xbf16> to vector<4x256xbf16>
    %28 = vector.shape_cast %25 : vector<4x256xbf16> to vector<1x4x256xbf16>
    tpu.vector_store %arg4[%c3_22, %c0_23, %c0_24], %28 {strides = array<i32>} : memref<8x4x256xbf16, #tpu.memory_space<vmem>>, vector<1x4x256xbf16>,
    %c4 = arith.constant 4 : index
    %c0_25 = arith.constant 0 : index
    %c0_26 = arith.constant 0 : index
    %29 = vector.load %arg3[%c4, %c0_25, %c0_26] : memref<8x2x256xbf16, #tpu.memory_space<vmem>>, vector<1x2x256xbf16>
    %30 = vector.shape_cast %29 : vector<1x2x256xbf16> to vector<2x256xbf16>
    %cst_27 = arith.constant dense<0.000000e+00> : vector<4x256xf32>
    %31 = tpu.matmul %0, %30, %cst_27 {dimension_numbers = #tpu.dot_dimension_numbers<[1], [0], [0], [1], [0, 0, 1, 1], [], []>} : vector<4x2xbf16>, vector<2x256xbf16>, vector<4x256xf32> -> vector<4x256xf32>
    %32 = arith.truncf %31 : vector<4x256xf32> to vector<4x256xbf16>
    %c4_28 = arith.constant 4 : index
    %c0_29 = arith.constant 0 : index
    %c0_30 = arith.constant 0 : index
    %33 = vector.load %arg4[%c4_28, %c0_29, %c0_30] : memref<8x4x256xbf16, #tpu.memory_space<vmem>>, vector<1x4x256xbf16>
    %34 = vector.shape_cast %33 : vector<1x4x256xbf16> to vector<4x256xbf16>
    %35 = vector.shape_cast %32 : vector<4x256xbf16> to vector<1x4x256xbf16>
    tpu.vector_store %arg4[%c4_28, %c0_29, %c0_30], %35 {strides = array<i32>} : memref<8x4x256xbf16, #tpu.memory_space<vmem>>, vector<1x4x256xbf16>,
    %c5 = arith.constant 5 : index
    %c0_31 = arith.constant 0 : index
    %c0_32 = arith.constant 0 : index
    %36 = vector.load %arg3[%c5, %c0_31, %c0_32] : memref<8x2x256xbf16, #tpu.memory_space<vmem>>, vector<1x2x256xbf16>
    %37 = vector.shape_cast %36 : vector<1x2x256xbf16> to vector<2x256xbf16>
    %cst_33 = arith.constant dense<0.000000e+00> : vector<4x256xf32>
    %38 = tpu.matmul %0, %37, %cst_33 {dimension_numbers = #tpu.dot_dimension_numbers<[1], [0], [0], [1], [0, 0, 1, 1], [], []>} : vector<4x2xbf16>, vector<2x256xbf16>, vector<4x256xf32> -> vector<4x256xf32>
    %39 = arith.truncf %38 : vector<4x256xf32> to vector<4x256xbf16>
    %c5_34 = arith.constant 5 : index
    %c0_35 = arith.constant 0 : index
    %c0_36 = arith.constant 0 : index
    %40 = vector.load %arg4[%c5_34, %c0_35, %c0_36] : memref<8x4x256xbf16, #tpu.memory_space<vmem>>, vector<1x4x256xbf16>
    %41 = vector.shape_cast %40 : vector<1x4x256xbf16> to vector<4x256xbf16>
    %42 = vector.shape_cast %39 : vector<4x256xbf16> to vector<1x4x256xbf16>
    tpu.vector_store %arg4[%c5_34, %c0_35, %c0_36], %42 {strides = array<i32>} : memref<8x4x256xbf16, #tpu.memory_space<vmem>>, vector<1x4x256xbf16>,
    %c6 = arith.constant 6 : index
    %c0_37 = arith.constant 0 : index
    %c0_38 = arith.constant 0 : index
    %43 = vector.load %arg3[%c6, %c0_37, %c0_38] : memref<8x2x256xbf16, #tpu.memory_space<vmem>>, vector<1x2x256xbf16>
    %44 = vector.shape_cast %43 : vector<1x2x256xbf16> to vector<2x256xbf16>
    %cst_39 = arith.constant dense<0.000000e+00> : vector<4x256xf32>
    %45 = tpu.matmul %0, %44, %cst_39 {dimension_numbers = #tpu.dot_dimension_numbers<[1], [0], [0], [1], [0, 0, 1, 1], [], []>} : vector<4x2xbf16>, vector<2x256xbf16>, vector<4x256xf32> -> vector<4x256xf32>
    %46 = arith.truncf %45 : vector<4x256xf32> to vector<4x256xbf16>
    %c6_40 = arith.constant 6 : index
    %c0_41 = arith.constant 0 : index
    %c0_42 = arith.constant 0 : index
    %47 = vector.load %arg4[%c6_40, %c0_41, %c0_42] : memref<8x4x256xbf16, #tpu.memory_space<vmem>>, vector<1x4x256xbf16>
    %48 = vector.shape_cast %47 : vector<1x4x256xbf16> to vector<4x256xbf16>
    %49 = vector.shape_cast %46 : vector<4x256xbf16> to vector<1x4x256xbf16>
    tpu.vector_store %arg4[%c6_40, %c0_41, %c0_42], %49 {strides = array<i32>} : memref<8x4x256xbf16, #tpu.memory_space<vmem>>, vector<1x4x256xbf16>,
    %c7 = arith.constant 7 : index
    %c0_43 = arith.constant 0 : index
    %c0_44 = arith.constant 0 : index
    %50 = vector.load %arg3[%c7, %c0_43, %c0_44] : memref<8x2x256xbf16, #tpu.memory_space<vmem>>, vector<1x2x256xbf16>
    %51 = vector.shape_cast %50 : vector<1x2x256xbf16> to vector<2x256xbf16>
    %cst_45 = arith.constant dense<0.000000e+00> : vector<4x256xf32>
    %52 = tpu.matmul %0, %51, %cst_45 {dimension_numbers = #tpu.dot_dimension_numbers<[1], [0], [0], [1], [0, 0, 1, 1], [], []>} : vector<4x2xbf16>, vector<2x256xbf16>, vector<4x256xf32> -> vector<4x256xf32>
    %53 = arith.truncf %52 : vector<4x256xf32> to vector<4x256xbf16>
    %c7_46 = arith.constant 7 : index
    %c0_47 = arith.constant 0 : index
    %c0_48 = arith.constant 0 : index
    %54 = vector.load %arg4[%c7_46, %c0_47, %c0_48] : memref<8x4x256xbf16, #tpu.memory_space<vmem>>, vector<1x4x256xbf16>
    %55 = vector.shape_cast %54 : vector<1x4x256xbf16> to vector<4x256xbf16>
    %56 = vector.shape_cast %53 : vector<4x256xbf16> to vector<1x4x256xbf16>
    tpu.vector_store %arg4[%c7_46, %c0_47, %c0_48], %56 {strides = array<i32>} : memref<8x4x256xbf16, #tpu.memory_space<vmem>>, vector<1x4x256xbf16>,
    return
  }
  func.func @transform_0(%arg0: i32, %arg1: i32) -> (i32, i32) {
    %c0_i32 = arith.constant 0 : i32
    %c0_i32_0 = arith.constant 0 : i32
    %c0_i32_1 = arith.constant 0 : i32
    return %c0_i32, %c0_i32_0 : i32, i32
  }
  func.func @transform_1(%arg0: i32, %arg1: i32) -> (i32, i32, i32) {
    %c0_i32 = arith.constant 0 : i32
    %c0_i32_0 = arith.constant 0 : i32
    return %arg0, %c0_i32, %arg1 : i32, i32, i32
  }
  func.func @transform_2(%arg0: i32, %arg1: i32) -> (i32, i32, i32) {
    %c0_i32 = arith.constant 0 : i32
    %c0_i32_0 = arith.constant 0 : i32
    return %arg0, %c0_i32, %arg1 : i32, i32, i32
  }
}

module attributes {stable_mosaic.version = 11 : i64} {
  func.func @_matmul_kernel(%arg0: i32, %arg1: i32, %arg2: i32, %arg3: memref<32x128xbf16, #tpu.memory_space<vmem>>, %arg4: memref<128x128xbf16, #tpu.memory_space<vmem>>, %arg5: memref<1x128xf32, #tpu.memory_space<vmem>>, %arg6: memref<32x128xbf16, #tpu.memory_space<vmem>>, %arg7: memref<32x128xf32, #tpu.memory_space<vmem>>) attributes {dimension_semantics = [#tpu.dimension_semantics<parallel>, #tpu.dimension_semantics<parallel>, #tpu.dimension_semantics<arbitrary>], iteration_bounds = array<i64: 1, 1, 1>, scalar_prefetch = 0 : i64, scratch_operands = 1 : i64, tpu.core_type = #tpu.core_type<tc>, window_params = [{transform_indices = @transform_0, window_bounds = array<i64: 32, 128>}, {transform_indices = @transform_1, window_bounds = array<i64: 128, 128>}, {transform_indices = @transform_2, window_bounds = array<i64: 1, 128>}, {transform_indices = @transform_3, window_bounds = array<i64: 32, 128>}]} {
    %c0_i32 = arith.constant 0 : i32
    %0 = arith.cmpi eq, %arg2, %c0_i32 : i32
    %1 = arith.extui %0 : i1 to i32
    %c0_i32_0 = arith.constant 0 : i32
    %2 = arith.cmpi ne, %1, %c0_i32_0 : i32
    scf.if %2 {
      %cst_10 = arith.constant 0.000000e+00 : f32
      %12 = vector.broadcast %cst_10 : f32 to vector<32x128xf32>
      %c0_11 = arith.constant 0 : index
      %c0_12 = arith.constant 0 : index
      %13 = vector.load %arg7[%c0_11, %c0_12] : memref<32x128xf32, #tpu.memory_space<vmem>>, vector<32x128xf32>
      tpu.vector_store %arg7[%c0_11, %c0_12], %12 {strides = array<i32>} : memref<32x128xf32, #tpu.memory_space<vmem>>, vector<32x128xf32>,
    } else {
    }
    %c0 = arith.constant 0 : index
    %c0_1 = arith.constant 0 : index
    %3 = vector.load %arg7[%c0, %c0_1] : memref<32x128xf32, #tpu.memory_space<vmem>>, vector<32x128xf32>
    %c0_2 = arith.constant 0 : index
    %c0_3 = arith.constant 0 : index
    %4 = vector.load %arg3[%c0_2, %c0_3] : memref<32x128xbf16, #tpu.memory_space<vmem>>, vector<32x128xbf16>
    %c0_4 = arith.constant 0 : index
    %c0_5 = arith.constant 0 : index
    %5 = vector.load %arg4[%c0_4, %c0_5] : memref<128x128xbf16, #tpu.memory_space<vmem>>, vector<128x128xbf16>
    %cst = arith.constant dense<0.000000e+00> : vector<32x128xf32>
    %6 = tpu.matmul %4, %5, %cst {dimension_numbers = #tpu.dot_dimension_numbers<[1], [0], [0], [1], [0, 0, 1, 1], [], []>} : vector<32x128xbf16>, vector<128x128xbf16>, vector<32x128xf32> -> vector<32x128xf32>
    %7 = arith.addf %3, %6 : vector<32x128xf32>
    %c0_6 = arith.constant 0 : index
    %c0_7 = arith.constant 0 : index
    %8 = vector.load %arg7[%c0_6, %c0_7] : memref<32x128xf32, #tpu.memory_space<vmem>>, vector<32x128xf32>
    tpu.vector_store %arg7[%c0_6, %c0_7], %7 {strides = array<i32>} : memref<32x128xf32, #tpu.memory_space<vmem>>, vector<32x128xf32>,
    %c0_i32_8 = arith.constant 0 : i32
    %9 = arith.cmpi eq, %arg2, %c0_i32_8 : i32
    %10 = arith.extui %9 : i1 to i32
    %c0_i32_9 = arith.constant 0 : i32
    %11 = arith.cmpi ne, %10, %c0_i32_9 : i32
    scf.if %11 {
      %c0_10 = arith.constant 0 : index
      %c0_11 = arith.constant 0 : index
      %12 = vector.load %arg7[%c0_10, %c0_11] : memref<32x128xf32, #tpu.memory_space<vmem>>, vector<32x128xf32>
      %c0_12 = arith.constant 0 : index
      %c0_13 = arith.constant 0 : index
      %13 = vector.load %arg5[%c0_12, %c0_13] : memref<1x128xf32, #tpu.memory_space<vmem>>, vector<1x128xf32>
      %14 = vector.broadcast %13 : vector<1x128xf32> to vector<32x128xf32>
      %15 = arith.addf %12, %14 : vector<32x128xf32>
      %cst_14 = arith.constant 0.000000e+00 : f32
      %16 = vector.broadcast %cst_14 : f32 to vector<32x128xf32>
      %17 = arith.maximumf %15, %16 : vector<32x128xf32>
      %18 = arith.truncf %17 : vector<32x128xf32> to vector<32x128xbf16>
      %c0_15 = arith.constant 0 : index
      %c0_16 = arith.constant 0 : index
      %19 = vector.load %arg6[%c0_15, %c0_16] : memref<32x128xbf16, #tpu.memory_space<vmem>>, vector<32x128xbf16>
      tpu.vector_store %arg6[%c0_15, %c0_16], %18 {strides = array<i32>} : memref<32x128xbf16, #tpu.memory_space<vmem>>, vector<32x128xbf16>,
    } else {
    }
    return
  }
  func.func @transform_0(%arg0: i32, %arg1: i32, %arg2: i32) -> (i32, i32) {
    %c0_i32 = arith.constant 0 : i32
    return %arg0, %arg2 : i32, i32
  }
  func.func @transform_1(%arg0: i32, %arg1: i32, %arg2: i32) -> (i32, i32) {
    %c0_i32 = arith.constant 0 : i32
    return %arg2, %arg1 : i32, i32
  }
  func.func @transform_2(%arg0: i32, %arg1: i32, %arg2: i32) -> (i32, i32) {
    %c0_i32 = arith.constant 0 : i32
    %c0_i32_0 = arith.constant 0 : i32
    return %c0_i32, %arg1 : i32, i32
  }
  func.func @transform_3(%arg0: i32, %arg1: i32, %arg2: i32) -> (i32, i32) {
    %c0_i32 = arith.constant 0 : i32
    return %arg0, %arg1 : i32, i32
  }
}

module attributes {stable_mosaic.version = 11 : i64} {
  func.func @_matmul_kernel(%arg0: i32, %arg1: i32, %arg2: i32, %arg3: memref<32x512xbf16, #tpu.memory_space<vmem>>, %arg4: memref<512x256xbf16, #tpu.memory_space<vmem>>, %arg5: memref<1x256xf32, #tpu.memory_space<vmem>>, %arg6: memref<32x256xbf16, #tpu.memory_space<vmem>>, %arg7: memref<32x256xf32, #tpu.memory_space<vmem>>) attributes {dimension_semantics = [#tpu.dimension_semantics<parallel>, #tpu.dimension_semantics<parallel>, #tpu.dimension_semantics<arbitrary>], iteration_bounds = array<i64: 1, 1, 6>, scalar_prefetch = 0 : i64, scratch_operands = 1 : i64, tpu.core_type = #tpu.core_type<tc>, window_params = [{transform_indices = @transform_0, window_bounds = array<i64: 32, 512>}, {transform_indices = @transform_1, window_bounds = array<i64: 512, 256>}, {transform_indices = @transform_2, window_bounds = array<i64: 1, 256>}, {transform_indices = @transform_3, window_bounds = array<i64: 32, 256>}]} {
    %c0_i32 = arith.constant 0 : i32
    %0 = arith.cmpi eq, %arg2, %c0_i32 : i32
    %1 = arith.extui %0 : i1 to i32
    %c0_i32_0 = arith.constant 0 : i32
    %2 = arith.cmpi ne, %1, %c0_i32_0 : i32
    scf.if %2 {
      %cst_9 = arith.constant 0.000000e+00 : f32
      %12 = vector.broadcast %cst_9 : f32 to vector<32x256xf32>
      %c0_10 = arith.constant 0 : index
      %c0_11 = arith.constant 0 : index
      %13 = vector.load %arg7[%c0_10, %c0_11] : memref<32x256xf32, #tpu.memory_space<vmem>>, vector<32x256xf32>
      tpu.vector_store %arg7[%c0_10, %c0_11], %12 {strides = array<i32>} : memref<32x256xf32, #tpu.memory_space<vmem>>, vector<32x256xf32>,
    } else {
    }
    %c0 = arith.constant 0 : index
    %c0_1 = arith.constant 0 : index
    %3 = vector.load %arg7[%c0, %c0_1] : memref<32x256xf32, #tpu.memory_space<vmem>>, vector<32x256xf32>
    %c0_2 = arith.constant 0 : index
    %c0_3 = arith.constant 0 : index
    %4 = vector.load %arg3[%c0_2, %c0_3] : memref<32x512xbf16, #tpu.memory_space<vmem>>, vector<32x512xbf16>
    %c0_4 = arith.constant 0 : index
    %c0_5 = arith.constant 0 : index
    %5 = vector.load %arg4[%c0_4, %c0_5] : memref<512x256xbf16, #tpu.memory_space<vmem>>, vector<512x256xbf16>
    %cst = arith.constant dense<0.000000e+00> : vector<32x256xf32>
    %6 = tpu.matmul %4, %5, %cst {dimension_numbers = #tpu.dot_dimension_numbers<[1], [0], [0], [1], [0, 0, 1, 1], [], []>} : vector<32x512xbf16>, vector<512x256xbf16>, vector<32x256xf32> -> vector<32x256xf32>
    %7 = arith.addf %3, %6 : vector<32x256xf32>
    %c0_6 = arith.constant 0 : index
    %c0_7 = arith.constant 0 : index
    %8 = vector.load %arg7[%c0_6, %c0_7] : memref<32x256xf32, #tpu.memory_space<vmem>>, vector<32x256xf32>
    tpu.vector_store %arg7[%c0_6, %c0_7], %7 {strides = array<i32>} : memref<32x256xf32, #tpu.memory_space<vmem>>, vector<32x256xf32>,
    %c5_i32 = arith.constant 5 : i32
    %9 = arith.cmpi eq, %arg2, %c5_i32 : i32
    %10 = arith.extui %9 : i1 to i32
    %c0_i32_8 = arith.constant 0 : i32
    %11 = arith.cmpi ne, %10, %c0_i32_8 : i32
    scf.if %11 {
      %c0_9 = arith.constant 0 : index
      %c0_10 = arith.constant 0 : index
      %12 = vector.load %arg7[%c0_9, %c0_10] : memref<32x256xf32, #tpu.memory_space<vmem>>, vector<32x256xf32>
      %c0_11 = arith.constant 0 : index
      %c0_12 = arith.constant 0 : index
      %13 = vector.load %arg5[%c0_11, %c0_12] : memref<1x256xf32, #tpu.memory_space<vmem>>, vector<1x256xf32>
      %14 = vector.broadcast %13 : vector<1x256xf32> to vector<32x256xf32>
      %15 = arith.addf %12, %14 : vector<32x256xf32>
      %cst_13 = arith.constant 0.000000e+00 : f32
      %16 = vector.broadcast %cst_13 : f32 to vector<32x256xf32>
      %17 = arith.maximumf %15, %16 : vector<32x256xf32>
      %18 = arith.truncf %17 : vector<32x256xf32> to vector<32x256xbf16>
      %c0_14 = arith.constant 0 : index
      %c0_15 = arith.constant 0 : index
      %19 = vector.load %arg6[%c0_14, %c0_15] : memref<32x256xbf16, #tpu.memory_space<vmem>>, vector<32x256xbf16>
      tpu.vector_store %arg6[%c0_14, %c0_15], %18 {strides = array<i32>} : memref<32x256xbf16, #tpu.memory_space<vmem>>, vector<32x256xbf16>,
    } else {
    }
    return
  }
  func.func @transform_0(%arg0: i32, %arg1: i32, %arg2: i32) -> (i32, i32) {
    %c0_i32 = arith.constant 0 : i32
    return %arg0, %arg2 : i32, i32
  }
  func.func @transform_1(%arg0: i32, %arg1: i32, %arg2: i32) -> (i32, i32) {
    %c0_i32 = arith.constant 0 : i32
    return %arg2, %arg1 : i32, i32
  }
  func.func @transform_2(%arg0: i32, %arg1: i32, %arg2: i32) -> (i32, i32) {
    %c0_i32 = arith.constant 0 : i32
    %c0_i32_0 = arith.constant 0 : i32
    return %c0_i32, %arg1 : i32, i32
  }
  func.func @transform_3(%arg0: i32, %arg1: i32, %arg2: i32) -> (i32, i32) {
    %c0_i32 = arith.constant 0 : i32
    return %arg0, %arg1 : i32, i32
  }
}

module attributes {stable_mosaic.version = 11 : i64} {
  func.func @_matmul_kernel(%arg0: i32, %arg1: i32, %arg2: i32, %arg3: memref<32x256xbf16, #tpu.memory_space<vmem>>, %arg4: memref<256x128xbf16, #tpu.memory_space<vmem>>, %arg5: memref<1x128xf32, #tpu.memory_space<vmem>>, %arg6: memref<32x128xbf16, #tpu.memory_space<vmem>>, %arg7: memref<32x128xf32, #tpu.memory_space<vmem>>) attributes {dimension_semantics = [#tpu.dimension_semantics<parallel>, #tpu.dimension_semantics<parallel>, #tpu.dimension_semantics<arbitrary>], iteration_bounds = array<i64: 1, 1, 1>, scalar_prefetch = 0 : i64, scratch_operands = 1 : i64, tpu.core_type = #tpu.core_type<tc>, window_params = [{transform_indices = @transform_0, window_bounds = array<i64: 32, 256>}, {transform_indices = @transform_1, window_bounds = array<i64: 256, 128>}, {transform_indices = @transform_2, window_bounds = array<i64: 1, 128>}, {transform_indices = @transform_3, window_bounds = array<i64: 32, 128>}]} {
    %c0_i32 = arith.constant 0 : i32
    %0 = arith.cmpi eq, %arg2, %c0_i32 : i32
    %1 = arith.extui %0 : i1 to i32
    %c0_i32_0 = arith.constant 0 : i32
    %2 = arith.cmpi ne, %1, %c0_i32_0 : i32
    scf.if %2 {
      %cst_10 = arith.constant 0.000000e+00 : f32
      %12 = vector.broadcast %cst_10 : f32 to vector<32x128xf32>
      %c0_11 = arith.constant 0 : index
      %c0_12 = arith.constant 0 : index
      %13 = vector.load %arg7[%c0_11, %c0_12] : memref<32x128xf32, #tpu.memory_space<vmem>>, vector<32x128xf32>
      tpu.vector_store %arg7[%c0_11, %c0_12], %12 {strides = array<i32>} : memref<32x128xf32, #tpu.memory_space<vmem>>, vector<32x128xf32>,
    } else {
    }
    %c0 = arith.constant 0 : index
    %c0_1 = arith.constant 0 : index
    %3 = vector.load %arg7[%c0, %c0_1] : memref<32x128xf32, #tpu.memory_space<vmem>>, vector<32x128xf32>
    %c0_2 = arith.constant 0 : index
    %c0_3 = arith.constant 0 : index
    %4 = vector.load %arg3[%c0_2, %c0_3] : memref<32x256xbf16, #tpu.memory_space<vmem>>, vector<32x256xbf16>
    %c0_4 = arith.constant 0 : index
    %c0_5 = arith.constant 0 : index
    %5 = vector.load %arg4[%c0_4, %c0_5] : memref<256x128xbf16, #tpu.memory_space<vmem>>, vector<256x128xbf16>
    %cst = arith.constant dense<0.000000e+00> : vector<32x128xf32>
    %6 = tpu.matmul %4, %5, %cst {dimension_numbers = #tpu.dot_dimension_numbers<[1], [0], [0], [1], [0, 0, 1, 1], [], []>} : vector<32x256xbf16>, vector<256x128xbf16>, vector<32x128xf32> -> vector<32x128xf32>
    %7 = arith.addf %3, %6 : vector<32x128xf32>
    %c0_6 = arith.constant 0 : index
    %c0_7 = arith.constant 0 : index
    %8 = vector.load %arg7[%c0_6, %c0_7] : memref<32x128xf32, #tpu.memory_space<vmem>>, vector<32x128xf32>
    tpu.vector_store %arg7[%c0_6, %c0_7], %7 {strides = array<i32>} : memref<32x128xf32, #tpu.memory_space<vmem>>, vector<32x128xf32>,
    %c0_i32_8 = arith.constant 0 : i32
    %9 = arith.cmpi eq, %arg2, %c0_i32_8 : i32
    %10 = arith.extui %9 : i1 to i32
    %c0_i32_9 = arith.constant 0 : i32
    %11 = arith.cmpi ne, %10, %c0_i32_9 : i32
    scf.if %11 {
      %c0_10 = arith.constant 0 : index
      %c0_11 = arith.constant 0 : index
      %12 = vector.load %arg7[%c0_10, %c0_11] : memref<32x128xf32, #tpu.memory_space<vmem>>, vector<32x128xf32>
      %c0_12 = arith.constant 0 : index
      %c0_13 = arith.constant 0 : index
      %13 = vector.load %arg5[%c0_12, %c0_13] : memref<1x128xf32, #tpu.memory_space<vmem>>, vector<1x128xf32>
      %14 = vector.broadcast %13 : vector<1x128xf32> to vector<32x128xf32>
      %15 = arith.addf %12, %14 : vector<32x128xf32>
      %16 = arith.truncf %15 : vector<32x128xf32> to vector<32x128xbf16>
      %c0_14 = arith.constant 0 : index
      %c0_15 = arith.constant 0 : index
      %17 = vector.load %arg6[%c0_14, %c0_15] : memref<32x128xbf16, #tpu.memory_space<vmem>>, vector<32x128xbf16>
      tpu.vector_store %arg6[%c0_14, %c0_15], %16 {strides = array<i32>} : memref<32x128xbf16, #tpu.memory_space<vmem>>, vector<32x128xbf16>,
    } else {
    }
    return
  }
  func.func @transform_0(%arg0: i32, %arg1: i32, %arg2: i32) -> (i32, i32) {
    %c0_i32 = arith.constant 0 : i32
    return %arg0, %arg2 : i32, i32
  }
  func.func @transform_1(%arg0: i32, %arg1: i32, %arg2: i32) -> (i32, i32) {
    %c0_i32 = arith.constant 0 : i32
    return %arg2, %arg1 : i32, i32
  }
  func.func @transform_2(%arg0: i32, %arg1: i32, %arg2: i32) -> (i32, i32) {
    %c0_i32 = arith.constant 0 : i32
    %c0_i32_0 = arith.constant 0 : i32
    return %c0_i32, %arg1 : i32, i32
  }
  func.func @transform_3(%arg0: i32, %arg1: i32, %arg2: i32) -> (i32, i32) {
    %c0_i32 = arith.constant 0 : i32
    return %arg0, %arg1 : i32, i32
  }
}

module attributes {stable_mosaic.version = 11 : i64} {
  func.func @_resize_kernel(%arg0: i32, %arg1: i32, %arg2: memref<16x4xbf16, #tpu.memory_space<vmem>>, %arg3: memref<2x4x8xbf16, #tpu.memory_space<vmem>>, %arg4: memref<2x16x8xbf16, #tpu.memory_space<vmem>>) attributes {dimension_semantics = [#tpu.dimension_semantics<parallel>, #tpu.dimension_semantics<parallel>], iteration_bounds = array<i64: 1, 1>, scalar_prefetch = 0 : i64, scratch_operands = 0 : i64, tpu.core_type = #tpu.core_type<tc>, window_params = [{pipeline_mode = #tpu.pipeline_mode<synchronous>, transform_indices = @transform_0, window_bounds = array<i64: 16, 4>}, {transform_indices = @transform_1, window_bounds = array<i64: 2, 4, 8>}, {transform_indices = @transform_2, window_bounds = array<i64: 2, 16, 8>}]} {
    %c0 = arith.constant 0 : index
    %c0_0 = arith.constant 0 : index
    %0 = vector.load %arg2[%c0, %c0_0] : memref<16x4xbf16, #tpu.memory_space<vmem>>, vector<16x4xbf16>
    %c0_1 = arith.constant 0 : index
    %c0_2 = arith.constant 0 : index
    %c0_3 = arith.constant 0 : index
    %1 = vector.load %arg3[%c0_1, %c0_2, %c0_3] : memref<2x4x8xbf16, #tpu.memory_space<vmem>>, vector<1x4x8xbf16>
    %2 = vector.shape_cast %1 : vector<1x4x8xbf16> to vector<4x8xbf16>
    %cst = arith.constant dense<0.000000e+00> : vector<16x8xf32>
    %3 = tpu.matmul %0, %2, %cst {dimension_numbers = #tpu.dot_dimension_numbers<[1], [0], [0], [1], [0, 0, 1, 1], [], []>} : vector<16x4xbf16>, vector<4x8xbf16>, vector<16x8xf32> -> vector<16x8xf32>
    %4 = arith.truncf %3 : vector<16x8xf32> to vector<16x8xbf16>
    %c0_4 = arith.constant 0 : index
    %c0_5 = arith.constant 0 : index
    %c0_6 = arith.constant 0 : index
    %5 = vector.load %arg4[%c0_4, %c0_5, %c0_6] : memref<2x16x8xbf16, #tpu.memory_space<vmem>>, vector<1x16x8xbf16>
    %6 = vector.shape_cast %5 : vector<1x16x8xbf16> to vector<16x8xbf16>
    %7 = vector.shape_cast %4 : vector<16x8xbf16> to vector<1x16x8xbf16>
    tpu.vector_store %arg4[%c0_4, %c0_5, %c0_6], %7 {strides = array<i32>} : memref<2x16x8xbf16, #tpu.memory_space<vmem>>, vector<1x16x8xbf16>,
    %c1 = arith.constant 1 : index
    %c0_7 = arith.constant 0 : index
    %c0_8 = arith.constant 0 : index
    %8 = vector.load %arg3[%c1, %c0_7, %c0_8] : memref<2x4x8xbf16, #tpu.memory_space<vmem>>, vector<1x4x8xbf16>
    %9 = vector.shape_cast %8 : vector<1x4x8xbf16> to vector<4x8xbf16>
    %cst_9 = arith.constant dense<0.000000e+00> : vector<16x8xf32>
    %10 = tpu.matmul %0, %9, %cst_9 {dimension_numbers = #tpu.dot_dimension_numbers<[1], [0], [0], [1], [0, 0, 1, 1], [], []>} : vector<16x4xbf16>, vector<4x8xbf16>, vector<16x8xf32> -> vector<16x8xf32>
    %11 = arith.truncf %10 : vector<16x8xf32> to vector<16x8xbf16>
    %c1_10 = arith.constant 1 : index
    %c0_11 = arith.constant 0 : index
    %c0_12 = arith.constant 0 : index
    %12 = vector.load %arg4[%c1_10, %c0_11, %c0_12] : memref<2x16x8xbf16, #tpu.memory_space<vmem>>, vector<1x16x8xbf16>
    %13 = vector.shape_cast %12 : vector<1x16x8xbf16> to vector<16x8xbf16>
    %14 = vector.shape_cast %11 : vector<16x8xbf16> to vector<1x16x8xbf16>
    tpu.vector_store %arg4[%c1_10, %c0_11, %c0_12], %14 {strides = array<i32>} : memref<2x16x8xbf16, #tpu.memory_space<vmem>>, vector<1x16x8xbf16>,
    return
  }
  func.func @transform_0(%arg0: i32, %arg1: i32) -> (i32, i32) {
    %c0_i32 = arith.constant 0 : i32
    %c0_i32_0 = arith.constant 0 : i32
    %c0_i32_1 = arith.constant 0 : i32
    return %c0_i32, %c0_i32_0 : i32, i32
  }
  func.func @transform_1(%arg0: i32, %arg1: i32) -> (i32, i32, i32) {
    %c0_i32 = arith.constant 0 : i32
    %c0_i32_0 = arith.constant 0 : i32
    return %arg0, %c0_i32, %arg1 : i32, i32, i32
  }
  func.func @transform_2(%arg0: i32, %arg1: i32) -> (i32, i32, i32) {
    %c0_i32 = arith.constant 0 : i32
    %c0_i32_0 = arith.constant 0 : i32
    return %arg0, %c0_i32, %arg1 : i32, i32, i32
  }
}

module attributes {stable_mosaic.version = 11 : i64} {
  func.func @_resize_kernel(%arg0: i32, %arg1: i32, %arg2: memref<16x4xbf16, #tpu.memory_space<vmem>>, %arg3: memref<8x4x2xbf16, #tpu.memory_space<vmem>>, %arg4: memref<8x16x2xbf16, #tpu.memory_space<vmem>>) attributes {dimension_semantics = [#tpu.dimension_semantics<parallel>, #tpu.dimension_semantics<parallel>], iteration_bounds = array<i64: 4, 1>, scalar_prefetch = 0 : i64, scratch_operands = 0 : i64, tpu.core_type = #tpu.core_type<tc>, window_params = [{pipeline_mode = #tpu.pipeline_mode<synchronous>, transform_indices = @transform_0, window_bounds = array<i64: 16, 4>}, {transform_indices = @transform_1, window_bounds = array<i64: 8, 4, 2>}, {transform_indices = @transform_2, window_bounds = array<i64: 8, 16, 2>}]} {
    %c0 = arith.constant 0 : index
    %c0_0 = arith.constant 0 : index
    %0 = vector.load %arg2[%c0, %c0_0] : memref<16x4xbf16, #tpu.memory_space<vmem>>, vector<16x4xbf16>
    %c0_1 = arith.constant 0 : index
    %c0_2 = arith.constant 0 : index
    %c0_3 = arith.constant 0 : index
    %1 = vector.load %arg3[%c0_1, %c0_2, %c0_3] : memref<8x4x2xbf16, #tpu.memory_space<vmem>>, vector<1x4x2xbf16>
    %2 = vector.shape_cast %1 : vector<1x4x2xbf16> to vector<4x2xbf16>
    %cst = arith.constant dense<0.000000e+00> : vector<16x2xf32>
    %3 = tpu.matmul %0, %2, %cst {dimension_numbers = #tpu.dot_dimension_numbers<[1], [0], [0], [1], [0, 0, 1, 1], [], []>} : vector<16x4xbf16>, vector<4x2xbf16>, vector<16x2xf32> -> vector<16x2xf32>
    %4 = arith.truncf %3 : vector<16x2xf32> to vector<16x2xbf16>
    %c0_4 = arith.constant 0 : index
    %c0_5 = arith.constant 0 : index
    %c0_6 = arith.constant 0 : index
    %5 = vector.load %arg4[%c0_4, %c0_5, %c0_6] : memref<8x16x2xbf16, #tpu.memory_space<vmem>>, vector<1x16x2xbf16>
    %6 = vector.shape_cast %5 : vector<1x16x2xbf16> to vector<16x2xbf16>
    %7 = vector.shape_cast %4 : vector<16x2xbf16> to vector<1x16x2xbf16>
    tpu.vector_store %arg4[%c0_4, %c0_5, %c0_6], %7 {strides = array<i32>} : memref<8x16x2xbf16, #tpu.memory_space<vmem>>, vector<1x16x2xbf16>,
    %c1 = arith.constant 1 : index
    %c0_7 = arith.constant 0 : index
    %c0_8 = arith.constant 0 : index
    %8 = vector.load %arg3[%c1, %c0_7, %c0_8] : memref<8x4x2xbf16, #tpu.memory_space<vmem>>, vector<1x4x2xbf16>
    %9 = vector.shape_cast %8 : vector<1x4x2xbf16> to vector<4x2xbf16>
    %cst_9 = arith.constant dense<0.000000e+00> : vector<16x2xf32>
    %10 = tpu.matmul %0, %9, %cst_9 {dimension_numbers = #tpu.dot_dimension_numbers<[1], [0], [0], [1], [0, 0, 1, 1], [], []>} : vector<16x4xbf16>, vector<4x2xbf16>, vector<16x2xf32> -> vector<16x2xf32>
    %11 = arith.truncf %10 : vector<16x2xf32> to vector<16x2xbf16>
    %c1_10 = arith.constant 1 : index
    %c0_11 = arith.constant 0 : index
    %c0_12 = arith.constant 0 : index
    %12 = vector.load %arg4[%c1_10, %c0_11, %c0_12] : memref<8x16x2xbf16, #tpu.memory_space<vmem>>, vector<1x16x2xbf16>
    %13 = vector.shape_cast %12 : vector<1x16x2xbf16> to vector<16x2xbf16>
    %14 = vector.shape_cast %11 : vector<16x2xbf16> to vector<1x16x2xbf16>
    tpu.vector_store %arg4[%c1_10, %c0_11, %c0_12], %14 {strides = array<i32>} : memref<8x16x2xbf16, #tpu.memory_space<vmem>>, vector<1x16x2xbf16>,
    %c2 = arith.constant 2 : index
    %c0_13 = arith.constant 0 : index
    %c0_14 = arith.constant 0 : index
    %15 = vector.load %arg3[%c2, %c0_13, %c0_14] : memref<8x4x2xbf16, #tpu.memory_space<vmem>>, vector<1x4x2xbf16>
    %16 = vector.shape_cast %15 : vector<1x4x2xbf16> to vector<4x2xbf16>
    %cst_15 = arith.constant dense<0.000000e+00> : vector<16x2xf32>
    %17 = tpu.matmul %0, %16, %cst_15 {dimension_numbers = #tpu.dot_dimension_numbers<[1], [0], [0], [1], [0, 0, 1, 1], [], []>} : vector<16x4xbf16>, vector<4x2xbf16>, vector<16x2xf32> -> vector<16x2xf32>
    %18 = arith.truncf %17 : vector<16x2xf32> to vector<16x2xbf16>
    %c2_16 = arith.constant 2 : index
    %c0_17 = arith.constant 0 : index
    %c0_18 = arith.constant 0 : index
    %19 = vector.load %arg4[%c2_16, %c0_17, %c0_18] : memref<8x16x2xbf16, #tpu.memory_space<vmem>>, vector<1x16x2xbf16>
    %20 = vector.shape_cast %19 : vector<1x16x2xbf16> to vector<16x2xbf16>
    %21 = vector.shape_cast %18 : vector<16x2xbf16> to vector<1x16x2xbf16>
    tpu.vector_store %arg4[%c2_16, %c0_17, %c0_18], %21 {strides = array<i32>} : memref<8x16x2xbf16, #tpu.memory_space<vmem>>, vector<1x16x2xbf16>,
    %c3 = arith.constant 3 : index
    %c0_19 = arith.constant 0 : index
    %c0_20 = arith.constant 0 : index
    %22 = vector.load %arg3[%c3, %c0_19, %c0_20] : memref<8x4x2xbf16, #tpu.memory_space<vmem>>, vector<1x4x2xbf16>
    %23 = vector.shape_cast %22 : vector<1x4x2xbf16> to vector<4x2xbf16>
    %cst_21 = arith.constant dense<0.000000e+00> : vector<16x2xf32>
    %24 = tpu.matmul %0, %23, %cst_21 {dimension_numbers = #tpu.dot_dimension_numbers<[1], [0], [0], [1], [0, 0, 1, 1], [], []>} : vector<16x4xbf16>, vector<4x2xbf16>, vector<16x2xf32> -> vector<16x2xf32>
    %25 = arith.truncf %24 : vector<16x2xf32> to vector<16x2xbf16>
    %c3_22 = arith.constant 3 : index
    %c0_23 = arith.constant 0 : index
    %c0_24 = arith.constant 0 : index
    %26 = vector.load %arg4[%c3_22, %c0_23, %c0_24] : memref<8x16x2xbf16, #tpu.memory_space<vmem>>, vector<1x16x2xbf16>
    %27 = vector.shape_cast %26 : vector<1x16x2xbf16> to vector<16x2xbf16>
    %28 = vector.shape_cast %25 : vector<16x2xbf16> to vector<1x16x2xbf16>
    tpu.vector_store %arg4[%c3_22, %c0_23, %c0_24], %28 {strides = array<i32>} : memref<8x16x2xbf16, #tpu.memory_space<vmem>>, vector<1x16x2xbf16>,
    %c4 = arith.constant 4 : index
    %c0_25 = arith.constant 0 : index
    %c0_26 = arith.constant 0 : index
    %29 = vector.load %arg3[%c4, %c0_25, %c0_26] : memref<8x4x2xbf16, #tpu.memory_space<vmem>>, vector<1x4x2xbf16>
    %30 = vector.shape_cast %29 : vector<1x4x2xbf16> to vector<4x2xbf16>
    %cst_27 = arith.constant dense<0.000000e+00> : vector<16x2xf32>
    %31 = tpu.matmul %0, %30, %cst_27 {dimension_numbers = #tpu.dot_dimension_numbers<[1], [0], [0], [1], [0, 0, 1, 1], [], []>} : vector<16x4xbf16>, vector<4x2xbf16>, vector<16x2xf32> -> vector<16x2xf32>
    %32 = arith.truncf %31 : vector<16x2xf32> to vector<16x2xbf16>
    %c4_28 = arith.constant 4 : index
    %c0_29 = arith.constant 0 : index
    %c0_30 = arith.constant 0 : index
    %33 = vector.load %arg4[%c4_28, %c0_29, %c0_30] : memref<8x16x2xbf16, #tpu.memory_space<vmem>>, vector<1x16x2xbf16>
    %34 = vector.shape_cast %33 : vector<1x16x2xbf16> to vector<16x2xbf16>
    %35 = vector.shape_cast %32 : vector<16x2xbf16> to vector<1x16x2xbf16>
    tpu.vector_store %arg4[%c4_28, %c0_29, %c0_30], %35 {strides = array<i32>} : memref<8x16x2xbf16, #tpu.memory_space<vmem>>, vector<1x16x2xbf16>,
    %c5 = arith.constant 5 : index
    %c0_31 = arith.constant 0 : index
    %c0_32 = arith.constant 0 : index
    %36 = vector.load %arg3[%c5, %c0_31, %c0_32] : memref<8x4x2xbf16, #tpu.memory_space<vmem>>, vector<1x4x2xbf16>
    %37 = vector.shape_cast %36 : vector<1x4x2xbf16> to vector<4x2xbf16>
    %cst_33 = arith.constant dense<0.000000e+00> : vector<16x2xf32>
    %38 = tpu.matmul %0, %37, %cst_33 {dimension_numbers = #tpu.dot_dimension_numbers<[1], [0], [0], [1], [0, 0, 1, 1], [], []>} : vector<16x4xbf16>, vector<4x2xbf16>, vector<16x2xf32> -> vector<16x2xf32>
    %39 = arith.truncf %38 : vector<16x2xf32> to vector<16x2xbf16>
    %c5_34 = arith.constant 5 : index
    %c0_35 = arith.constant 0 : index
    %c0_36 = arith.constant 0 : index
    %40 = vector.load %arg4[%c5_34, %c0_35, %c0_36] : memref<8x16x2xbf16, #tpu.memory_space<vmem>>, vector<1x16x2xbf16>
    %41 = vector.shape_cast %40 : vector<1x16x2xbf16> to vector<16x2xbf16>
    %42 = vector.shape_cast %39 : vector<16x2xbf16> to vector<1x16x2xbf16>
    tpu.vector_store %arg4[%c5_34, %c0_35, %c0_36], %42 {strides = array<i32>} : memref<8x16x2xbf16, #tpu.memory_space<vmem>>, vector<1x16x2xbf16>,
    %c6 = arith.constant 6 : index
    %c0_37 = arith.constant 0 : index
    %c0_38 = arith.constant 0 : index
    %43 = vector.load %arg3[%c6, %c0_37, %c0_38] : memref<8x4x2xbf16, #tpu.memory_space<vmem>>, vector<1x4x2xbf16>
    %44 = vector.shape_cast %43 : vector<1x4x2xbf16> to vector<4x2xbf16>
    %cst_39 = arith.constant dense<0.000000e+00> : vector<16x2xf32>
    %45 = tpu.matmul %0, %44, %cst_39 {dimension_numbers = #tpu.dot_dimension_numbers<[1], [0], [0], [1], [0, 0, 1, 1], [], []>} : vector<16x4xbf16>, vector<4x2xbf16>, vector<16x2xf32> -> vector<16x2xf32>
    %46 = arith.truncf %45 : vector<16x2xf32> to vector<16x2xbf16>
    %c6_40 = arith.constant 6 : index
    %c0_41 = arith.constant 0 : index
    %c0_42 = arith.constant 0 : index
    %47 = vector.load %arg4[%c6_40, %c0_41, %c0_42] : memref<8x16x2xbf16, #tpu.memory_space<vmem>>, vector<1x16x2xbf16>
    %48 = vector.shape_cast %47 : vector<1x16x2xbf16> to vector<16x2xbf16>
    %49 = vector.shape_cast %46 : vector<16x2xbf16> to vector<1x16x2xbf16>
    tpu.vector_store %arg4[%c6_40, %c0_41, %c0_42], %49 {strides = array<i32>} : memref<8x16x2xbf16, #tpu.memory_space<vmem>>, vector<1x16x2xbf16>,
    %c7 = arith.constant 7 : index
    %c0_43 = arith.constant 0 : index
    %c0_44 = arith.constant 0 : index
    %50 = vector.load %arg3[%c7, %c0_43, %c0_44] : memref<8x4x2xbf16, #tpu.memory_space<vmem>>, vector<1x4x2xbf16>
    %51 = vector.shape_cast %50 : vector<1x4x2xbf16> to vector<4x2xbf16>
    %cst_45 = arith.constant dense<0.000000e+00> : vector<16x2xf32>
    %52 = tpu.matmul %0, %51, %cst_45 {dimension_numbers = #tpu.dot_dimension_numbers<[1], [0], [0], [1], [0, 0, 1, 1], [], []>} : vector<16x4xbf16>, vector<4x2xbf16>, vector<16x2xf32> -> vector<16x2xf32>
    %53 = arith.truncf %52 : vector<16x2xf32> to vector<16x2xbf16>
    %c7_46 = arith.constant 7 : index
    %c0_47 = arith.constant 0 : index
    %c0_48 = arith.constant 0 : index
    %54 = vector.load %arg4[%c7_46, %c0_47, %c0_48] : memref<8x16x2xbf16, #tpu.memory_space<vmem>>, vector<1x16x2xbf16>
    %55 = vector.shape_cast %54 : vector<1x16x2xbf16> to vector<16x2xbf16>
    %56 = vector.shape_cast %53 : vector<16x2xbf16> to vector<1x16x2xbf16>
    tpu.vector_store %arg4[%c7_46, %c0_47, %c0_48], %56 {strides = array<i32>} : memref<8x16x2xbf16, #tpu.memory_space<vmem>>, vector<1x16x2xbf16>,
    return
  }
  func.func @transform_0(%arg0: i32, %arg1: i32) -> (i32, i32) {
    %c0_i32 = arith.constant 0 : i32
    %c0_i32_0 = arith.constant 0 : i32
    %c0_i32_1 = arith.constant 0 : i32
    return %c0_i32, %c0_i32_0 : i32, i32
  }
  func.func @transform_1(%arg0: i32, %arg1: i32) -> (i32, i32, i32) {
    %c0_i32 = arith.constant 0 : i32
    %c0_i32_0 = arith.constant 0 : i32
    return %arg0, %c0_i32, %arg1 : i32, i32, i32
  }
  func.func @transform_2(%arg0: i32, %arg1: i32) -> (i32, i32, i32) {
    %c0_i32 = arith.constant 0 : i32
    %c0_i32_0 = arith.constant 0 : i32
    return %arg0, %c0_i32, %arg1 : i32, i32, i32
  }
}

module attributes {stable_mosaic.version = 11 : i64} {
  func.func @_matmul_kernel(%arg0: i32, %arg1: i32, %arg2: i32, %arg3: memref<512x128xbf16, #tpu.memory_space<vmem>>, %arg4: memref<128x128xbf16, #tpu.memory_space<vmem>>, %arg5: memref<1x128xf32, #tpu.memory_space<vmem>>, %arg6: memref<512x128xbf16, #tpu.memory_space<vmem>>, %arg7: memref<512x128xf32, #tpu.memory_space<vmem>>) attributes {dimension_semantics = [#tpu.dimension_semantics<parallel>, #tpu.dimension_semantics<parallel>, #tpu.dimension_semantics<arbitrary>], iteration_bounds = array<i64: 1, 1, 1>, scalar_prefetch = 0 : i64, scratch_operands = 1 : i64, tpu.core_type = #tpu.core_type<tc>, window_params = [{transform_indices = @transform_0, window_bounds = array<i64: 512, 128>}, {transform_indices = @transform_1, window_bounds = array<i64: 128, 128>}, {transform_indices = @transform_2, window_bounds = array<i64: 1, 128>}, {transform_indices = @transform_3, window_bounds = array<i64: 512, 128>}]} {
    %c0_i32 = arith.constant 0 : i32
    %0 = arith.cmpi eq, %arg2, %c0_i32 : i32
    %1 = arith.extui %0 : i1 to i32
    %c0_i32_0 = arith.constant 0 : i32
    %2 = arith.cmpi ne, %1, %c0_i32_0 : i32
    scf.if %2 {
      %cst_10 = arith.constant 0.000000e+00 : f32
      %12 = vector.broadcast %cst_10 : f32 to vector<512x128xf32>
      %c0_11 = arith.constant 0 : index
      %c0_12 = arith.constant 0 : index
      %13 = vector.load %arg7[%c0_11, %c0_12] : memref<512x128xf32, #tpu.memory_space<vmem>>, vector<512x128xf32>
      tpu.vector_store %arg7[%c0_11, %c0_12], %12 {strides = array<i32>} : memref<512x128xf32, #tpu.memory_space<vmem>>, vector<512x128xf32>,
    } else {
    }
    %c0 = arith.constant 0 : index
    %c0_1 = arith.constant 0 : index
    %3 = vector.load %arg7[%c0, %c0_1] : memref<512x128xf32, #tpu.memory_space<vmem>>, vector<512x128xf32>
    %c0_2 = arith.constant 0 : index
    %c0_3 = arith.constant 0 : index
    %4 = vector.load %arg3[%c0_2, %c0_3] : memref<512x128xbf16, #tpu.memory_space<vmem>>, vector<512x128xbf16>
    %c0_4 = arith.constant 0 : index
    %c0_5 = arith.constant 0 : index
    %5 = vector.load %arg4[%c0_4, %c0_5] : memref<128x128xbf16, #tpu.memory_space<vmem>>, vector<128x128xbf16>
    %cst = arith.constant dense<0.000000e+00> : vector<512x128xf32>
    %6 = tpu.matmul %4, %5, %cst {dimension_numbers = #tpu.dot_dimension_numbers<[1], [0], [0], [1], [0, 0, 1, 1], [], []>} : vector<512x128xbf16>, vector<128x128xbf16>, vector<512x128xf32> -> vector<512x128xf32>
    %7 = arith.addf %3, %6 : vector<512x128xf32>
    %c0_6 = arith.constant 0 : index
    %c0_7 = arith.constant 0 : index
    %8 = vector.load %arg7[%c0_6, %c0_7] : memref<512x128xf32, #tpu.memory_space<vmem>>, vector<512x128xf32>
    tpu.vector_store %arg7[%c0_6, %c0_7], %7 {strides = array<i32>} : memref<512x128xf32, #tpu.memory_space<vmem>>, vector<512x128xf32>,
    %c0_i32_8 = arith.constant 0 : i32
    %9 = arith.cmpi eq, %arg2, %c0_i32_8 : i32
    %10 = arith.extui %9 : i1 to i32
    %c0_i32_9 = arith.constant 0 : i32
    %11 = arith.cmpi ne, %10, %c0_i32_9 : i32
    scf.if %11 {
      %c0_10 = arith.constant 0 : index
      %c0_11 = arith.constant 0 : index
      %12 = vector.load %arg7[%c0_10, %c0_11] : memref<512x128xf32, #tpu.memory_space<vmem>>, vector<512x128xf32>
      %c0_12 = arith.constant 0 : index
      %c0_13 = arith.constant 0 : index
      %13 = vector.load %arg5[%c0_12, %c0_13] : memref<1x128xf32, #tpu.memory_space<vmem>>, vector<1x128xf32>
      %14 = vector.broadcast %13 : vector<1x128xf32> to vector<512x128xf32>
      %15 = arith.addf %12, %14 : vector<512x128xf32>
      %16 = arith.truncf %15 : vector<512x128xf32> to vector<512x128xbf16>
      %c0_14 = arith.constant 0 : index
      %c0_15 = arith.constant 0 : index
      %17 = vector.load %arg6[%c0_14, %c0_15] : memref<512x128xbf16, #tpu.memory_space<vmem>>, vector<512x128xbf16>
      tpu.vector_store %arg6[%c0_14, %c0_15], %16 {strides = array<i32>} : memref<512x128xbf16, #tpu.memory_space<vmem>>, vector<512x128xbf16>,
    } else {
    }
    return
  }
  func.func @transform_0(%arg0: i32, %arg1: i32, %arg2: i32) -> (i32, i32) {
    %c0_i32 = arith.constant 0 : i32
    return %arg0, %arg2 : i32, i32
  }
  func.func @transform_1(%arg0: i32, %arg1: i32, %arg2: i32) -> (i32, i32) {
    %c0_i32 = arith.constant 0 : i32
    return %arg2, %arg1 : i32, i32
  }
  func.func @transform_2(%arg0: i32, %arg1: i32, %arg2: i32) -> (i32, i32) {
    %c0_i32 = arith.constant 0 : i32
    %c0_i32_0 = arith.constant 0 : i32
    return %c0_i32, %arg1 : i32, i32
  }
  func.func @transform_3(%arg0: i32, %arg1: i32, %arg2: i32) -> (i32, i32) {
    %c0_i32 = arith.constant 0 : i32
    return %arg0, %arg1 : i32, i32
  }
}

module attributes {stable_mosaic.version = 11 : i64} {
  func.func @_gru_reset_kernel(%arg0: i32, %arg1: memref<32x32xbf16, #tpu.memory_space<vmem>>, %arg2: memref<32x32xbf16, #tpu.memory_space<vmem>>, %arg3: memref<32x32xbf16, #tpu.memory_space<vmem>>) attributes {dimension_semantics = [#tpu.dimension_semantics<parallel>], iteration_bounds = array<i64: 1>, scalar_prefetch = 0 : i64, scratch_operands = 0 : i64, tpu.core_type = #tpu.core_type<tc>, window_params = [{transform_indices = @transform_0, window_bounds = array<i64: 32, 32>}, {transform_indices = @transform_1, window_bounds = array<i64: 32, 32>}, {transform_indices = @transform_2, window_bounds = array<i64: 32, 32>}]} {
    %c0 = arith.constant 0 : index
    %c0_0 = arith.constant 0 : index
    %0 = vector.load %arg1[%c0, %c0_0] : memref<32x32xbf16, #tpu.memory_space<vmem>>, vector<32x32xbf16>
    %1 = arith.extf %0 : vector<32x32xbf16> to vector<32x32xf32>
    %2 = arith.negf %1 : vector<32x32xf32>
    %3 = math.exp %2 : vector<32x32xf32>
    %cst = arith.constant 1.000000e+00 : f32
    %4 = vector.broadcast %cst : f32 to vector<32x32xf32>
    %5 = arith.addf %4, %3 : vector<32x32xf32>
    %6 = arith.divf %4, %5 : vector<32x32xf32>
    %c0_1 = arith.constant 0 : index
    %c0_2 = arith.constant 0 : index
    %7 = vector.load %arg2[%c0_1, %c0_2] : memref<32x32xbf16, #tpu.memory_space<vmem>>, vector<32x32xbf16>
    %8 = arith.extf %7 : vector<32x32xbf16> to vector<32x32xf32>
    %9 = arith.mulf %6, %8 : vector<32x32xf32>
    %10 = arith.truncf %9 : vector<32x32xf32> to vector<32x32xbf16>
    %c0_3 = arith.constant 0 : index
    %c0_4 = arith.constant 0 : index
    %11 = vector.load %arg3[%c0_3, %c0_4] : memref<32x32xbf16, #tpu.memory_space<vmem>>, vector<32x32xbf16>
    tpu.vector_store %arg3[%c0_3, %c0_4], %10 {strides = array<i32>} : memref<32x32xbf16, #tpu.memory_space<vmem>>, vector<32x32xbf16>,
    return
  }
  func.func @transform_0(%arg0: i32) -> (i32, i32) {
    %c0_i32 = arith.constant 0 : i32
    %c0_i32_0 = arith.constant 0 : i32
    return %arg0, %c0_i32 : i32, i32
  }
  func.func @transform_1(%arg0: i32) -> (i32, i32) {
    %c0_i32 = arith.constant 0 : i32
    %c0_i32_0 = arith.constant 0 : i32
    return %arg0, %c0_i32 : i32, i32
  }
  func.func @transform_2(%arg0: i32) -> (i32, i32) {
    %c0_i32 = arith.constant 0 : i32
    %c0_i32_0 = arith.constant 0 : i32
    return %arg0, %c0_i32 : i32, i32
  }
}

module attributes {stable_mosaic.version = 11 : i64} {
  func.func @_gru_update_kernel(%arg0: i32, %arg1: memref<32x32xbf16, #tpu.memory_space<vmem>>, %arg2: memref<32x32xbf16, #tpu.memory_space<vmem>>, %arg3: memref<32x32xbf16, #tpu.memory_space<vmem>>, %arg4: memref<32x32xbf16, #tpu.memory_space<vmem>>) attributes {dimension_semantics = [#tpu.dimension_semantics<parallel>], iteration_bounds = array<i64: 1>, scalar_prefetch = 0 : i64, scratch_operands = 0 : i64, tpu.core_type = #tpu.core_type<tc>, window_params = [{transform_indices = @transform_0, window_bounds = array<i64: 32, 32>}, {transform_indices = @transform_1, window_bounds = array<i64: 32, 32>}, {transform_indices = @transform_2, window_bounds = array<i64: 32, 32>}, {transform_indices = @transform_3, window_bounds = array<i64: 32, 32>}]} {
    %c0 = arith.constant 0 : index
    %c0_0 = arith.constant 0 : index
    %0 = vector.load %arg1[%c0, %c0_0] : memref<32x32xbf16, #tpu.memory_space<vmem>>, vector<32x32xbf16>
    %1 = arith.extf %0 : vector<32x32xbf16> to vector<32x32xf32>
    %2 = arith.negf %1 : vector<32x32xf32>
    %3 = math.exp %2 : vector<32x32xf32>
    %cst = arith.constant 1.000000e+00 : f32
    %4 = vector.broadcast %cst : f32 to vector<32x32xf32>
    %5 = arith.addf %4, %3 : vector<32x32xf32>
    %6 = arith.divf %4, %5 : vector<32x32xf32>
    %c0_1 = arith.constant 0 : index
    %c0_2 = arith.constant 0 : index
    %7 = vector.load %arg2[%c0_1, %c0_2] : memref<32x32xbf16, #tpu.memory_space<vmem>>, vector<32x32xbf16>
    %8 = arith.extf %7 : vector<32x32xbf16> to vector<32x32xf32>
    %c0_3 = arith.constant 0 : index
    %c0_4 = arith.constant 0 : index
    %9 = vector.load %arg3[%c0_3, %c0_4] : memref<32x32xbf16, #tpu.memory_space<vmem>>, vector<32x32xbf16>
    %10 = arith.extf %9 : vector<32x32xbf16> to vector<32x32xf32>
    %11 = math.tanh %10 : vector<32x32xf32>
    %cst_5 = arith.constant 1.000000e+00 : f32
    %12 = vector.broadcast %cst_5 : f32 to vector<32x32xf32>
    %13 = arith.subf %12, %6 : vector<32x32xf32>
    %14 = arith.mulf %13, %8 : vector<32x32xf32>
    %15 = arith.mulf %6, %11 : vector<32x32xf32>
    %16 = arith.addf %14, %15 : vector<32x32xf32>
    %17 = arith.truncf %16 : vector<32x32xf32> to vector<32x32xbf16>
    %c0_6 = arith.constant 0 : index
    %c0_7 = arith.constant 0 : index
    %18 = vector.load %arg4[%c0_6, %c0_7] : memref<32x32xbf16, #tpu.memory_space<vmem>>, vector<32x32xbf16>
    tpu.vector_store %arg4[%c0_6, %c0_7], %17 {strides = array<i32>} : memref<32x32xbf16, #tpu.memory_space<vmem>>, vector<32x32xbf16>,
    return
  }
  func.func @transform_0(%arg0: i32) -> (i32, i32) {
    %c0_i32 = arith.constant 0 : i32
    %c0_i32_0 = arith.constant 0 : i32
    return %arg0, %c0_i32 : i32, i32
  }
  func.func @transform_1(%arg0: i32) -> (i32, i32) {
    %c0_i32 = arith.constant 0 : i32
    %c0_i32_0 = arith.constant 0 : i32
    return %arg0, %c0_i32 : i32, i32
  }
  func.func @transform_2(%arg0: i32) -> (i32, i32) {
    %c0_i32 = arith.constant 0 : i32
    %c0_i32_0 = arith.constant 0 : i32
    return %arg0, %c0_i32 : i32, i32
  }
  func.func @transform_3(%arg0: i32) -> (i32, i32) {
    %c0_i32 = arith.constant 0 : i32
    %c0_i32_0 = arith.constant 0 : i32
    return %arg0, %c0_i32 : i32, i32
  }
}

</mosaic_0001>

<llo_original>
// kernel: deeplabv3plus_gru_forward.30
$region0: #{deeplabv3plus_gru_forward.30}
  #allocation0 [shape = 'u32[]', space=smem, size = 0x4, offset = 0x4, fixed_abs, tag = 'smem constant byte address 0x4 - core index']
  #allocation1 [shape = 'u32[144,128]{1,0:T(1,128)}', space=vmem, size = 0x12000, scoped, tag = 'internal scratch']
  #allocation2 [shape = 'f32[128,128]{1,0:T(8,128)}', space=vmem, size = 0x10000, scoped, tag = 'scratch operand']
  %s0 = inlined_call_operand.vmem [shape: bf16[128,128], index: 0, kind: input, shape index: {}]
  %s1 = inlined_call_operand.vmem [shape: bf16[128,128], index: 1, kind: input, shape index: {}]
  %s2 = inlined_call_operand.vmem [shape: f32[1,128], index: 2, kind: input, shape index: {}]
  %s3 = inlined_call_operand.vmem [shape: bf16[128,128], index: 3, kind: output, shape index: {}]
  %s4 = sld [smem:[#allocation0]]
  $region30: #{deeplabv3plus_gru_forward.30} parent=0
    _
  %s6 = ssub.s32 1, %s4
  %s7 = scalar_select 0, %s6, %s4
  // Predicated region
  $region2: #{deeplabv3plus_gru_forward.30} parent=0 // pred_check
    _
  $region3: #{deeplabv3plus_gru_forward.30} parent=0 // pred_check_branch
    %9 = sbr.rel (0) target = $region5
  $region4: #{deeplabv3plus_gru_forward.30} parent=0 // pred_region
    _
  $region5: #{deeplabv3plus_gru_forward.30} parent=0 // pred_fallthru
    _
  // Predicated region
  $region6: #{deeplabv3plus_gru_forward.30} parent=0 // pred_check
    _
  $region7: #{deeplabv3plus_gru_forward.30} parent=0 // pred_check_branch
    %11 = sbr.rel (0) target = $region9
  $region8: #{deeplabv3plus_gru_forward.30} parent=0 // pred_region
    _
  $region9: #{deeplabv3plus_gru_forward.30} parent=0 // pred_fallthru
    _
  // Predicated region
  $region10: #{deeplabv3plus_gru_forward.30} parent=0 // pred_check
    _
  $region11: #{deeplabv3plus_gru_forward.30} parent=0 // pred_check_branch
    %13 = sbr.rel (0) target = $region13
  $region12: #{deeplabv3plus_gru_forward.30} parent=0 // pred_region
    _
  $region13: #{deeplabv3plus_gru_forward.30} parent=0 // pred_fallthru
    _
  %p15 = scmp.eq.s32.totalorder 0, 0
  // Predicated region
  $region14: #{deeplabv3plus_gru_forward.30} parent=0 // pred_check
    %p16 = pneg %p15
  $region15: #{deeplabv3plus_gru_forward.30} parent=0 // pred_check_branch
    %18 = sbr.rel (%p16) target = $region17
  $region16: #{deeplabv3plus_gru_forward.30} parent=0 // pred_region
    %19 = vst [vmem:[#allocation2] sm:$0xff] 0.0
    %20 = vst [vmem:[#allocation2 + $0x8] sm:$0xff] 0.0
    %21 = vst [vmem:[#allocation2 + $0x10] sm:$0xff] 0.0
    %22 = vst [vmem:[#allocation2 + $0x18] sm:$0xff] 0.0
    %23 = vst [vmem:[#allocation2 + $0x20] sm:$0xff] 0.0
    %24 = vst [vmem:[#allocation2 + $0x28] sm:$0xff] 0.0
    %25 = vst [vmem:[#allocation2 + $0x30] sm:$0xff] 0.0
    %26 = vst [vmem:[#allocation2 + $0x38] sm:$0xff] 0.0
    %27 = vst [vmem:[#allocation2 + $0x40] sm:$0xff] 0.0
    %28 = vst [vmem:[#allocation2 + $0x48] sm:$0xff] 0.0
    %29 = vst [vmem:[#allocation2 + $0x50] sm:$0xff] 0.0
    %30 = vst [vmem:[#allocation2 + $0x58] sm:$0xff] 0.0
    %31 = vst [vmem:[#allocation2 + $0x60] sm:$0xff] 0.0
    %32 = vst [vmem:[#allocation2 + $0x68] sm:$0xff] 0.0
    %33 = vst [vmem:[#allocation2 + $0x70] sm:$0xff] 0.0
    %34 = vst [vmem:[#allocation2 + $0x78] sm:$0xff] 0.0
  $region17: #{deeplabv3plus_gru_forward.30} parent=0 // pred_fallthru
    _
  %v35 = vld [vmem:[#allocation2] sm:$0xff]
  %v36 = vld [vmem:[#allocation2 + $0x8] sm:$0xff]
  %v37 = vld [vmem:[#allocation2 + $0x10] sm:$0xff]
  %v38 = vld [vmem:[#allocation2 + $0x18] sm:$0xff]
  %v39 = vld [vmem:[#allocation2 + $0x20] sm:$0xff]
  %v40 = vld [vmem:[#allocation2 + $0x28] sm:$0xff]
  %v41 = vld [vmem:[#allocation2 + $0x30] sm:$0xff]
  %v42 = vld [vmem:[#allocation2 + $0x38] sm:$0xff]
  %v43 = vld [vmem:[#allocation2 + $0x40] sm:$0xff]
  %v44 = vld [vmem:[#allocation2 + $0x48] sm:$0xff]
  %v45 = vld [vmem:[#allocation2 + $0x50] sm:$0xff]
  %v46 = vld [vmem:[#allocation2 + $0x58] sm:$0xff]
  %v47 = vld [vmem:[#allocation2 + $0x60] sm:$0xff]
  %v48 = vld [vmem:[#allocation2 + $0x68] sm:$0xff]
  %v49 = vld [vmem:[#allocation2 + $0x70] sm:$0xff]
  %v50 = vld [vmem:[#allocation2 + $0x78] sm:$0xff]
  %v51 = vld [vmem:[%s0] sm:$0xf]
  %v52 = vld [vmem:[%s0 + $0x4] sm:$0xf]
  %v53 = vld [vmem:[%s0 + $0x8] sm:$0xf]
  %v54 = vld [vmem:[%s0 + $0xc] sm:$0xf]
  %v55 = vld [vmem:[%s0 + $0x10] sm:$0xf]
  %v56 = vld [vmem:[%s0 + $0x14] sm:$0xf]
  %v57 = vld [vmem:[%s0 + $0x18] sm:$0xf]
  %v58 = vld [vmem:[%s0 + $0x1c] sm:$0xf]
  %v59 = vld [vmem:[%s0 + $0x20] sm:$0xf]
  %v60 = vld [vmem:[%s0 + $0x24] sm:$0xf]
  %v61 = vld [vmem:[%s0 + $0x28] sm:$0xf]
  %v62 = vld [vmem:[%s0 + $0x2c] sm:$0xf]
  %v63 = vld [vmem:[%s0 + $0x30] sm:$0xf]
  %v64 = vld [vmem:[%s0 + $0x34] sm:$0xf]
  %v65 = vld [vmem:[%s0 + $0x38] sm:$0xf]
  %v66 = vld [vmem:[%s0 + $0x3c] sm:$0xf]
  %v67 = vld [vmem:[%s1] sm:$0xf]
  %v68 = vld [vmem:[%s1 + $0x4] sm:$0xf]
  %v69 = vld [vmem:[%s1 + $0x8] sm:$0xf]
  %v70 = vld [vmem:[%s1 + $0xc] sm:$0xf]
  %v71 = vld [vmem:[%s1 + $0x10] sm:$0xf]
  %v72 = vld [vmem:[%s1 + $0x14] sm:$0xf]
  %v73 = vld [vmem:[%s1 + $0x18] sm:$0xf]
  %v74 = vld [vmem:[%s1 + $0x1c] sm:$0xf]
  %v75 = vld [vmem:[%s1 + $0x20] sm:$0xf]
  %v76 = vld [vmem:[%s1 + $0x24] sm:$0xf]
  %v77 = vld [vmem:[%s1 + $0x28] sm:$0xf]
  %v78 = vld [vmem:[%s1 + $0x2c] sm:$0xf]
  %v79 = vld [vmem:[%s1 + $0x30] sm:$0xf]
  %v80 = vld [vmem:[%s1 + $0x34] sm:$0xf]
  %v81 = vld [vmem:[%s1 + $0x38] sm:$0xf]
  %v82 = vld [vmem:[%s1 + $0x3c] sm:$0xf]
  %v99 = vunpack.c.l.b16 %v51
  %v100 = vunpack.c.l.b16 %v52
  %v101 = vunpack.c.l.b16 %v53
  %v102 = vunpack.c.l.b16 %v54
  %v103 = vunpack.c.l.b16 %v55
  %v104 = vunpack.c.l.b16 %v56
  %v105 = vunpack.c.l.b16 %v57
  %v106 = vunpack.c.l.b16 %v58
  %v107 = vunpack.c.l.b16 %v59
  %v108 = vunpack.c.l.b16 %v60
  %v109 = vunpack.c.l.b16 %v61
  %v110 = vunpack.c.l.b16 %v62
  %v111 = vunpack.c.l.b16 %v63
  %v112 = vunpack.c.l.b16 %v64
  %v113 = vunpack.c.l.b16 %v65
  %v114 = vunpack.c.l.b16 %v66
  %v115 = vpack.c.b16 %v100, %v99
  %v116 = vpack.c.b16 %v102, %v101
  %v117 = vpack.c.b16 %v104, %v103
  %v118 = vpack.c.b16 %v106, %v105
  %v119 = vpack.c.b16 %v108, %v107
  %v120 = vpack.c.b16 %v110, %v109
  %v121 = vpack.c.b16 %v112, %v111
  %v122 = vpack.c.b16 %v114, %v113
  %v147 = vunpack.c.l.b16 %v67
  %v148 = vunpack.c.l.b16 %v68
  %v149 = vunpack.c.l.b16 %v69
  %v150 = vunpack.c.l.b16 %v70
  %v151 = vunpack.c.l.b16 %v71
  %v152 = vunpack.c.l.b16 %v72
  %v153 = vunpack.c.l.b16 %v73
  %v154 = vunpack.c.l.b16 %v74
  %v155 = vunpack.c.l.b16 %v75
  %v156 = vunpack.c.l.b16 %v76
  %v157 = vunpack.c.l.b16 %v77
  %v158 = vunpack.c.l.b16 %v78
  %v159 = vunpack.c.l.b16 %v79
  %v160 = vunpack.c.l.b16 %v80
  %v161 = vunpack.c.l.b16 %v81
  %v162 = vunpack.c.l.b16 %v82
  %v163 = vpack.c.b16 %v148, %v147
  %v164 = vpack.c.b16 %v150, %v149
  %v165 = vpack.c.b16 %v152, %v151
  %v166 = vpack.c.b16 %v154, %v153
  %v167 = vpack.c.b16 %v156, %v155
  %v168 = vpack.c.b16 %v158, %v157
  %v169 = vpack.c.b16 %v160, %v159
  %v170 = vpack.c.b16 %v162, %v161
  %179 = vmatprep.subr.bf16.mxu0 0
  %180 = vmatpush1.bf16.msra.mxu0 %v163
  %181 = vmatprep.subr.bf16.mxu0 0
  %182 = vmatpush1.bf16.msra.mxu0 %v164
  %183 = vmatprep.subr.bf16.mxu0 0
  %184 = vmatpush1.bf16.msra.mxu0 %v165
  %185 = vmatprep.subr.bf16.mxu0 0
  %186 = vmatpush1.bf16.msra.mxu0 %v166
  %187 = vmatprep.subr.bf16.mxu0 0
  %188 = vmatpush1.bf16.msra.mxu0 %v167
  %189 = vmatprep.subr.bf16.mxu0 0
  %190 = vmatpush1.bf16.msra.mxu0 %v168
  %191 = vmatprep.subr.bf16.mxu0 0
  %192 = vmatpush1.bf16.msra.mxu0 %v169
  %193 = vmatprep.subr.bf16.mxu0 0
  %194 = vmatpush1.bf16.msra.mxu0 %v170
  %195 = vmatprep.subr.bf16.mxu0 0
  %196 = vmatpush1.bf16.msra.mxu0 0
  %197 = vmatprep.subr.bf16.mxu0 0
  %198 = vmatpush1.bf16.msra.mxu0 0
  %199 = vmatprep.subr.bf16.mxu0 0
  %200 = vmatpush1.bf16.msra.mxu0 0
  %201 = vmatprep.subr.bf16.mxu0 0
  %202 = vmatpush1.bf16.msra.mxu0 0
  %203 = vmatprep.subr.bf16.mxu0 0
  %204 = vmatpush1.bf16.msra.mxu0 0
  %205 = vmatprep.subr.bf16.mxu0 0
  %206 = vmatpush1.bf16.msra.mxu0 0
  %207 = vmatprep.subr.bf16.mxu0 0
  %208 = vmatpush1.bf16.msra.mxu0 0
  %209 = vmatprep.subr.bf16.mxu0 0
  %210 = vmatpush1.bf16.msra.mxu0 0
  %211 = vmatprep.mubr.bf16.mxu0 0
  %212 = vmatmul.mubr.bf16.gmra.mrb[0].mxu0 %v115
  %v213 = vpop.f32.mrb[0].mxu0
  %v214 = vadd.f32 0.0, %v213
  %v215 = vpop.f32.mrb[0].mxu0
  %v216 = vpop.f32.mrb[0].mxu0
  %v217 = vadd.f32 0.0, %v216
  %v218 = vpop.f32.mrb[0].mxu0
  %219 = vmatprep.mubr.bf16.mxu0 0
  %220 = vmatmul.mubr.bf16.gmra.mrb[0].mxu0 %v116
  %v221 = vpop.f32.mrb[0].mxu0
  %v222 = vadd.f32 0.0, %v221
  %v223 = vpop.f32.mrb[0].mxu0
  %v224 = vpop.f32.mrb[0].mxu0
  %v225 = vadd.f32 0.0, %v224
  %v226 = vpop.f32.mrb[0].mxu0
  %227 = vmatprep.mubr.bf16.mxu0 0
  %228 = vmatmul.mubr.bf16.gmra.mrb[0].mxu0 %v117
  %v229 = vpop.f32.mrb[0].mxu0
  %v230 = vadd.f32 0.0, %v229
  %v231 = vpop.f32.mrb[0].mxu0
  %v232 = vpop.f32.mrb[0].mxu0
  %v233 = vadd.f32 0.0, %v232
  %v234 = vpop.f32.mrb[0].mxu0
  %235 = vmatprep.mubr.bf16.mxu0 0
  %236 = vmatmul.mubr.bf16.gmra.mrb[0].mxu0 %v118
  %v237 = vpop.f32.mrb[0].mxu0
  %v238 = vadd.f32 0.0, %v237
  %v239 = vpop.f32.mrb[0].mxu0
  %v240 = vpop.f32.mrb[0].mxu0
  %v241 = vadd.f32 0.0, %v240
  %v242 = vpop.f32.mrb[0].mxu0
  %243 = vmatprep.mubr.bf16.mxu0 0
  %244 = vmatmul.mubr.bf16.gmra.mrb[0].mxu0 %v119
  %v245 = vpop.f32.mrb[0].mxu0
  %v246 = vadd.f32 0.0, %v245
  %v247 = vpop.f32.mrb[0].mxu0
  %v248 = vpop.f32.mrb[0].mxu0
  %v249 = vadd.f32 0.0, %v248
  %v250 = vpop.f32.mrb[0].mxu0
  %251 = vmatprep.mubr.bf16.mxu0 0
  %252 = vmatmul.mubr.bf16.gmra.mrb[0].mxu0 %v120
  %v253 = vpop.f32.mrb[0].mxu0
  %v254 = vadd.f32 0.0, %v253
  %v255 = vpop.f32.mrb[0].mxu0
  %v256 = vpop.f32.mrb[0].mxu0
  %v257 = vadd.f32 0.0, %v256
  %v258 = vpop.f32.mrb[0].mxu0
  %259 = vmatprep.mubr.bf16.mxu0 0
  %260 = vmatmul.mubr.bf16.gmra.mrb[0].mxu0 %v121
  %v261 = vpop.f32.mrb[0].mxu0
  %v262 = vadd.f32 0.0, %v261
  %v263 = vpop.f32.mrb[0].mxu0
  %v264 = vpop.f32.mrb[0].mxu0
  %v265 = vadd.f32 0.0, %v264
  %v266 = vpop.f32.mrb[0].mxu0
  %267 = vmatprep.mubr.bf16.mxu0 0
  %268 = vmatmul.mubr.bf16.gmra.mrb[0].mxu0 %v122
  %v269 = vpop.f32.mrb[0].mxu0
  %v270 = vadd.f32 0.0, %v269
  %v271 = vpop.f32.mrb[0].mxu0
  %v272 = vpop.f32.mrb[0].mxu0
  %v273 = vadd.f32 0.0, %v272
  %v274 = vpop.f32.mrb[0].mxu0
  %275 = vdwg.mxu0
  %v276 = vadd.f32 %v35, %v214
  %v277 = vadd.f32 %v36, %v217
  %v278 = vadd.f32 %v37, %v222
  %v279 = vadd.f32 %v38, %v225
  %v280 = vadd.f32 %v39, %v230
  %v281 = vadd.f32 %v40, %v233
  %v282 = vadd.f32 %v41, %v238
  %v283 = vadd.f32 %v42, %v241
  %v284 = vadd.f32 %v43, %v246
  %v285 = vadd.f32 %v44, %v249
  %v286 = vadd.f32 %v45, %v254
  %v287 = vadd.f32 %v46, %v257
  %v288 = vadd.f32 %v47, %v262
  %v289 = vadd.f32 %v48, %v265
  %v290 = vadd.f32 %v49, %v270
  %v291 = vadd.f32 %v50, %v273
  %292 = vst [vmem:[#allocation2] sm:$0xff] %v276
  %293 = vst [vmem:[#allocation2 + $0x8] sm:$0xff] %v277
  %294 = vst [vmem:[#allocation2 + $0x10] sm:$0xff] %v278
  %295 = vst [vmem:[#allocation2 + $0x18] sm:$0xff] %v279
  %296 = vst [vmem:[#allocation2 + $0x20] sm:$0xff] %v280
  %297 = vst [vmem:[#allocation2 + $0x28] sm:$0xff] %v281
  %298 = vst [vmem:[#allocation2 + $0x30] sm:$0xff] %v282
  %299 = vst [vmem:[#allocation2 + $0x38] sm:$0xff] %v283
  %300 = vst [vmem:[#allocation2 + $0x40] sm:$0xff] %v284
  %301 = vst [vmem:[#allocation2 + $0x48] sm:$0xff] %v285
  %302 = vst [vmem:[#allocation2 + $0x50] sm:$0xff] %v286
  %303 = vst [vmem:[#allocation2 + $0x58] sm:$0xff] %v287
  %304 = vst [vmem:[#allocation2 + $0x60] sm:$0xff] %v288
  %305 = vst [vmem:[#allocation2 + $0x68] sm:$0xff] %v289
  %306 = vst [vmem:[#allocation2 + $0x70] sm:$0xff] %v290
  %307 = vst [vmem:[#allocation2 + $0x78] sm:$0xff] %v291
  // Predicated region
  $region18: #{deeplabv3plus_gru_forward.30} parent=0 // pred_check
    %p308 = pneg %p15
  $region19: #{deeplabv3plus_gru_forward.30} parent=0 // pred_check_branch
    %310 = sbr.rel (%p308) target = $region21
  $region20: #{deeplabv3plus_gru_forward.30} parent=0 // pred_region
    %v311 = vld [vmem:[#allocation2] sm:$0xff]
    %v312 = vld [vmem:[#allocation2 + $0x8] sm:$0xff]
    %v313 = vld [vmem:[#allocation2 + $0x10] sm:$0xff]
    %v314 = vld [vmem:[#allocation2 + $0x18] sm:$0xff]
    %v315 = vld [vmem:[#allocation2 + $0x20] sm:$0xff]
    %v316 = vld [vmem:[#allocation2 + $0x28] sm:$0xff]
    %v317 = vld [vmem:[#allocation2 + $0x30] sm:$0xff]
    %v318 = vld [vmem:[#allocation2 + $0x38] sm:$0xff]
    %v319 = vld [vmem:[#allocation2 + $0x40] sm:$0xff]
    %v320 = vld [vmem:[#allocation2 + $0x48] sm:$0xff]
    %v321 = vld [vmem:[#allocation2 + $0x50] sm:$0xff]
    %v322 = vld [vmem:[#allocation2 + $0x58] sm:$0xff]
    %v323 = vld [vmem:[#allocation2 + $0x60] sm:$0xff]
    %v324 = vld [vmem:[#allocation2 + $0x68] sm:$0xff]
    %v325 = vld [vmem:[#allocation2 + $0x70] sm:$0xff]
    %v326 = vld [vmem:[#allocation2 + $0x78] sm:$0xff]
    %v327 = vld [vmem:[%s2] sm:$0x1]
    %v329 = vlaneseq
    %v330 = vshrl.u32 %v329, 7
    %v331 = vsub.s32 0, %v330
    %v332 = vrot.slane %v327, %v331
    %v334 = vadd.f32 %v311, %v332
    %v335 = vadd.f32 %v312, %v332
    %v336 = vadd.f32 %v313, %v332
    %v337 = vadd.f32 %v314, %v332
    %v338 = vadd.f32 %v315, %v332
    %v339 = vadd.f32 %v316, %v332
    %v340 = vadd.f32 %v317, %v332
    %v341 = vadd.f32 %v318, %v332
    %v342 = vadd.f32 %v319, %v332
    %v343 = vadd.f32 %v320, %v332
    %v344 = vadd.f32 %v321, %v332
    %v345 = vadd.f32 %v322, %v332
    %v346 = vadd.f32 %v323, %v332
    %v347 = vadd.f32 %v324, %v332
    %v348 = vadd.f32 %v325, %v332
    %v349 = vadd.f32 %v326, %v332
    %v350 = vmax.f32 %v334, 0.0
    %v351 = vmax.f32 %v335, 0.0
    %v352 = vmax.f32 %v336, 0.0
    %v353 = vmax.f32 %v337, 0.0
    %v354 = vmax.f32 %v338, 0.0
    %v355 = vmax.f32 %v339, 0.0
    %v356 = vmax.f32 %v340, 0.0
    %v357 = vmax.f32 %v341, 0.0
    %v358 = vmax.f32 %v342, 0.0
    %v359 = vmax.f32 %v343, 0.0
    %v360 = vmax.f32 %v344, 0.0
    %v361 = vmax.f32 %v345, 0.0
    %v362 = vmax.f32 %v346, 0.0
    %v363 = vmax.f32 %v347, 0.0
    %v364 = vmax.f32 %v348, 0.0
    %v365 = vmax.f32 %v349, 0.0
    %v366 = vpack.c.bf16 %v351, %v350
    %v367 = vpack.c.bf16 %v353, %v352
    %v368 = vpack.c.bf16 %v355, %v354
    %v369 = vpack.c.bf16 %v357, %v356
    %v370 = vpack.c.bf16 %v359, %v358
    %v371 = vpack.c.bf16 %v361, %v360
    %v372 = vpack.c.bf16 %v363, %v362
    %v373 = vpack.c.bf16 %v365, %v364
    %v382 = vunpack.c.l.b16 %v366
    %v383 = vunpack.c.h.b16 %v366
    %v384 = vunpack.c.l.b16 %v367
    %v385 = vunpack.c.h.b16 %v367
    %v386 = vunpack.c.l.b16 %v368
    %v387 = vunpack.c.h.b16 %v368
    %v388 = vunpack.c.l.b16 %v369
    %v389 = vunpack.c.h.b16 %v369
    %v390 = vunpack.c.l.b16 %v370
    %v391 = vunpack.c.h.b16 %v370
    %v392 = vunpack.c.l.b16 %v371
    %v393 = vunpack.c.h.b16 %v371
    %v394 = vunpack.c.l.b16 %v372
    %v395 = vunpack.c.h.b16 %v372
    %v396 = vunpack.c.l.b16 %v373
    %v397 = vunpack.c.h.b16 %v373
    %v398 = vpack.c.b16 %v382, %v382
    %v399 = vpack.c.b16 %v383, %v383
    %v400 = vpack.c.b16 %v384, %v384
    %v401 = vpack.c.b16 %v385, %v385
    %v402 = vpack.c.b16 %v386, %v386
    %v403 = vpack.c.b16 %v387, %v387
    %v404 = vpack.c.b16 %v388, %v388
    %v405 = vpack.c.b16 %v389, %v389
    %v406 = vpack.c.b16 %v390, %v390
    %v407 = vpack.c.b16 %v391, %v391
    %v408 = vpack.c.b16 %v392, %v392
    %v409 = vpack.c.b16 %v393, %v393
    %v410 = vpack.c.b16 %v394, %v394
    %v411 = vpack.c.b16 %v395, %v395
    %v412 = vpack.c.b16 %v396, %v396
    %v413 = vpack.c.b16 %v397, %v397
    %430 = vst [vmem:[%s3] sm:$0xf] %v398
    %431 = vst [vmem:[%s3 + $0x4] sm:$0xf] %v399
    %432 = vst [vmem:[%s3 + $0x8] sm:$0xf] %v400
    %433 = vst [vmem:[%s3 + $0xc] sm:$0xf] %v401
    %434 = vst [vmem:[%s3 + $0x10] sm:$0xf] %v402
    %435 = vst [vmem:[%s3 + $0x14] sm:$0xf] %v403
    %436 = vst [vmem:[%s3 + $0x18] sm:$0xf] %v404
    %437 = vst [vmem:[%s3 + $0x1c] sm:$0xf] %v405
    %438 = vst [vmem:[%s3 + $0x20] sm:$0xf] %v406
    %439 = vst [vmem:[%s3 + $0x24] sm:$0xf] %v407
    %440 = vst [vmem:[%s3 + $0x28] sm:$0xf] %v408
    %441 = vst [vmem:[%s3 + $0x2c] sm:$0xf] %v409
    %442 = vst [vmem:[%s3 + $0x30] sm:$0xf] %v410
    %443 = vst [vmem:[%s3 + $0x34] sm:$0xf] %v411
    %444 = vst [vmem:[%s3 + $0x38] sm:$0xf] %v412
    %445 = vst [vmem:[%s3 + $0x3c] sm:$0xf] %v413
  $region21: #{deeplabv3plus_gru_forward.30} parent=0 // pred_fallthru
    _
  // Predicated region
  $region22: #{deeplabv3plus_gru_forward.30} parent=0 // pred_check
    _
  $region23: #{deeplabv3plus_gru_forward.30} parent=0 // pred_check_branch
    %447 = sbr.rel (0) target = $region25
  $region24: #{deeplabv3plus_gru_forward.30} parent=0 // pred_region
    _
  $region25: #{deeplabv3plus_gru_forward.30} parent=0 // pred_fallthru
    _
  // Predicated region
  $region26: #{deeplabv3plus_gru_forward.30} parent=0 // pred_check
    _
  $region27: #{deeplabv3plus_gru_forward.30} parent=0 // pred_check_branch
    %449 = sbr.rel (0) target = $region29
  $region28: #{deeplabv3plus_gru_forward.30} parent=0 // pred_region
    _
  $region29: #{deeplabv3plus_gru_forward.30} parent=0 // pred_fallthru
    _

// kernel: deeplabv3plus_gru_forward.31
$region0: #{deeplabv3plus_gru_forward.31}
  #allocation0 [shape = 'u32[]', space=smem, size = 0x4, offset = 0x4, fixed_abs, tag = 'smem constant byte address 0x4 - core index']
  #allocation1 [shape = 'u32[144,128]{1,0:T(1,128)}', space=vmem, size = 0x12000, scoped, tag = 'internal scratch']
  #allocation2 [shape = 'f32[32,128]{1,0:T(8,128)}', space=vmem, size = 0x4000, scoped, tag = 'scratch operand']
  %s0 = inlined_call_operand.vmem [shape: bf16[32,256], index: 0, kind: input, shape index: {}]
  %s1 = inlined_call_operand.vmem [shape: bf16[256,128], index: 1, kind: input, shape index: {}]
  %s2 = inlined_call_operand.vmem [shape: f32[1,128], index: 2, kind: input, shape index: {}]
  %s3 = inlined_call_operand.vmem [shape: bf16[32,128], index: 3, kind: output, shape index: {}]
  %s4 = sld [smem:[#allocation0]]
  $region30: #{deeplabv3plus_gru_forward.31} parent=0
    _
  %s6 = ssub.s32 1, %s4
  %s7 = scalar_select 0, %s6, %s4
  // Predicated region
  $region2: #{deeplabv3plus_gru_forward.31} parent=0 // pred_check
    _
  $region3: #{deeplabv3plus_gru_forward.31} parent=0 // pred_check_branch
    %9 = sbr.rel (0) target = $region5
  $region4: #{deeplabv3plus_gru_forward.31} parent=0 // pred_region
    _
  $region5: #{deeplabv3plus_gru_forward.31} parent=0 // pred_fallthru
    _
  // Predicated region
  $region6: #{deeplabv3plus_gru_forward.31} parent=0 // pred_check
    _
  $region7: #{deeplabv3plus_gru_forward.31} parent=0 // pred_check_branch
    %11 = sbr.rel (0) target = $region9
  $region8: #{deeplabv3plus_gru_forward.31} parent=0 // pred_region
    _
  $region9: #{deeplabv3plus_gru_forward.31} parent=0 // pred_fallthru
    _
  // Predicated region
  $region10: #{deeplabv3plus_gru_forward.31} parent=0 // pred_check
    _
  $region11: #{deeplabv3plus_gru_forward.31} parent=0 // pred_check_branch
    %13 = sbr.rel (0) target = $region13
  $region12: #{deeplabv3plus_gru_forward.31} parent=0 // pred_region
    _
  $region13: #{deeplabv3plus_gru_forward.31} parent=0 // pred_fallthru
    _
  %p15 = scmp.eq.s32.totalorder 0, 0
  // Predicated region
  $region14: #{deeplabv3plus_gru_forward.31} parent=0 // pred_check
    %p16 = pneg %p15
  $region15: #{deeplabv3plus_gru_forward.31} parent=0 // pred_check_branch
    %18 = sbr.rel (%p16) target = $region17
  $region16: #{deeplabv3plus_gru_forward.31} parent=0 // pred_region
    %19 = vst [vmem:[#allocation2] sm:$0xff] 0.0
    %20 = vst [vmem:[#allocation2 + $0x8] sm:$0xff] 0.0
    %21 = vst [vmem:[#allocation2 + $0x10] sm:$0xff] 0.0
    %22 = vst [vmem:[#allocation2 + $0x18] sm:$0xff] 0.0
  $region17: #{deeplabv3plus_gru_forward.31} parent=0 // pred_fallthru
    _
  %v23 = vld [vmem:[#allocation2] sm:$0xff]
  %v24 = vld [vmem:[#allocation2 + $0x8] sm:$0xff]
  %v25 = vld [vmem:[#allocation2 + $0x10] sm:$0xff]
  %v26 = vld [vmem:[#allocation2 + $0x18] sm:$0xff]
  %v27 = vld [vmem:[%s0] sm:$0xff]
  %v28 = vld [vmem:[%s0 + $0x8] sm:$0xff]
  %v29 = vld [vmem:[%s0 + $0x10] sm:$0xff]
  %v30 = vld [vmem:[%s0 + $0x18] sm:$0xff]
  %v31 = vld [vmem:[%s1] sm:$0xf]
  %v32 = vld [vmem:[%s1 + $0x4] sm:$0xf]
  %v33 = vld [vmem:[%s1 + $0x8] sm:$0xf]
  %v34 = vld [vmem:[%s1 + $0xc] sm:$0xf]
  %v35 = vld [vmem:[%s1 + $0x10] sm:$0xf]
  %v36 = vld [vmem:[%s1 + $0x14] sm:$0xf]
  %v37 = vld [vmem:[%s1 + $0x18] sm:$0xf]
  %v38 = vld [vmem:[%s1 + $0x1c] sm:$0xf]
  %v39 = vld [vmem:[%s1 + $0x20] sm:$0xf]
  %v40 = vld [vmem:[%s1 + $0x24] sm:$0xf]
  %v41 = vld [vmem:[%s1 + $0x28] sm:$0xf]
  %v42 = vld [vmem:[%s1 + $0x2c] sm:$0xf]
  %v43 = vld [vmem:[%s1 + $0x30] sm:$0xf]
  %v44 = vld [vmem:[%s1 + $0x34] sm:$0xf]
  %v45 = vld [vmem:[%s1 + $0x38] sm:$0xf]
  %v46 = vld [vmem:[%s1 + $0x3c] sm:$0xf]
  %v47 = vld [vmem:[%s1 + $0x40] sm:$0xf]
  %v48 = vld [vmem:[%s1 + $0x44] sm:$0xf]
  %v49 = vld [vmem:[%s1 + $0x48] sm:$0xf]
  %v50 = vld [vmem:[%s1 + $0x4c] sm:$0xf]
  %v51 = vld [vmem:[%s1 + $0x50] sm:$0xf]
  %v52 = vld [vmem:[%s1 + $0x54] sm:$0xf]
  %v53 = vld [vmem:[%s1 + $0x58] sm:$0xf]
  %v54 = vld [vmem:[%s1 + $0x5c] sm:$0xf]
  %v55 = vld [vmem:[%s1 + $0x60] sm:$0xf]
  %v56 = vld [vmem:[%s1 + $0x64] sm:$0xf]
  %v57 = vld [vmem:[%s1 + $0x68] sm:$0xf]
  %v58 = vld [vmem:[%s1 + $0x6c] sm:$0xf]
  %v59 = vld [vmem:[%s1 + $0x70] sm:$0xf]
  %v60 = vld [vmem:[%s1 + $0x74] sm:$0xf]
  %v61 = vld [vmem:[%s1 + $0x78] sm:$0xf]
  %v62 = vld [vmem:[%s1 + $0x7c] sm:$0xf]
  %v67 = vunpack.c.l.b16 %v27
  %v68 = vunpack.c.h.b16 %v27
  %v69 = vunpack.c.l.b16 %v28
  %v70 = vunpack.c.h.b16 %v28
  %v71 = vunpack.c.l.b16 %v29
  %v72 = vunpack.c.h.b16 %v29
  %v73 = vunpack.c.l.b16 %v30
  %v74 = vunpack.c.h.b16 %v30
  %v75 = vpack.c.b16 %v69, %v67
  %v76 = vpack.c.b16 %v70, %v68
  %v77 = vpack.c.b16 %v73, %v71
  %v78 = vpack.c.b16 %v74, %v72
  %v115 = vunpack.c.l.b16 %v31
  %v116 = vunpack.c.l.b16 %v32
  %v117 = vunpack.c.l.b16 %v33
  %v118 = vunpack.c.l.b16 %v34
  %v119 = vunpack.c.l.b16 %v35
  %v120 = vunpack.c.l.b16 %v36
  %v121 = vunpack.c.l.b16 %v37
  %v122 = vunpack.c.l.b16 %v38
  %v123 = vunpack.c.l.b16 %v39
  %v124 = vunpack.c.l.b16 %v40
  %v125 = vunpack.c.l.b16 %v41
  %v126 = vunpack.c.l.b16 %v42
  %v127 = vunpack.c.l.b16 %v43
  %v128 = vunpack.c.l.b16 %v44
  %v129 = vunpack.c.l.b16 %v45
  %v130 = vunpack.c.l.b16 %v46
  %v131 = vunpack.c.l.b16 %v47
  %v132 = vunpack.c.l.b16 %v48
  %v133 = vunpack.c.l.b16 %v49
  %v134 = vunpack.c.l.b16 %v50
  %v135 = vunpack.c.l.b16 %v51
  %v136 = vunpack.c.l.b16 %v52
  %v137 = vunpack.c.l.b16 %v53
  %v138 = vunpack.c.l.b16 %v54
  %v139 = vunpack.c.l.b16 %v55
  %v140 = vunpack.c.l.b16 %v56
  %v141 = vunpack.c.l.b16 %v57
  %v142 = vunpack.c.l.b16 %v58
  %v143 = vunpack.c.l.b16 %v59
  %v144 = vunpack.c.l.b16 %v60
  %v145 = vunpack.c.l.b16 %v61
  %v146 = vunpack.c.l.b16 %v62
  %v147 = vpack.c.b16 %v116, %v115
  %v148 = vpack.c.b16 %v118, %v117
  %v149 = vpack.c.b16 %v120, %v119
  %v150 = vpack.c.b16 %v122, %v121
  %v151 = vpack.c.b16 %v124, %v123
  %v152 = vpack.c.b16 %v126, %v125
  %v153 = vpack.c.b16 %v128, %v127
  %v154 = vpack.c.b16 %v130, %v129
  %v155 = vpack.c.b16 %v132, %v131
  %v156 = vpack.c.b16 %v134, %v133
  %v157 = vpack.c.b16 %v136, %v135
  %v158 = vpack.c.b16 %v138, %v137
  %v159 = vpack.c.b16 %v140, %v139
  %v160 = vpack.c.b16 %v142, %v141
  %v161 = vpack.c.b16 %v144, %v143
  %v162 = vpack.c.b16 %v146, %v145
  %179 = vmatprep.subr.bf16.mxu0 0
  %180 = vmatpush1.bf16.msra.mxu0 %v147
  %181 = vmatprep.subr.bf16.mxu0 0
  %182 = vmatpush1.bf16.msra.mxu0 %v148
  %183 = vmatprep.subr.bf16.mxu0 0
  %184 = vmatpush1.bf16.msra.mxu0 %v149
  %185 = vmatprep.subr.bf16.mxu0 0
  %186 = vmatpush1.bf16.msra.mxu0 %v150
  %187 = vmatprep.subr.bf16.mxu0 0
  %188 = vmatpush1.bf16.msra.mxu0 %v151
  %189 = vmatprep.subr.bf16.mxu0 0
  %190 = vmatpush1.bf16.msra.mxu0 %v152
  %191 = vmatprep.subr.bf16.mxu0 0
  %192 = vmatpush1.bf16.msra.mxu0 %v153
  %193 = vmatprep.subr.bf16.mxu0 0
  %194 = vmatpush1.bf16.msra.mxu0 %v154
  %195 = vmatprep.subr.bf16.mxu0 0
  %196 = vmatpush1.bf16.msra.mxu0 %v155
  %197 = vmatprep.subr.bf16.mxu0 0
  %198 = vmatpush1.bf16.msra.mxu0 %v156
  %199 = vmatprep.subr.bf16.mxu0 0
  %200 = vmatpush1.bf16.msra.mxu0 %v157
  %201 = vmatprep.subr.bf16.mxu0 0
  %202 = vmatpush1.bf16.msra.mxu0 %v158
  %203 = vmatprep.subr.bf16.mxu0 0
  %204 = vmatpush1.bf16.msra.mxu0 %v159
  %205 = vmatprep.subr.bf16.mxu0 0
  %206 = vmatpush1.bf16.msra.mxu0 %v160
  %207 = vmatprep.subr.bf16.mxu0 0
  %208 = vmatpush1.bf16.msra.mxu0 %v161
  %209 = vmatprep.subr.bf16.mxu0 0
  %210 = vmatpush1.bf16.msra.mxu0 %v162
  %211 = vmatprep.mubr.bf16.mxu0 %v76
  %212 = vmatmul.mubr.bf16.gmra.mrb[0].mxu0 %v75
  %v213 = vpop.f32.mrb[0].mxu0
  %v214 = vadd.f32 0.0, %v213
  %v215 = vpop.f32.mrb[0].mxu0
  %v216 = vpop.f32.mrb[0].mxu0
  %v217 = vadd.f32 0.0, %v216
  %v218 = vpop.f32.mrb[0].mxu0
  %219 = vmatprep.mubr.bf16.mxu0 %v78
  %220 = vmatmul.mubr.bf16.gmra.mrb[0].mxu0 %v77
  %v221 = vpop.f32.mrb[0].mxu0
  %v222 = vadd.f32 0.0, %v221
  %v223 = vpop.f32.mrb[0].mxu0
  %v224 = vpop.f32.mrb[0].mxu0
  %v225 = vadd.f32 0.0, %v224
  %v226 = vpop.f32.mrb[0].mxu0
  %227 = vdwg.mxu0
  %v228 = vadd.f32 %v23, %v214
  %v229 = vadd.f32 %v24, %v217
  %v230 = vadd.f32 %v25, %v222
  %v231 = vadd.f32 %v26, %v225
  %232 = vst [vmem:[#allocation2] sm:$0xff] %v228
  %233 = vst [vmem:[#allocation2 + $0x8] sm:$0xff] %v229
  %234 = vst [vmem:[#allocation2 + $0x10] sm:$0xff] %v230
  %235 = vst [vmem:[#allocation2 + $0x18] sm:$0xff] %v231
  // Predicated region
  $region18: #{deeplabv3plus_gru_forward.31} parent=0 // pred_check
    %p236 = pneg %p15
  $region19: #{deeplabv3plus_gru_forward.31} parent=0 // pred_check_branch
    %238 = sbr.rel (%p236) target = $region21
  $region20: #{deeplabv3plus_gru_forward.31} parent=0 // pred_region
    %v239 = vld [vmem:[#allocation2] sm:$0xff]
    %v240 = vld [vmem:[#allocation2 + $0x8] sm:$0xff]
    %v241 = vld [vmem:[#allocation2 + $0x10] sm:$0xff]
    %v242 = vld [vmem:[#allocation2 + $0x18] sm:$0xff]
    %v243 = vld [vmem:[%s2] sm:$0x1]
    %v245 = vlaneseq
    %v246 = vshrl.u32 %v245, 7
    %v247 = vsub.s32 0, %v246
    %v248 = vrot.slane %v243, %v247
    %v250 = vadd.f32 %v239, %v248
    %v251 = vadd.f32 %v240, %v248
    %v252 = vadd.f32 %v241, %v248
    %v253 = vadd.f32 %v242, %v248
    %v254 = vmax.f32 %v250, 0.0
    %v255 = vmax.f32 %v251, 0.0
    %v256 = vmax.f32 %v252, 0.0
    %v257 = vmax.f32 %v253, 0.0
    %v258 = vpack.c.bf16 %v255, %v254
    %v259 = vpack.c.bf16 %v257, %v256
    %v262 = vunpack.c.l.b16 %v258
    %v263 = vunpack.c.h.b16 %v258
    %v264 = vunpack.c.l.b16 %v259
    %v265 = vunpack.c.h.b16 %v259
    %v266 = vpack.c.b16 %v262, %v262
    %v267 = vpack.c.b16 %v263, %v263
    %v268 = vpack.c.b16 %v264, %v264
    %v269 = vpack.c.b16 %v265, %v265
    %274 = vst [vmem:[%s3] sm:$0xf] %v266
    %275 = vst [vmem:[%s3 + $0x4] sm:$0xf] %v267
    %276 = vst [vmem:[%s3 + $0x8] sm:$0xf] %v268
    %277 = vst [vmem:[%s3 + $0xc] sm:$0xf] %v269
  $region21: #{deeplabv3plus_gru_forward.31} parent=0 // pred_fallthru
    _
  // Predicated region
  $region22: #{deeplabv3plus_gru_forward.31} parent=0 // pred_check
    _
  $region23: #{deeplabv3plus_gru_forward.31} parent=0 // pred_check_branch
    %279 = sbr.rel (0) target = $region25
  $region24: #{deeplabv3plus_gru_forward.31} parent=0 // pred_region
    _
  $region25: #{deeplabv3plus_gru_forward.31} parent=0 // pred_fallthru
    _
  // Predicated region
  $region26: #{deeplabv3plus_gru_forward.31} parent=0 // pred_check
    _
  $region27: #{deeplabv3plus_gru_forward.31} parent=0 // pred_check_branch
    %281 = sbr.rel (0) target = $region29
  $region28: #{deeplabv3plus_gru_forward.31} parent=0 // pred_region
    _
  $region29: #{deeplabv3plus_gru_forward.31} parent=0 // pred_fallthru
    _

// kernel: deeplabv3plus_gru_forward.32
$region0: #{deeplabv3plus_gru_forward.32}
  #allocation0 [shape = 'u32[]', space=smem, size = 0x4, offset = 0x4, fixed_abs, tag = 'smem constant byte address 0x4 - core index']
  #allocation1 [shape = 'u32[144,128]{1,0:T(1,128)}', space=vmem, size = 0x12000, scoped, tag = 'internal scratch']
  #allocation2 [shape = 'f32[8,256]{1,0:T(8,128)}', space=vmem, size = 0x2000, scoped, tag = 'scratch operand']
  %s0 = inlined_call_operand.vmem [shape: bf16[8,256], index: 0, kind: input, shape index: {}]
  %s1 = inlined_call_operand.vmem [shape: bf16[256,512], index: 1, kind: input, shape index: {}]
  %s2 = inlined_call_operand.vmem [shape: f32[1,512], index: 2, kind: input, shape index: {}]
  %s3 = inlined_call_operand.vmem [shape: bf16[8,512], index: 3, kind: output, shape index: {}]
  %s4 = sld [smem:[#allocation0]]
  $region91: #{deeplabv3plus_gru_forward.32} parent=0
    _
  %s6 = ssub.s32 1, %s4
  %s7 = scalar_select 0, %s6, %s4
  $region1: #{deeplabv3plus_gru_forward.32} parent=0
    #allocation3 [shape = 'u8[262144]{0}', space=vmem, size = 0x40000, scoped, tag = 'input window, operand 1']
    loop: start=0, step=1, limit=4
    $region2: #{deeplabv3plus_gru_forward.32} parent=1 // loop_pre_header
      _
    $region3: #{deeplabv3plus_gru_forward.32} parent=1 // loop_header
      %s9 = sphi 0, %s13
      %p10 = scmp.ge.s32.totalorder %s9, 4
      %s16 = sphi 0, %s35
      %s17 = sphi 0, %s31
      %s18 = sphi 0, %s27
      %s19 = sphi 0, %s16
      %s20 = sphi 0, %s17
      %s21 = sphi 0, %s18
      %s22 = sphi 0, %s19
      %s23 = sphi 0, %s20
      %s24 = sphi 0, %s21
      %s40 = sphi 0, %s42
      %s43 = sphi 0, %s40
      %s44 = sphi 0, %s43
      %s60 = sphi 0, %s44
      %s68 = sphi 0, %s70
      %s71 = sphi 0, %s68
      %s72 = sphi 0, %s71
      %s88 = sphi 0, %s72
      %s94 = sphi 0, %s96
      %s97 = sphi 0, %s94
      %s98 = sphi 0, %s97
      %s114 = sphi 0, %s98
      %s122 = sphi 0, %s124
      %s125 = sphi 0, %s122
      %s126 = sphi 0, %s125
      %s142 = sphi 0, %s126
    $region4: #{deeplabv3plus_gru_forward.32} parent=1 // loop_header_branch
      %12 = sbr.rel (%p10) target = $region8
    $region5: #{deeplabv3plus_gru_forward.32} parent=1 // loop_body
      %s14 = ssub.s32 %s9, 1
      %s15 = ssub.s32 %s9, 2
      %s25 = sadd.s32 1, %s18
      %p26 = scmp.ge.s32.totalorder %s25, 1
      %s27 = scalar_select %p26, 0, %s25
      %s28 = sadd.s32 1, %s17
      %s29 = scalar_select %p26, %s28, %s17
      %p30 = scmp.ge.s32.totalorder %s29, 2
      %s31 = scalar_select %p30, 0, %s29
      %s32 = sadd.s32 1, %s16
      %s33 = scalar_select %p30, %s32, %s16
      %p34 = scmp.ge.s32.totalorder %s33, 1
      %s35 = scalar_select %p34, 0, %s33
      %s36 = ssub.s32 %s16, %s35
      %s37 = ssub.s32 %s18, %s27
      %s38 = sor.u32 %s36, %s37
      %p39 = scmp.eq.s32.totalorder %s38, 0
      %s41 = sadd.s32 %s40, 1
      %s42 = scalar_select %p39, %s40, %s41
      %p45 = pneg %p39
      %p46 = scmp.eq.s32.totalorder %s9, 1
      %p47 = por %p45, %p46
      %p48 = scmp.ne.s32.totalorder %s40, %s43
      %p49 = scmp.eq.s32.totalorder %s9, 0
      %p50 = por %p48, %p49
      %p51 = scmp.ne.s32.totalorder %s40, %s43
      %p52 = scmp.eq.s32.totalorder %s14, 1
      %p53 = por %p51, %p52
      %p54 = scmp.ne.s32.totalorder %s43, %s44
      %p55 = scmp.eq.s32.totalorder %s14, 0
      %p56 = por %p54, %p55
      %p57 = scmp.ne.s32.totalorder %s43, %s44
      %p58 = scmp.eq.s32.totalorder %s15, 1
      %p59 = por %p57, %p58
      %p61 = scmp.ne.s32.totalorder %s44, %s60
      %p62 = scmp.eq.s32.totalorder %s15, 0
      %p63 = por %p61, %p62
      %s64 = ssub.s32 %s18, %s27
      %s65 = ssub.s32 %s17, %s31
      %s66 = sor.u32 %s64, %s65
      %p67 = scmp.eq.s32.totalorder %s66, 0
      %s69 = sadd.s32 %s68, 1
      %s70 = scalar_select %p67, %s68, %s69
      %p73 = pneg %p67
      %p74 = scmp.eq.s32.totalorder %s9, 1
      %p75 = por %p73, %p74
      %p76 = scmp.ne.s32.totalorder %s68, %s71
      %p77 = scmp.eq.s32.totalorder %s9, 0
      %p78 = por %p76, %p77
      %p79 = scmp.ne.s32.totalorder %s68, %s71
      %p80 = scmp.eq.s32.totalorder %s14, 1
      %p81 = por %p79, %p80
      %p82 = scmp.ne.s32.totalorder %s71, %s72
      %p83 = scmp.eq.s32.totalorder %s14, 0
      %p84 = por %p82, %p83
      %p85 = scmp.ne.s32.totalorder %s71, %s72
      %p86 = scmp.eq.s32.totalorder %s15, 1
      %p87 = por %p85, %p86
      %p89 = scmp.ne.s32.totalorder %s72, %s88
      %p90 = scmp.eq.s32.totalorder %s15, 0
      %p91 = por %p89, %p90
      %s92 = ssub.s32 %s17, %s31
      %p93 = scmp.eq.s32.totalorder %s92, 0
      %s95 = sadd.s32 %s94, 1
      %s96 = scalar_select %p93, %s94, %s95
      %p99 = pneg %p93
      %p100 = scmp.eq.s32.totalorder %s9, 1
      %p101 = por %p99, %p100
      %p102 = scmp.ne.s32.totalorder %s94, %s97
      %p103 = scmp.eq.s32.totalorder %s9, 0
      %p104 = por %p102, %p103
      %p105 = scmp.ne.s32.totalorder %s94, %s97
      %p106 = scmp.eq.s32.totalorder %s14, 1
      %p107 = por %p105, %p106
      %p108 = scmp.ne.s32.totalorder %s97, %s98
      %p109 = scmp.eq.s32.totalorder %s14, 0
      %p110 = por %p108, %p109
      %p111 = scmp.ne.s32.totalorder %s97, %s98
      %p112 = scmp.eq.s32.totalorder %s15, 1
      %p113 = por %p111, %p112
      %p115 = scmp.ne.s32.totalorder %s98, %s114
      %p116 = scmp.eq.s32.totalorder %s15, 0
      %p117 = por %p115, %p116
      %s118 = ssub.s32 %s16, %s35
      %s119 = ssub.s32 %s17, %s31
      %s120 = sor.u32 %s118, %s119
      %p121 = scmp.eq.s32.totalorder %s120, 0
      %s123 = sadd.s32 %s122, 1
      %s124 = scalar_select %p121, %s122, %s123
      %p127 = pneg %p121
      %p128 = scmp.eq.s32.totalorder %s9, 1
      %p129 = por %p127, %p128
      %p130 = scmp.ne.s32.totalorder %s122, %s125
      %p131 = scmp.eq.s32.totalorder %s9, 0
      %p132 = por %p130, %p131
      %p133 = scmp.ne.s32.totalorder %s122, %s125
      %p134 = scmp.eq.s32.totalorder %s14, 1
      %p135 = por %p133, %p134
      %p136 = scmp.ne.s32.totalorder %s125, %s126
      %p137 = scmp.eq.s32.totalorder %s14, 0
      %p138 = por %p136, %p137
      %p139 = scmp.ne.s32.totalorder %s125, %s126
      %p140 = scmp.eq.s32.totalorder %s15, 1
      %p141 = por %p139, %p140
      %p143 = scmp.ne.s32.totalorder %s126, %s142
      %p144 = scmp.eq.s32.totalorder %s15, 0
      %p145 = por %p143, %p144
      %p146 = scmp.le.s32.totalorder 1, %s9
      %p147 = scmp.lt.s32.totalorder %s9, 3
      %p148 = pnand %p146, %p147
      %p149 = pneg %p148
      // Predicated region
      $region9: #{deeplabv3plus_gru_forward.32} parent=5 // pred_check
        _
      $region10: #{deeplabv3plus_gru_forward.32} parent=5 // pred_check_branch
        %151 = sbr.rel (%p148) target = $region12
      $region11: #{deeplabv3plus_gru_forward.32} parent=5 // pred_region
        %s152 = ssub.s32 %s9, 1
        // Predicated region
        $region13: #{deeplabv3plus_gru_forward.32} parent=11 // pred_check
          %p153 = pneg %p56
        $region14: #{deeplabv3plus_gru_forward.32} parent=11 // pred_check_branch
          %155 = sbr.rel (%p153) target = $region16
        $region15: #{deeplabv3plus_gru_forward.32} parent=11 // pred_region
          %s156 = smul.u32 2, %s21
          %p157 = scmp.lt.s32.totalorder %s19, 0
          %s158 = scalar_select %p157, %s19, 0
          %p159 = scmp.lt.s32.totalorder %s156, 1
          %s160 = scalar_select %p159, %s156, 1
          %s161 = smul.addr %s158, 2
          %s162 = sadd.s32 %s160, %s161
          %s163 = smul.addr %s162, 4
          %s164 = scalar_lea.vmem %s0, %s163
          %s165 = smul.u32 2, %s21
        $region16: #{deeplabv3plus_gru_forward.32} parent=11 // pred_fallthru
          _
      $region12: #{deeplabv3plus_gru_forward.32} parent=5 // pred_fallthru
        _
      %p166 = scmp.lt.s32.totalorder %s9, 2
      // Predicated region
      $region17: #{deeplabv3plus_gru_forward.32} parent=5 // pred_check
        %p167 = pneg %p166
      $region18: #{deeplabv3plus_gru_forward.32} parent=5 // pred_check_branch
        %169 = sbr.rel (%p167) target = $region20
      $region19: #{deeplabv3plus_gru_forward.32} parent=5 // pred_region
        // Predicated region
        $region21: #{deeplabv3plus_gru_forward.32} parent=19 // pred_check
          %p170 = pneg %p78
        $region22: #{deeplabv3plus_gru_forward.32} parent=19 // pred_check_branch
          %172 = sbr.rel (%p170) target = $region24
        $region23: #{deeplabv3plus_gru_forward.32} parent=19 // pred_region
          %s173 = sand.u32 %s68, 1
          %s174 = sand.u32 %s68, 1
          %s175 = smul.addr %s174, 256
          %s176 = scalar_lea.vmem [#allocation3], %s175
          %s177 = smul.u32 32, %s18
          %s178 = smul.u32 2, %s17
          %s179 = smul.addr %s177, 4
          %s180 = sadd.s32 %s178, %s179
          %s181 = smul.addr %s180, 4
          %s182 = scalar_lea.vmem %s1, %s181
          // Predicated region
          $region25: #{deeplabv3plus_gru_forward.32} parent=23 // pred_check
            _
          $region26: #{deeplabv3plus_gru_forward.32} parent=23 // pred_check_branch
            %184 = sbr.rel (0) target = $region28
          $region27: #{deeplabv3plus_gru_forward.32} parent=23 // pred_region
            // Predicated region
            $region29: #{deeplabv3plus_gru_forward.32} parent=27 // pred_check
              _
            $region30: #{deeplabv3plus_gru_forward.32} parent=27 // pred_check_branch
              %186 = sbr.rel (0) target = $region32
            $region31: #{deeplabv3plus_gru_forward.32} parent=27 // pred_region
              // Predicated region
              $region44: #{deeplabv3plus_gru_forward.32} parent=31 // pred_check
                _
              $region45: #{deeplabv3plus_gru_forward.32} parent=31 // pred_check_branch
                %263 = sbr.rel (0) target = $region47
              $region46: #{deeplabv3plus_gru_forward.32} parent=31 // pred_region
                loop: start=0, step=1, limit=1
                $region48: #{deeplabv3plus_gru_forward.32} parent=46 // loop_pre_header
                  _
                $region49: #{deeplabv3plus_gru_forward.32} parent=46 // loop_header
                  %s265 = sphi 0, %s269
                  %p266 = scmp.ge.s32.totalorder %s265, 1
                  %s270 = sphi %s182, %s182
                  %s271 = sphi %s176, %s176
                $region50: #{deeplabv3plus_gru_forward.32} parent=46 // loop_header_branch
                  %268 = sbr.rel (%p266) target = $region54
                $region51: #{deeplabv3plus_gru_forward.32} parent=46 // loop_body
                  %v272 = vld [vmem:[%s270] sm:$0xff]
                  %273 = vst [vmem:[%s271] sm:$0xff] %v272
                  %v274 = vld [vmem:[%s270 + $0x10] sm:$0xff]
                  %275 = vst [vmem:[%s271 + $0x8] sm:$0xff] %v274
                  %v276 = vld [vmem:[%s270 + $0x20] sm:$0xff]
                  %277 = vst [vmem:[%s271 + $0x10] sm:$0xff] %v276
                  %v278 = vld [vmem:[%s270 + $0x30] sm:$0xff]
                  %279 = vst [vmem:[%s271 + $0x18] sm:$0xff] %v278
                  %v280 = vld [vmem:[%s270 + $0x40] sm:$0xff]
                  %281 = vst [vmem:[%s271 + $0x20] sm:$0xff] %v280
                  %v282 = vld [vmem:[%s270 + $0x50] sm:$0xff]
                  %283 = vst [vmem:[%s271 + $0x28] sm:$0xff] %v282
                  %v284 = vld [vmem:[%s270 + $0x60] sm:$0xff]
                  %285 = vst [vmem:[%s271 + $0x30] sm:$0xff] %v284
                  %v286 = vld [vmem:[%s270 + $0x70] sm:$0xff]
                  %287 = vst [vmem:[%s271 + $0x38] sm:$0xff] %v286
                  %v288 = vld [vmem:[%s270 + $0x80] sm:$0xff]
                  %289 = vst [vmem:[%s271 + $0x40] sm:$0xff] %v288
                  %v290 = vld [vmem:[%s270 + $0x90] sm:$0xff]
                  %291 = vst [vmem:[%s271 + $0x48] sm:$0xff] %v290
                  %v292 = vld [vmem:[%s270 + $0xa0] sm:$0xff]
                  %293 = vst [vmem:[%s271 + $0x50] sm:$0xff] %v292
                  %v294 = vld [vmem:[%s270 + $0xb0] sm:$0xff]
                  %295 = vst [vmem:[%s271 + $0x58] sm:$0xff] %v294
                  %v296 = vld [vmem:[%s270 + $0xc0] sm:$0xff]
                  %297 = vst [vmem:[%s271 + $0x60] sm:$0xff] %v296
                  %v298 = vld [vmem:[%s270 + $0xd0] sm:$0xff]
                  %299 = vst [vmem:[%s271 + $0x68] sm:$0xff] %v298
                  %v300 = vld [vmem:[%s270 + $0xe0] sm:$0xff]
                  %301 = vst [vmem:[%s271 + $0x70] sm:$0xff] %v300
                  %v302 = vld [vmem:[%s270 + $0xf0] sm:$0xff]
                  %303 = vst [vmem:[%s271 + $0x78] sm:$0xff] %v302
                  %v304 = vld [vmem:[%s270 + $0x100] sm:$0xff]
                  %305 = vst [vmem:[%s271 + $0x80] sm:$0xff] %v304
                  %v306 = vld [vmem:[%s270 + $0x110] sm:$0xff]
                  %307 = vst [vmem:[%s271 + $0x88] sm:$0xff] %v306
                  %v308 = vld [vmem:[%s270 + $0x120] sm:$0xff]
                  %309 = vst [vmem:[%s271 + $0x90] sm:$0xff] %v308
                  %v310 = vld [vmem:[%s270 + $0x130] sm:$0xff]
                  %311 = vst [vmem:[%s271 + $0x98] sm:$0xff] %v310
                  %v312 = vld [vmem:[%s270 + $0x140] sm:$0xff]
                  %313 = vst [vmem:[%s271 + $0xa0] sm:$0xff] %v312
                  %v314 = vld [vmem:[%s270 + $0x150] sm:$0xff]
                  %315 = vst [vmem:[%s271 + $0xa8] sm:$0xff] %v314
                  %v316 = vld [vmem:[%s270 + $0x160] sm:$0xff]
                  %317 = vst [vmem:[%s271 + $0xb0] sm:$0xff] %v316
                  %v318 = vld [vmem:[%s270 + $0x170] sm:$0xff]
                  %319 = vst [vmem:[%s271 + $0xb8] sm:$0xff] %v318
                  %v320 = vld [vmem:[%s270 + $0x180] sm:$0xff]
                  %321 = vst [vmem:[%s271 + $0xc0] sm:$0xff] %v320
                  %v322 = vld [vmem:[%s270 + $0x190] sm:$0xff]
                  %323 = vst [vmem:[%s271 + $0xc8] sm:$0xff] %v322
                  %v324 = vld [vmem:[%s270 + $0x1a0] sm:$0xff]
                  %325 = vst [vmem:[%s271 + $0xd0] sm:$0xff] %v324
                  %v326 = vld [vmem:[%s270 + $0x1b0] sm:$0xff]
                  %327 = vst [vmem:[%s271 + $0xd8] sm:$0xff] %v326
                  %v328 = vld [vmem:[%s270 + $0x1c0] sm:$0xff]
                  %329 = vst [vmem:[%s271 + $0xe0] sm:$0xff] %v328
                  %v330 = vld [vmem:[%s270 + $0x1d0] sm:$0xff]
                  %331 = vst [vmem:[%s271 + $0xe8] sm:$0xff] %v330
                  %v332 = vld [vmem:[%s270 + $0x1e0] sm:$0xff]
                  %333 = vst [vmem:[%s271 + $0xf0] sm:$0xff] %v332
                  %v334 = vld [vmem:[%s270 + $0x1f0] sm:$0xff]
                  %335 = vst [vmem:[%s271 + $0xf8] sm:$0xff] %v334
                $region52: #{deeplabv3plus_gru_forward.32} parent=46 // loop_footer
                  %s269 = sadd.s32 1, %s265
                $region53: #{deeplabv3plus_gru_forward.32} parent=46 // loop_footer_branch
                  %264 = sbr.rel target = $region49
                $region54: #{deeplabv3plus_gru_forward.32} parent=46 // loop_exit
                  _
              $region47: #{deeplabv3plus_gru_forward.32} parent=31 // pred_fallthru
                _
              // Predicated region
              $region55: #{deeplabv3plus_gru_forward.32} parent=31 // pred_check
                _
              $region56: #{deeplabv3plus_gru_forward.32} parent=31 // pred_check_branch
                %337 = sbr.rel target = $region58
              $region57: #{deeplabv3plus_gru_forward.32} parent=31 // pred_region
                _
              $region58: #{deeplabv3plus_gru_forward.32} parent=31 // pred_fallthru
                _
            $region32: #{deeplabv3plus_gru_forward.32} parent=27 // pred_fallthru
              _
            // Predicated region
            $region33: #{deeplabv3plus_gru_forward.32} parent=27 // pred_check
              _
            $region34: #{deeplabv3plus_gru_forward.32} parent=27 // pred_check_branch
              %188 = sbr.rel target = $region36
            $region35: #{deeplabv3plus_gru_forward.32} parent=27 // pred_region
              loop: start=0, step=1, limit=1
              $region37: #{deeplabv3plus_gru_forward.32} parent=35 // loop_pre_header
                _
              $region38: #{deeplabv3plus_gru_forward.32} parent=35 // loop_header
                %s191 = sphi 0, %s195
                %p192 = scmp.ge.s32.totalorder %s191, 1
                %s196 = sphi %s182, %s182
                %s197 = sphi %s176, %s176
              $region39: #{deeplabv3plus_gru_forward.32} parent=35 // loop_header_branch
                %194 = sbr.rel (%p192) target = $region43
              $region40: #{deeplabv3plus_gru_forward.32} parent=35 // loop_body
                %v198 = vld [vmem:[%s196] sm:$0xff]
                %199 = vst [vmem:[%s197] sm:$0xff] %v198
                %v200 = vld [vmem:[%s196 + $0x10] sm:$0xff]
                %201 = vst [vmem:[%s197 + $0x8] sm:$0xff] %v200
                %v202 = vld [vmem:[%s196 + $0x20] sm:$0xff]
                %203 = vst [vmem:[%s197 + $0x10] sm:$0xff] %v202
                %v204 = vld [vmem:[%s196 + $0x30] sm:$0xff]
                %205 = vst [vmem:[%s197 + $0x18] sm:$0xff] %v204
                %v206 = vld [vmem:[%s196 + $0x40] sm:$0xff]
                %207 = vst [vmem:[%s197 + $0x20] sm:$0xff] %v206
                %v208 = vld [vmem:[%s196 + $0x50] sm:$0xff]
                %209 = vst [vmem:[%s197 + $0x28] sm:$0xff] %v208
                %v210 = vld [vmem:[%s196 + $0x60] sm:$0xff]
                %211 = vst [vmem:[%s197 + $0x30] sm:$0xff] %v210
                %v212 = vld [vmem:[%s196 + $0x70] sm:$0xff]
                %213 = vst [vmem:[%s197 + $0x38] sm:$0xff] %v212
                %v214 = vld [vmem:[%s196 + $0x80] sm:$0xff]
                %215 = vst [vmem:[%s197 + $0x40] sm:$0xff] %v214
                %v216 = vld [vmem:[%s196 + $0x90] sm:$0xff]
                %217 = vst [vmem:[%s197 + $0x48] sm:$0xff] %v216
                %v218 = vld [vmem:[%s196 + $0xa0] sm:$0xff]
                %219 = vst [vmem:[%s197 + $0x50] sm:$0xff] %v218
                %v220 = vld [vmem:[%s196 + $0xb0] sm:$0xff]
                %221 = vst [vmem:[%s197 + $0x58] sm:$0xff] %v220
                %v222 = vld [vmem:[%s196 + $0xc0] sm:$0xff]
                %223 = vst [vmem:[%s197 + $0x60] sm:$0xff] %v222
                %v224 = vld [vmem:[%s196 + $0xd0] sm:$0xff]
                %225 = vst [vmem:[%s197 + $0x68] sm:$0xff] %v224
                %v226 = vld [vmem:[%s196 + $0xe0] sm:$0xff]
                %227 = vst [vmem:[%s197 + $0x70] sm:$0xff] %v226
                %v228 = vld [vmem:[%s196 + $0xf0] sm:$0xff]
                %229 = vst [vmem:[%s197 + $0x78] sm:$0xff] %v228
                %v230 = vld [vmem:[%s196 + $0x100] sm:$0xff]
                %231 = vst [vmem:[%s197 + $0x80] sm:$0xff] %v230
                %v232 = vld [vmem:[%s196 + $0x110] sm:$0xff]
                %233 = vst [vmem:[%s197 + $0x88] sm:$0xff] %v232
                %v234 = vld [vmem:[%s196 + $0x120] sm:$0xff]
                %235 = vst [vmem:[%s197 + $0x90] sm:$0xff] %v234
                %v236 = vld [vmem:[%s196 + $0x130] sm:$0xff]
                %237 = vst [vmem:[%s197 + $0x98] sm:$0xff] %v236
                %v238 = vld [vmem:[%s196 + $0x140] sm:$0xff]
                %239 = vst [vmem:[%s197 + $0xa0] sm:$0xff] %v238
                %v240 = vld [vmem:[%s196 + $0x150] sm:$0xff]
                %241 = vst [vmem:[%s197 + $0xa8] sm:$0xff] %v240
                %v242 = vld [vmem:[%s196 + $0x160] sm:$0xff]
                %243 = vst [vmem:[%s197 + $0xb0] sm:$0xff] %v242
                %v244 = vld [vmem:[%s196 + $0x170] sm:$0xff]
                %245 = vst [vmem:[%s197 + $0xb8] sm:$0xff] %v244
                %v246 = vld [vmem:[%s196 + $0x180] sm:$0xff]
                %247 = vst [vmem:[%s197 + $0xc0] sm:$0xff] %v246
                %v248 = vld [vmem:[%s196 + $0x190] sm:$0xff]
                %249 = vst [vmem:[%s197 + $0xc8] sm:$0xff] %v248
                %v250 = vld [vmem:[%s196 + $0x1a0] sm:$0xff]
                %251 = vst [vmem:[%s197 + $0xd0] sm:$0xff] %v250
                %v252 = vld [vmem:[%s196 + $0x1b0] sm:$0xff]
                %253 = vst [vmem:[%s197 + $0xd8] sm:$0xff] %v252
                %v254 = vld [vmem:[%s196 + $0x1c0] sm:$0xff]
                %255 = vst [vmem:[%s197 + $0xe0] sm:$0xff] %v254
                %v256 = vld [vmem:[%s196 + $0x1d0] sm:$0xff]
                %257 = vst [vmem:[%s197 + $0xe8] sm:$0xff] %v256
                %v258 = vld [vmem:[%s196 + $0x1e0] sm:$0xff]
                %259 = vst [vmem:[%s197 + $0xf0] sm:$0xff] %v258
                %v260 = vld [vmem:[%s196 + $0x1f0] sm:$0xff]
                %261 = vst [vmem:[%s197 + $0xf8] sm:$0xff] %v260
              $region41: #{deeplabv3plus_gru_forward.32} parent=35 // loop_footer
                %s195 = sadd.s32 1, %s191
              $region42: #{deeplabv3plus_gru_forward.32} parent=35 // loop_footer_branch
                %190 = sbr.rel target = $region38
              $region43: #{deeplabv3plus_gru_forward.32} parent=35 // loop_exit
                _
            $region36: #{deeplabv3plus_gru_forward.32} parent=27 // pred_fallthru
              _
          $region28: #{deeplabv3plus_gru_forward.32} parent=23 // pred_fallthru
            _
          %338 = vnop
        $region24: #{deeplabv3plus_gru_forward.32} parent=19 // pred_fallthru
          _
        // Predicated region
        $region59: #{deeplabv3plus_gru_forward.32} parent=19 // pred_check
          %p339 = pneg %p104
        $region60: #{deeplabv3plus_gru_forward.32} parent=19 // pred_check_branch
          %341 = sbr.rel (%p339) target = $region62
        $region61: #{deeplabv3plus_gru_forward.32} parent=19 // pred_region
          %s342 = smul.u32 2, %s17
          %p343 = scmp.lt.s32.totalorder %s342, 3
          %s344 = scalar_select %p343, %s342, 3
          %s345 = scalar_lea.vmem %s2, %s344
          %s346 = smul.u32 2, %s17
        $region62: #{deeplabv3plus_gru_forward.32} parent=19 // pred_fallthru
          _
      $region20: #{deeplabv3plus_gru_forward.32} parent=5 // pred_fallthru
        _
      %p347 = scmp.le.s32.totalorder 1, %s9
      %p348 = scmp.lt.s32.totalorder %s9, 3
      %p349 = pnand %p347, %p348
      %p350 = pneg %p349
      // Predicated region
      $region63: #{deeplabv3plus_gru_forward.32} parent=5 // pred_check
        _
      $region64: #{deeplabv3plus_gru_forward.32} parent=5 // pred_check_branch
        %352 = sbr.rel (%p349) target = $region66
      $region65: #{deeplabv3plus_gru_forward.32} parent=5 // pred_region
        %s353 = ssub.s32 %s9, 1
        %s354 = sand.u32 %s71, 1
        %s355 = sand.u32 %s71, 1
        %s356 = smul.addr %s355, 256
        %s357 = scalar_lea.vmem [#allocation3], %s356
        // Predicated region
        $region67: #{deeplabv3plus_gru_forward.32} parent=65 // pred_check
          %p358 = pneg %p84
        $region68: #{deeplabv3plus_gru_forward.32} parent=65 // pred_check_branch
          %360 = sbr.rel (%p358) target = $region70
        $region69: #{deeplabv3plus_gru_forward.32} parent=65 // pred_region
          _
        $region70: #{deeplabv3plus_gru_forward.32} parent=65 // pred_fallthru
          _
        %s361 = smul.u32 2, %s21
        %p362 = scmp.lt.s32.totalorder %s19, 0
        %s363 = scalar_select %p362, %s19, 0
        %p364 = scmp.lt.s32.totalorder %s361, 1
        %s365 = scalar_select %p364, %s361, 1
        %s366 = smul.addr %s363, 2
        %s367 = sadd.s32 %s365, %s366
        %s368 = smul.addr %s367, 4
        %s369 = scalar_lea.vmem %s0, %s368
        %p370 = pneg %p56
        %p371 = pneg %p53
        %s372 = sand.u32 %s71, 1
        %s373 = sand.u32 %s71, 1
        %s374 = smul.addr %s373, 256
        %s375 = scalar_lea.vmem [#allocation3], %s374
        %p376 = pneg %p84
        %p377 = pneg %p81
        %s378 = smul.u32 2, %s20
        %p379 = scmp.lt.s32.totalorder %s378, 3
        %s380 = scalar_select %p379, %s378, 3
        %s381 = scalar_lea.vmem %s2, %s380
        %p382 = pneg %p110
        %p383 = pneg %p107
        %p384 = pneg %p138
        %p385 = pneg %p135
        %s386 = smul.u32 2, %s20
        %p387 = scmp.lt.s32.totalorder %s19, 0
        %s388 = scalar_select %p387, %s19, 0
        %p389 = scmp.lt.s32.totalorder %s386, 3
        %s390 = scalar_select %p389, %s386, 3
        %s391 = smul.addr %s388, 4
        %s392 = sadd.s32 %s390, %s391
        %s393 = smul.addr %s392, 4
        %s394 = scalar_lea.vmem %s3, %s393
        %s395 = smul.u32 2, %s21
        %p396 = scmp.lt.s32.totalorder %s19, 0
        %s397 = scalar_select %p396, %s19, 0
        %p398 = scmp.lt.s32.totalorder %s395, 1
        %s399 = scalar_select %p398, %s395, 1
        %s400 = smul.addr %s397, 2
        %s401 = sadd.s32 %s399, %s400
        %s402 = smul.addr %s401, 4
        %s403 = scalar_lea.vmem %s0, %s402
        %s404 = smul.u32 2, %s21
        %s405 = smul.u32 32, %s21
        %s406 = smul.u32 2, %s20
        %s407 = smul.u32 2, %s20
        %p408 = scmp.lt.s32.totalorder %s407, 3
        %s409 = scalar_select %p408, %s407, 3
        %s410 = scalar_lea.vmem %s2, %s409
        %s411 = smul.u32 2, %s20
        %s412 = smul.u32 2, %s20
        %p413 = scmp.lt.s32.totalorder %s19, 0
        %s414 = scalar_select %p413, %s19, 0
        %p415 = scmp.lt.s32.totalorder %s412, 3
        %s416 = scalar_select %p415, %s412, 3
        %s417 = smul.addr %s414, 4
        %s418 = sadd.s32 %s416, %s417
        %s419 = smul.addr %s418, 4
        %s420 = scalar_lea.vmem %s3, %s419
        %s421 = smul.u32 2, %s20
        %p422 = scmp.eq.s32.totalorder %s21, 0
        // Predicated region
        $region71: #{deeplabv3plus_gru_forward.32} parent=65 // pred_check
          %p423 = pneg %p422
        $region72: #{deeplabv3plus_gru_forward.32} parent=65 // pred_check_branch
          %425 = sbr.rel (%p423) target = $region74
        $region73: #{deeplabv3plus_gru_forward.32} parent=65 // pred_region
          %426 = vst [vmem:[#allocation2] sm:$0xff] 0.0
          %427 = vst [vmem:[#allocation2 + $0x8] sm:$0xff] 0.0
        $region74: #{deeplabv3plus_gru_forward.32} parent=65 // pred_fallthru
          _
        %v428 = vld [vmem:[#allocation2] sm:$0xff]
        %v429 = vld [vmem:[#allocation2 + $0x8] sm:$0xff]
        %v430 = vld [vmem:[%s403] sm:$0xff]
        %v431 = vld [vmem:[%s357] sm:$0xff]
        %v432 = vld [vmem:[%s357 + $0x8] sm:$0xff]
        %v433 = vld [vmem:[%s357 + $0x10] sm:$0xff]
        %v434 = vld [vmem:[%s357 + $0x18] sm:$0xff]
        %v435 = vld [vmem:[%s357 + $0x20] sm:$0xff]
        %v436 = vld [vmem:[%s357 + $0x28] sm:$0xff]
        %v437 = vld [vmem:[%s357 + $0x30] sm:$0xff]
        %v438 = vld [vmem:[%s357 + $0x38] sm:$0xff]
        %v439 = vld [vmem:[%s357 + $0x40] sm:$0xff]
        %v440 = vld [vmem:[%s357 + $0x48] sm:$0xff]
        %v441 = vld [vmem:[%s357 + $0x50] sm:$0xff]
        %v442 = vld [vmem:[%s357 + $0x58] sm:$0xff]
        %v443 = vld [vmem:[%s357 + $0x60] sm:$0xff]
        %v444 = vld [vmem:[%s357 + $0x68] sm:$0xff]
        %v445 = vld [vmem:[%s357 + $0x70] sm:$0xff]
        %v446 = vld [vmem:[%s357 + $0x78] sm:$0xff]
        %v447 = vld [vmem:[%s357 + $0x80] sm:$0xff]
        %v448 = vld [vmem:[%s357 + $0x88] sm:$0xff]
        %v449 = vld [vmem:[%s357 + $0x90] sm:$0xff]
        %v450 = vld [vmem:[%s357 + $0x98] sm:$0xff]
        %v451 = vld [vmem:[%s357 + $0xa0] sm:$0xff]
        %v452 = vld [vmem:[%s357 + $0xa8] sm:$0xff]
        %v453 = vld [vmem:[%s357 + $0xb0] sm:$0xff]
        %v454 = vld [vmem:[%s357 + $0xb8] sm:$0xff]
        %v455 = vld [vmem:[%s357 + $0xc0] sm:$0xff]
        %v456 = vld [vmem:[%s357 + $0xc8] sm:$0xff]
        %v457 = vld [vmem:[%s357 + $0xd0] sm:$0xff]
        %v458 = vld [vmem:[%s357 + $0xd8] sm:$0xff]
        %v459 = vld [vmem:[%s357 + $0xe0] sm:$0xff]
        %v460 = vld [vmem:[%s357 + $0xe8] sm:$0xff]
        %v461 = vld [vmem:[%s357 + $0xf0] sm:$0xff]
        %v462 = vld [vmem:[%s357 + $0xf8] sm:$0xff]
        %v464 = vunpack.c.l.b16 %v430
        %v465 = vunpack.c.h.b16 %v430
        %v466 = vpack.c.b16 %v464, %v464
        %v467 = vpack.c.b16 %v465, %v465
        %v502 = vunpack.c.l.b16 %v431
        %v503 = vunpack.c.h.b16 %v431
        %v504 = vunpack.c.l.b16 %v432
        %v505 = vunpack.c.h.b16 %v432
        %v506 = vunpack.c.l.b16 %v433
        %v507 = vunpack.c.h.b16 %v433
        %v508 = vunpack.c.l.b16 %v434
        %v509 = vunpack.c.h.b16 %v434
        %v510 = vunpack.c.l.b16 %v435
        %v511 = vunpack.c.h.b16 %v435
        %v512 = vunpack.c.l.b16 %v436
        %v513 = vunpack.c.h.b16 %v436
        %v514 = vunpack.c.l.b16 %v437
        %v515 = vunpack.c.h.b16 %v437
        %v516 = vunpack.c.l.b16 %v438
        %v517 = vunpack.c.h.b16 %v438
        %v518 = vunpack.c.l.b16 %v439
        %v519 = vunpack.c.h.b16 %v439
        %v520 = vunpack.c.l.b16 %v440
        %v521 = vunpack.c.h.b16 %v440
        %v522 = vunpack.c.l.b16 %v441
        %v523 = vunpack.c.h.b16 %v441
        %v524 = vunpack.c.l.b16 %v442
        %v525 = vunpack.c.h.b16 %v442
        %v526 = vunpack.c.l.b16 %v443
        %v527 = vunpack.c.h.b16 %v443
        %v528 = vunpack.c.l.b16 %v444
        %v529 = vunpack.c.h.b16 %v444
        %v530 = vunpack.c.l.b16 %v445
        %v531 = vunpack.c.h.b16 %v445
        %v532 = vunpack.c.l.b16 %v446
        %v533 = vunpack.c.h.b16 %v446
        %v534 = vunpack.c.l.b16 %v447
        %v535 = vunpack.c.h.b16 %v447
        %v536 = vunpack.c.l.b16 %v448
        %v537 = vunpack.c.h.b16 %v448
        %v538 = vunpack.c.l.b16 %v449
        %v539 = vunpack.c.h.b16 %v449
        %v540 = vunpack.c.l.b16 %v450
        %v541 = vunpack.c.h.b16 %v450
        %v542 = vunpack.c.l.b16 %v451
        %v543 = vunpack.c.h.b16 %v451
        %v544 = vunpack.c.l.b16 %v452
        %v545 = vunpack.c.h.b16 %v452
        %v546 = vunpack.c.l.b16 %v453
        %v547 = vunpack.c.h.b16 %v453
        %v548 = vunpack.c.l.b16 %v454
        %v549 = vunpack.c.h.b16 %v454
        %v550 = vunpack.c.l.b16 %v455
        %v551 = vunpack.c.h.b16 %v455
        %v552 = vunpack.c.l.b16 %v456
        %v553 = vunpack.c.h.b16 %v456
        %v554 = vunpack.c.l.b16 %v457
        %v555 = vunpack.c.h.b16 %v457
        %v556 = vunpack.c.l.b16 %v458
        %v557 = vunpack.c.h.b16 %v458
        %v558 = vunpack.c.l.b16 %v459
        %v559 = vunpack.c.h.b16 %v459
        %v560 = vunpack.c.l.b16 %v460
        %v561 = vunpack.c.h.b16 %v460
        %v562 = vunpack.c.l.b16 %v461
        %v563 = vunpack.c.h.b16 %v461
        %v564 = vunpack.c.l.b16 %v462
        %v565 = vunpack.c.h.b16 %v462
        %v566 = vpack.c.b16 %v504, %v502
        %v567 = vpack.c.b16 %v505, %v503
        %v568 = vpack.c.b16 %v508, %v506
        %v569 = vpack.c.b16 %v509, %v507
        %v570 = vpack.c.b16 %v512, %v510
        %v571 = vpack.c.b16 %v513, %v511
        %v572 = vpack.c.b16 %v516, %v514
        %v573 = vpack.c.b16 %v517, %v515
        %v574 = vpack.c.b16 %v520, %v518
        %v575 = vpack.c.b16 %v521, %v519
        %v576 = vpack.c.b16 %v524, %v522
        %v577 = vpack.c.b16 %v525, %v523
        %v578 = vpack.c.b16 %v528, %v526
        %v579 = vpack.c.b16 %v529, %v527
        %v580 = vpack.c.b16 %v532, %v530
        %v581 = vpack.c.b16 %v533, %v531
        %v582 = vpack.c.b16 %v536, %v534
        %v583 = vpack.c.b16 %v537, %v535
        %v584 = vpack.c.b16 %v540, %v538
        %v585 = vpack.c.b16 %v541, %v539
        %v586 = vpack.c.b16 %v544, %v542
        %v587 = vpack.c.b16 %v545, %v543
        %v588 = vpack.c.b16 %v548, %v546
        %v589 = vpack.c.b16 %v549, %v547
        %v590 = vpack.c.b16 %v552, %v550
        %v591 = vpack.c.b16 %v553, %v551
        %v592 = vpack.c.b16 %v556, %v554
        %v593 = vpack.c.b16 %v557, %v555
        %v594 = vpack.c.b16 %v560, %v558
        %v595 = vpack.c.b16 %v561, %v559
        %v596 = vpack.c.b16 %v564, %v562
        %v597 = vpack.c.b16 %v565, %v563
        %630 = vmatprep.subr.bf16.mxu0 %v567
        %631 = vmatpush1.bf16.msra.mxu0 %v566
        %632 = vmatprep.subr.bf16.mxu0 %v569
        %633 = vmatpush1.bf16.msra.mxu0 %v568
        %634 = vmatprep.subr.bf16.mxu0 %v571
        %635 = vmatpush1.bf16.msra.mxu0 %v570
        %636 = vmatprep.subr.bf16.mxu0 %v573
        %637 = vmatpush1.bf16.msra.mxu0 %v572
        %638 = vmatprep.subr.bf16.mxu0 %v575
        %639 = vmatpush1.bf16.msra.mxu0 %v574
        %640 = vmatprep.subr.bf16.mxu0 %v577
        %641 = vmatpush1.bf16.msra.mxu0 %v576
        %642 = vmatprep.subr.bf16.mxu0 %v579
        %643 = vmatpush1.bf16.msra.mxu0 %v578
        %644 = vmatprep.subr.bf16.mxu0 %v581
        %645 = vmatpush1.bf16.msra.mxu0 %v580
        %646 = vmatprep.subr.bf16.mxu0 %v583
        %647 = vmatpush1.bf16.msra.mxu0 %v582
        %648 = vmatprep.subr.bf16.mxu0 %v585
        %649 = vmatpush1.bf16.msra.mxu0 %v584
        %650 = vmatprep.subr.bf16.mxu0 %v587
        %651 = vmatpush1.bf16.msra.mxu0 %v586
        %652 = vmatprep.subr.bf16.mxu0 %v589
        %653 = vmatpush1.bf16.msra.mxu0 %v588
        %654 = vmatprep.subr.bf16.mxu0 %v591
        %655 = vmatpush1.bf16.msra.mxu0 %v590
        %656 = vmatprep.subr.bf16.mxu0 %v593
        %657 = vmatpush1.bf16.msra.mxu0 %v592
        %658 = vmatprep.subr.bf16.mxu0 %v595
        %659 = vmatpush1.bf16.msra.mxu0 %v594
        %660 = vmatprep.subr.bf16.mxu0 %v597
        %661 = vmatpush1.bf16.msra.mxu0 %v596
        %662 = vmatprep.mubr.bf16.mxu0 %v467
        %663 = vmatmul.mubr.bf16.gmra.mrb[0].mxu0 %v466
        %v664 = vpop.f32.mrb[0].mxu0
        %v665 = vadd.f32 0.0, %v664
        %v666 = vpop.f32.mrb[0].mxu0
        %v667 = vadd.f32 0.0, %v666
        %v668 = vpop.f32.mrb[0].mxu0
        %v669 = vpop.f32.mrb[0].mxu0
        %670 = vdwg.mxu0
        %v671 = vadd.f32 %v428, %v665
        %v672 = vadd.f32 %v429, %v667
        %673 = vst [vmem:[#allocation2] sm:$0xff] %v671
        %674 = vst [vmem:[#allocation2 + $0x8] sm:$0xff] %v672
        // Predicated region
        $region75: #{deeplabv3plus_gru_forward.32} parent=65 // pred_check
          %p675 = pneg %p422
        $region76: #{deeplabv3plus_gru_forward.32} parent=65 // pred_check_branch
          %677 = sbr.rel (%p675) target = $region78
        $region77: #{deeplabv3plus_gru_forward.32} parent=65 // pred_region
          %v678 = vld [vmem:[#allocation2] sm:$0xff]
          %v679 = vld [vmem:[#allocation2 + $0x8] sm:$0xff]
          %v680 = vld [vmem:[%s410] sm:$0x3]
          %v682 = vlaneseq
          %v683 = vshrl.u32 %v682, 7
          %v684 = vsub.s32 0, %v683
          %v685 = vrot.slane %v680, %v684
          %v686 = vlaneseq
          %v687 = vshrl.u32 %v686, 7
          %v688 = vsub.s32 1, %v687
          %v689 = vrot.slane %v680, %v688
          %v692 = vadd.f32 %v678, %v685
          %v693 = vadd.f32 %v679, %v689
          %v694 = vmax.f32 %v692, 0.0
          %v695 = vmax.f32 %v693, 0.0
          %v696 = vpack.c.bf16 %v694, %v694
          %v697 = vpack.c.bf16 %v695, %v695
          %v700 = vunpack.c.l.b16 %v696
          %v701 = vunpack.c.l.b16 %v697
          %v702 = vpack.c.b16 %v701, %v700
          %704 = vst [vmem:[%s420] sm:$0xff] %v702
        $region78: #{deeplabv3plus_gru_forward.32} parent=65 // pred_fallthru
          _
        %s705 = smul.u32 2, %s20
        %p706 = scmp.lt.s32.totalorder %s19, 0
        %s707 = scalar_select %p706, %s19, 0
        %p708 = scmp.lt.s32.totalorder %s705, 3
        %s709 = scalar_select %p708, %s705, 3
        %s710 = smul.addr %s707, 4
        %s711 = sadd.s32 %s709, %s710
        %s712 = smul.addr %s711, 4
        %s713 = scalar_lea.vmem %s3, %s712
        // Predicated region
        $region79: #{deeplabv3plus_gru_forward.32} parent=65 // pred_check
          %p714 = pneg %p135
        $region80: #{deeplabv3plus_gru_forward.32} parent=65 // pred_check_branch
          %716 = sbr.rel (%p714) target = $region82
        $region81: #{deeplabv3plus_gru_forward.32} parent=65 // pred_region
          %s717 = smul.u32 2, %s20
        $region82: #{deeplabv3plus_gru_forward.32} parent=65 // pred_fallthru
          _
      $region66: #{deeplabv3plus_gru_forward.32} parent=5 // pred_fallthru
        _
      %p718 = scmp.le.s32.totalorder 2, %s9
      // Predicated region
      $region83: #{deeplabv3plus_gru_forward.32} parent=5 // pred_check
        %p719 = pneg %p718
      $region84: #{deeplabv3plus_gru_forward.32} parent=5 // pred_check_branch
        %721 = sbr.rel (%p719) target = $region86
      $region85: #{deeplabv3plus_gru_forward.32} parent=5 // pred_region
        %s722 = ssub.s32 %s9, 2
        // Predicated region
        $region87: #{deeplabv3plus_gru_forward.32} parent=85 // pred_check
          %p723 = pneg %p141
        $region88: #{deeplabv3plus_gru_forward.32} parent=85 // pred_check_branch
          %725 = sbr.rel (%p723) target = $region90
        $region89: #{deeplabv3plus_gru_forward.32} parent=85 // pred_region
          %s726 = smul.u32 2, %s23
          %p727 = scmp.lt.s32.totalorder %s22, 0
          %s728 = scalar_select %p727, %s22, 0
          %p729 = scmp.lt.s32.totalorder %s726, 3
          %s730 = scalar_select %p729, %s726, 3
          %s731 = smul.addr %s728, 4
          %s732 = sadd.s32 %s730, %s731
          %s733 = smul.addr %s732, 4
          %s734 = scalar_lea.vmem %s3, %s733
        $region90: #{deeplabv3plus_gru_forward.32} parent=85 // pred_fallthru
          _
      $region86: #{deeplabv3plus_gru_forward.32} parent=5 // pred_fallthru
        _
    $region6: #{deeplabv3plus_gru_forward.32} parent=1 // loop_footer
      %s13 = sadd.s32 1, %s9
    $region7: #{deeplabv3plus_gru_forward.32} parent=1 // loop_footer_branch
      %8 = sbr.rel target = $region3
    $region8: #{deeplabv3plus_gru_forward.32} parent=1 // loop_exit
      _

// kernel: deeplabv3plus_gru_forward.34
$region0: #{deeplabv3plus_gru_forward.34}
  #allocation0 [shape = 'u32[]', space=smem, size = 0x4, offset = 0x4, fixed_abs, tag = 'smem constant byte address 0x4 - core index']
  #allocation1 [shape = 'u32[144,128]{1,0:T(1,128)}', space=vmem, size = 0x12000, scoped, tag = 'internal scratch']
  #allocation2 [shape = 'f32[8,256]{1,0:T(8,128)}', space=vmem, size = 0x2000, scoped, tag = 'scratch operand']
  %s0 = inlined_call_operand.vmem [shape: bf16[8,3072], index: 0, kind: input, shape index: {}]
  %s1 = inlined_call_operand.vmem [shape: bf16[3072,256], index: 1, kind: input, shape index: {}]
  %s2 = inlined_call_operand.vmem [shape: f32[1,256], index: 2, kind: input, shape index: {}]
  %s3 = inlined_call_operand.vmem [shape: bf16[8,256], index: 3, kind: output, shape index: {}]
  %s4 = sld [smem:[#allocation0]]
  $region53: #{deeplabv3plus_gru_forward.34} parent=0
    _
  %s6 = ssub.s32 1, %s4
  %s7 = scalar_select 0, %s6, %s4
  loop: start=0, step=1, limit=8
  $region2: #{deeplabv3plus_gru_forward.34} parent=0 // loop_pre_header
    _
  $region3: #{deeplabv3plus_gru_forward.34} parent=0 // loop_header
    %s9 = sphi 0, %s13
    %p10 = scmp.ge.s32.totalorder %s9, 8
    %s16 = sphi 0, %s35
    %s17 = sphi 0, %s31
    %s18 = sphi 0, %s27
    %s19 = sphi 0, %s16
    %s20 = sphi 0, %s17
    %s21 = sphi 0, %s18
    %s22 = sphi 0, %s19
    %s23 = sphi 0, %s20
    %s24 = sphi 0, %s21
    %s40 = sphi 0, %s42
    %s43 = sphi 0, %s40
    %s44 = sphi 0, %s43
    %s60 = sphi 0, %s44
    %s68 = sphi 0, %s70
    %s71 = sphi 0, %s68
    %s72 = sphi 0, %s71
    %s88 = sphi 0, %s72
    %s94 = sphi 0, %s96
    %s97 = sphi 0, %s94
    %s98 = sphi 0, %s97
    %s114 = sphi 0, %s98
    %s122 = sphi 0, %s124
    %s125 = sphi 0, %s122
    %s126 = sphi 0, %s125
    %s142 = sphi 0, %s126
  $region4: #{deeplabv3plus_gru_forward.34} parent=0 // loop_header_branch
    %12 = sbr.rel (%p10) target = $region8
  $region5: #{deeplabv3plus_gru_forward.34} parent=0 // loop_body
    %s14 = ssub.s32 %s9, 1
    %s15 = ssub.s32 %s9, 2
    %s25 = sadd.s32 1, %s18
    %p26 = scmp.ge.s32.totalorder %s25, 6
    %s27 = scalar_select %p26, 0, %s25
    %s28 = sadd.s32 1, %s17
    %s29 = scalar_select %p26, %s28, %s17
    %p30 = scmp.ge.s32.totalorder %s29, 1
    %s31 = scalar_select %p30, 0, %s29
    %s32 = sadd.s32 1, %s16
    %s33 = scalar_select %p30, %s32, %s16
    %p34 = scmp.ge.s32.totalorder %s33, 1
    %s35 = scalar_select %p34, 0, %s33
    %s36 = ssub.s32 %s16, %s35
    %s37 = ssub.s32 %s18, %s27
    %s38 = sor.u32 %s36, %s37
    %p39 = scmp.eq.s32.totalorder %s38, 0
    %s41 = sadd.s32 %s40, 1
    %s42 = scalar_select %p39, %s40, %s41
    %p45 = pneg %p39
    %p46 = scmp.eq.s32.totalorder %s9, 5
    %p47 = por %p45, %p46
    %p48 = scmp.ne.s32.totalorder %s40, %s43
    %p49 = scmp.eq.s32.totalorder %s9, 0
    %p50 = por %p48, %p49
    %p51 = scmp.ne.s32.totalorder %s40, %s43
    %p52 = scmp.eq.s32.totalorder %s14, 5
    %p53 = por %p51, %p52
    %p54 = scmp.ne.s32.totalorder %s43, %s44
    %p55 = scmp.eq.s32.totalorder %s14, 0
    %p56 = por %p54, %p55
    %p57 = scmp.ne.s32.totalorder %s43, %s44
    %p58 = scmp.eq.s32.totalorder %s15, 5
    %p59 = por %p57, %p58
    %p61 = scmp.ne.s32.totalorder %s44, %s60
    %p62 = scmp.eq.s32.totalorder %s15, 0
    %p63 = por %p61, %p62
    %s64 = ssub.s32 %s18, %s27
    %s65 = ssub.s32 %s17, %s31
    %s66 = sor.u32 %s64, %s65
    %p67 = scmp.eq.s32.totalorder %s66, 0
    %s69 = sadd.s32 %s68, 1
    %s70 = scalar_select %p67, %s68, %s69
    %p73 = pneg %p67
    %p74 = scmp.eq.s32.totalorder %s9, 5
    %p75 = por %p73, %p74
    %p76 = scmp.ne.s32.totalorder %s68, %s71
    %p77 = scmp.eq.s32.totalorder %s9, 0
    %p78 = por %p76, %p77
    %p79 = scmp.ne.s32.totalorder %s68, %s71
    %p80 = scmp.eq.s32.totalorder %s14, 5
    %p81 = por %p79, %p80
    %p82 = scmp.ne.s32.totalorder %s71, %s72
    %p83 = scmp.eq.s32.totalorder %s14, 0
    %p84 = por %p82, %p83
    %p85 = scmp.ne.s32.totalorder %s71, %s72
    %p86 = scmp.eq.s32.totalorder %s15, 5
    %p87 = por %p85, %p86
    %p89 = scmp.ne.s32.totalorder %s72, %s88
    %p90 = scmp.eq.s32.totalorder %s15, 0
    %p91 = por %p89, %p90
    %s92 = ssub.s32 %s17, %s31
    %p93 = scmp.eq.s32.totalorder %s92, 0
    %s95 = sadd.s32 %s94, 1
    %s96 = scalar_select %p93, %s94, %s95
    %p99 = pneg %p93
    %p100 = scmp.eq.s32.totalorder %s9, 5
    %p101 = por %p99, %p100
    %p102 = scmp.ne.s32.totalorder %s94, %s97
    %p103 = scmp.eq.s32.totalorder %s9, 0
    %p104 = por %p102, %p103
    %p105 = scmp.ne.s32.totalorder %s94, %s97
    %p106 = scmp.eq.s32.totalorder %s14, 5
    %p107 = por %p105, %p106
    %p108 = scmp.ne.s32.totalorder %s97, %s98
    %p109 = scmp.eq.s32.totalorder %s14, 0
    %p110 = por %p108, %p109
    %p111 = scmp.ne.s32.totalorder %s97, %s98
    %p112 = scmp.eq.s32.totalorder %s15, 5
    %p113 = por %p111, %p112
    %p115 = scmp.ne.s32.totalorder %s98, %s114
    %p116 = scmp.eq.s32.totalorder %s15, 0
    %p117 = por %p115, %p116
    %s118 = ssub.s32 %s16, %s35
    %s119 = ssub.s32 %s17, %s31
    %s120 = sor.u32 %s118, %s119
    %p121 = scmp.eq.s32.totalorder %s120, 0
    %s123 = sadd.s32 %s122, 1
    %s124 = scalar_select %p121, %s122, %s123
    %p127 = pneg %p121
    %p128 = scmp.eq.s32.totalorder %s9, 5
    %p129 = por %p127, %p128
    %p130 = scmp.ne.s32.totalorder %s122, %s125
    %p131 = scmp.eq.s32.totalorder %s9, 0
    %p132 = por %p130, %p131
    %p133 = scmp.ne.s32.totalorder %s122, %s125
    %p134 = scmp.eq.s32.totalorder %s14, 5
    %p135 = por %p133, %p134
    %p136 = scmp.ne.s32.totalorder %s125, %s126
    %p137 = scmp.eq.s32.totalorder %s14, 0
    %p138 = por %p136, %p137
    %p139 = scmp.ne.s32.totalorder %s125, %s126
    %p140 = scmp.eq.s32.totalorder %s15, 5
    %p141 = por %p139, %p140
    %p143 = scmp.ne.s32.totalorder %s126, %s142
    %p144 = scmp.eq.s32.totalorder %s15, 0
    %p145 = por %p143, %p144
    %p146 = scmp.le.s32.totalorder 1, %s9
    %p147 = scmp.lt.s32.totalorder %s9, 7
    %p148 = pnand %p146, %p147
    %p149 = pneg %p148
    // Predicated region
    $region9: #{deeplabv3plus_gru_forward.34} parent=5 // pred_check
      _
    $region10: #{deeplabv3plus_gru_forward.34} parent=5 // pred_check_branch
      %151 = sbr.rel (%p148) target = $region12
    $region11: #{deeplabv3plus_gru_forward.34} parent=5 // pred_region
      %s152 = ssub.s32 %s9, 1
      // Predicated region
      $region13: #{deeplabv3plus_gru_forward.34} parent=11 // pred_check
        %p153 = pneg %p110
      $region14: #{deeplabv3plus_gru_forward.34} parent=11 // pred_check_branch
        %155 = sbr.rel (%p153) target = $region16
      $region15: #{deeplabv3plus_gru_forward.34} parent=11 // pred_region
        %s156 = smul.u32 2, %s20
        %p157 = scmp.lt.s32.totalorder %s156, 1
        %s158 = scalar_select %p157, %s156, 1
        %s159 = scalar_lea.vmem %s2, %s158
        %s160 = smul.u32 2, %s20
      $region16: #{deeplabv3plus_gru_forward.34} parent=11 // pred_fallthru
        _
    $region12: #{deeplabv3plus_gru_forward.34} parent=5 // pred_fallthru
      _
    %p161 = scmp.lt.s32.totalorder %s9, 6
    // Predicated region
    $region17: #{deeplabv3plus_gru_forward.34} parent=5 // pred_check
      %p162 = pneg %p161
    $region18: #{deeplabv3plus_gru_forward.34} parent=5 // pred_check_branch
      %164 = sbr.rel (%p162) target = $region20
    $region19: #{deeplabv3plus_gru_forward.34} parent=5 // pred_region
      // Predicated region
      $region21: #{deeplabv3plus_gru_forward.34} parent=19 // pred_check
        %p165 = pneg %p50
      $region22: #{deeplabv3plus_gru_forward.34} parent=19 // pred_check_branch
        %167 = sbr.rel (%p165) target = $region24
      $region23: #{deeplabv3plus_gru_forward.34} parent=19 // pred_region
        %s168 = smul.u32 4, %s18
        %p169 = scmp.lt.s32.totalorder %s16, 0
        %s170 = scalar_select %p169, %s16, 0
        %p171 = scmp.lt.s32.totalorder %s168, 23
        %s172 = scalar_select %p171, %s168, 23
        %s173 = smul.addr %s170, 24
        %s174 = sadd.s32 %s172, %s173
        %s175 = smul.addr %s174, 4
        %s176 = scalar_lea.vmem %s0, %s175
        %s177 = smul.u32 4, %s18
      $region24: #{deeplabv3plus_gru_forward.34} parent=19 // pred_fallthru
        _
      // Predicated region
      $region25: #{deeplabv3plus_gru_forward.34} parent=19 // pred_check
        %p178 = pneg %p78
      $region26: #{deeplabv3plus_gru_forward.34} parent=19 // pred_check_branch
        %180 = sbr.rel (%p178) target = $region28
      $region27: #{deeplabv3plus_gru_forward.34} parent=19 // pred_region
        %s181 = smul.u32 64, %s18
        %s182 = smul.u32 2, %s17
        %p183 = scmp.lt.s32.totalorder %s181, 383
        %s184 = scalar_select %p183, %s181, 383
        %p185 = scmp.lt.s32.totalorder %s182, 1
        %s186 = scalar_select %p185, %s182, 1
        %s187 = smul.addr %s184, 2
        %s188 = sadd.s32 %s186, %s187
        %s189 = smul.addr %s188, 4
        %s190 = scalar_lea.vmem %s1, %s189
        %s191 = smul.u32 64, %s18
        %s192 = smul.u32 2, %s17
      $region28: #{deeplabv3plus_gru_forward.34} parent=19 // pred_fallthru
        _
    $region20: #{deeplabv3plus_gru_forward.34} parent=5 // pred_fallthru
      _
    %p193 = scmp.le.s32.totalorder 1, %s9
    %p194 = scmp.lt.s32.totalorder %s9, 7
    %p195 = pnand %p193, %p194
    %p196 = pneg %p195
    // Predicated region
    $region29: #{deeplabv3plus_gru_forward.34} parent=5 // pred_check
      _
    $region30: #{deeplabv3plus_gru_forward.34} parent=5 // pred_check_branch
      %198 = sbr.rel (%p195) target = $region32
    $region31: #{deeplabv3plus_gru_forward.34} parent=5 // pred_region
      %s199 = ssub.s32 %s9, 1
      %s200 = smul.u32 4, %s21
      %p201 = scmp.lt.s32.totalorder %s19, 0
      %s202 = scalar_select %p201, %s19, 0
      %p203 = scmp.lt.s32.totalorder %s200, 23
      %s204 = scalar_select %p203, %s200, 23
      %s205 = smul.addr %s202, 24
      %s206 = sadd.s32 %s204, %s205
      %s207 = smul.addr %s206, 4
      %s208 = scalar_lea.vmem %s0, %s207
      %p209 = pneg %p56
      %p210 = pneg %p53
      %s211 = smul.u32 64, %s21
      %s212 = smul.u32 2, %s20
      %p213 = scmp.lt.s32.totalorder %s211, 383
      %s214 = scalar_select %p213, %s211, 383
      %p215 = scmp.lt.s32.totalorder %s212, 1
      %s216 = scalar_select %p215, %s212, 1
      %s217 = smul.addr %s214, 2
      %s218 = sadd.s32 %s216, %s217
      %s219 = smul.addr %s218, 4
      %s220 = scalar_lea.vmem %s1, %s219
      %p221 = pneg %p84
      %p222 = pneg %p81
      %s223 = smul.u32 2, %s20
      %p224 = scmp.lt.s32.totalorder %s223, 1
      %s225 = scalar_select %p224, %s223, 1
      %s226 = scalar_lea.vmem %s2, %s225
      %p227 = pneg %p110
      %p228 = pneg %p107
      %p229 = pneg %p138
      %p230 = pneg %p135
      %s231 = smul.u32 2, %s20
      %p232 = scmp.lt.s32.totalorder %s19, 0
      %s233 = scalar_select %p232, %s19, 0
      %p234 = scmp.lt.s32.totalorder %s231, 1
      %s235 = scalar_select %p234, %s231, 1
      %s236 = smul.addr %s233, 2
      %s237 = sadd.s32 %s235, %s236
      %s238 = smul.addr %s237, 4
      %s239 = scalar_lea.vmem %s3, %s238
      %s240 = smul.u32 4, %s21
      %p241 = scmp.lt.s32.totalorder %s19, 0
      %s242 = scalar_select %p241, %s19, 0
      %p243 = scmp.lt.s32.totalorder %s240, 23
      %s244 = scalar_select %p243, %s240, 23
      %s245 = smul.addr %s242, 24
      %s246 = sadd.s32 %s244, %s245
      %s247 = smul.addr %s246, 4
      %s248 = scalar_lea.vmem %s0, %s247
      %s249 = smul.u32 4, %s21
      %s250 = smul.u32 64, %s21
      %s251 = smul.u32 2, %s20
      %p252 = scmp.lt.s32.totalorder %s250, 383
      %s253 = scalar_select %p252, %s250, 383
      %p254 = scmp.lt.s32.totalorder %s251, 1
      %s255 = scalar_select %p254, %s251, 1
      %s256 = smul.addr %s253, 2
      %s257 = sadd.s32 %s255, %s256
      %s258 = smul.addr %s257, 4
      %s259 = scalar_lea.vmem %s1, %s258
      %s260 = smul.u32 64, %s21
      %s261 = smul.u32 2, %s20
      %s262 = smul.u32 2, %s20
      %p263 = scmp.lt.s32.totalorder %s262, 1
      %s264 = scalar_select %p263, %s262, 1
      %s265 = scalar_lea.vmem %s2, %s264
      %s266 = smul.u32 2, %s20
      %s267 = smul.u32 2, %s20
      %p268 = scmp.lt.s32.totalorder %s19, 0
      %s269 = scalar_select %p268, %s19, 0
      %p270 = scmp.lt.s32.totalorder %s267, 1
      %s271 = scalar_select %p270, %s267, 1
      %s272 = smul.addr %s269, 2
      %s273 = sadd.s32 %s271, %s272
      %s274 = smul.addr %s273, 4
      %s275 = scalar_lea.vmem %s3, %s274
      %s276 = smul.u32 2, %s20
      %p277 = scmp.eq.s32.totalorder %s21, 0
      // Predicated region
      $region33: #{deeplabv3plus_gru_forward.34} parent=31 // pred_check
        %p278 = pneg %p277
      $region34: #{deeplabv3plus_gru_forward.34} parent=31 // pred_check_branch
        %280 = sbr.rel (%p278) target = $region36
      $region35: #{deeplabv3plus_gru_forward.34} parent=31 // pred_region
        %281 = vst [vmem:[#allocation2] sm:$0xff] 0.0
        %282 = vst [vmem:[#allocation2 + $0x8] sm:$0xff] 0.0
      $region36: #{deeplabv3plus_gru_forward.34} parent=31 // pred_fallthru
        _
      %v283 = vld [vmem:[#allocation2] sm:$0xff]
      %v284 = vld [vmem:[#allocation2 + $0x8] sm:$0xff]
      %v285 = vld [vmem:[%s248] sm:$0xff]
      %v286 = vld [vmem:[%s248 + $0x8] sm:$0xff]
      %v287 = vld [vmem:[%s259] sm:$0xff]
      %v288 = vld [vmem:[%s259 + $0x8] sm:$0xff]
      %v289 = vld [vmem:[%s259 + $0x10] sm:$0xff]
      %v290 = vld [vmem:[%s259 + $0x18] sm:$0xff]
      %v291 = vld [vmem:[%s259 + $0x20] sm:$0xff]
      %v292 = vld [vmem:[%s259 + $0x28] sm:$0xff]
      %v293 = vld [vmem:[%s259 + $0x30] sm:$0xff]
      %v294 = vld [vmem:[%s259 + $0x38] sm:$0xff]
      %v295 = vld [vmem:[%s259 + $0x40] sm:$0xff]
      %v296 = vld [vmem:[%s259 + $0x48] sm:$0xff]
      %v297 = vld [vmem:[%s259 + $0x50] sm:$0xff]
      %v298 = vld [vmem:[%s259 + $0x58] sm:$0xff]
      %v299 = vld [vmem:[%s259 + $0x60] sm:$0xff]
      %v300 = vld [vmem:[%s259 + $0x68] sm:$0xff]
      %v301 = vld [vmem:[%s259 + $0x70] sm:$0xff]
      %v302 = vld [vmem:[%s259 + $0x78] sm:$0xff]
      %v303 = vld [vmem:[%s259 + $0x80] sm:$0xff]
      %v304 = vld [vmem:[%s259 + $0x88] sm:$0xff]
      %v305 = vld [vmem:[%s259 + $0x90] sm:$0xff]
      %v306 = vld [vmem:[%s259 + $0x98] sm:$0xff]
      %v307 = vld [vmem:[%s259 + $0xa0] sm:$0xff]
      %v308 = vld [vmem:[%s259 + $0xa8] sm:$0xff]
      %v309 = vld [vmem:[%s259 + $0xb0] sm:$0xff]
      %v310 = vld [vmem:[%s259 + $0xb8] sm:$0xff]
      %v311 = vld [vmem:[%s259 + $0xc0] sm:$0xff]
      %v312 = vld [vmem:[%s259 + $0xc8] sm:$0xff]
      %v313 = vld [vmem:[%s259 + $0xd0] sm:$0xff]
      %v314 = vld [vmem:[%s259 + $0xd8] sm:$0xff]
      %v315 = vld [vmem:[%s259 + $0xe0] sm:$0xff]
      %v316 = vld [vmem:[%s259 + $0xe8] sm:$0xff]
      %v317 = vld [vmem:[%s259 + $0xf0] sm:$0xff]
      %v318 = vld [vmem:[%s259 + $0xf8] sm:$0xff]
      %v319 = vld [vmem:[%s259 + $0x100] sm:$0xff]
      %v320 = vld [vmem:[%s259 + $0x108] sm:$0xff]
      %v321 = vld [vmem:[%s259 + $0x110] sm:$0xff]
      %v322 = vld [vmem:[%s259 + $0x118] sm:$0xff]
      %v323 = vld [vmem:[%s259 + $0x120] sm:$0xff]
      %v324 = vld [vmem:[%s259 + $0x128] sm:$0xff]
      %v325 = vld [vmem:[%s259 + $0x130] sm:$0xff]
      %v326 = vld [vmem:[%s259 + $0x138] sm:$0xff]
      %v327 = vld [vmem:[%s259 + $0x140] sm:$0xff]
      %v328 = vld [vmem:[%s259 + $0x148] sm:$0xff]
      %v329 = vld [vmem:[%s259 + $0x150] sm:$0xff]
      %v330 = vld [vmem:[%s259 + $0x158] sm:$0xff]
      %v331 = vld [vmem:[%s259 + $0x160] sm:$0xff]
      %v332 = vld [vmem:[%s259 + $0x168] sm:$0xff]
      %v333 = vld [vmem:[%s259 + $0x170] sm:$0xff]
      %v334 = vld [vmem:[%s259 + $0x178] sm:$0xff]
      %v335 = vld [vmem:[%s259 + $0x180] sm:$0xff]
      %v336 = vld [vmem:[%s259 + $0x188] sm:$0xff]
      %v337 = vld [vmem:[%s259 + $0x190] sm:$0xff]
      %v338 = vld [vmem:[%s259 + $0x198] sm:$0xff]
      %v339 = vld [vmem:[%s259 + $0x1a0] sm:$0xff]
      %v340 = vld [vmem:[%s259 + $0x1a8] sm:$0xff]
      %v341 = vld [vmem:[%s259 + $0x1b0] sm:$0xff]
      %v342 = vld [vmem:[%s259 + $0x1b8] sm:$0xff]
      %v343 = vld [vmem:[%s259 + $0x1c0] sm:$0xff]
      %v344 = vld [vmem:[%s259 + $0x1c8] sm:$0xff]
      %v345 = vld [vmem:[%s259 + $0x1d0] sm:$0xff]
      %v346 = vld [vmem:[%s259 + $0x1d8] sm:$0xff]
      %v347 = vld [vmem:[%s259 + $0x1e0] sm:$0xff]
      %v348 = vld [vmem:[%s259 + $0x1e8] sm:$0xff]
      %v349 = vld [vmem:[%s259 + $0x1f0] sm:$0xff]
      %v350 = vld [vmem:[%s259 + $0x1f8] sm:$0xff]
      %v353 = vunpack.c.l.b16 %v285
      %v354 = vunpack.c.h.b16 %v285
      %v355 = vunpack.c.l.b16 %v286
      %v356 = vunpack.c.h.b16 %v286
      %v357 = vpack.c.b16 %v353, %v353
      %v358 = vpack.c.b16 %v354, %v354
      %v359 = vpack.c.b16 %v355, %v355
      %v360 = vpack.c.b16 %v356, %v356
      %v429 = vunpack.c.l.b16 %v287
      %v430 = vunpack.c.h.b16 %v287
      %v431 = vunpack.c.l.b16 %v288
      %v432 = vunpack.c.h.b16 %v288
      %v433 = vunpack.c.l.b16 %v289
      %v434 = vunpack.c.h.b16 %v289
      %v435 = vunpack.c.l.b16 %v290
      %v436 = vunpack.c.h.b16 %v290
      %v437 = vunpack.c.l.b16 %v291
      %v438 = vunpack.c.h.b16 %v291
      %v439 = vunpack.c.l.b16 %v292
      %v440 = vunpack.c.h.b16 %v292
      %v441 = vunpack.c.l.b16 %v293
      %v442 = vunpack.c.h.b16 %v293
      %v443 = vunpack.c.l.b16 %v294
      %v444 = vunpack.c.h.b16 %v294
      %v445 = vunpack.c.l.b16 %v295
      %v446 = vunpack.c.h.b16 %v295
      %v447 = vunpack.c.l.b16 %v296
      %v448 = vunpack.c.h.b16 %v296
      %v449 = vunpack.c.l.b16 %v297
      %v450 = vunpack.c.h.b16 %v297
      %v451 = vunpack.c.l.b16 %v298
      %v452 = vunpack.c.h.b16 %v298
      %v453 = vunpack.c.l.b16 %v299
      %v454 = vunpack.c.h.b16 %v299
      %v455 = vunpack.c.l.b16 %v300
      %v456 = vunpack.c.h.b16 %v300
      %v457 = vunpack.c.l.b16 %v301
      %v458 = vunpack.c.h.b16 %v301
      %v459 = vunpack.c.l.b16 %v302
      %v460 = vunpack.c.h.b16 %v302
      %v461 = vunpack.c.l.b16 %v303
      %v462 = vunpack.c.h.b16 %v303
      %v463 = vunpack.c.l.b16 %v304
      %v464 = vunpack.c.h.b16 %v304
      %v465 = vunpack.c.l.b16 %v305
      %v466 = vunpack.c.h.b16 %v305
      %v467 = vunpack.c.l.b16 %v306
      %v468 = vunpack.c.h.b16 %v306
      %v469 = vunpack.c.l.b16 %v307
      %v470 = vunpack.c.h.b16 %v307
      %v471 = vunpack.c.l.b16 %v308
      %v472 = vunpack.c.h.b16 %v308
      %v473 = vunpack.c.l.b16 %v309
      %v474 = vunpack.c.h.b16 %v309
      %v475 = vunpack.c.l.b16 %v310
      %v476 = vunpack.c.h.b16 %v310
      %v477 = vunpack.c.l.b16 %v311
      %v478 = vunpack.c.h.b16 %v311
      %v479 = vunpack.c.l.b16 %v312
      %v480 = vunpack.c.h.b16 %v312
      %v481 = vunpack.c.l.b16 %v313
      %v482 = vunpack.c.h.b16 %v313
      %v483 = vunpack.c.l.b16 %v314
      %v484 = vunpack.c.h.b16 %v314
      %v485 = vunpack.c.l.b16 %v315
      %v486 = vunpack.c.h.b16 %v315
      %v487 = vunpack.c.l.b16 %v316
      %v488 = vunpack.c.h.b16 %v316
      %v489 = vunpack.c.l.b16 %v317
      %v490 = vunpack.c.h.b16 %v317
      %v491 = vunpack.c.l.b16 %v318
      %v492 = vunpack.c.h.b16 %v318
      %v493 = vunpack.c.l.b16 %v319
      %v494 = vunpack.c.h.b16 %v319
      %v495 = vunpack.c.l.b16 %v320
      %v496 = vunpack.c.h.b16 %v320
      %v497 = vunpack.c.l.b16 %v321
      %v498 = vunpack.c.h.b16 %v321
      %v499 = vunpack.c.l.b16 %v322
      %v500 = vunpack.c.h.b16 %v322
      %v501 = vunpack.c.l.b16 %v323
      %v502 = vunpack.c.h.b16 %v323
      %v503 = vunpack.c.l.b16 %v324
      %v504 = vunpack.c.h.b16 %v324
      %v505 = vunpack.c.l.b16 %v325
      %v506 = vunpack.c.h.b16 %v325
      %v507 = vunpack.c.l.b16 %v326
      %v508 = vunpack.c.h.b16 %v326
      %v509 = vunpack.c.l.b16 %v327
      %v510 = vunpack.c.h.b16 %v327
      %v511 = vunpack.c.l.b16 %v328
      %v512 = vunpack.c.h.b16 %v328
      %v513 = vunpack.c.l.b16 %v329
      %v514 = vunpack.c.h.b16 %v329
      %v515 = vunpack.c.l.b16 %v330
      %v516 = vunpack.c.h.b16 %v330
      %v517 = vunpack.c.l.b16 %v331
      %v518 = vunpack.c.h.b16 %v331
      %v519 = vunpack.c.l.b16 %v332
      %v520 = vunpack.c.h.b16 %v332
      %v521 = vunpack.c.l.b16 %v333
      %v522 = vunpack.c.h.b16 %v333
      %v523 = vunpack.c.l.b16 %v334
      %v524 = vunpack.c.h.b16 %v334
      %v525 = vunpack.c.l.b16 %v335
      %v526 = vunpack.c.h.b16 %v335
      %v527 = vunpack.c.l.b16 %v336
      %v528 = vunpack.c.h.b16 %v336
      %v529 = vunpack.c.l.b16 %v337
      %v530 = vunpack.c.h.b16 %v337
      %v531 = vunpack.c.l.b16 %v338
      %v532 = vunpack.c.h.b16 %v338
      %v533 = vunpack.c.l.b16 %v339
      %v534 = vunpack.c.h.b16 %v339
      %v535 = vunpack.c.l.b16 %v340
      %v536 = vunpack.c.h.b16 %v340
      %v537 = vunpack.c.l.b16 %v341
      %v538 = vunpack.c.h.b16 %v341
      %v539 = vunpack.c.l.b16 %v342
      %v540 = vunpack.c.h.b16 %v342
      %v541 = vunpack.c.l.b16 %v343
      %v542 = vunpack.c.h.b16 %v343
      %v543 = vunpack.c.l.b16 %v344
      %v544 = vunpack.c.h.b16 %v344
      %v545 = vunpack.c.l.b16 %v345
      %v546 = vunpack.c.h.b16 %v345
      %v547 = vunpack.c.l.b16 %v346
      %v548 = vunpack.c.h.b16 %v346
      %v549 = vunpack.c.l.b16 %v347
      %v550 = vunpack.c.h.b16 %v347
      %v551 = vunpack.c.l.b16 %v348
      %v552 = vunpack.c.h.b16 %v348
      %v553 = vunpack.c.l.b16 %v349
      %v554 = vunpack.c.h.b16 %v349
      %v555 = vunpack.c.l.b16 %v350
      %v556 = vunpack.c.h.b16 %v350
      %v557 = vpack.c.b16 %v431, %v429
      %v558 = vpack.c.b16 %v432, %v430
      %v559 = vpack.c.b16 %v435, %v433
      %v560 = vpack.c.b16 %v436, %v434
      %v561 = vpack.c.b16 %v439, %v437
      %v562 = vpack.c.b16 %v440, %v438
      %v563 = vpack.c.b16 %v443, %v441
      %v564 = vpack.c.b16 %v444, %v442
      %v565 = vpack.c.b16 %v447, %v445
      %v566 = vpack.c.b16 %v448, %v446
      %v567 = vpack.c.b16 %v451, %v449
      %v568 = vpack.c.b16 %v452, %v450
      %v569 = vpack.c.b16 %v455, %v453
      %v570 = vpack.c.b16 %v456, %v454
      %v571 = vpack.c.b16 %v459, %v457
      %v572 = vpack.c.b16 %v460, %v458
      %v573 = vpack.c.b16 %v463, %v461
      %v574 = vpack.c.b16 %v464, %v462
      %v575 = vpack.c.b16 %v467, %v465
      %v576 = vpack.c.b16 %v468, %v466
      %v577 = vpack.c.b16 %v471, %v469
      %v578 = vpack.c.b16 %v472, %v470
      %v579 = vpack.c.b16 %v475, %v473
      %v580 = vpack.c.b16 %v476, %v474
      %v581 = vpack.c.b16 %v479, %v477
      %v582 = vpack.c.b16 %v480, %v478
      %v583 = vpack.c.b16 %v483, %v481
      %v584 = vpack.c.b16 %v484, %v482
      %v585 = vpack.c.b16 %v487, %v485
      %v586 = vpack.c.b16 %v488, %v486
      %v587 = vpack.c.b16 %v491, %v489
      %v588 = vpack.c.b16 %v492, %v490
      %v589 = vpack.c.b16 %v495, %v493
      %v590 = vpack.c.b16 %v496, %v494
      %v591 = vpack.c.b16 %v499, %v497
      %v592 = vpack.c.b16 %v500, %v498
      %v593 = vpack.c.b16 %v503, %v501
      %v594 = vpack.c.b16 %v504, %v502
      %v595 = vpack.c.b16 %v507, %v505
      %v596 = vpack.c.b16 %v508, %v506
      %v597 = vpack.c.b16 %v511, %v509
      %v598 = vpack.c.b16 %v512, %v510
      %v599 = vpack.c.b16 %v515, %v513
      %v600 = vpack.c.b16 %v516, %v514
      %v601 = vpack.c.b16 %v519, %v517
      %v602 = vpack.c.b16 %v520, %v518
      %v603 = vpack.c.b16 %v523, %v521
      %v604 = vpack.c.b16 %v524, %v522
      %v605 = vpack.c.b16 %v527, %v525
      %v606 = vpack.c.b16 %v528, %v526
      %v607 = vpack.c.b16 %v531, %v529
      %v608 = vpack.c.b16 %v532, %v530
      %v609 = vpack.c.b16 %v535, %v533
      %v610 = vpack.c.b16 %v536, %v534
      %v611 = vpack.c.b16 %v539, %v537
      %v612 = vpack.c.b16 %v540, %v538
      %v613 = vpack.c.b16 %v543, %v541
      %v614 = vpack.c.b16 %v544, %v542
      %v615 = vpack.c.b16 %v547, %v545
      %v616 = vpack.c.b16 %v548, %v546
      %v617 = vpack.c.b16 %v551, %v549
      %v618 = vpack.c.b16 %v552, %v550
      %v619 = vpack.c.b16 %v555, %v553
      %v620 = vpack.c.b16 %v556, %v554
      %685 = vmatprep.subr.bf16.mxu0 %v558
      %686 = vmatpush1.bf16.msra.mxu0 %v557
      %687 = vmatprep.subr.bf16.mxu0 %v560
      %688 = vmatpush1.bf16.msra.mxu0 %v559
      %689 = vmatprep.subr.bf16.mxu0 %v562
      %690 = vmatpush1.bf16.msra.mxu0 %v561
      %691 = vmatprep.subr.bf16.mxu0 %v564
      %692 = vmatpush1.bf16.msra.mxu0 %v563
      %693 = vmatprep.subr.bf16.mxu0 %v566
      %694 = vmatpush1.bf16.msra.mxu0 %v565
      %695 = vmatprep.subr.bf16.mxu0 %v568
      %696 = vmatpush1.bf16.msra.mxu0 %v567
      %697 = vmatprep.subr.bf16.mxu0 %v570
      %698 = vmatpush1.bf16.msra.mxu0 %v569
      %699 = vmatprep.subr.bf16.mxu0 %v572
      %700 = vmatpush1.bf16.msra.mxu0 %v571
      %701 = vmatprep.subr.bf16.mxu0 %v574
      %702 = vmatpush1.bf16.msra.mxu0 %v573
      %703 = vmatprep.subr.bf16.mxu0 %v576
      %704 = vmatpush1.bf16.msra.mxu0 %v575
      %705 = vmatprep.subr.bf16.mxu0 %v578
      %706 = vmatpush1.bf16.msra.mxu0 %v577
      %707 = vmatprep.subr.bf16.mxu0 %v580
      %708 = vmatpush1.bf16.msra.mxu0 %v579
      %709 = vmatprep.subr.bf16.mxu0 %v582
      %710 = vmatpush1.bf16.msra.mxu0 %v581
      %711 = vmatprep.subr.bf16.mxu0 %v584
      %712 = vmatpush1.bf16.msra.mxu0 %v583
      %713 = vmatprep.subr.bf16.mxu0 %v586
      %714 = vmatpush1.bf16.msra.mxu0 %v585
      %715 = vmatprep.subr.bf16.mxu0 %v588
      %716 = vmatpush1.bf16.msra.mxu0 %v587
      %717 = vmatprep.mubr.bf16.mxu0 %v358
      %718 = vmatmul.mubr.bf16.gmra.mrb[0].mxu0 %v357
      %v719 = vpop.f32.mrb[0].mxu0
      %v720 = vadd.f32 0.0, %v719
      %v721 = vpop.f32.mrb[0].mxu0
      %v722 = vadd.f32 0.0, %v721
      %v723 = vpop.f32.mrb[0].mxu0
      %v724 = vpop.f32.mrb[0].mxu0
      %725 = vdwg.mxu0
      %726 = vmatprep.subr.bf16.mxu0 %v590
      %727 = vmatpush1.bf16.msra.mxu0 %v589
      %728 = vmatprep.subr.bf16.mxu0 %v592
      %729 = vmatpush1.bf16.msra.mxu0 %v591
      %730 = vmatprep.subr.bf16.mxu0 %v594
      %731 = vmatpush1.bf16.msra.mxu0 %v593
      %732 = vmatprep.subr.bf16.mxu0 %v596
      %733 = vmatpush1.bf16.msra.mxu0 %v595
      %734 = vmatprep.subr.bf16.mxu0 %v598
      %735 = vmatpush1.bf16.msra.mxu0 %v597
      %736 = vmatprep.subr.bf16.mxu0 %v600
      %737 = vmatpush1.bf16.msra.mxu0 %v599
      %738 = vmatprep.subr.bf16.mxu0 %v602
      %739 = vmatpush1.bf16.msra.mxu0 %v601
      %740 = vmatprep.subr.bf16.mxu0 %v604
      %741 = vmatpush1.bf16.msra.mxu0 %v603
      %742 = vmatprep.subr.bf16.mxu0 %v606
      %743 = vmatpush1.bf16.msra.mxu0 %v605
      %744 = vmatprep.subr.bf16.mxu0 %v608
      %745 = vmatpush1.bf16.msra.mxu0 %v607
      %746 = vmatprep.subr.bf16.mxu0 %v610
      %747 = vmatpush1.bf16.msra.mxu0 %v609
      %748 = vmatprep.subr.bf16.mxu0 %v612
      %749 = vmatpush1.bf16.msra.mxu0 %v611
      %750 = vmatprep.subr.bf16.mxu0 %v614
      %751 = vmatpush1.bf16.msra.mxu0 %v613
      %752 = vmatprep.subr.bf16.mxu0 %v616
      %753 = vmatpush1.bf16.msra.mxu0 %v615
      %754 = vmatprep.subr.bf16.mxu0 %v618
      %755 = vmatpush1.bf16.msra.mxu0 %v617
      %756 = vmatprep.subr.bf16.mxu0 %v620
      %757 = vmatpush1.bf16.msra.mxu0 %v619
      %758 = vmatprep.mubr.bf16.mxu0 %v360
      %759 = vmatmul.mubr.bf16.gmra.mrb[0].mxu0 %v359
      %v760 = vpop.f32.mrb[0].mxu0
      %v761 = vadd.f32 %v720, %v760
      %v762 = vpop.f32.mrb[0].mxu0
      %v763 = vadd.f32 %v722, %v762
      %v764 = vpop.f32.mrb[0].mxu0
      %v765 = vpop.f32.mrb[0].mxu0
      %766 = vdwg.mxu0
      %v767 = vadd.f32 %v283, %v761
      %v768 = vadd.f32 %v284, %v763
      %769 = vst [vmem:[#allocation2] sm:$0xff] %v767
      %770 = vst [vmem:[#allocation2 + $0x8] sm:$0xff] %v768
      %p771 = scmp.eq.s32.totalorder %s21, 5
      // Predicated region
      $region37: #{deeplabv3plus_gru_forward.34} parent=31 // pred_check
        %p772 = pneg %p771
      $region38: #{deeplabv3plus_gru_forward.34} parent=31 // pred_check_branch
        %774 = sbr.rel (%p772) target = $region40
      $region39: #{deeplabv3plus_gru_forward.34} parent=31 // pred_region
        %v775 = vld [vmem:[#allocation2] sm:$0xff]
        %v776 = vld [vmem:[#allocation2 + $0x8] sm:$0xff]
        %v777 = vld [vmem:[%s265] sm:$0x3]
        %v779 = vlaneseq
        %v780 = vshrl.u32 %v779, 7
        %v781 = vsub.s32 0, %v780
        %v782 = vrot.slane %v777, %v781
        %v783 = vlaneseq
        %v784 = vshrl.u32 %v783, 7
        %v785 = vsub.s32 1, %v784
        %v786 = vrot.slane %v777, %v785
        %v789 = vadd.f32 %v775, %v782
        %v790 = vadd.f32 %v776, %v786
        %v791 = vmax.f32 %v789, 0.0
        %v792 = vmax.f32 %v790, 0.0
        %v793 = vpack.c.bf16 %v791, %v791
        %v794 = vpack.c.bf16 %v792, %v792
        %v797 = vunpack.c.l.b16 %v793
        %v798 = vunpack.c.l.b16 %v794
        %v799 = vpack.c.b16 %v798, %v797
        %801 = vst [vmem:[%s275] sm:$0xff] %v799
      $region40: #{deeplabv3plus_gru_forward.34} parent=31 // pred_fallthru
        _
      %s802 = smul.u32 2, %s20
      %p803 = scmp.lt.s32.totalorder %s19, 0
      %s804 = scalar_select %p803, %s19, 0
      %p805 = scmp.lt.s32.totalorder %s802, 1
      %s806 = scalar_select %p805, %s802, 1
      %s807 = smul.addr %s804, 2
      %s808 = sadd.s32 %s806, %s807
      %s809 = smul.addr %s808, 4
      %s810 = scalar_lea.vmem %s3, %s809
      // Predicated region
      $region41: #{deeplabv3plus_gru_forward.34} parent=31 // pred_check
        %p811 = pneg %p135
      $region42: #{deeplabv3plus_gru_forward.34} parent=31 // pred_check_branch
        %813 = sbr.rel (%p811) target = $region44
      $region43: #{deeplabv3plus_gru_forward.34} parent=31 // pred_region
        %s814 = smul.u32 2, %s20
      $region44: #{deeplabv3plus_gru_forward.34} parent=31 // pred_fallthru
        _
      // Predicated region
      $region45: #{deeplabv3plus_gru_forward.34} parent=31 // pred_check
        %p815 = pneg %p135
      $region46: #{deeplabv3plus_gru_forward.34} parent=31 // pred_check_branch
        %817 = sbr.rel (%p815) target = $region48
      $region47: #{deeplabv3plus_gru_forward.34} parent=31 // pred_region
        %s818 = smul.u32 2, %s20
        %p819 = scmp.lt.s32.totalorder %s19, 0
        %s820 = scalar_select %p819, %s19, 0
        %p821 = scmp.lt.s32.totalorder %s818, 1
        %s822 = scalar_select %p821, %s818, 1
        %s823 = smul.addr %s820, 2
        %s824 = sadd.s32 %s822, %s823
        %s825 = smul.addr %s824, 4
        %s826 = scalar_lea.vmem %s3, %s825
      $region48: #{deeplabv3plus_gru_forward.34} parent=31 // pred_fallthru
        _
    $region32: #{deeplabv3plus_gru_forward.34} parent=5 // pred_fallthru
      _
    %p827 = scmp.le.s32.totalorder 2, %s9
    // Predicated region
    $region49: #{deeplabv3plus_gru_forward.34} parent=5 // pred_check
      %p828 = pneg %p827
    $region50: #{deeplabv3plus_gru_forward.34} parent=5 // pred_check_branch
      %830 = sbr.rel (%p828) target = $region52
    $region51: #{deeplabv3plus_gru_forward.34} parent=5 // pred_region
      %s831 = ssub.s32 %s9, 2
    $region52: #{deeplabv3plus_gru_forward.34} parent=5 // pred_fallthru
      _
  $region6: #{deeplabv3plus_gru_forward.34} parent=0 // loop_footer
    %s13 = sadd.s32 1, %s9
  $region7: #{deeplabv3plus_gru_forward.34} parent=0 // loop_footer_branch
    %8 = sbr.rel target = $region3
  $region8: #{deeplabv3plus_gru_forward.34} parent=0 // loop_exit
    _

// kernel: deeplabv3plus_gru_forward.37
$region0: #{deeplabv3plus_gru_forward.37}
  #allocation0 [shape = 'u32[]', space=smem, size = 0x4, offset = 0x4, fixed_abs, tag = 'smem constant byte address 0x4 - core index']
  #allocation1 [shape = 'u32[144,128]{1,0:T(1,128)}', space=vmem, size = 0x12000, scoped, tag = 'internal scratch']
  #allocation2 [shape = 'f32[1,320]{1,0:T(1,128)}', space=vmem, size = 0x600, scoped, tag = 'scratch operand']
  %s0 = inlined_call_operand.vmem [shape: bf16[2,8,320], index: 0, kind: input, shape index: {}]
  %s1 = inlined_call_operand.vmem [shape: f32[2,1,320], index: 1, kind: output, shape index: {}]
  %s2 = sld [smem:[#allocation0]]
  $region45: #{deeplabv3plus_gru_forward.37} parent=0
    _
  %s4 = ssub.s32 1, %s2
  %s5 = scalar_select 0, %s4, %s2
  loop: start=0, step=1, limit=4
  $region2: #{deeplabv3plus_gru_forward.37} parent=0 // loop_pre_header
    _
  $region3: #{deeplabv3plus_gru_forward.37} parent=0 // loop_header
    %s7 = sphi 0, %s11
    %p8 = scmp.ge.s32.totalorder %s7, 4
    %s14 = sphi 0, %s26
    %s15 = sphi 0, %s22
    %s16 = sphi 0, %s14
    %s17 = sphi 0, %s15
    %s18 = sphi 0, %s16
    %s19 = sphi 0, %s17
    %s31 = sphi 0, %s33
    %s34 = sphi 0, %s31
    %s35 = sphi 0, %s34
    %s51 = sphi 0, %s35
    %s57 = sphi 0, %s59
    %s60 = sphi 0, %s57
    %s61 = sphi 0, %s60
    %s77 = sphi 0, %s61
  $region4: #{deeplabv3plus_gru_forward.37} parent=0 // loop_header_branch
    %10 = sbr.rel (%p8) target = $region8
  $region5: #{deeplabv3plus_gru_forward.37} parent=0 // loop_body
    %s12 = ssub.s32 %s7, 1
    %s13 = ssub.s32 %s7, 2
    %s20 = sadd.s32 1, %s15
    %p21 = scmp.ge.s32.totalorder %s20, 1
    %s22 = scalar_select %p21, 0, %s20
    %s23 = sadd.s32 1, %s14
    %s24 = scalar_select %p21, %s23, %s14
    %p25 = scmp.ge.s32.totalorder %s24, 2
    %s26 = scalar_select %p25, 0, %s24
    %s27 = ssub.s32 %s14, %s26
    %s28 = ssub.s32 %s15, %s22
    %s29 = sor.u32 %s27, %s28
    %p30 = scmp.eq.s32.totalorder %s29, 0
    %s32 = sadd.s32 %s31, 1
    %s33 = scalar_select %p30, %s31, %s32
    %p36 = pneg %p30
    %p37 = scmp.eq.s32.totalorder %s7, 1
    %p38 = por %p36, %p37
    %p39 = scmp.ne.s32.totalorder %s31, %s34
    %p40 = scmp.eq.s32.totalorder %s7, 0
    %p41 = por %p39, %p40
    %p42 = scmp.ne.s32.totalorder %s31, %s34
    %p43 = scmp.eq.s32.totalorder %s12, 1
    %p44 = por %p42, %p43
    %p45 = scmp.ne.s32.totalorder %s34, %s35
    %p46 = scmp.eq.s32.totalorder %s12, 0
    %p47 = por %p45, %p46
    %p48 = scmp.ne.s32.totalorder %s34, %s35
    %p49 = scmp.eq.s32.totalorder %s13, 1
    %p50 = por %p48, %p49
    %p52 = scmp.ne.s32.totalorder %s35, %s51
    %p53 = scmp.eq.s32.totalorder %s13, 0
    %p54 = por %p52, %p53
    %s55 = ssub.s32 %s14, %s26
    %p56 = scmp.eq.s32.totalorder %s55, 0
    %s58 = sadd.s32 %s57, 1
    %s59 = scalar_select %p56, %s57, %s58
    %p62 = pneg %p56
    %p63 = scmp.eq.s32.totalorder %s7, 1
    %p64 = por %p62, %p63
    %p65 = scmp.ne.s32.totalorder %s57, %s60
    %p66 = scmp.eq.s32.totalorder %s7, 0
    %p67 = por %p65, %p66
    %p68 = scmp.ne.s32.totalorder %s57, %s60
    %p69 = scmp.eq.s32.totalorder %s12, 1
    %p70 = por %p68, %p69
    %p71 = scmp.ne.s32.totalorder %s60, %s61
    %p72 = scmp.eq.s32.totalorder %s12, 0
    %p73 = por %p71, %p72
    %p74 = scmp.ne.s32.totalorder %s60, %s61
    %p75 = scmp.eq.s32.totalorder %s13, 1
    %p76 = por %p74, %p75
    %p78 = scmp.ne.s32.totalorder %s61, %s77
    %p79 = scmp.eq.s32.totalorder %s13, 0
    %p80 = por %p78, %p79
    %p81 = scmp.le.s32.totalorder 1, %s7
    %p82 = scmp.lt.s32.totalorder %s7, 3
    %p83 = pnand %p81, %p82
    %p84 = pneg %p83
    // Predicated region
    $region9: #{deeplabv3plus_gru_forward.37} parent=5 // pred_check
      _
    $region10: #{deeplabv3plus_gru_forward.37} parent=5 // pred_check_branch
      %86 = sbr.rel (%p83) target = $region12
    $region11: #{deeplabv3plus_gru_forward.37} parent=5 // pred_region
      %s87 = ssub.s32 %s7, 1
    $region12: #{deeplabv3plus_gru_forward.37} parent=5 // pred_fallthru
      _
    %p88 = scmp.lt.s32.totalorder %s7, 2
    // Predicated region
    $region13: #{deeplabv3plus_gru_forward.37} parent=5 // pred_check
      %p89 = pneg %p88
    $region14: #{deeplabv3plus_gru_forward.37} parent=5 // pred_check_branch
      %91 = sbr.rel (%p89) target = $region16
    $region15: #{deeplabv3plus_gru_forward.37} parent=5 // pred_region
      // Predicated region
      $region17: #{deeplabv3plus_gru_forward.37} parent=15 // pred_check
        %p92 = pneg %p41
      $region18: #{deeplabv3plus_gru_forward.37} parent=15 // pred_check_branch
        %94 = sbr.rel (%p92) target = $region20
      $region19: #{deeplabv3plus_gru_forward.37} parent=15 // pred_region
        %p95 = scmp.lt.s32.totalorder %s14, 1
        %s96 = scalar_select %p95, %s14, 1
        %p97 = scmp.lt.s32.totalorder %s15, 0
        %s98 = scalar_select %p97, %s15, 0
        %s99 = smul.addr %s98, 3
        %s100 = smul.addr %s96, 3
        %s101 = sadd.s32 %s99, %s100
        %s102 = smul.addr %s101, 4
        %s103 = scalar_lea.vmem %s0, %s102
      $region20: #{deeplabv3plus_gru_forward.37} parent=15 // pred_fallthru
        _
    $region16: #{deeplabv3plus_gru_forward.37} parent=5 // pred_fallthru
      _
    %p104 = scmp.le.s32.totalorder 1, %s7
    %p105 = scmp.lt.s32.totalorder %s7, 3
    %p106 = pnand %p104, %p105
    %p107 = pneg %p106
    // Predicated region
    $region21: #{deeplabv3plus_gru_forward.37} parent=5 // pred_check
      _
    $region22: #{deeplabv3plus_gru_forward.37} parent=5 // pred_check_branch
      %109 = sbr.rel (%p106) target = $region24
    $region23: #{deeplabv3plus_gru_forward.37} parent=5 // pred_region
      %s110 = ssub.s32 %s7, 1
      %p111 = scmp.lt.s32.totalorder %s16, 1
      %s112 = scalar_select %p111, %s16, 1
      %p113 = scmp.lt.s32.totalorder %s17, 0
      %s114 = scalar_select %p113, %s17, 0
      %s115 = smul.addr %s114, 3
      %s116 = smul.addr %s112, 3
      %s117 = sadd.s32 %s115, %s116
      %s118 = smul.addr %s117, 4
      %s119 = scalar_lea.vmem %s0, %s118
      %p120 = pneg %p47
      %p121 = pneg %p44
      %p122 = pneg %p73
      %p123 = pneg %p70
      %p124 = scmp.lt.s32.totalorder %s16, 1
      %s125 = scalar_select %p124, %s16, 1
      %s126 = smul.addr %s125, 3
      %s127 = scalar_lea.vmem %s1, %s126
      %p128 = scmp.lt.s32.totalorder %s16, 1
      %s129 = scalar_select %p128, %s16, 1
      %p130 = scmp.lt.s32.totalorder %s17, 0
      %s131 = scalar_select %p130, %s17, 0
      %s132 = smul.addr %s131, 3
      %s133 = smul.addr %s129, 3
      %s134 = sadd.s32 %s132, %s133
      %s135 = smul.addr %s134, 4
      %s136 = scalar_lea.vmem %s0, %s135
      %p137 = scmp.lt.s32.totalorder %s16, 1
      %s138 = scalar_select %p137, %s16, 1
      %s139 = smul.addr %s138, 3
      %s140 = scalar_lea.vmem %s1, %s139
      %p141 = scmp.eq.s32.totalorder %s17, 0
      // Predicated region
      $region25: #{deeplabv3plus_gru_forward.37} parent=23 // pred_check
        %p142 = pneg %p141
      $region26: #{deeplabv3plus_gru_forward.37} parent=23 // pred_check_branch
        %144 = sbr.rel (%p142) target = $region28
      $region27: #{deeplabv3plus_gru_forward.37} parent=23 // pred_region
        %v145 = vlaneseq
        %vm146 = vcmp.ge.s32.totalorder %v145, 0
        %vm147 = vcmp.lt.s32.totalorder %v145, 320
        %vm148 = vmand %vm146, %vm147
        %149 = vst.msk [vmem:[#allocation2] sm:$0x7] %vm148, 0.0
      $region28: #{deeplabv3plus_gru_forward.37} parent=23 // pred_fallthru
        _
      %v150 = vld [vmem:[#allocation2] sm:$0x7]
      %v151 = vld [vmem:[%s136] sm:$0xff]
      %v152 = vld [vmem:[%s136 + $0x8] sm:$0xf]
      %v153 = vunpack.c.l.bf16 %v151
      %v154 = vunpack.c.h.bf16 %v151
      %v155 = vunpack.c.l.bf16 %v152
      %v156 = vrot.slane %v153, 4
      %v157 = vadd.f32 %v153, %v156
      %v158 = vrot.slane %v157, 2
      %v159 = vadd.f32 %v157, %v158
      %v160 = vrot.slane %v159, 1
      %v161 = vadd.f32 %v159, %v160
      %v162 = vrot.slane %v154, 4
      %v163 = vadd.f32 %v154, %v162
      %v164 = vrot.slane %v163, 2
      %v165 = vadd.f32 %v163, %v164
      %v166 = vrot.slane %v165, 1
      %v167 = vadd.f32 %v165, %v166
      %vm168 = vcmask 523264
      %v169 = vsel %vm168, %v155, 0.0
      %v170 = vrot.slane %v169, 4
      %v171 = vadd.f32 %v169, %v170
      %v172 = vrot.slane %v171, 2
      %v173 = vadd.f32 %v171, %v172
      %v174 = vrot.slane %v173, 1
      %v175 = vadd.f32 %v173, %v174
      %v179 = vcombine.low %v161, %v167
      %v181 = vunpack.c.l.s4 1966171168
      %v182 = vunpack.c.0.s8 %v181
      %v183 = vlaneseq
      %v184 = vshrl.u32 %v183, 7
      %v185 = vsub.s32 %v182, %v184
      %v186 = vrot.slane %v179, %v185
      %v188 = vunpack.c.l.s4 1966171168
      %v189 = vunpack.c.0.s8 %v188
      %v190 = vlaneseq
      %v191 = vshrl.u32 %v190, 7
      %v192 = vsub.s32 %v189, %v191
      %v193 = vrot.slane %v175, %v192
      %v194 = vcombine.low %v186, %v193
      %v196 = vunpack.c.l.s4 1966171168
      %v197 = vunpack.c.0.s8 %v196
      %v198 = vlaneseq
      %v199 = vshrl.u32 %v198, 7
      %v200 = vsub.s32 %v197, %v199
      %v201 = vrot.slane %v194, %v200
      %v203 = vadd.f32 %v150, %v201
      %v204 = vlaneseq
      %vm205 = vcmp.ge.s32.totalorder %v204, 0
      %vm206 = vcmp.lt.s32.totalorder %v204, 320
      %vm207 = vmand %vm205, %vm206
      %208 = vst.msk [vmem:[#allocation2] sm:$0x7] %vm207, %v203
      // Predicated region
      $region29: #{deeplabv3plus_gru_forward.37} parent=23 // pred_check
        %p209 = pneg %p141
      $region30: #{deeplabv3plus_gru_forward.37} parent=23 // pred_check_branch
        %211 = sbr.rel (%p209) target = $region32
      $region31: #{deeplabv3plus_gru_forward.37} parent=23 // pred_region
        %v212 = vld [vmem:[#allocation2] sm:$0x7]
        %v213 = vmul.f32 %v212, 0.25
        %214 = vst.msk [vmem:[%s140] sm:$0x7] %vm207, %v213
      $region32: #{deeplabv3plus_gru_forward.37} parent=23 // pred_fallthru
        _
      %p215 = scmp.lt.s32.totalorder %s16, 1
      %s216 = scalar_select %p215, %s16, 1
      %s217 = smul.addr %s216, 3
      %s218 = scalar_lea.vmem %s1, %s217
      // Predicated region
      $region33: #{deeplabv3plus_gru_forward.37} parent=23 // pred_check
        %p219 = pneg %p70
      $region34: #{deeplabv3plus_gru_forward.37} parent=23 // pred_check_branch
        %221 = sbr.rel (%p219) target = $region36
      $region35: #{deeplabv3plus_gru_forward.37} parent=23 // pred_region
        _
      $region36: #{deeplabv3plus_gru_forward.37} parent=23 // pred_fallthru
        _
    $region24: #{deeplabv3plus_gru_forward.37} parent=5 // pred_fallthru
      _
    %p222 = scmp.le.s32.totalorder 2, %s7
    // Predicated region
    $region37: #{deeplabv3plus_gru_forward.37} parent=5 // pred_check
      %p223 = pneg %p222
    $region38: #{deeplabv3plus_gru_forward.37} parent=5 // pred_check_branch
      %225 = sbr.rel (%p223) target = $region40
    $region39: #{deeplabv3plus_gru_forward.37} parent=5 // pred_region
      %s226 = ssub.s32 %s7, 2
      // Predicated region
      $region41: #{deeplabv3plus_gru_forward.37} parent=39 // pred_check
        %p227 = pneg %p76
      $region42: #{deeplabv3plus_gru_forward.37} parent=39 // pred_check_branch
        %229 = sbr.rel (%p227) target = $region44
      $region43: #{deeplabv3plus_gru_forward.37} parent=39 // pred_region
        %p230 = scmp.lt.s32.totalorder %s18, 1
        %s231 = scalar_select %p230, %s18, 1
        %s232 = smul.addr %s231, 3
        %s233 = scalar_lea.vmem %s1, %s232
      $region44: #{deeplabv3plus_gru_forward.37} parent=39 // pred_fallthru
        _
    $region40: #{deeplabv3plus_gru_forward.37} parent=5 // pred_fallthru
      _
  $region6: #{deeplabv3plus_gru_forward.37} parent=0 // loop_footer
    %s11 = sadd.s32 1, %s7
  $region7: #{deeplabv3plus_gru_forward.37} parent=0 // loop_footer_branch
    %6 = sbr.rel target = $region3
  $region8: #{deeplabv3plus_gru_forward.37} parent=0 // loop_exit
    _

// kernel: deeplabv3plus_gru_forward.38
$region0: #{deeplabv3plus_gru_forward.38}
  #allocation0 [shape = 'u32[]', space=smem, size = 0x4, offset = 0x4, fixed_abs, tag = 'smem constant byte address 0x4 - core index']
  #allocation1 [shape = 'u32[144,128]{1,0:T(1,128)}', space=vmem, size = 0x12000, scoped, tag = 'internal scratch']
  #allocation2 [shape = 'f32[8,256]{1,0:T(8,128)}', space=vmem, size = 0x2000, scoped, tag = 'scratch operand']
  %s0 = inlined_call_operand.vmem [shape: bf16[8,384], index: 0, kind: input, shape index: {}]
  %s1 = inlined_call_operand.vmem [shape: bf16[384,256], index: 1, kind: input, shape index: {}]
  %s2 = inlined_call_operand.vmem [shape: f32[1,256], index: 2, kind: input, shape index: {}]
  %s3 = inlined_call_operand.vmem [shape: bf16[8,256], index: 3, kind: output, shape index: {}]
  %s4 = sld [smem:[#allocation0]]
  $region30: #{deeplabv3plus_gru_forward.38} parent=0
    _
  %s6 = ssub.s32 1, %s4
  %s7 = scalar_select 0, %s6, %s4
  // Predicated region
  $region2: #{deeplabv3plus_gru_forward.38} parent=0 // pred_check
    _
  $region3: #{deeplabv3plus_gru_forward.38} parent=0 // pred_check_branch
    %9 = sbr.rel (0) target = $region5
  $region4: #{deeplabv3plus_gru_forward.38} parent=0 // pred_region
    _
  $region5: #{deeplabv3plus_gru_forward.38} parent=0 // pred_fallthru
    _
  // Predicated region
  $region6: #{deeplabv3plus_gru_forward.38} parent=0 // pred_check
    _
  $region7: #{deeplabv3plus_gru_forward.38} parent=0 // pred_check_branch
    %11 = sbr.rel (0) target = $region9
  $region8: #{deeplabv3plus_gru_forward.38} parent=0 // pred_region
    _
  $region9: #{deeplabv3plus_gru_forward.38} parent=0 // pred_fallthru
    _
  // Predicated region
  $region10: #{deeplabv3plus_gru_forward.38} parent=0 // pred_check
    _
  $region11: #{deeplabv3plus_gru_forward.38} parent=0 // pred_check_branch
    %13 = sbr.rel (0) target = $region13
  $region12: #{deeplabv3plus_gru_forward.38} parent=0 // pred_region
    _
  $region13: #{deeplabv3plus_gru_forward.38} parent=0 // pred_fallthru
    _
  %p15 = scmp.eq.s32.totalorder 0, 0
  // Predicated region
  $region14: #{deeplabv3plus_gru_forward.38} parent=0 // pred_check
    %p16 = pneg %p15
  $region15: #{deeplabv3plus_gru_forward.38} parent=0 // pred_check_branch
    %18 = sbr.rel (%p16) target = $region17
  $region16: #{deeplabv3plus_gru_forward.38} parent=0 // pred_region
    %19 = vst [vmem:[#allocation2] sm:$0xff] 0.0
    %20 = vst [vmem:[#allocation2 + $0x8] sm:$0xff] 0.0
  $region17: #{deeplabv3plus_gru_forward.38} parent=0 // pred_fallthru
    _
  %v21 = vld [vmem:[#allocation2] sm:$0xff]
  %v22 = vld [vmem:[#allocation2 + $0x8] sm:$0xff]
  %v23 = vld [vmem:[%s0] sm:$0xff]
  %v24 = vld [vmem:[%s0 + $0x8] sm:$0xf]
  %v25 = vld [vmem:[%s1] sm:$0xff]
  %v26 = vld [vmem:[%s1 + $0x8] sm:$0xff]
  %v27 = vld [vmem:[%s1 + $0x10] sm:$0xff]
  %v28 = vld [vmem:[%s1 + $0x18] sm:$0xff]
  %v29 = vld [vmem:[%s1 + $0x20] sm:$0xff]
  %v30 = vld [vmem:[%s1 + $0x28] sm:$0xff]
  %v31 = vld [vmem:[%s1 + $0x30] sm:$0xff]
  %v32 = vld [vmem:[%s1 + $0x38] sm:$0xff]
  %v33 = vld [vmem:[%s1 + $0x40] sm:$0xff]
  %v34 = vld [vmem:[%s1 + $0x48] sm:$0xff]
  %v35 = vld [vmem:[%s1 + $0x50] sm:$0xff]
  %v36 = vld [vmem:[%s1 + $0x58] sm:$0xff]
  %v37 = vld [vmem:[%s1 + $0x60] sm:$0xff]
  %v38 = vld [vmem:[%s1 + $0x68] sm:$0xff]
  %v39 = vld [vmem:[%s1 + $0x70] sm:$0xff]
  %v40 = vld [vmem:[%s1 + $0x78] sm:$0xff]
  %v41 = vld [vmem:[%s1 + $0x80] sm:$0xff]
  %v42 = vld [vmem:[%s1 + $0x88] sm:$0xff]
  %v43 = vld [vmem:[%s1 + $0x90] sm:$0xff]
  %v44 = vld [vmem:[%s1 + $0x98] sm:$0xff]
  %v45 = vld [vmem:[%s1 + $0xa0] sm:$0xff]
  %v46 = vld [vmem:[%s1 + $0xa8] sm:$0xff]
  %v47 = vld [vmem:[%s1 + $0xb0] sm:$0xff]
  %v48 = vld [vmem:[%s1 + $0xb8] sm:$0xff]
  %v49 = vld [vmem:[%s1 + $0xc0] sm:$0xff]
  %v50 = vld [vmem:[%s1 + $0xc8] sm:$0xff]
  %v51 = vld [vmem:[%s1 + $0xd0] sm:$0xff]
  %v52 = vld [vmem:[%s1 + $0xd8] sm:$0xff]
  %v53 = vld [vmem:[%s1 + $0xe0] sm:$0xff]
  %v54 = vld [vmem:[%s1 + $0xe8] sm:$0xff]
  %v55 = vld [vmem:[%s1 + $0xf0] sm:$0xff]
  %v56 = vld [vmem:[%s1 + $0xf8] sm:$0xff]
  %v57 = vld [vmem:[%s1 + $0x100] sm:$0xff]
  %v58 = vld [vmem:[%s1 + $0x108] sm:$0xff]
  %v59 = vld [vmem:[%s1 + $0x110] sm:$0xff]
  %v60 = vld [vmem:[%s1 + $0x118] sm:$0xff]
  %v61 = vld [vmem:[%s1 + $0x120] sm:$0xff]
  %v62 = vld [vmem:[%s1 + $0x128] sm:$0xff]
  %v63 = vld [vmem:[%s1 + $0x130] sm:$0xff]
  %v64 = vld [vmem:[%s1 + $0x138] sm:$0xff]
  %v65 = vld [vmem:[%s1 + $0x140] sm:$0xff]
  %v66 = vld [vmem:[%s1 + $0x148] sm:$0xff]
  %v67 = vld [vmem:[%s1 + $0x150] sm:$0xff]
  %v68 = vld [vmem:[%s1 + $0x158] sm:$0xff]
  %v69 = vld [vmem:[%s1 + $0x160] sm:$0xff]
  %v70 = vld [vmem:[%s1 + $0x168] sm:$0xff]
  %v71 = vld [vmem:[%s1 + $0x170] sm:$0xff]
  %v72 = vld [vmem:[%s1 + $0x178] sm:$0xff]
  %v75 = vunpack.c.l.b16 %v23
  %v76 = vunpack.c.h.b16 %v23
  %v77 = vunpack.c.l.b16 %v24
  %v78 = vpack.c.b16 %v75, %v75
  %v79 = vpack.c.b16 %v76, %v76
  %v80 = vpack.c.b16 %v77, %v77
  %v132 = vunpack.c.l.b16 %v25
  %v133 = vunpack.c.h.b16 %v25
  %v134 = vunpack.c.l.b16 %v26
  %v135 = vunpack.c.h.b16 %v26
  %v136 = vunpack.c.l.b16 %v27
  %v137 = vunpack.c.h.b16 %v27
  %v138 = vunpack.c.l.b16 %v28
  %v139 = vunpack.c.h.b16 %v28
  %v140 = vunpack.c.l.b16 %v29
  %v141 = vunpack.c.h.b16 %v29
  %v142 = vunpack.c.l.b16 %v30
  %v143 = vunpack.c.h.b16 %v30
  %v144 = vunpack.c.l.b16 %v31
  %v145 = vunpack.c.h.b16 %v31
  %v146 = vunpack.c.l.b16 %v32
  %v147 = vunpack.c.h.b16 %v32
  %v148 = vunpack.c.l.b16 %v33
  %v149 = vunpack.c.h.b16 %v33
  %v150 = vunpack.c.l.b16 %v34
  %v151 = vunpack.c.h.b16 %v34
  %v152 = vunpack.c.l.b16 %v35
  %v153 = vunpack.c.h.b16 %v35
  %v154 = vunpack.c.l.b16 %v36
  %v155 = vunpack.c.h.b16 %v36
  %v156 = vunpack.c.l.b16 %v37
  %v157 = vunpack.c.h.b16 %v37
  %v158 = vunpack.c.l.b16 %v38
  %v159 = vunpack.c.h.b16 %v38
  %v160 = vunpack.c.l.b16 %v39
  %v161 = vunpack.c.h.b16 %v39
  %v162 = vunpack.c.l.b16 %v40
  %v163 = vunpack.c.h.b16 %v40
  %v164 = vunpack.c.l.b16 %v41
  %v165 = vunpack.c.h.b16 %v41
  %v166 = vunpack.c.l.b16 %v42
  %v167 = vunpack.c.h.b16 %v42
  %v168 = vunpack.c.l.b16 %v43
  %v169 = vunpack.c.h.b16 %v43
  %v170 = vunpack.c.l.b16 %v44
  %v171 = vunpack.c.h.b16 %v44
  %v172 = vunpack.c.l.b16 %v45
  %v173 = vunpack.c.h.b16 %v45
  %v174 = vunpack.c.l.b16 %v46
  %v175 = vunpack.c.h.b16 %v46
  %v176 = vunpack.c.l.b16 %v47
  %v177 = vunpack.c.h.b16 %v47
  %v178 = vunpack.c.l.b16 %v48
  %v179 = vunpack.c.h.b16 %v48
  %v180 = vunpack.c.l.b16 %v49
  %v181 = vunpack.c.h.b16 %v49
  %v182 = vunpack.c.l.b16 %v50
  %v183 = vunpack.c.h.b16 %v50
  %v184 = vunpack.c.l.b16 %v51
  %v185 = vunpack.c.h.b16 %v51
  %v186 = vunpack.c.l.b16 %v52
  %v187 = vunpack.c.h.b16 %v52
  %v188 = vunpack.c.l.b16 %v53
  %v189 = vunpack.c.h.b16 %v53
  %v190 = vunpack.c.l.b16 %v54
  %v191 = vunpack.c.h.b16 %v54
  %v192 = vunpack.c.l.b16 %v55
  %v193 = vunpack.c.h.b16 %v55
  %v194 = vunpack.c.l.b16 %v56
  %v195 = vunpack.c.h.b16 %v56
  %v196 = vunpack.c.l.b16 %v57
  %v197 = vunpack.c.h.b16 %v57
  %v198 = vunpack.c.l.b16 %v58
  %v199 = vunpack.c.h.b16 %v58
  %v200 = vunpack.c.l.b16 %v59
  %v201 = vunpack.c.h.b16 %v59
  %v202 = vunpack.c.l.b16 %v60
  %v203 = vunpack.c.h.b16 %v60
  %v204 = vunpack.c.l.b16 %v61
  %v205 = vunpack.c.h.b16 %v61
  %v206 = vunpack.c.l.b16 %v62
  %v207 = vunpack.c.h.b16 %v62
  %v208 = vunpack.c.l.b16 %v63
  %v209 = vunpack.c.h.b16 %v63
  %v210 = vunpack.c.l.b16 %v64
  %v211 = vunpack.c.h.b16 %v64
  %v212 = vunpack.c.l.b16 %v65
  %v213 = vunpack.c.h.b16 %v65
  %v214 = vunpack.c.l.b16 %v66
  %v215 = vunpack.c.h.b16 %v66
  %v216 = vunpack.c.l.b16 %v67
  %v217 = vunpack.c.h.b16 %v67
  %v218 = vunpack.c.l.b16 %v68
  %v219 = vunpack.c.h.b16 %v68
  %v220 = vunpack.c.l.b16 %v69
  %v221 = vunpack.c.h.b16 %v69
  %v222 = vunpack.c.l.b16 %v70
  %v223 = vunpack.c.h.b16 %v70
  %v224 = vunpack.c.l.b16 %v71
  %v225 = vunpack.c.h.b16 %v71
  %v226 = vunpack.c.l.b16 %v72
  %v227 = vunpack.c.h.b16 %v72
  %v228 = vpack.c.b16 %v134, %v132
  %v229 = vpack.c.b16 %v135, %v133
  %v230 = vpack.c.b16 %v138, %v136
  %v231 = vpack.c.b16 %v139, %v137
  %v232 = vpack.c.b16 %v142, %v140
  %v233 = vpack.c.b16 %v143, %v141
  %v234 = vpack.c.b16 %v146, %v144
  %v235 = vpack.c.b16 %v147, %v145
  %v236 = vpack.c.b16 %v150, %v148
  %v237 = vpack.c.b16 %v151, %v149
  %v238 = vpack.c.b16 %v154, %v152
  %v239 = vpack.c.b16 %v155, %v153
  %v240 = vpack.c.b16 %v158, %v156
  %v241 = vpack.c.b16 %v159, %v157
  %v242 = vpack.c.b16 %v162, %v160
  %v243 = vpack.c.b16 %v163, %v161
  %v244 = vpack.c.b16 %v166, %v164
  %v245 = vpack.c.b16 %v167, %v165
  %v246 = vpack.c.b16 %v170, %v168
  %v247 = vpack.c.b16 %v171, %v169
  %v248 = vpack.c.b16 %v174, %v172
  %v249 = vpack.c.b16 %v175, %v173
  %v250 = vpack.c.b16 %v178, %v176
  %v251 = vpack.c.b16 %v179, %v177
  %v252 = vpack.c.b16 %v182, %v180
  %v253 = vpack.c.b16 %v183, %v181
  %v254 = vpack.c.b16 %v186, %v184
  %v255 = vpack.c.b16 %v187, %v185
  %v256 = vpack.c.b16 %v190, %v188
  %v257 = vpack.c.b16 %v191, %v189
  %v258 = vpack.c.b16 %v194, %v192
  %v259 = vpack.c.b16 %v195, %v193
  %v260 = vpack.c.b16 %v198, %v196
  %v261 = vpack.c.b16 %v199, %v197
  %v262 = vpack.c.b16 %v202, %v200
  %v263 = vpack.c.b16 %v203, %v201
  %v264 = vpack.c.b16 %v206, %v204
  %v265 = vpack.c.b16 %v207, %v205
  %v266 = vpack.c.b16 %v210, %v208
  %v267 = vpack.c.b16 %v211, %v209
  %v268 = vpack.c.b16 %v214, %v212
  %v269 = vpack.c.b16 %v215, %v213
  %v270 = vpack.c.b16 %v218, %v216
  %v271 = vpack.c.b16 %v219, %v217
  %v272 = vpack.c.b16 %v222, %v220
  %v273 = vpack.c.b16 %v223, %v221
  %v274 = vpack.c.b16 %v226, %v224
  %v275 = vpack.c.b16 %v227, %v225
  %324 = vmatprep.subr.bf16.mxu0 %v229
  %325 = vmatpush1.bf16.msra.mxu0 %v228
  %326 = vmatprep.subr.bf16.mxu0 %v231
  %327 = vmatpush1.bf16.msra.mxu0 %v230
  %328 = vmatprep.subr.bf16.mxu0 %v233
  %329 = vmatpush1.bf16.msra.mxu0 %v232
  %330 = vmatprep.subr.bf16.mxu0 %v235
  %331 = vmatpush1.bf16.msra.mxu0 %v234
  %332 = vmatprep.subr.bf16.mxu0 %v237
  %333 = vmatpush1.bf16.msra.mxu0 %v236
  %334 = vmatprep.subr.bf16.mxu0 %v239
  %335 = vmatpush1.bf16.msra.mxu0 %v238
  %336 = vmatprep.subr.bf16.mxu0 %v241
  %337 = vmatpush1.bf16.msra.mxu0 %v240
  %338 = vmatprep.subr.bf16.mxu0 %v243
  %339 = vmatpush1.bf16.msra.mxu0 %v242
  %340 = vmatprep.subr.bf16.mxu0 %v245
  %341 = vmatpush1.bf16.msra.mxu0 %v244
  %342 = vmatprep.subr.bf16.mxu0 %v247
  %343 = vmatpush1.bf16.msra.mxu0 %v246
  %344 = vmatprep.subr.bf16.mxu0 %v249
  %345 = vmatpush1.bf16.msra.mxu0 %v248
  %346 = vmatprep.subr.bf16.mxu0 %v251
  %347 = vmatpush1.bf16.msra.mxu0 %v250
  %348 = vmatprep.subr.bf16.mxu0 %v253
  %349 = vmatpush1.bf16.msra.mxu0 %v252
  %350 = vmatprep.subr.bf16.mxu0 %v255
  %351 = vmatpush1.bf16.msra.mxu0 %v254
  %352 = vmatprep.subr.bf16.mxu0 %v257
  %353 = vmatpush1.bf16.msra.mxu0 %v256
  %354 = vmatprep.subr.bf16.mxu0 %v259
  %355 = vmatpush1.bf16.msra.mxu0 %v258
  %356 = vmatprep.mubr.bf16.mxu0 %v79
  %357 = vmatmul.mubr.bf16.gmra.mrb[0].mxu0 %v78
  %v358 = vpop.f32.mrb[0].mxu0
  %v359 = vadd.f32 0.0, %v358
  %v360 = vpop.f32.mrb[0].mxu0
  %v361 = vadd.f32 0.0, %v360
  %v362 = vpop.f32.mrb[0].mxu0
  %v363 = vpop.f32.mrb[0].mxu0
  %364 = vdwg.mxu0
  %365 = vmatprep.subr.bf16.mxu0 %v261
  %366 = vmatpush1.bf16.msra.mxu0 %v260
  %367 = vmatprep.subr.bf16.mxu0 %v263
  %368 = vmatpush1.bf16.msra.mxu0 %v262
  %369 = vmatprep.subr.bf16.mxu0 %v265
  %370 = vmatpush1.bf16.msra.mxu0 %v264
  %371 = vmatprep.subr.bf16.mxu0 %v267
  %372 = vmatpush1.bf16.msra.mxu0 %v266
  %373 = vmatprep.subr.bf16.mxu0 %v269
  %374 = vmatpush1.bf16.msra.mxu0 %v268
  %375 = vmatprep.subr.bf16.mxu0 %v271
  %376 = vmatpush1.bf16.msra.mxu0 %v270
  %377 = vmatprep.subr.bf16.mxu0 %v273
  %378 = vmatpush1.bf16.msra.mxu0 %v272
  %379 = vmatprep.subr.bf16.mxu0 %v275
  %380 = vmatpush1.bf16.msra.mxu0 %v274
  %381 = vmatprep.subr.bf16.mxu0 0
  %382 = vmatpush1.bf16.msra.mxu0 0
  %383 = vmatprep.subr.bf16.mxu0 0
  %384 = vmatpush1.bf16.msra.mxu0 0
  %385 = vmatprep.subr.bf16.mxu0 0
  %386 = vmatpush1.bf16.msra.mxu0 0
  %387 = vmatprep.subr.bf16.mxu0 0
  %388 = vmatpush1.bf16.msra.mxu0 0
  %389 = vmatprep.subr.bf16.mxu0 0
  %390 = vmatpush1.bf16.msra.mxu0 0
  %391 = vmatprep.subr.bf16.mxu0 0
  %392 = vmatpush1.bf16.msra.mxu0 0
  %393 = vmatprep.subr.bf16.mxu0 0
  %394 = vmatpush1.bf16.msra.mxu0 0
  %395 = vmatprep.subr.bf16.mxu0 0
  %396 = vmatpush1.bf16.msra.mxu0 0
  %397 = vmatprep.mubr.bf16.mxu0 0
  %398 = vmatmul.mubr.bf16.gmra.mrb[0].mxu0 %v80
  %v399 = vpop.f32.mrb[0].mxu0
  %v400 = vadd.f32 %v359, %v399
  %v401 = vpop.f32.mrb[0].mxu0
  %v402 = vadd.f32 %v361, %v401
  %v403 = vpop.f32.mrb[0].mxu0
  %v404 = vpop.f32.mrb[0].mxu0
  %405 = vdwg.mxu0
  %v406 = vadd.f32 %v21, %v400
  %v407 = vadd.f32 %v22, %v402
  %408 = vst [vmem:[#allocation2] sm:$0xff] %v406
  %409 = vst [vmem:[#allocation2 + $0x8] sm:$0xff] %v407
  // Predicated region
  $region18: #{deeplabv3plus_gru_forward.38} parent=0 // pred_check
    %p410 = pneg %p15
  $region19: #{deeplabv3plus_gru_forward.38} parent=0 // pred_check_branch
    %412 = sbr.rel (%p410) target = $region21
  $region20: #{deeplabv3plus_gru_forward.38} parent=0 // pred_region
    %v413 = vld [vmem:[#allocation2] sm:$0xff]
    %v414 = vld [vmem:[#allocation2 + $0x8] sm:$0xff]
    %v415 = vld [vmem:[%s2] sm:$0x3]
    %v417 = vlaneseq
    %v418 = vshrl.u32 %v417, 7
    %v419 = vsub.s32 0, %v418
    %v420 = vrot.slane %v415, %v419
    %v421 = vlaneseq
    %v422 = vshrl.u32 %v421, 7
    %v423 = vsub.s32 1, %v422
    %v424 = vrot.slane %v415, %v423
    %v427 = vadd.f32 %v413, %v420
    %v428 = vadd.f32 %v414, %v424
    %v429 = vmax.f32 %v427, 0.0
    %v430 = vmax.f32 %v428, 0.0
    %v431 = vpack.c.bf16 %v429, %v429
    %v432 = vpack.c.bf16 %v430, %v430
    %v435 = vunpack.c.l.b16 %v431
    %v436 = vunpack.c.l.b16 %v432
    %v437 = vpack.c.b16 %v436, %v435
    %439 = vst [vmem:[%s3] sm:$0xff] %v437
  $region21: #{deeplabv3plus_gru_forward.38} parent=0 // pred_fallthru
    _
  // Predicated region
  $region22: #{deeplabv3plus_gru_forward.38} parent=0 // pred_check
    _
  $region23: #{deeplabv3plus_gru_forward.38} parent=0 // pred_check_branch
    %441 = sbr.rel (0) target = $region25
  $region24: #{deeplabv3plus_gru_forward.38} parent=0 // pred_region
    _
  $region25: #{deeplabv3plus_gru_forward.38} parent=0 // pred_fallthru
    _
  // Predicated region
  $region26: #{deeplabv3plus_gru_forward.38} parent=0 // pred_check
    _
  $region27: #{deeplabv3plus_gru_forward.38} parent=0 // pred_check_branch
    %443 = sbr.rel (0) target = $region29
  $region28: #{deeplabv3plus_gru_forward.38} parent=0 // pred_region
    _
  $region29: #{deeplabv3plus_gru_forward.38} parent=0 // pred_fallthru
    _

// kernel: deeplabv3plus_gru_forward.39
$region0: #{deeplabv3plus_gru_forward.39}
  #allocation0 [shape = 'u32[]', space=smem, size = 0x4, offset = 0x4, fixed_abs, tag = 'smem constant byte address 0x4 - core index']
  #allocation1 [shape = 'u32[144,128]{1,0:T(1,128)}', space=vmem, size = 0x12000, scoped, tag = 'internal scratch']
  #allocation2 [shape = 'f32[8,256]{1,0:T(8,128)}', space=vmem, size = 0x2000, scoped, tag = 'scratch operand']
  %s0 = inlined_call_operand.vmem [shape: bf16[8,256], index: 0, kind: input, shape index: {}]
  %s1 = inlined_call_operand.vmem [shape: bf16[256,256], index: 1, kind: input, shape index: {}]
  %s2 = inlined_call_operand.vmem [shape: f32[1,256], index: 2, kind: input, shape index: {}]
  %s3 = inlined_call_operand.vmem [shape: f32[8,256], index: 3, kind: output, shape index: {}]
  %s4 = sld [smem:[#allocation0]]
  $region30: #{deeplabv3plus_gru_forward.39} parent=0
    _
  %s6 = ssub.s32 1, %s4
  %s7 = scalar_select 0, %s6, %s4
  // Predicated region
  $region2: #{deeplabv3plus_gru_forward.39} parent=0 // pred_check
    _
  $region3: #{deeplabv3plus_gru_forward.39} parent=0 // pred_check_branch
    %9 = sbr.rel (0) target = $region5
  $region4: #{deeplabv3plus_gru_forward.39} parent=0 // pred_region
    _
  $region5: #{deeplabv3plus_gru_forward.39} parent=0 // pred_fallthru
    _
  // Predicated region
  $region6: #{deeplabv3plus_gru_forward.39} parent=0 // pred_check
    _
  $region7: #{deeplabv3plus_gru_forward.39} parent=0 // pred_check_branch
    %11 = sbr.rel (0) target = $region9
  $region8: #{deeplabv3plus_gru_forward.39} parent=0 // pred_region
    _
  $region9: #{deeplabv3plus_gru_forward.39} parent=0 // pred_fallthru
    _
  // Predicated region
  $region10: #{deeplabv3plus_gru_forward.39} parent=0 // pred_check
    _
  $region11: #{deeplabv3plus_gru_forward.39} parent=0 // pred_check_branch
    %13 = sbr.rel (0) target = $region13
  $region12: #{deeplabv3plus_gru_forward.39} parent=0 // pred_region
    _
  $region13: #{deeplabv3plus_gru_forward.39} parent=0 // pred_fallthru
    _
  %p14 = scmp.eq.s32.totalorder 0, 0
  // Predicated region
  $region14: #{deeplabv3plus_gru_forward.39} parent=0 // pred_check
    %p15 = pneg %p14
  $region15: #{deeplabv3plus_gru_forward.39} parent=0 // pred_check_branch
    %17 = sbr.rel (%p15) target = $region17
  $region16: #{deeplabv3plus_gru_forward.39} parent=0 // pred_region
    %18 = vst [vmem:[#allocation2] sm:$0xff] 0.0
    %19 = vst [vmem:[#allocation2 + $0x8] sm:$0xff] 0.0
  $region17: #{deeplabv3plus_gru_forward.39} parent=0 // pred_fallthru
    _
  %v20 = vld [vmem:[#allocation2] sm:$0xff]
  %v21 = vld [vmem:[#allocation2 + $0x8] sm:$0xff]
  %v22 = vld [vmem:[%s0] sm:$0xff]
  %v23 = vld [vmem:[%s1] sm:$0xff]
  %v24 = vld [vmem:[%s1 + $0x8] sm:$0xff]
  %v25 = vld [vmem:[%s1 + $0x10] sm:$0xff]
  %v26 = vld [vmem:[%s1 + $0x18] sm:$0xff]
  %v27 = vld [vmem:[%s1 + $0x20] sm:$0xff]
  %v28 = vld [vmem:[%s1 + $0x28] sm:$0xff]
  %v29 = vld [vmem:[%s1 + $0x30] sm:$0xff]
  %v30 = vld [vmem:[%s1 + $0x38] sm:$0xff]
  %v31 = vld [vmem:[%s1 + $0x40] sm:$0xff]
  %v32 = vld [vmem:[%s1 + $0x48] sm:$0xff]
  %v33 = vld [vmem:[%s1 + $0x50] sm:$0xff]
  %v34 = vld [vmem:[%s1 + $0x58] sm:$0xff]
  %v35 = vld [vmem:[%s1 + $0x60] sm:$0xff]
  %v36 = vld [vmem:[%s1 + $0x68] sm:$0xff]
  %v37 = vld [vmem:[%s1 + $0x70] sm:$0xff]
  %v38 = vld [vmem:[%s1 + $0x78] sm:$0xff]
  %v39 = vld [vmem:[%s1 + $0x80] sm:$0xff]
  %v40 = vld [vmem:[%s1 + $0x88] sm:$0xff]
  %v41 = vld [vmem:[%s1 + $0x90] sm:$0xff]
  %v42 = vld [vmem:[%s1 + $0x98] sm:$0xff]
  %v43 = vld [vmem:[%s1 + $0xa0] sm:$0xff]
  %v44 = vld [vmem:[%s1 + $0xa8] sm:$0xff]
  %v45 = vld [vmem:[%s1 + $0xb0] sm:$0xff]
  %v46 = vld [vmem:[%s1 + $0xb8] sm:$0xff]
  %v47 = vld [vmem:[%s1 + $0xc0] sm:$0xff]
  %v48 = vld [vmem:[%s1 + $0xc8] sm:$0xff]
  %v49 = vld [vmem:[%s1 + $0xd0] sm:$0xff]
  %v50 = vld [vmem:[%s1 + $0xd8] sm:$0xff]
  %v51 = vld [vmem:[%s1 + $0xe0] sm:$0xff]
  %v52 = vld [vmem:[%s1 + $0xe8] sm:$0xff]
  %v53 = vld [vmem:[%s1 + $0xf0] sm:$0xff]
  %v54 = vld [vmem:[%s1 + $0xf8] sm:$0xff]
  %v56 = vunpack.c.l.b16 %v22
  %v57 = vunpack.c.h.b16 %v22
  %v58 = vpack.c.b16 %v56, %v56
  %v59 = vpack.c.b16 %v57, %v57
  %v94 = vunpack.c.l.b16 %v23
  %v95 = vunpack.c.h.b16 %v23
  %v96 = vunpack.c.l.b16 %v24
  %v97 = vunpack.c.h.b16 %v24
  %v98 = vunpack.c.l.b16 %v25
  %v99 = vunpack.c.h.b16 %v25
  %v100 = vunpack.c.l.b16 %v26
  %v101 = vunpack.c.h.b16 %v26
  %v102 = vunpack.c.l.b16 %v27
  %v103 = vunpack.c.h.b16 %v27
  %v104 = vunpack.c.l.b16 %v28
  %v105 = vunpack.c.h.b16 %v28
  %v106 = vunpack.c.l.b16 %v29
  %v107 = vunpack.c.h.b16 %v29
  %v108 = vunpack.c.l.b16 %v30
  %v109 = vunpack.c.h.b16 %v30
  %v110 = vunpack.c.l.b16 %v31
  %v111 = vunpack.c.h.b16 %v31
  %v112 = vunpack.c.l.b16 %v32
  %v113 = vunpack.c.h.b16 %v32
  %v114 = vunpack.c.l.b16 %v33
  %v115 = vunpack.c.h.b16 %v33
  %v116 = vunpack.c.l.b16 %v34
  %v117 = vunpack.c.h.b16 %v34
  %v118 = vunpack.c.l.b16 %v35
  %v119 = vunpack.c.h.b16 %v35
  %v120 = vunpack.c.l.b16 %v36
  %v121 = vunpack.c.h.b16 %v36
  %v122 = vunpack.c.l.b16 %v37
  %v123 = vunpack.c.h.b16 %v37
  %v124 = vunpack.c.l.b16 %v38
  %v125 = vunpack.c.h.b16 %v38
  %v126 = vunpack.c.l.b16 %v39
  %v127 = vunpack.c.h.b16 %v39
  %v128 = vunpack.c.l.b16 %v40
  %v129 = vunpack.c.h.b16 %v40
  %v130 = vunpack.c.l.b16 %v41
  %v131 = vunpack.c.h.b16 %v41
  %v132 = vunpack.c.l.b16 %v42
  %v133 = vunpack.c.h.b16 %v42
  %v134 = vunpack.c.l.b16 %v43
  %v135 = vunpack.c.h.b16 %v43
  %v136 = vunpack.c.l.b16 %v44
  %v137 = vunpack.c.h.b16 %v44
  %v138 = vunpack.c.l.b16 %v45
  %v139 = vunpack.c.h.b16 %v45
  %v140 = vunpack.c.l.b16 %v46
  %v141 = vunpack.c.h.b16 %v46
  %v142 = vunpack.c.l.b16 %v47
  %v143 = vunpack.c.h.b16 %v47
  %v144 = vunpack.c.l.b16 %v48
  %v145 = vunpack.c.h.b16 %v48
  %v146 = vunpack.c.l.b16 %v49
  %v147 = vunpack.c.h.b16 %v49
  %v148 = vunpack.c.l.b16 %v50
  %v149 = vunpack.c.h.b16 %v50
  %v150 = vunpack.c.l.b16 %v51
  %v151 = vunpack.c.h.b16 %v51
  %v152 = vunpack.c.l.b16 %v52
  %v153 = vunpack.c.h.b16 %v52
  %v154 = vunpack.c.l.b16 %v53
  %v155 = vunpack.c.h.b16 %v53
  %v156 = vunpack.c.l.b16 %v54
  %v157 = vunpack.c.h.b16 %v54
  %v158 = vpack.c.b16 %v96, %v94
  %v159 = vpack.c.b16 %v97, %v95
  %v160 = vpack.c.b16 %v100, %v98
  %v161 = vpack.c.b16 %v101, %v99
  %v162 = vpack.c.b16 %v104, %v102
  %v163 = vpack.c.b16 %v105, %v103
  %v164 = vpack.c.b16 %v108, %v106
  %v165 = vpack.c.b16 %v109, %v107
  %v166 = vpack.c.b16 %v112, %v110
  %v167 = vpack.c.b16 %v113, %v111
  %v168 = vpack.c.b16 %v116, %v114
  %v169 = vpack.c.b16 %v117, %v115
  %v170 = vpack.c.b16 %v120, %v118
  %v171 = vpack.c.b16 %v121, %v119
  %v172 = vpack.c.b16 %v124, %v122
  %v173 = vpack.c.b16 %v125, %v123
  %v174 = vpack.c.b16 %v128, %v126
  %v175 = vpack.c.b16 %v129, %v127
  %v176 = vpack.c.b16 %v132, %v130
  %v177 = vpack.c.b16 %v133, %v131
  %v178 = vpack.c.b16 %v136, %v134
  %v179 = vpack.c.b16 %v137, %v135
  %v180 = vpack.c.b16 %v140, %v138
  %v181 = vpack.c.b16 %v141, %v139
  %v182 = vpack.c.b16 %v144, %v142
  %v183 = vpack.c.b16 %v145, %v143
  %v184 = vpack.c.b16 %v148, %v146
  %v185 = vpack.c.b16 %v149, %v147
  %v186 = vpack.c.b16 %v152, %v150
  %v187 = vpack.c.b16 %v153, %v151
  %v188 = vpack.c.b16 %v156, %v154
  %v189 = vpack.c.b16 %v157, %v155
  %222 = vmatprep.subr.bf16.mxu0 %v159
  %223 = vmatpush1.bf16.msra.mxu0 %v158
  %224 = vmatprep.subr.bf16.mxu0 %v161
  %225 = vmatpush1.bf16.msra.mxu0 %v160
  %226 = vmatprep.subr.bf16.mxu0 %v163
  %227 = vmatpush1.bf16.msra.mxu0 %v162
  %228 = vmatprep.subr.bf16.mxu0 %v165
  %229 = vmatpush1.bf16.msra.mxu0 %v164
  %230 = vmatprep.subr.bf16.mxu0 %v167
  %231 = vmatpush1.bf16.msra.mxu0 %v166
  %232 = vmatprep.subr.bf16.mxu0 %v169
  %233 = vmatpush1.bf16.msra.mxu0 %v168
  %234 = vmatprep.subr.bf16.mxu0 %v171
  %235 = vmatpush1.bf16.msra.mxu0 %v170
  %236 = vmatprep.subr.bf16.mxu0 %v173
  %237 = vmatpush1.bf16.msra.mxu0 %v172
  %238 = vmatprep.subr.bf16.mxu0 %v175
  %239 = vmatpush1.bf16.msra.mxu0 %v174
  %240 = vmatprep.subr.bf16.mxu0 %v177
  %241 = vmatpush1.bf16.msra.mxu0 %v176
  %242 = vmatprep.subr.bf16.mxu0 %v179
  %243 = vmatpush1.bf16.msra.mxu0 %v178
  %244 = vmatprep.subr.bf16.mxu0 %v181
  %245 = vmatpush1.bf16.msra.mxu0 %v180
  %246 = vmatprep.subr.bf16.mxu0 %v183
  %247 = vmatpush1.bf16.msra.mxu0 %v182
  %248 = vmatprep.subr.bf16.mxu0 %v185
  %249 = vmatpush1.bf16.msra.mxu0 %v184
  %250 = vmatprep.subr.bf16.mxu0 %v187
  %251 = vmatpush1.bf16.msra.mxu0 %v186
  %252 = vmatprep.subr.bf16.mxu0 %v189
  %253 = vmatpush1.bf16.msra.mxu0 %v188
  %254 = vmatprep.mubr.bf16.mxu0 %v59
  %255 = vmatmul.mubr.bf16.gmra.mrb[0].mxu0 %v58
  %v256 = vpop.f32.mrb[0].mxu0
  %v257 = vadd.f32 0.0, %v256
  %v258 = vpop.f32.mrb[0].mxu0
  %v259 = vadd.f32 0.0, %v258
  %v260 = vpop.f32.mrb[0].mxu0
  %v261 = vpop.f32.mrb[0].mxu0
  %262 = vdwg.mxu0
  %v263 = vadd.f32 %v20, %v257
  %v264 = vadd.f32 %v21, %v259
  %265 = vst [vmem:[#allocation2] sm:$0xff] %v263
  %266 = vst [vmem:[#allocation2 + $0x8] sm:$0xff] %v264
  // Predicated region
  $region18: #{deeplabv3plus_gru_forward.39} parent=0 // pred_check
    %p267 = pneg %p14
  $region19: #{deeplabv3plus_gru_forward.39} parent=0 // pred_check_branch
    %269 = sbr.rel (%p267) target = $region21
  $region20: #{deeplabv3plus_gru_forward.39} parent=0 // pred_region
    %v270 = vld [vmem:[#allocation2] sm:$0xff]
    %v271 = vld [vmem:[#allocation2 + $0x8] sm:$0xff]
    %v272 = vld [vmem:[%s2] sm:$0x3]
    %v274 = vlaneseq
    %v275 = vshrl.u32 %v274, 7
    %v276 = vsub.s32 0, %v275
    %v277 = vrot.slane %v272, %v276
    %v278 = vlaneseq
    %v279 = vshrl.u32 %v278, 7
    %v280 = vsub.s32 1, %v279
    %v281 = vrot.slane %v272, %v280
    %v284 = vadd.f32 %v270, %v277
    %v285 = vadd.f32 %v271, %v281
    %286 = vst [vmem:[%s3] sm:$0xff] %v284
    %287 = vst [vmem:[%s3 + $0x8] sm:$0xff] %v285
  $region21: #{deeplabv3plus_gru_forward.39} parent=0 // pred_fallthru
    _
  // Predicated region
  $region22: #{deeplabv3plus_gru_forward.39} parent=0 // pred_check
    _
  $region23: #{deeplabv3plus_gru_forward.39} parent=0 // pred_check_branch
    %289 = sbr.rel (0) target = $region25
  $region24: #{deeplabv3plus_gru_forward.39} parent=0 // pred_region
    _
  $region25: #{deeplabv3plus_gru_forward.39} parent=0 // pred_fallthru
    _
  // Predicated region
  $region26: #{deeplabv3plus_gru_forward.39} parent=0 // pred_check
    _
  $region27: #{deeplabv3plus_gru_forward.39} parent=0 // pred_check_branch
    %291 = sbr.rel (0) target = $region29
  $region28: #{deeplabv3plus_gru_forward.39} parent=0 // pred_region
    _
  $region29: #{deeplabv3plus_gru_forward.39} parent=0 // pred_fallthru
    _

// kernel: deeplabv3plus_gru_forward.40
$region0: #{deeplabv3plus_gru_forward.40}
  #allocation0 [shape = 'u32[]', space=smem, size = 0x4, offset = 0x4, fixed_abs, tag = 'smem constant byte address 0x4 - core index']
  #allocation1 [shape = 'u32[144,128]{1,0:T(1,128)}', space=vmem, size = 0x12000, scoped, tag = 'internal scratch']
  %s0 = inlined_call_operand.vmem [shape: bf16[2,8,256], index: 0, kind: input, shape index: {}]
  %s1 = inlined_call_operand.vmem [shape: bf16[2,8,256], index: 1, kind: input, shape index: {}]
  %s2 = inlined_call_operand.vmem [shape: bf16[2,8,256], index: 2, kind: input, shape index: {}]
  %s3 = inlined_call_operand.vmem [shape: bf16[2,8,256], index: 3, kind: input, shape index: {}]
  %s4 = inlined_call_operand.vmem [shape: f32[2,1,256], index: 4, kind: input, shape index: {}]
  %s5 = inlined_call_operand.vmem [shape: bf16[4,256,256], index: 5, kind: input, shape index: {}]
  %s6 = inlined_call_operand.vmem [shape: bf16[2,8,256], index: 6, kind: output, shape index: {}]
  %s7 = sld [smem:[#allocation0]]
  $region57: #{deeplabv3plus_gru_forward.40} parent=0
    _
  %s9 = ssub.s32 1, %s7
  %s10 = scalar_select 0, %s9, %s7
  loop: start=0, step=1, limit=4
  $region2: #{deeplabv3plus_gru_forward.40} parent=0 // loop_pre_header
    _
  $region3: #{deeplabv3plus_gru_forward.40} parent=0 // loop_header
    %s12 = sphi 0, %s16
    %p13 = scmp.ge.s32.totalorder %s12, 4
    %s19 = sphi 0, %s31
    %s20 = sphi 0, %s27
    %s21 = sphi 0, %s19
    %s22 = sphi 0, %s20
    %s23 = sphi 0, %s21
    %s24 = sphi 0, %s22
    %s36 = sphi 0, %s38
    %s39 = sphi 0, %s36
    %s40 = sphi 0, %s39
    %s56 = sphi 0, %s40
    %s64 = sphi 0, %s66
    %s67 = sphi 0, %s64
    %s68 = sphi 0, %s67
    %s84 = sphi 0, %s68
    %s92 = sphi 0, %s94
    %s95 = sphi 0, %s92
    %s96 = sphi 0, %s95
    %s112 = sphi 0, %s96
    %s120 = sphi 0, %s122
    %s123 = sphi 0, %s120
    %s124 = sphi 0, %s123
    %s140 = sphi 0, %s124
    %s146 = sphi 0, %s148
    %s149 = sphi 0, %s146
    %s150 = sphi 0, %s149
    %s166 = sphi 0, %s150
    %s170 = sphi 0, %s170
    %s172 = sphi 0, %s170
    %s173 = sphi 0, %s172
    %s187 = sphi 0, %s173
    %s195 = sphi 0, %s197
    %s198 = sphi 0, %s195
    %s199 = sphi 0, %s198
    %s215 = sphi 0, %s199
  $region4: #{deeplabv3plus_gru_forward.40} parent=0 // loop_header_branch
    %15 = sbr.rel (%p13) target = $region8
  $region5: #{deeplabv3plus_gru_forward.40} parent=0 // loop_body
    %s17 = ssub.s32 %s12, 1
    %s18 = ssub.s32 %s12, 2
    %s25 = sadd.s32 1, %s20
    %p26 = scmp.ge.s32.totalorder %s25, 1
    %s27 = scalar_select %p26, 0, %s25
    %s28 = sadd.s32 1, %s19
    %s29 = scalar_select %p26, %s28, %s19
    %p30 = scmp.ge.s32.totalorder %s29, 2
    %s31 = scalar_select %p30, 0, %s29
    %s32 = ssub.s32 %s19, %s31
    %s33 = ssub.s32 %s20, %s27
    %s34 = sor.u32 %s32, %s33
    %p35 = scmp.eq.s32.totalorder %s34, 0
    %s37 = sadd.s32 %s36, 1
    %s38 = scalar_select %p35, %s36, %s37
    %p41 = pneg %p35
    %p42 = scmp.eq.s32.totalorder %s12, 1
    %p43 = por %p41, %p42
    %p44 = scmp.ne.s32.totalorder %s36, %s39
    %p45 = scmp.eq.s32.totalorder %s12, 0
    %p46 = por %p44, %p45
    %p47 = scmp.ne.s32.totalorder %s36, %s39
    %p48 = scmp.eq.s32.totalorder %s17, 1
    %p49 = por %p47, %p48
    %p50 = scmp.ne.s32.totalorder %s39, %s40
    %p51 = scmp.eq.s32.totalorder %s17, 0
    %p52 = por %p50, %p51
    %p53 = scmp.ne.s32.totalorder %s39, %s40
    %p54 = scmp.eq.s32.totalorder %s18, 1
    %p55 = por %p53, %p54
    %p57 = scmp.ne.s32.totalorder %s40, %s56
    %p58 = scmp.eq.s32.totalorder %s18, 0
    %p59 = por %p57, %p58
    %s60 = ssub.s32 %s19, %s31
    %s61 = ssub.s32 %s20, %s27
    %s62 = sor.u32 %s60, %s61
    %p63 = scmp.eq.s32.totalorder %s62, 0
    %s65 = sadd.s32 %s64, 1
    %s66 = scalar_select %p63, %s64, %s65
    %p69 = pneg %p63
    %p70 = scmp.eq.s32.totalorder %s12, 1
    %p71 = por %p69, %p70
    %p72 = scmp.ne.s32.totalorder %s64, %s67
    %p73 = scmp.eq.s32.totalorder %s12, 0
    %p74 = por %p72, %p73
    %p75 = scmp.ne.s32.totalorder %s64, %s67
    %p76 = scmp.eq.s32.totalorder %s17, 1
    %p77 = por %p75, %p76
    %p78 = scmp.ne.s32.totalorder %s67, %s68
    %p79 = scmp.eq.s32.totalorder %s17, 0
    %p80 = por %p78, %p79
    %p81 = scmp.ne.s32.totalorder %s67, %s68
    %p82 = scmp.eq.s32.totalorder %s18, 1
    %p83 = por %p81, %p82
    %p85 = scmp.ne.s32.totalorder %s68, %s84
    %p86 = scmp.eq.s32.totalorder %s18, 0
    %p87 = por %p85, %p86
    %s88 = ssub.s32 %s19, %s31
    %s89 = ssub.s32 %s20, %s27
    %s90 = sor.u32 %s88, %s89
    %p91 = scmp.eq.s32.totalorder %s90, 0
    %s93 = sadd.s32 %s92, 1
    %s94 = scalar_select %p91, %s92, %s93
    %p97 = pneg %p91
    %p98 = scmp.eq.s32.totalorder %s12, 1
    %p99 = por %p97, %p98
    %p100 = scmp.ne.s32.totalorder %s92, %s95
    %p101 = scmp.eq.s32.totalorder %s12, 0
    %p102 = por %p100, %p101
    %p103 = scmp.ne.s32.totalorder %s92, %s95
    %p104 = scmp.eq.s32.totalorder %s17, 1
    %p105 = por %p103, %p104
    %p106 = scmp.ne.s32.totalorder %s95, %s96
    %p107 = scmp.eq.s32.totalorder %s17, 0
    %p108 = por %p106, %p107
    %p109 = scmp.ne.s32.totalorder %s95, %s96
    %p110 = scmp.eq.s32.totalorder %s18, 1
    %p111 = por %p109, %p110
    %p113 = scmp.ne.s32.totalorder %s96, %s112
    %p114 = scmp.eq.s32.totalorder %s18, 0
    %p115 = por %p113, %p114
    %s116 = ssub.s32 %s19, %s31
    %s117 = ssub.s32 %s20, %s27
    %s118 = sor.u32 %s116, %s117
    %p119 = scmp.eq.s32.totalorder %s118, 0
    %s121 = sadd.s32 %s120, 1
    %s122 = scalar_select %p119, %s120, %s121
    %p125 = pneg %p119
    %p126 = scmp.eq.s32.totalorder %s12, 1
    %p127 = por %p125, %p126
    %p128 = scmp.ne.s32.totalorder %s120, %s123
    %p129 = scmp.eq.s32.totalorder %s12, 0
    %p130 = por %p128, %p129
    %p131 = scmp.ne.s32.totalorder %s120, %s123
    %p132 = scmp.eq.s32.totalorder %s17, 1
    %p133 = por %p131, %p132
    %p134 = scmp.ne.s32.totalorder %s123, %s124
    %p135 = scmp.eq.s32.totalorder %s17, 0
    %p136 = por %p134, %p135
    %p137 = scmp.ne.s32.totalorder %s123, %s124
    %p138 = scmp.eq.s32.totalorder %s18, 1
    %p139 = por %p137, %p138
    %p141 = scmp.ne.s32.totalorder %s124, %s140
    %p142 = scmp.eq.s32.totalorder %s18, 0
    %p143 = por %p141, %p142
    %s144 = ssub.s32 %s19, %s31
    %p145 = scmp.eq.s32.totalorder %s144, 0
    %s147 = sadd.s32 %s146, 1
    %s148 = scalar_select %p145, %s146, %s147
    %p151 = pneg %p145
    %p152 = scmp.eq.s32.totalorder %s12, 1
    %p153 = por %p151, %p152
    %p154 = scmp.ne.s32.totalorder %s146, %s149
    %p155 = scmp.eq.s32.totalorder %s12, 0
    %p156 = por %p154, %p155
    %p157 = scmp.ne.s32.totalorder %s146, %s149
    %p158 = scmp.eq.s32.totalorder %s17, 1
    %p159 = por %p157, %p158
    %p160 = scmp.ne.s32.totalorder %s149, %s150
    %p161 = scmp.eq.s32.totalorder %s17, 0
    %p162 = por %p160, %p161
    %p163 = scmp.ne.s32.totalorder %s149, %s150
    %p164 = scmp.eq.s32.totalorder %s18, 1
    %p165 = por %p163, %p164
    %p167 = scmp.ne.s32.totalorder %s150, %s166
    %p168 = scmp.eq.s32.totalorder %s18, 0
    %p169 = por %p167, %p168
    %s171 = sadd.s32 %s170, 1
    %p174 = scmp.eq.s32.totalorder %s12, 1
    %p175 = scmp.ne.s32.totalorder %s170, %s172
    %p176 = scmp.eq.s32.totalorder %s12, 0
    %p177 = por %p175, %p176
    %p178 = scmp.ne.s32.totalorder %s170, %s172
    %p179 = scmp.eq.s32.totalorder %s17, 1
    %p180 = por %p178, %p179
    %p181 = scmp.ne.s32.totalorder %s172, %s173
    %p182 = scmp.eq.s32.totalorder %s17, 0
    %p183 = por %p181, %p182
    %p184 = scmp.ne.s32.totalorder %s172, %s173
    %p185 = scmp.eq.s32.totalorder %s18, 1
    %p186 = por %p184, %p185
    %p188 = scmp.ne.s32.totalorder %s173, %s187
    %p189 = scmp.eq.s32.totalorder %s18, 0
    %p190 = por %p188, %p189
    %s191 = ssub.s32 %s19, %s31
    %s192 = ssub.s32 %s20, %s27
    %s193 = sor.u32 %s191, %s192
    %p194 = scmp.eq.s32.totalorder %s193, 0
    %s196 = sadd.s32 %s195, 1
    %s197 = scalar_select %p194, %s195, %s196
    %p200 = pneg %p194
    %p201 = scmp.eq.s32.totalorder %s12, 1
    %p202 = por %p200, %p201
    %p203 = scmp.ne.s32.totalorder %s195, %s198
    %p204 = scmp.eq.s32.totalorder %s12, 0
    %p205 = por %p203, %p204
    %p206 = scmp.ne.s32.totalorder %s195, %s198
    %p207 = scmp.eq.s32.totalorder %s17, 1
    %p208 = por %p206, %p207
    %p209 = scmp.ne.s32.totalorder %s198, %s199
    %p210 = scmp.eq.s32.totalorder %s17, 0
    %p211 = por %p209, %p210
    %p212 = scmp.ne.s32.totalorder %s198, %s199
    %p213 = scmp.eq.s32.totalorder %s18, 1
    %p214 = por %p212, %p213
    %p216 = scmp.ne.s32.totalorder %s199, %s215
    %p217 = scmp.eq.s32.totalorder %s18, 0
    %p218 = por %p216, %p217
    %p219 = scmp.le.s32.totalorder 1, %s12
    %p220 = scmp.lt.s32.totalorder %s12, 3
    %p221 = pnand %p219, %p220
    %p222 = pneg %p221
    // Predicated region
    $region9: #{deeplabv3plus_gru_forward.40} parent=5 // pred_check
      _
    $region10: #{deeplabv3plus_gru_forward.40} parent=5 // pred_check_branch
      %224 = sbr.rel (%p221) target = $region12
    $region11: #{deeplabv3plus_gru_forward.40} parent=5 // pred_region
      %s225 = ssub.s32 %s12, 1
      // Predicated region
      $region13: #{deeplabv3plus_gru_forward.40} parent=11 // pred_check
        %p226 = pneg %p183
      $region14: #{deeplabv3plus_gru_forward.40} parent=11 // pred_check_branch
        %228 = sbr.rel (%p226) target = $region16
      $region15: #{deeplabv3plus_gru_forward.40} parent=11 // pred_region
        _
      $region16: #{deeplabv3plus_gru_forward.40} parent=11 // pred_fallthru
        _
    $region12: #{deeplabv3plus_gru_forward.40} parent=5 // pred_fallthru
      _
    %p229 = scmp.lt.s32.totalorder %s12, 2
    // Predicated region
    $region17: #{deeplabv3plus_gru_forward.40} parent=5 // pred_check
      %p230 = pneg %p229
    $region18: #{deeplabv3plus_gru_forward.40} parent=5 // pred_check_branch
      %232 = sbr.rel (%p230) target = $region20
    $region19: #{deeplabv3plus_gru_forward.40} parent=5 // pred_region
      // Predicated region
      $region21: #{deeplabv3plus_gru_forward.40} parent=19 // pred_check
        %p233 = pneg %p46
      $region22: #{deeplabv3plus_gru_forward.40} parent=19 // pred_check_branch
        %235 = sbr.rel (%p233) target = $region24
      $region23: #{deeplabv3plus_gru_forward.40} parent=19 // pred_region
        %p236 = scmp.lt.s32.totalorder %s19, 1
        %s237 = scalar_select %p236, %s19, 1
        %p238 = scmp.lt.s32.totalorder %s20, 0
        %s239 = scalar_select %p238, %s20, 0
        %s240 = smul.addr %s239, 2
        %s241 = smul.addr %s237, 2
        %s242 = sadd.s32 %s240, %s241
        %s243 = smul.addr %s242, 4
        %s244 = scalar_lea.vmem %s0, %s243
      $region24: #{deeplabv3plus_gru_forward.40} parent=19 // pred_fallthru
        _
      // Predicated region
      $region25: #{deeplabv3plus_gru_forward.40} parent=19 // pred_check
        %p245 = pneg %p74
      $region26: #{deeplabv3plus_gru_forward.40} parent=19 // pred_check_branch
        %247 = sbr.rel (%p245) target = $region28
      $region27: #{deeplabv3plus_gru_forward.40} parent=19 // pred_region
        %p248 = scmp.lt.s32.totalorder %s19, 1
        %s249 = scalar_select %p248, %s19, 1
        %p250 = scmp.lt.s32.totalorder %s20, 0
        %s251 = scalar_select %p250, %s20, 0
        %s252 = smul.addr %s251, 2
        %s253 = smul.addr %s249, 2
        %s254 = sadd.s32 %s252, %s253
        %s255 = smul.addr %s254, 4
        %s256 = scalar_lea.vmem %s1, %s255
      $region28: #{deeplabv3plus_gru_forward.40} parent=19 // pred_fallthru
        _
      // Predicated region
      $region29: #{deeplabv3plus_gru_forward.40} parent=19 // pred_check
        %p257 = pneg %p102
      $region30: #{deeplabv3plus_gru_forward.40} parent=19 // pred_check_branch
        %259 = sbr.rel (%p257) target = $region32
      $region31: #{deeplabv3plus_gru_forward.40} parent=19 // pred_region
        %p260 = scmp.lt.s32.totalorder %s19, 1
        %s261 = scalar_select %p260, %s19, 1
        %p262 = scmp.lt.s32.totalorder %s20, 0
        %s263 = scalar_select %p262, %s20, 0
        %s264 = smul.addr %s263, 2
        %s265 = smul.addr %s261, 2
        %s266 = sadd.s32 %s264, %s265
        %s267 = smul.addr %s266, 4
        %s268 = scalar_lea.vmem %s2, %s267
      $region32: #{deeplabv3plus_gru_forward.40} parent=19 // pred_fallthru
        _
      // Predicated region
      $region33: #{deeplabv3plus_gru_forward.40} parent=19 // pred_check
        %p269 = pneg %p130
      $region34: #{deeplabv3plus_gru_forward.40} parent=19 // pred_check_branch
        %271 = sbr.rel (%p269) target = $region36
      $region35: #{deeplabv3plus_gru_forward.40} parent=19 // pred_region
        %p272 = scmp.lt.s32.totalorder %s19, 1
        %s273 = scalar_select %p272, %s19, 1
        %p274 = scmp.lt.s32.totalorder %s20, 0
        %s275 = scalar_select %p274, %s20, 0
        %s276 = smul.addr %s275, 2
        %s277 = smul.addr %s273, 2
        %s278 = sadd.s32 %s276, %s277
        %s279 = smul.addr %s278, 4
        %s280 = scalar_lea.vmem %s3, %s279
      $region36: #{deeplabv3plus_gru_forward.40} parent=19 // pred_fallthru
        _
      // Predicated region
      $region37: #{deeplabv3plus_gru_forward.40} parent=19 // pred_check
        %p281 = pneg %p156
      $region38: #{deeplabv3plus_gru_forward.40} parent=19 // pred_check_branch
        %283 = sbr.rel (%p281) target = $region40
      $region39: #{deeplabv3plus_gru_forward.40} parent=19 // pred_region
        %p284 = scmp.lt.s32.totalorder %s19, 1
        %s285 = scalar_select %p284, %s19, 1
        %s286 = smul.addr %s285, 2
        %s287 = scalar_lea.vmem %s4, %s286
      $region40: #{deeplabv3plus_gru_forward.40} parent=19 // pred_fallthru
        _
    $region20: #{deeplabv3plus_gru_forward.40} parent=5 // pred_fallthru
      _
    %p288 = scmp.le.s32.totalorder 1, %s12
    %p289 = scmp.lt.s32.totalorder %s12, 3
    %p290 = pnand %p288, %p289
    %p291 = pneg %p290
    // Predicated region
    $region41: #{deeplabv3plus_gru_forward.40} parent=5 // pred_check
      _
    $region42: #{deeplabv3plus_gru_forward.40} parent=5 // pred_check_branch
      %293 = sbr.rel (%p290) target = $region44
    $region43: #{deeplabv3plus_gru_forward.40} parent=5 // pred_region
      %s294 = ssub.s32 %s12, 1
      %p295 = scmp.lt.s32.totalorder %s21, 1
      %s296 = scalar_select %p295, %s21, 1
      %p297 = scmp.lt.s32.totalorder %s22, 0
      %s298 = scalar_select %p297, %s22, 0
      %s299 = smul.addr %s298, 2
      %s300 = smul.addr %s296, 2
      %s301 = sadd.s32 %s299, %s300
      %s302 = smul.addr %s301, 4
      %s303 = scalar_lea.vmem %s0, %s302
      %p304 = pneg %p52
      %p305 = pneg %p49
      %p306 = scmp.lt.s32.totalorder %s21, 1
      %s307 = scalar_select %p306, %s21, 1
      %p308 = scmp.lt.s32.totalorder %s22, 0
      %s309 = scalar_select %p308, %s22, 0
      %s310 = smul.addr %s309, 2
      %s311 = smul.addr %s307, 2
      %s312 = sadd.s32 %s310, %s311
      %s313 = smul.addr %s312, 4
      %s314 = scalar_lea.vmem %s1, %s313
      %p315 = pneg %p80
      %p316 = pneg %p77
      %p317 = scmp.lt.s32.totalorder %s21, 1
      %s318 = scalar_select %p317, %s21, 1
      %p319 = scmp.lt.s32.totalorder %s22, 0
      %s320 = scalar_select %p319, %s22, 0
      %s321 = smul.addr %s320, 2
      %s322 = smul.addr %s318, 2
      %s323 = sadd.s32 %s321, %s322
      %s324 = smul.addr %s323, 4
      %s325 = scalar_lea.vmem %s2, %s324
      %p326 = pneg %p108
      %p327 = pneg %p105
      %p328 = scmp.lt.s32.totalorder %s21, 1
      %s329 = scalar_select %p328, %s21, 1
      %p330 = scmp.lt.s32.totalorder %s22, 0
      %s331 = scalar_select %p330, %s22, 0
      %s332 = smul.addr %s331, 2
      %s333 = smul.addr %s329, 2
      %s334 = sadd.s32 %s332, %s333
      %s335 = smul.addr %s334, 4
      %s336 = scalar_lea.vmem %s3, %s335
      %p337 = pneg %p136
      %p338 = pneg %p133
      %p339 = scmp.lt.s32.totalorder %s21, 1
      %s340 = scalar_select %p339, %s21, 1
      %s341 = smul.addr %s340, 2
      %s342 = scalar_lea.vmem %s4, %s341
      %p343 = pneg %p162
      %p344 = pneg %p159
      %p345 = pneg %p183
      %p346 = pneg %p180
      %p347 = pneg %p211
      %p348 = pneg %p208
      %p349 = scmp.lt.s32.totalorder %s21, 1
      %s350 = scalar_select %p349, %s21, 1
      %p351 = scmp.lt.s32.totalorder %s22, 0
      %s352 = scalar_select %p351, %s22, 0
      %s353 = smul.addr %s352, 2
      %s354 = smul.addr %s350, 2
      %s355 = sadd.s32 %s353, %s354
      %s356 = smul.addr %s355, 4
      %s357 = scalar_lea.vmem %s6, %s356
      %p358 = scmp.lt.s32.totalorder %s21, 1
      %s359 = scalar_select %p358, %s21, 1
      %p360 = scmp.lt.s32.totalorder %s22, 0
      %s361 = scalar_select %p360, %s22, 0
      %s362 = smul.addr %s361, 2
      %s363 = smul.addr %s359, 2
      %s364 = sadd.s32 %s362, %s363
      %s365 = smul.addr %s364, 4
      %s366 = scalar_lea.vmem %s0, %s365
      %p367 = scmp.lt.s32.totalorder %s21, 1
      %s368 = scalar_select %p367, %s21, 1
      %p369 = scmp.lt.s32.totalorder %s22, 0
      %s370 = scalar_select %p369, %s22, 0
      %s371 = smul.addr %s370, 2
      %s372 = smul.addr %s368, 2
      %s373 = sadd.s32 %s371, %s372
      %s374 = smul.addr %s373, 4
      %s375 = scalar_lea.vmem %s1, %s374
      %p376 = scmp.lt.s32.totalorder %s21, 1
      %s377 = scalar_select %p376, %s21, 1
      %p378 = scmp.lt.s32.totalorder %s22, 0
      %s379 = scalar_select %p378, %s22, 0
      %s380 = smul.addr %s379, 2
      %s381 = smul.addr %s377, 2
      %s382 = sadd.s32 %s380, %s381
      %s383 = smul.addr %s382, 4
      %s384 = scalar_lea.vmem %s2, %s383
      %p385 = scmp.lt.s32.totalorder %s21, 1
      %s386 = scalar_select %p385, %s21, 1
      %p387 = scmp.lt.s32.totalorder %s22, 0
      %s388 = scalar_select %p387, %s22, 0
      %s389 = smul.addr %s388, 2
      %s390 = smul.addr %s386, 2
      %s391 = sadd.s32 %s389, %s390
      %s392 = smul.addr %s391, 4
      %s393 = scalar_lea.vmem %s3, %s392
      %p394 = scmp.lt.s32.totalorder %s21, 1
      %s395 = scalar_select %p394, %s21, 1
      %s396 = smul.addr %s395, 2
      %s397 = scalar_lea.vmem %s4, %s396
      %p398 = scmp.lt.s32.totalorder %s21, 1
      %s399 = scalar_select %p398, %s21, 1
      %p400 = scmp.lt.s32.totalorder %s22, 0
      %s401 = scalar_select %p400, %s22, 0
      %s402 = smul.addr %s401, 2
      %s403 = smul.addr %s399, 2
      %s404 = sadd.s32 %s402, %s403
      %s405 = smul.addr %s404, 4
      %s406 = scalar_lea.vmem %s6, %s405
      %v407 = vld [vmem:[%s366] sm:$0xff]
      %v408 = vld [vmem:[%s5] sm:$0xff]
      %v409 = vld [vmem:[%s5 + $0x8] sm:$0xff]
      %v410 = vld [vmem:[%s5 + $0x10] sm:$0xff]
      %v411 = vld [vmem:[%s5 + $0x18] sm:$0xff]
      %v412 = vld [vmem:[%s5 + $0x20] sm:$0xff]
      %v413 = vld [vmem:[%s5 + $0x28] sm:$0xff]
      %v414 = vld [vmem:[%s5 + $0x30] sm:$0xff]
      %v415 = vld [vmem:[%s5 + $0x38] sm:$0xff]
      %v416 = vld [vmem:[%s5 + $0x40] sm:$0xff]
      %v417 = vld [vmem:[%s5 + $0x48] sm:$0xff]
      %v418 = vld [vmem:[%s5 + $0x50] sm:$0xff]
      %v419 = vld [vmem:[%s5 + $0x58] sm:$0xff]
      %v420 = vld [vmem:[%s5 + $0x60] sm:$0xff]
      %v421 = vld [vmem:[%s5 + $0x68] sm:$0xff]
      %v422 = vld [vmem:[%s5 + $0x70] sm:$0xff]
      %v423 = vld [vmem:[%s5 + $0x78] sm:$0xff]
      %v424 = vld [vmem:[%s5 + $0x80] sm:$0xff]
      %v425 = vld [vmem:[%s5 + $0x88] sm:$0xff]
      %v426 = vld [vmem:[%s5 + $0x90] sm:$0xff]
      %v427 = vld [vmem:[%s5 + $0x98] sm:$0xff]
      %v428 = vld [vmem:[%s5 + $0xa0] sm:$0xff]
      %v429 = vld [vmem:[%s5 + $0xa8] sm:$0xff]
      %v430 = vld [vmem:[%s5 + $0xb0] sm:$0xff]
      %v431 = vld [vmem:[%s5 + $0xb8] sm:$0xff]
      %v432 = vld [vmem:[%s5 + $0xc0] sm:$0xff]
      %v433 = vld [vmem:[%s5 + $0xc8] sm:$0xff]
      %v434 = vld [vmem:[%s5 + $0xd0] sm:$0xff]
      %v435 = vld [vmem:[%s5 + $0xd8] sm:$0xff]
      %v436 = vld [vmem:[%s5 + $0xe0] sm:$0xff]
      %v437 = vld [vmem:[%s5 + $0xe8] sm:$0xff]
      %v438 = vld [vmem:[%s5 + $0xf0] sm:$0xff]
      %v439 = vld [vmem:[%s5 + $0xf8] sm:$0xff]
      %v440 = vld [vmem:[%s375] sm:$0xff]
      %s441 = scalar_lea.vmem %s5, 256
      %v442 = vld [vmem:[%s441] sm:$0xff]
      %v443 = vld [vmem:[%s441 + $0x8] sm:$0xff]
      %v444 = vld [vmem:[%s441 + $0x10] sm:$0xff]
      %v445 = vld [vmem:[%s441 + $0x18] sm:$0xff]
      %v446 = vld [vmem:[%s441 + $0x20] sm:$0xff]
      %v447 = vld [vmem:[%s441 + $0x28] sm:$0xff]
      %v448 = vld [vmem:[%s441 + $0x30] sm:$0xff]
      %v449 = vld [vmem:[%s441 + $0x38] sm:$0xff]
      %v450 = vld [vmem:[%s441 + $0x40] sm:$0xff]
      %v451 = vld [vmem:[%s441 + $0x48] sm:$0xff]
      %v452 = vld [vmem:[%s441 + $0x50] sm:$0xff]
      %v453 = vld [vmem:[%s441 + $0x58] sm:$0xff]
      %v454 = vld [vmem:[%s441 + $0x60] sm:$0xff]
      %v455 = vld [vmem:[%s441 + $0x68] sm:$0xff]
      %v456 = vld [vmem:[%s441 + $0x70] sm:$0xff]
      %v457 = vld [vmem:[%s441 + $0x78] sm:$0xff]
      %v458 = vld [vmem:[%s441 + $0x80] sm:$0xff]
      %v459 = vld [vmem:[%s441 + $0x88] sm:$0xff]
      %v460 = vld [vmem:[%s441 + $0x90] sm:$0xff]
      %v461 = vld [vmem:[%s441 + $0x98] sm:$0xff]
      %v462 = vld [vmem:[%s441 + $0xa0] sm:$0xff]
      %v463 = vld [vmem:[%s441 + $0xa8] sm:$0xff]
      %v464 = vld [vmem:[%s441 + $0xb0] sm:$0xff]
      %v465 = vld [vmem:[%s441 + $0xb8] sm:$0xff]
      %v466 = vld [vmem:[%s441 + $0xc0] sm:$0xff]
      %v467 = vld [vmem:[%s441 + $0xc8] sm:$0xff]
      %v468 = vld [vmem:[%s441 + $0xd0] sm:$0xff]
      %v469 = vld [vmem:[%s441 + $0xd8] sm:$0xff]
      %v470 = vld [vmem:[%s441 + $0xe0] sm:$0xff]
      %v471 = vld [vmem:[%s441 + $0xe8] sm:$0xff]
      %v472 = vld [vmem:[%s441 + $0xf0] sm:$0xff]
      %v473 = vld [vmem:[%s441 + $0xf8] sm:$0xff]
      %v475 = vunpack.c.l.b16 %v440
      %v476 = vunpack.c.h.b16 %v440
      %v477 = vpack.c.b16 %v475, %v475
      %v478 = vpack.c.b16 %v476, %v476
      %v513 = vunpack.c.l.b16 %v442
      %v514 = vunpack.c.h.b16 %v442
      %v515 = vunpack.c.l.b16 %v443
      %v516 = vunpack.c.h.b16 %v443
      %v517 = vunpack.c.l.b16 %v444
      %v518 = vunpack.c.h.b16 %v444
      %v519 = vunpack.c.l.b16 %v445
      %v520 = vunpack.c.h.b16 %v445
      %v521 = vunpack.c.l.b16 %v446
      %v522 = vunpack.c.h.b16 %v446
      %v523 = vunpack.c.l.b16 %v447
      %v524 = vunpack.c.h.b16 %v447
      %v525 = vunpack.c.l.b16 %v448
      %v526 = vunpack.c.h.b16 %v448
      %v527 = vunpack.c.l.b16 %v449
      %v528 = vunpack.c.h.b16 %v449
      %v529 = vunpack.c.l.b16 %v450
      %v530 = vunpack.c.h.b16 %v450
      %v531 = vunpack.c.l.b16 %v451
      %v532 = vunpack.c.h.b16 %v451
      %v533 = vunpack.c.l.b16 %v452
      %v534 = vunpack.c.h.b16 %v452
      %v535 = vunpack.c.l.b16 %v453
      %v536 = vunpack.c.h.b16 %v453
      %v537 = vunpack.c.l.b16 %v454
      %v538 = vunpack.c.h.b16 %v454
      %v539 = vunpack.c.l.b16 %v455
      %v540 = vunpack.c.h.b16 %v455
      %v541 = vunpack.c.l.b16 %v456
      %v542 = vunpack.c.h.b16 %v456
      %v543 = vunpack.c.l.b16 %v457
      %v544 = vunpack.c.h.b16 %v457
      %v545 = vunpack.c.l.b16 %v458
      %v546 = vunpack.c.h.b16 %v458
      %v547 = vunpack.c.l.b16 %v459
      %v548 = vunpack.c.h.b16 %v459
      %v549 = vunpack.c.l.b16 %v460
      %v550 = vunpack.c.h.b16 %v460
      %v551 = vunpack.c.l.b16 %v461
      %v552 = vunpack.c.h.b16 %v461
      %v553 = vunpack.c.l.b16 %v462
      %v554 = vunpack.c.h.b16 %v462
      %v555 = vunpack.c.l.b16 %v463
      %v556 = vunpack.c.h.b16 %v463
      %v557 = vunpack.c.l.b16 %v464
      %v558 = vunpack.c.h.b16 %v464
      %v559 = vunpack.c.l.b16 %v465
      %v560 = vunpack.c.h.b16 %v465
      %v561 = vunpack.c.l.b16 %v466
      %v562 = vunpack.c.h.b16 %v466
      %v563 = vunpack.c.l.b16 %v467
      %v564 = vunpack.c.h.b16 %v467
      %v565 = vunpack.c.l.b16 %v468
      %v566 = vunpack.c.h.b16 %v468
      %v567 = vunpack.c.l.b16 %v469
      %v568 = vunpack.c.h.b16 %v469
      %v569 = vunpack.c.l.b16 %v470
      %v570 = vunpack.c.h.b16 %v470
      %v571 = vunpack.c.l.b16 %v471
      %v572 = vunpack.c.h.b16 %v471
      %v573 = vunpack.c.l.b16 %v472
      %v574 = vunpack.c.h.b16 %v472
      %v575 = vunpack.c.l.b16 %v473
      %v576 = vunpack.c.h.b16 %v473
      %v577 = vpack.c.b16 %v515, %v513
      %v578 = vpack.c.b16 %v516, %v514
      %v579 = vpack.c.b16 %v519, %v517
      %v580 = vpack.c.b16 %v520, %v518
      %v581 = vpack.c.b16 %v523, %v521
      %v582 = vpack.c.b16 %v524, %v522
      %v583 = vpack.c.b16 %v527, %v525
      %v584 = vpack.c.b16 %v528, %v526
      %v585 = vpack.c.b16 %v531, %v529
      %v586 = vpack.c.b16 %v532, %v530
      %v587 = vpack.c.b16 %v535, %v533
      %v588 = vpack.c.b16 %v536, %v534
      %v589 = vpack.c.b16 %v539, %v537
      %v590 = vpack.c.b16 %v540, %v538
      %v591 = vpack.c.b16 %v543, %v541
      %v592 = vpack.c.b16 %v544, %v542
      %v593 = vpack.c.b16 %v547, %v545
      %v594 = vpack.c.b16 %v548, %v546
      %v595 = vpack.c.b16 %v551, %v549
      %v596 = vpack.c.b16 %v552, %v550
      %v597 = vpack.c.b16 %v555, %v553
      %v598 = vpack.c.b16 %v556, %v554
      %v599 = vpack.c.b16 %v559, %v557
      %v600 = vpack.c.b16 %v560, %v558
      %v601 = vpack.c.b16 %v563, %v561
      %v602 = vpack.c.b16 %v564, %v562
      %v603 = vpack.c.b16 %v567, %v565
      %v604 = vpack.c.b16 %v568, %v566
      %v605 = vpack.c.b16 %v571, %v569
      %v606 = vpack.c.b16 %v572, %v570
      %v607 = vpack.c.b16 %v575, %v573
      %v608 = vpack.c.b16 %v576, %v574
      %641 = vmatprep.subr.bf16.mxu0 %v578
      %642 = vmatpush1.bf16.msra.mxu0 %v577
      %643 = vmatprep.subr.bf16.mxu0 %v580
      %644 = vmatpush1.bf16.msra.mxu0 %v579
      %645 = vmatprep.subr.bf16.mxu0 %v582
      %646 = vmatpush1.bf16.msra.mxu0 %v581
      %647 = vmatprep.subr.bf16.mxu0 %v584
      %648 = vmatpush1.bf16.msra.mxu0 %v583
      %649 = vmatprep.subr.bf16.mxu0 %v586
      %650 = vmatpush1.bf16.msra.mxu0 %v585
      %651 = vmatprep.subr.bf16.mxu0 %v588
      %652 = vmatpush1.bf16.msra.mxu0 %v587
      %653 = vmatprep.subr.bf16.mxu0 %v590
      %654 = vmatpush1.bf16.msra.mxu0 %v589
      %655 = vmatprep.subr.bf16.mxu0 %v592
      %656 = vmatpush1.bf16.msra.mxu0 %v591
      %657 = vmatprep.subr.bf16.mxu0 %v594
      %658 = vmatpush1.bf16.msra.mxu0 %v593
      %659 = vmatprep.subr.bf16.mxu0 %v596
      %660 = vmatpush1.bf16.msra.mxu0 %v595
      %661 = vmatprep.subr.bf16.mxu0 %v598
      %662 = vmatpush1.bf16.msra.mxu0 %v597
      %663 = vmatprep.subr.bf16.mxu0 %v600
      %664 = vmatpush1.bf16.msra.mxu0 %v599
      %665 = vmatprep.subr.bf16.mxu0 %v602
      %666 = vmatpush1.bf16.msra.mxu0 %v601
      %667 = vmatprep.subr.bf16.mxu0 %v604
      %668 = vmatpush1.bf16.msra.mxu0 %v603
      %669 = vmatprep.subr.bf16.mxu0 %v606
      %670 = vmatpush1.bf16.msra.mxu0 %v605
      %671 = vmatprep.subr.bf16.mxu0 %v608
      %672 = vmatpush1.bf16.msra.mxu0 %v607
      %673 = vmatprep.mubr.bf16.mxu0 %v478
      %674 = vmatmul.mubr.bf16.gmra.mrb[0].mxu0 %v477
      %v675 = vpop.f32.mrb[0].mxu0
      %v676 = vadd.f32 0.0, %v675
      %v677 = vpop.f32.mrb[0].mxu0
      %v678 = vadd.f32 0.0, %v677
      %v679 = vpop.f32.mrb[0].mxu0
      %v680 = vpop.f32.mrb[0].mxu0
      %681 = vdwg.mxu0
      %v683 = vunpack.c.l.b16 %v407
      %v684 = vunpack.c.h.b16 %v407
      %v685 = vpack.c.b16 %v683, %v683
      %v686 = vpack.c.b16 %v684, %v684
      %v721 = vunpack.c.l.b16 %v408
      %v722 = vunpack.c.h.b16 %v408
      %v723 = vunpack.c.l.b16 %v409
      %v724 = vunpack.c.h.b16 %v409
      %v725 = vunpack.c.l.b16 %v410
      %v726 = vunpack.c.h.b16 %v410
      %v727 = vunpack.c.l.b16 %v411
      %v728 = vunpack.c.h.b16 %v411
      %v729 = vunpack.c.l.b16 %v412
      %v730 = vunpack.c.h.b16 %v412
      %v731 = vunpack.c.l.b16 %v413
      %v732 = vunpack.c.h.b16 %v413
      %v733 = vunpack.c.l.b16 %v414
      %v734 = vunpack.c.h.b16 %v414
      %v735 = vunpack.c.l.b16 %v415
      %v736 = vunpack.c.h.b16 %v415
      %v737 = vunpack.c.l.b16 %v416
      %v738 = vunpack.c.h.b16 %v416
      %v739 = vunpack.c.l.b16 %v417
      %v740 = vunpack.c.h.b16 %v417
      %v741 = vunpack.c.l.b16 %v418
      %v742 = vunpack.c.h.b16 %v418
      %v743 = vunpack.c.l.b16 %v419
      %v744 = vunpack.c.h.b16 %v419
      %v745 = vunpack.c.l.b16 %v420
      %v746 = vunpack.c.h.b16 %v420
      %v747 = vunpack.c.l.b16 %v421
      %v748 = vunpack.c.h.b16 %v421
      %v749 = vunpack.c.l.b16 %v422
      %v750 = vunpack.c.h.b16 %v422
      %v751 = vunpack.c.l.b16 %v423
      %v752 = vunpack.c.h.b16 %v423
      %v753 = vunpack.c.l.b16 %v424
      %v754 = vunpack.c.h.b16 %v424
      %v755 = vunpack.c.l.b16 %v425
      %v756 = vunpack.c.h.b16 %v425
      %v757 = vunpack.c.l.b16 %v426
      %v758 = vunpack.c.h.b16 %v426
      %v759 = vunpack.c.l.b16 %v427
      %v760 = vunpack.c.h.b16 %v427
      %v761 = vunpack.c.l.b16 %v428
      %v762 = vunpack.c.h.b16 %v428
      %v763 = vunpack.c.l.b16 %v429
      %v764 = vunpack.c.h.b16 %v429
      %v765 = vunpack.c.l.b16 %v430
      %v766 = vunpack.c.h.b16 %v430
      %v767 = vunpack.c.l.b16 %v431
      %v768 = vunpack.c.h.b16 %v431
      %v769 = vunpack.c.l.b16 %v432
      %v770 = vunpack.c.h.b16 %v432
      %v771 = vunpack.c.l.b16 %v433
      %v772 = vunpack.c.h.b16 %v433
      %v773 = vunpack.c.l.b16 %v434
      %v774 = vunpack.c.h.b16 %v434
      %v775 = vunpack.c.l.b16 %v435
      %v776 = vunpack.c.h.b16 %v435
      %v777 = vunpack.c.l.b16 %v436
      %v778 = vunpack.c.h.b16 %v436
      %v779 = vunpack.c.l.b16 %v437
      %v780 = vunpack.c.h.b16 %v437
      %v781 = vunpack.c.l.b16 %v438
      %v782 = vunpack.c.h.b16 %v438
      %v783 = vunpack.c.l.b16 %v439
      %v784 = vunpack.c.h.b16 %v439
      %v785 = vpack.c.b16 %v723, %v721
      %v786 = vpack.c.b16 %v724, %v722
      %v787 = vpack.c.b16 %v727, %v725
      %v788 = vpack.c.b16 %v728, %v726
      %v789 = vpack.c.b16 %v731, %v729
      %v790 = vpack.c.b16 %v732, %v730
      %v791 = vpack.c.b16 %v735, %v733
      %v792 = vpack.c.b16 %v736, %v734
      %v793 = vpack.c.b16 %v739, %v737
      %v794 = vpack.c.b16 %v740, %v738
      %v795 = vpack.c.b16 %v743, %v741
      %v796 = vpack.c.b16 %v744, %v742
      %v797 = vpack.c.b16 %v747, %v745
      %v798 = vpack.c.b16 %v748, %v746
      %v799 = vpack.c.b16 %v751, %v749
      %v800 = vpack.c.b16 %v752, %v750
      %v801 = vpack.c.b16 %v755, %v753
      %v802 = vpack.c.b16 %v756, %v754
      %v803 = vpack.c.b16 %v759, %v757
      %v804 = vpack.c.b16 %v760, %v758
      %v805 = vpack.c.b16 %v763, %v761
      %v806 = vpack.c.b16 %v764, %v762
      %v807 = vpack.c.b16 %v767, %v765
      %v808 = vpack.c.b16 %v768, %v766
      %v809 = vpack.c.b16 %v771, %v769
      %v810 = vpack.c.b16 %v772, %v770
      %v811 = vpack.c.b16 %v775, %v773
      %v812 = vpack.c.b16 %v776, %v774
      %v813 = vpack.c.b16 %v779, %v777
      %v814 = vpack.c.b16 %v780, %v778
      %v815 = vpack.c.b16 %v783, %v781
      %v816 = vpack.c.b16 %v784, %v782
      %849 = vmatprep.subr.bf16.mxu0 %v786
      %850 = vmatpush1.bf16.msra.mxu0 %v785
      %851 = vmatprep.subr.bf16.mxu0 %v788
      %852 = vmatpush1.bf16.msra.mxu0 %v787
      %853 = vmatprep.subr.bf16.mxu0 %v790
      %854 = vmatpush1.bf16.msra.mxu0 %v789
      %855 = vmatprep.subr.bf16.mxu0 %v792
      %856 = vmatpush1.bf16.msra.mxu0 %v791
      %857 = vmatprep.subr.bf16.mxu0 %v794
      %858 = vmatpush1.bf16.msra.mxu0 %v793
      %859 = vmatprep.subr.bf16.mxu0 %v796
      %860 = vmatpush1.bf16.msra.mxu0 %v795
      %861 = vmatprep.subr.bf16.mxu0 %v798
      %862 = vmatpush1.bf16.msra.mxu0 %v797
      %863 = vmatprep.subr.bf16.mxu0 %v800
      %864 = vmatpush1.bf16.msra.mxu0 %v799
      %865 = vmatprep.subr.bf16.mxu0 %v802
      %866 = vmatpush1.bf16.msra.mxu0 %v801
      %867 = vmatprep.subr.bf16.mxu0 %v804
      %868 = vmatpush1.bf16.msra.mxu0 %v803
      %869 = vmatprep.subr.bf16.mxu0 %v806
      %870 = vmatpush1.bf16.msra.mxu0 %v805
      %871 = vmatprep.subr.bf16.mxu0 %v808
      %872 = vmatpush1.bf16.msra.mxu0 %v807
      %873 = vmatprep.subr.bf16.mxu0 %v810
      %874 = vmatpush1.bf16.msra.mxu0 %v809
      %875 = vmatprep.subr.bf16.mxu0 %v812
      %876 = vmatpush1.bf16.msra.mxu0 %v811
      %877 = vmatprep.subr.bf16.mxu0 %v814
      %878 = vmatpush1.bf16.msra.mxu0 %v813
      %879 = vmatprep.subr.bf16.mxu0 %v816
      %880 = vmatpush1.bf16.msra.mxu0 %v815
      %881 = vmatprep.mubr.bf16.mxu0 %v686
      %882 = vmatmul.mubr.bf16.gmra.mrb[0].mxu0 %v685
      %v883 = vpop.f32.mrb[0].mxu0
      %v884 = vadd.f32 %v676, %v883
      %v885 = vpop.f32.mrb[0].mxu0
      %v886 = vadd.f32 %v678, %v885
      %v887 = vpop.f32.mrb[0].mxu0
      %v888 = vpop.f32.mrb[0].mxu0
      %889 = vdwg.mxu0
      %v890 = vld [vmem:[%s384] sm:$0xff]
      %s891 = scalar_lea.vmem %s5, 512
      %v892 = vld [vmem:[%s891] sm:$0xff]
      %v893 = vld [vmem:[%s891 + $0x8] sm:$0xff]
      %v894 = vld [vmem:[%s891 + $0x10] sm:$0xff]
      %v895 = vld [vmem:[%s891 + $0x18] sm:$0xff]
      %v896 = vld [vmem:[%s891 + $0x20] sm:$0xff]
      %v897 = vld [vmem:[%s891 + $0x28] sm:$0xff]
      %v898 = vld [vmem:[%s891 + $0x30] sm:$0xff]
      %v899 = vld [vmem:[%s891 + $0x38] sm:$0xff]
      %v900 = vld [vmem:[%s891 + $0x40] sm:$0xff]
      %v901 = vld [vmem:[%s891 + $0x48] sm:$0xff]
      %v902 = vld [vmem:[%s891 + $0x50] sm:$0xff]
      %v903 = vld [vmem:[%s891 + $0x58] sm:$0xff]
      %v904 = vld [vmem:[%s891 + $0x60] sm:$0xff]
      %v905 = vld [vmem:[%s891 + $0x68] sm:$0xff]
      %v906 = vld [vmem:[%s891 + $0x70] sm:$0xff]
      %v907 = vld [vmem:[%s891 + $0x78] sm:$0xff]
      %v908 = vld [vmem:[%s891 + $0x80] sm:$0xff]
      %v909 = vld [vmem:[%s891 + $0x88] sm:$0xff]
      %v910 = vld [vmem:[%s891 + $0x90] sm:$0xff]
      %v911 = vld [vmem:[%s891 + $0x98] sm:$0xff]
      %v912 = vld [vmem:[%s891 + $0xa0] sm:$0xff]
      %v913 = vld [vmem:[%s891 + $0xa8] sm:$0xff]
      %v914 = vld [vmem:[%s891 + $0xb0] sm:$0xff]
      %v915 = vld [vmem:[%s891 + $0xb8] sm:$0xff]
      %v916 = vld [vmem:[%s891 + $0xc0] sm:$0xff]
      %v917 = vld [vmem:[%s891 + $0xc8] sm:$0xff]
      %v918 = vld [vmem:[%s891 + $0xd0] sm:$0xff]
      %v919 = vld [vmem:[%s891 + $0xd8] sm:$0xff]
      %v920 = vld [vmem:[%s891 + $0xe0] sm:$0xff]
      %v921 = vld [vmem:[%s891 + $0xe8] sm:$0xff]
      %v922 = vld [vmem:[%s891 + $0xf0] sm:$0xff]
      %v923 = vld [vmem:[%s891 + $0xf8] sm:$0xff]
      %v925 = vunpack.c.l.b16 %v890
      %v926 = vunpack.c.h.b16 %v890
      %v927 = vpack.c.b16 %v925, %v925
      %v928 = vpack.c.b16 %v926, %v926
      %v963 = vunpack.c.l.b16 %v892
      %v964 = vunpack.c.h.b16 %v892
      %v965 = vunpack.c.l.b16 %v893
      %v966 = vunpack.c.h.b16 %v893
      %v967 = vunpack.c.l.b16 %v894
      %v968 = vunpack.c.h.b16 %v894
      %v969 = vunpack.c.l.b16 %v895
      %v970 = vunpack.c.h.b16 %v895
      %v971 = vunpack.c.l.b16 %v896
      %v972 = vunpack.c.h.b16 %v896
      %v973 = vunpack.c.l.b16 %v897
      %v974 = vunpack.c.h.b16 %v897
      %v975 = vunpack.c.l.b16 %v898
      %v976 = vunpack.c.h.b16 %v898
      %v977 = vunpack.c.l.b16 %v899
      %v978 = vunpack.c.h.b16 %v899
      %v979 = vunpack.c.l.b16 %v900
      %v980 = vunpack.c.h.b16 %v900
      %v981 = vunpack.c.l.b16 %v901
      %v982 = vunpack.c.h.b16 %v901
      %v983 = vunpack.c.l.b16 %v902
      %v984 = vunpack.c.h.b16 %v902
      %v985 = vunpack.c.l.b16 %v903
      %v986 = vunpack.c.h.b16 %v903
      %v987 = vunpack.c.l.b16 %v904
      %v988 = vunpack.c.h.b16 %v904
      %v989 = vunpack.c.l.b16 %v905
      %v990 = vunpack.c.h.b16 %v905
      %v991 = vunpack.c.l.b16 %v906
      %v992 = vunpack.c.h.b16 %v906
      %v993 = vunpack.c.l.b16 %v907
      %v994 = vunpack.c.h.b16 %v907
      %v995 = vunpack.c.l.b16 %v908
      %v996 = vunpack.c.h.b16 %v908
      %v997 = vunpack.c.l.b16 %v909
      %v998 = vunpack.c.h.b16 %v909
      %v999 = vunpack.c.l.b16 %v910
      %v1000 = vunpack.c.h.b16 %v910
      %v1001 = vunpack.c.l.b16 %v911
      %v1002 = vunpack.c.h.b16 %v911
      %v1003 = vunpack.c.l.b16 %v912
      %v1004 = vunpack.c.h.b16 %v912
      %v1005 = vunpack.c.l.b16 %v913
      %v1006 = vunpack.c.h.b16 %v913
      %v1007 = vunpack.c.l.b16 %v914
      %v1008 = vunpack.c.h.b16 %v914
      %v1009 = vunpack.c.l.b16 %v915
      %v1010 = vunpack.c.h.b16 %v915
      %v1011 = vunpack.c.l.b16 %v916
      %v1012 = vunpack.c.h.b16 %v916
      %v1013 = vunpack.c.l.b16 %v917
      %v1014 = vunpack.c.h.b16 %v917
      %v1015 = vunpack.c.l.b16 %v918
      %v1016 = vunpack.c.h.b16 %v918
      %v1017 = vunpack.c.l.b16 %v919
      %v1018 = vunpack.c.h.b16 %v919
      %v1019 = vunpack.c.l.b16 %v920
      %v1020 = vunpack.c.h.b16 %v920
      %v1021 = vunpack.c.l.b16 %v921
      %v1022 = vunpack.c.h.b16 %v921
      %v1023 = vunpack.c.l.b16 %v922
      %v1024 = vunpack.c.h.b16 %v922
      %v1025 = vunpack.c.l.b16 %v923
      %v1026 = vunpack.c.h.b16 %v923
      %v1027 = vpack.c.b16 %v965, %v963
      %v1028 = vpack.c.b16 %v966, %v964
      %v1029 = vpack.c.b16 %v969, %v967
      %v1030 = vpack.c.b16 %v970, %v968
      %v1031 = vpack.c.b16 %v973, %v971
      %v1032 = vpack.c.b16 %v974, %v972
      %v1033 = vpack.c.b16 %v977, %v975
      %v1034 = vpack.c.b16 %v978, %v976
      %v1035 = vpack.c.b16 %v981, %v979
      %v1036 = vpack.c.b16 %v982, %v980
      %v1037 = vpack.c.b16 %v985, %v983
      %v1038 = vpack.c.b16 %v986, %v984
      %v1039 = vpack.c.b16 %v989, %v987
      %v1040 = vpack.c.b16 %v990, %v988
      %v1041 = vpack.c.b16 %v993, %v991
      %v1042 = vpack.c.b16 %v994, %v992
      %v1043 = vpack.c.b16 %v997, %v995
      %v1044 = vpack.c.b16 %v998, %v996
      %v1045 = vpack.c.b16 %v1001, %v999
      %v1046 = vpack.c.b16 %v1002, %v1000
      %v1047 = vpack.c.b16 %v1005, %v1003
      %v1048 = vpack.c.b16 %v1006, %v1004
      %v1049 = vpack.c.b16 %v1009, %v1007
      %v1050 = vpack.c.b16 %v1010, %v1008
      %v1051 = vpack.c.b16 %v1013, %v1011
      %v1052 = vpack.c.b16 %v1014, %v1012
      %v1053 = vpack.c.b16 %v1017, %v1015
      %v1054 = vpack.c.b16 %v1018, %v1016
      %v1055 = vpack.c.b16 %v1021, %v1019
      %v1056 = vpack.c.b16 %v1022, %v1020
      %v1057 = vpack.c.b16 %v1025, %v1023
      %v1058 = vpack.c.b16 %v1026, %v1024
      %1091 = vmatprep.subr.bf16.mxu0 %v1028
      %1092 = vmatpush1.bf16.msra.mxu0 %v1027
      %1093 = vmatprep.subr.bf16.mxu0 %v1030
      %1094 = vmatpush1.bf16.msra.mxu0 %v1029
      %1095 = vmatprep.subr.bf16.mxu0 %v1032
      %1096 = vmatpush1.bf16.msra.mxu0 %v1031
      %1097 = vmatprep.subr.bf16.mxu0 %v1034
      %1098 = vmatpush1.bf16.msra.mxu0 %v1033
      %1099 = vmatprep.subr.bf16.mxu0 %v1036
      %1100 = vmatpush1.bf16.msra.mxu0 %v1035
      %1101 = vmatprep.subr.bf16.mxu0 %v1038
      %1102 = vmatpush1.bf16.msra.mxu0 %v1037
      %1103 = vmatprep.subr.bf16.mxu0 %v1040
      %1104 = vmatpush1.bf16.msra.mxu0 %v1039
      %1105 = vmatprep.subr.bf16.mxu0 %v1042
      %1106 = vmatpush1.bf16.msra.mxu0 %v1041
      %1107 = vmatprep.subr.bf16.mxu0 %v1044
      %1108 = vmatpush1.bf16.msra.mxu0 %v1043
      %1109 = vmatprep.subr.bf16.mxu0 %v1046
      %1110 = vmatpush1.bf16.msra.mxu0 %v1045
      %1111 = vmatprep.subr.bf16.mxu0 %v1048
      %1112 = vmatpush1.bf16.msra.mxu0 %v1047
      %1113 = vmatprep.subr.bf16.mxu0 %v1050
      %1114 = vmatpush1.bf16.msra.mxu0 %v1049
      %1115 = vmatprep.subr.bf16.mxu0 %v1052
      %1116 = vmatpush1.bf16.msra.mxu0 %v1051
      %1117 = vmatprep.subr.bf16.mxu0 %v1054
      %1118 = vmatpush1.bf16.msra.mxu0 %v1053
      %1119 = vmatprep.subr.bf16.mxu0 %v1056
      %1120 = vmatpush1.bf16.msra.mxu0 %v1055
      %1121 = vmatprep.subr.bf16.mxu0 %v1058
      %1122 = vmatpush1.bf16.msra.mxu0 %v1057
      %1123 = vmatprep.mubr.bf16.mxu0 %v928
      %1124 = vmatmul.mubr.bf16.gmra.mrb[0].mxu0 %v927
      %v1125 = vpop.f32.mrb[0].mxu0
      %v1126 = vadd.f32 0.0, %v1125
      %v1127 = vpop.f32.mrb[0].mxu0
      %v1128 = vadd.f32 0.0, %v1127
      %v1129 = vpop.f32.mrb[0].mxu0
      %v1130 = vpop.f32.mrb[0].mxu0
      %1131 = vdwg.mxu0
      %v1132 = vadd.f32 %v884, %v1126
      %v1133 = vadd.f32 %v886, %v1128
      %v1134 = vld [vmem:[%s393] sm:$0xff]
      %s1135 = scalar_lea.vmem %s5, 768
      %v1136 = vld [vmem:[%s1135] sm:$0xff]
      %v1137 = vld [vmem:[%s1135 + $0x8] sm:$0xff]
      %v1138 = vld [vmem:[%s1135 + $0x10] sm:$0xff]
      %v1139 = vld [vmem:[%s1135 + $0x18] sm:$0xff]
      %v1140 = vld [vmem:[%s1135 + $0x20] sm:$0xff]
      %v1141 = vld [vmem:[%s1135 + $0x28] sm:$0xff]
      %v1142 = vld [vmem:[%s1135 + $0x30] sm:$0xff]
      %v1143 = vld [vmem:[%s1135 + $0x38] sm:$0xff]
      %v1144 = vld [vmem:[%s1135 + $0x40] sm:$0xff]
      %v1145 = vld [vmem:[%s1135 + $0x48] sm:$0xff]
      %v1146 = vld [vmem:[%s1135 + $0x50] sm:$0xff]
      %v1147 = vld [vmem:[%s1135 + $0x58] sm:$0xff]
      %v1148 = vld [vmem:[%s1135 + $0x60] sm:$0xff]
      %v1149 = vld [vmem:[%s1135 + $0x68] sm:$0xff]
      %v1150 = vld [vmem:[%s1135 + $0x70] sm:$0xff]
      %v1151 = vld [vmem:[%s1135 + $0x78] sm:$0xff]
      %v1152 = vld [vmem:[%s1135 + $0x80] sm:$0xff]
      %v1153 = vld [vmem:[%s1135 + $0x88] sm:$0xff]
      %v1154 = vld [vmem:[%s1135 + $0x90] sm:$0xff]
      %v1155 = vld [vmem:[%s1135 + $0x98] sm:$0xff]
      %v1156 = vld [vmem:[%s1135 + $0xa0] sm:$0xff]
      %v1157 = vld [vmem:[%s1135 + $0xa8] sm:$0xff]
      %v1158 = vld [vmem:[%s1135 + $0xb0] sm:$0xff]
      %v1159 = vld [vmem:[%s1135 + $0xb8] sm:$0xff]
      %v1160 = vld [vmem:[%s1135 + $0xc0] sm:$0xff]
      %v1161 = vld [vmem:[%s1135 + $0xc8] sm:$0xff]
      %v1162 = vld [vmem:[%s1135 + $0xd0] sm:$0xff]
      %v1163 = vld [vmem:[%s1135 + $0xd8] sm:$0xff]
      %v1164 = vld [vmem:[%s1135 + $0xe0] sm:$0xff]
      %v1165 = vld [vmem:[%s1135 + $0xe8] sm:$0xff]
      %v1166 = vld [vmem:[%s1135 + $0xf0] sm:$0xff]
      %v1167 = vld [vmem:[%s1135 + $0xf8] sm:$0xff]
      %v1169 = vunpack.c.l.b16 %v1134
      %v1170 = vunpack.c.h.b16 %v1134
      %v1171 = vpack.c.b16 %v1169, %v1169
      %v1172 = vpack.c.b16 %v1170, %v1170
      %v1207 = vunpack.c.l.b16 %v1136
      %v1208 = vunpack.c.h.b16 %v1136
      %v1209 = vunpack.c.l.b16 %v1137
      %v1210 = vunpack.c.h.b16 %v1137
      %v1211 = vunpack.c.l.b16 %v1138
      %v1212 = vunpack.c.h.b16 %v1138
      %v1213 = vunpack.c.l.b16 %v1139
      %v1214 = vunpack.c.h.b16 %v1139
      %v1215 = vunpack.c.l.b16 %v1140
      %v1216 = vunpack.c.h.b16 %v1140
      %v1217 = vunpack.c.l.b16 %v1141
      %v1218 = vunpack.c.h.b16 %v1141
      %v1219 = vunpack.c.l.b16 %v1142
      %v1220 = vunpack.c.h.b16 %v1142
      %v1221 = vunpack.c.l.b16 %v1143
      %v1222 = vunpack.c.h.b16 %v1143
      %v1223 = vunpack.c.l.b16 %v1144
      %v1224 = vunpack.c.h.b16 %v1144
      %v1225 = vunpack.c.l.b16 %v1145
      %v1226 = vunpack.c.h.b16 %v1145
      %v1227 = vunpack.c.l.b16 %v1146
      %v1228 = vunpack.c.h.b16 %v1146
      %v1229 = vunpack.c.l.b16 %v1147
      %v1230 = vunpack.c.h.b16 %v1147
      %v1231 = vunpack.c.l.b16 %v1148
      %v1232 = vunpack.c.h.b16 %v1148
      %v1233 = vunpack.c.l.b16 %v1149
      %v1234 = vunpack.c.h.b16 %v1149
      %v1235 = vunpack.c.l.b16 %v1150
      %v1236 = vunpack.c.h.b16 %v1150
      %v1237 = vunpack.c.l.b16 %v1151
      %v1238 = vunpack.c.h.b16 %v1151
      %v1239 = vunpack.c.l.b16 %v1152
      %v1240 = vunpack.c.h.b16 %v1152
      %v1241 = vunpack.c.l.b16 %v1153
      %v1242 = vunpack.c.h.b16 %v1153
      %v1243 = vunpack.c.l.b16 %v1154
      %v1244 = vunpack.c.h.b16 %v1154
      %v1245 = vunpack.c.l.b16 %v1155
      %v1246 = vunpack.c.h.b16 %v1155
      %v1247 = vunpack.c.l.b16 %v1156
      %v1248 = vunpack.c.h.b16 %v1156
      %v1249 = vunpack.c.l.b16 %v1157
      %v1250 = vunpack.c.h.b16 %v1157
      %v1251 = vunpack.c.l.b16 %v1158
      %v1252 = vunpack.c.h.b16 %v1158
      %v1253 = vunpack.c.l.b16 %v1159
      %v1254 = vunpack.c.h.b16 %v1159
      %v1255 = vunpack.c.l.b16 %v1160
      %v1256 = vunpack.c.h.b16 %v1160
      %v1257 = vunpack.c.l.b16 %v1161
      %v1258 = vunpack.c.h.b16 %v1161
      %v1259 = vunpack.c.l.b16 %v1162
      %v1260 = vunpack.c.h.b16 %v1162
      %v1261 = vunpack.c.l.b16 %v1163
      %v1262 = vunpack.c.h.b16 %v1163
      %v1263 = vunpack.c.l.b16 %v1164
      %v1264 = vunpack.c.h.b16 %v1164
      %v1265 = vunpack.c.l.b16 %v1165
      %v1266 = vunpack.c.h.b16 %v1165
      %v1267 = vunpack.c.l.b16 %v1166
      %v1268 = vunpack.c.h.b16 %v1166
      %v1269 = vunpack.c.l.b16 %v1167
      %v1270 = vunpack.c.h.b16 %v1167
      %v1271 = vpack.c.b16 %v1209, %v1207
      %v1272 = vpack.c.b16 %v1210, %v1208
      %v1273 = vpack.c.b16 %v1213, %v1211
      %v1274 = vpack.c.b16 %v1214, %v1212
      %v1275 = vpack.c.b16 %v1217, %v1215
      %v1276 = vpack.c.b16 %v1218, %v1216
      %v1277 = vpack.c.b16 %v1221, %v1219
      %v1278 = vpack.c.b16 %v1222, %v1220
      %v1279 = vpack.c.b16 %v1225, %v1223
      %v1280 = vpack.c.b16 %v1226, %v1224
      %v1281 = vpack.c.b16 %v1229, %v1227
      %v1282 = vpack.c.b16 %v1230, %v1228
      %v1283 = vpack.c.b16 %v1233, %v1231
      %v1284 = vpack.c.b16 %v1234, %v1232
      %v1285 = vpack.c.b16 %v1237, %v1235
      %v1286 = vpack.c.b16 %v1238, %v1236
      %v1287 = vpack.c.b16 %v1241, %v1239
      %v1288 = vpack.c.b16 %v1242, %v1240
      %v1289 = vpack.c.b16 %v1245, %v1243
      %v1290 = vpack.c.b16 %v1246, %v1244
      %v1291 = vpack.c.b16 %v1249, %v1247
      %v1292 = vpack.c.b16 %v1250, %v1248
      %v1293 = vpack.c.b16 %v1253, %v1251
      %v1294 = vpack.c.b16 %v1254, %v1252
      %v1295 = vpack.c.b16 %v1257, %v1255
      %v1296 = vpack.c.b16 %v1258, %v1256
      %v1297 = vpack.c.b16 %v1261, %v1259
      %v1298 = vpack.c.b16 %v1262, %v1260
      %v1299 = vpack.c.b16 %v1265, %v1263
      %v1300 = vpack.c.b16 %v1266, %v1264
      %v1301 = vpack.c.b16 %v1269, %v1267
      %v1302 = vpack.c.b16 %v1270, %v1268
      %1335 = vmatprep.subr.bf16.mxu0 %v1272
      %1336 = vmatpush1.bf16.msra.mxu0 %v1271
      %1337 = vmatprep.subr.bf16.mxu0 %v1274
      %1338 = vmatpush1.bf16.msra.mxu0 %v1273
      %1339 = vmatprep.subr.bf16.mxu0 %v1276
      %1340 = vmatpush1.bf16.msra.mxu0 %v1275
      %1341 = vmatprep.subr.bf16.mxu0 %v1278
      %1342 = vmatpush1.bf16.msra.mxu0 %v1277
      %1343 = vmatprep.subr.bf16.mxu0 %v1280
      %1344 = vmatpush1.bf16.msra.mxu0 %v1279
      %1345 = vmatprep.subr.bf16.mxu0 %v1282
      %1346 = vmatpush1.bf16.msra.mxu0 %v1281
      %1347 = vmatprep.subr.bf16.mxu0 %v1284
      %1348 = vmatpush1.bf16.msra.mxu0 %v1283
      %1349 = vmatprep.subr.bf16.mxu0 %v1286
      %1350 = vmatpush1.bf16.msra.mxu0 %v1285
      %1351 = vmatprep.subr.bf16.mxu0 %v1288
      %1352 = vmatpush1.bf16.msra.mxu0 %v1287
      %1353 = vmatprep.subr.bf16.mxu0 %v1290
      %1354 = vmatpush1.bf16.msra.mxu0 %v1289
      %1355 = vmatprep.subr.bf16.mxu0 %v1292
      %1356 = vmatpush1.bf16.msra.mxu0 %v1291
      %1357 = vmatprep.subr.bf16.mxu0 %v1294
      %1358 = vmatpush1.bf16.msra.mxu0 %v1293
      %1359 = vmatprep.subr.bf16.mxu0 %v1296
      %1360 = vmatpush1.bf16.msra.mxu0 %v1295
      %1361 = vmatprep.subr.bf16.mxu0 %v1298
      %1362 = vmatpush1.bf16.msra.mxu0 %v1297
      %1363 = vmatprep.subr.bf16.mxu0 %v1300
      %1364 = vmatpush1.bf16.msra.mxu0 %v1299
      %1365 = vmatprep.subr.bf16.mxu0 %v1302
      %1366 = vmatpush1.bf16.msra.mxu0 %v1301
      %1367 = vmatprep.mubr.bf16.mxu0 %v1172
      %1368 = vmatmul.mubr.bf16.gmra.mrb[0].mxu0 %v1171
      %v1369 = vpop.f32.mrb[0].mxu0
      %v1370 = vadd.f32 0.0, %v1369
      %v1371 = vpop.f32.mrb[0].mxu0
      %v1372 = vadd.f32 0.0, %v1371
      %v1373 = vpop.f32.mrb[0].mxu0
      %v1374 = vpop.f32.mrb[0].mxu0
      %1375 = vdwg.mxu0
      %v1376 = vadd.f32 %v1132, %v1370
      %v1377 = vadd.f32 %v1133, %v1372
      %v1378 = vld [vmem:[%s397] sm:$0x3]
      %v1380 = vlaneseq
      %v1381 = vshrl.u32 %v1380, 7
      %v1382 = vsub.s32 0, %v1381
      %v1383 = vrot.slane %v1378, %v1382
      %v1384 = vlaneseq
      %v1385 = vshrl.u32 %v1384, 7
      %v1386 = vsub.s32 1, %v1385
      %v1387 = vrot.slane %v1378, %v1386
      %v1390 = vadd.f32 %v1376, %v1383
      %v1391 = vadd.f32 %v1377, %v1387
      %v1392 = vmax.f32 %v1390, 0.0
      %v1393 = vmax.f32 %v1391, 0.0
      %v1394 = vpack.c.bf16 %v1392, %v1392
      %v1395 = vpack.c.bf16 %v1393, %v1393
      %v1398 = vunpack.c.l.b16 %v1394
      %v1399 = vunpack.c.l.b16 %v1395
      %v1400 = vpack.c.b16 %v1399, %v1398
      %1402 = vst [vmem:[%s406] sm:$0xff] %v1400
      %p1403 = scmp.lt.s32.totalorder %s21, 1
      %s1404 = scalar_select %p1403, %s21, 1
      %p1405 = scmp.lt.s32.totalorder %s22, 0
      %s1406 = scalar_select %p1405, %s22, 0
      %s1407 = smul.addr %s1406, 2
      %s1408 = smul.addr %s1404, 2
      %s1409 = sadd.s32 %s1407, %s1408
      %s1410 = smul.addr %s1409, 4
      %s1411 = scalar_lea.vmem %s6, %s1410
      // Predicated region
      $region45: #{deeplabv3plus_gru_forward.40} parent=43 // pred_check
        %p1412 = pneg %p208
      $region46: #{deeplabv3plus_gru_forward.40} parent=43 // pred_check_branch
        %1414 = sbr.rel (%p1412) target = $region48
      $region47: #{deeplabv3plus_gru_forward.40} parent=43 // pred_region
        _
      $region48: #{deeplabv3plus_gru_forward.40} parent=43 // pred_fallthru
        _
    $region44: #{deeplabv3plus_gru_forward.40} parent=5 // pred_fallthru
      _
    %p1415 = scmp.le.s32.totalorder 2, %s12
    // Predicated region
    $region49: #{deeplabv3plus_gru_forward.40} parent=5 // pred_check
      %p1416 = pneg %p1415
    $region50: #{deeplabv3plus_gru_forward.40} parent=5 // pred_check_branch
      %1418 = sbr.rel (%p1416) target = $region52
    $region51: #{deeplabv3plus_gru_forward.40} parent=5 // pred_region
      %s1419 = ssub.s32 %s12, 2
      // Predicated region
      $region53: #{deeplabv3plus_gru_forward.40} parent=51 // pred_check
        %p1420 = pneg %p214
      $region54: #{deeplabv3plus_gru_forward.40} parent=51 // pred_check_branch
        %1422 = sbr.rel (%p1420) target = $region56
      $region55: #{deeplabv3plus_gru_forward.40} parent=51 // pred_region
        %p1423 = scmp.lt.s32.totalorder %s23, 1
        %s1424 = scalar_select %p1423, %s23, 1
        %p1425 = scmp.lt.s32.totalorder %s24, 0
        %s1426 = scalar_select %p1425, %s24, 0
        %s1427 = smul.addr %s1426, 2
        %s1428 = smul.addr %s1424, 2
        %s1429 = sadd.s32 %s1427, %s1428
        %s1430 = smul.addr %s1429, 4
        %s1431 = scalar_lea.vmem %s6, %s1430
      $region56: #{deeplabv3plus_gru_forward.40} parent=51 // pred_fallthru
        _
    $region52: #{deeplabv3plus_gru_forward.40} parent=5 // pred_fallthru
      _
  $region6: #{deeplabv3plus_gru_forward.40} parent=0 // loop_footer
    %s16 = sadd.s32 1, %s12
  $region7: #{deeplabv3plus_gru_forward.40} parent=0 // loop_footer_branch
    %11 = sbr.rel target = $region3
  $region8: #{deeplabv3plus_gru_forward.40} parent=0 // loop_exit
    _

// kernel: deeplabv3plus_gru_forward.42
$region0: #{deeplabv3plus_gru_forward.42}
  #allocation0 [shape = 'u32[]', space=smem, size = 0x4, offset = 0x4, fixed_abs, tag = 'smem constant byte address 0x4 - core index']
  #allocation1 [shape = 'u32[144,128]{1,0:T(1,128)}', space=vmem, size = 0x12000, scoped, tag = 'internal scratch']
  %s0 = inlined_call_operand.vmem [shape: bf16[4,2], index: 0, kind: input, shape index: {}]
  %s1 = inlined_call_operand.vmem [shape: bf16[2,2,512], index: 1, kind: input, shape index: {}]
  %s2 = inlined_call_operand.vmem [shape: bf16[2,4,512], index: 2, kind: output, shape index: {}]
  %s3 = sld [smem:[#allocation0]]
  $region18: #{deeplabv3plus_gru_forward.42} parent=0
    _
  %s5 = ssub.s32 1, %s3
  %s6 = scalar_select 0, %s5, %s3
  // Predicated region
  $region2: #{deeplabv3plus_gru_forward.42} parent=0 // pred_check
    _
  $region3: #{deeplabv3plus_gru_forward.42} parent=0 // pred_check_branch
    %8 = sbr.rel (0) target = $region5
  $region4: #{deeplabv3plus_gru_forward.42} parent=0 // pred_region
    _
  $region5: #{deeplabv3plus_gru_forward.42} parent=0 // pred_fallthru
    _
  // Predicated region
  $region6: #{deeplabv3plus_gru_forward.42} parent=0 // pred_check
    _
  $region7: #{deeplabv3plus_gru_forward.42} parent=0 // pred_check_branch
    %10 = sbr.rel (0) target = $region9
  $region8: #{deeplabv3plus_gru_forward.42} parent=0 // pred_region
    _
  $region9: #{deeplabv3plus_gru_forward.42} parent=0 // pred_fallthru
    _
  %v12 = vld [vmem:[%s0] sm:$0x3]
  %v13 = vld [vmem:[%s1] sm:$0xf]
  %v16 = vunpack.c.l.s4 1966171168
  %v17 = vunpack.c.0.s8 %v16
  %v18 = vlaneseq
  %v19 = vshrl.u32 %v18, 7
  %v20 = vsub.s32 %v17, %v19
  %v21 = vrot.slane %v13, %v20
  %v22 = vcombine.high %v21, %v21
  %v24 = vunpack.c.l.s4 1966171168
  %v25 = vunpack.c.0.s8 %v24
  %v26 = vlaneseq
  %v27 = vshrl.u32 %v26, 7
  %v28 = vsub.s32 %v25, %v27
  %v29 = vrot.slane %v21, %v28
  %v31 = vunpack.c.l.s4 1966171168
  %v32 = vunpack.c.0.s8 %v31
  %v33 = vlaneseq
  %v34 = vshrl.u32 %v33, 7
  %v35 = vsub.s32 %v32, %v34
  %v36 = vrot.slane %v22, %v35
  %v37 = vcombine.high %v29, %v29
  %v38 = vcombine.high %v36, %v36
  %vm39 = vcmask 15360
  %v41 = vsel %vm39, %v12, 0
  %vm43 = vcmask 1040384
  %v45 = vsel %vm43, %v29, 0
  %v48 = vsel %vm43, %v36, 0
  %v51 = vsel %vm43, %v37, 0
  %v54 = vsel %vm43, %v38, 0
  %56 = vmatprep.subr.bf16.mxu0 %v48
  %57 = vmatpush1.bf16.msra.mxu0 %v45
  %58 = vmatprep.subr.bf16.mxu0 0
  %59 = vmatpush1.bf16.msra.mxu0 0
  %60 = vmatprep.subr.bf16.mxu0 0
  %61 = vmatpush1.bf16.msra.mxu0 0
  %62 = vmatprep.subr.bf16.mxu0 0
  %63 = vmatpush1.bf16.msra.mxu0 0
  %64 = vmatprep.subr.bf16.mxu0 0
  %65 = vmatpush1.bf16.msra.mxu0 0
  %66 = vmatprep.subr.bf16.mxu0 0
  %67 = vmatpush1.bf16.msra.mxu0 0
  %68 = vmatprep.subr.bf16.mxu0 0
  %69 = vmatpush1.bf16.msra.mxu0 0
  %70 = vmatprep.subr.bf16.mxu0 0
  %71 = vmatpush1.bf16.msra.mxu0 0
  %72 = vmatprep.subr.bf16.mxu0 0
  %73 = vmatpush1.bf16.msra.mxu0 0
  %74 = vmatprep.subr.bf16.mxu0 0
  %75 = vmatpush1.bf16.msra.mxu0 0
  %76 = vmatprep.subr.bf16.mxu0 0
  %77 = vmatpush1.bf16.msra.mxu0 0
  %78 = vmatprep.subr.bf16.mxu0 0
  %79 = vmatpush1.bf16.msra.mxu0 0
  %80 = vmatprep.subr.bf16.mxu0 0
  %81 = vmatpush1.bf16.msra.mxu0 0
  %82 = vmatprep.subr.bf16.mxu0 0
  %83 = vmatpush1.bf16.msra.mxu0 0
  %84 = vmatprep.subr.bf16.mxu0 0
  %85 = vmatpush1.bf16.msra.mxu0 0
  %86 = vmatprep.subr.bf16.mxu0 0
  %87 = vmatpush1.bf16.msra.mxu0 0
  %88 = vmatprep.mubr.bf16.mxu0 0
  %89 = vmatmul.mubr.bf16.gmra.mrb[0].mxu0 %v41
  %v90 = vpop.f32.mrb[0].mxu0
  %v91 = vadd.f32 0.0, %v90
  %v92 = vpop.f32.mrb[0].mxu0
  %v93 = vadd.f32 0.0, %v92
  %v94 = vpop.f32.mrb[0].mxu0
  %v95 = vpop.f32.mrb[0].mxu0
  %96 = vdwg.mxu0
  %97 = vmatprep.subr.bf16.mxu0 %v54
  %98 = vmatpush1.bf16.msra.mxu0 %v51
  %99 = vmatprep.subr.bf16.mxu0 0
  %100 = vmatpush1.bf16.msra.mxu0 0
  %101 = vmatprep.subr.bf16.mxu0 0
  %102 = vmatpush1.bf16.msra.mxu0 0
  %103 = vmatprep.subr.bf16.mxu0 0
  %104 = vmatpush1.bf16.msra.mxu0 0
  %105 = vmatprep.subr.bf16.mxu0 0
  %106 = vmatpush1.bf16.msra.mxu0 0
  %107 = vmatprep.subr.bf16.mxu0 0
  %108 = vmatpush1.bf16.msra.mxu0 0
  %109 = vmatprep.subr.bf16.mxu0 0
  %110 = vmatpush1.bf16.msra.mxu0 0
  %111 = vmatprep.subr.bf16.mxu0 0
  %112 = vmatpush1.bf16.msra.mxu0 0
  %113 = vmatprep.subr.bf16.mxu0 0
  %114 = vmatpush1.bf16.msra.mxu0 0
  %115 = vmatprep.subr.bf16.mxu0 0
  %116 = vmatpush1.bf16.msra.mxu0 0
  %117 = vmatprep.subr.bf16.mxu0 0
  %118 = vmatpush1.bf16.msra.mxu0 0
  %119 = vmatprep.subr.bf16.mxu0 0
  %120 = vmatpush1.bf16.msra.mxu0 0
  %121 = vmatprep.subr.bf16.mxu0 0
  %122 = vmatpush1.bf16.msra.mxu0 0
  %123 = vmatprep.subr.bf16.mxu0 0
  %124 = vmatpush1.bf16.msra.mxu0 0
  %125 = vmatprep.subr.bf16.mxu0 0
  %126 = vmatpush1.bf16.msra.mxu0 0
  %127 = vmatprep.subr.bf16.mxu0 0
  %128 = vmatpush1.bf16.msra.mxu0 0
  %129 = vmatprep.mubr.bf16.mxu0 0
  %130 = vmatmul.mubr.bf16.gmra.mrb[0].mxu0 %v41
  %v131 = vpop.f32.mrb[0].mxu0
  %v132 = vadd.f32 0.0, %v131
  %v133 = vpop.f32.mrb[0].mxu0
  %v134 = vadd.f32 0.0, %v133
  %v135 = vpop.f32.mrb[0].mxu0
  %v136 = vpop.f32.mrb[0].mxu0
  %137 = vdwg.mxu0
  %v138 = vpack.c.bf16 %v91, %v91
  %v139 = vpack.c.bf16 %v93, %v93
  %v140 = vpack.c.bf16 %v132, %v132
  %v141 = vpack.c.bf16 %v134, %v134
  %v146 = vcombine.low %v138, %v139
  %v147 = vcombine.low %v140, %v141
  %v149 = vunpack.c.l.s4 1983009808
  %v150 = vunpack.c.0.s8 %v149
  %v151 = vlaneseq
  %v152 = vshrl.u32 %v151, 7
  %v153 = vsub.s32 %v150, %v152
  %v154 = vrot.slane %v146, %v153
  %v156 = vunpack.c.l.s4 1983009808
  %v157 = vunpack.c.0.s8 %v156
  %v158 = vlaneseq
  %v159 = vshrl.u32 %v158, 7
  %v160 = vsub.s32 %v157, %v159
  %v161 = vrot.slane %v147, %v160
  %v162 = vcombine.low %v154, %v161
  %164 = vst [vmem:[%s2] sm:$0xff] %v162
  %s165 = scalar_lea.vmem %s1, 4
  %v166 = vld [vmem:[%s165] sm:$0xf]
  %v169 = vunpack.c.l.s4 1966171168
  %v170 = vunpack.c.0.s8 %v169
  %v171 = vlaneseq
  %v172 = vshrl.u32 %v171, 7
  %v173 = vsub.s32 %v170, %v172
  %v174 = vrot.slane %v166, %v173
  %v175 = vcombine.high %v174, %v174
  %v177 = vunpack.c.l.s4 1966171168
  %v178 = vunpack.c.0.s8 %v177
  %v179 = vlaneseq
  %v180 = vshrl.u32 %v179, 7
  %v181 = vsub.s32 %v178, %v180
  %v182 = vrot.slane %v174, %v181
  %v184 = vunpack.c.l.s4 1966171168
  %v185 = vunpack.c.0.s8 %v184
  %v186 = vlaneseq
  %v187 = vshrl.u32 %v186, 7
  %v188 = vsub.s32 %v185, %v187
  %v189 = vrot.slane %v175, %v188
  %v190 = vcombine.high %v182, %v182
  %v191 = vcombine.high %v189, %v189
  %v193 = vsel %vm43, %v182, 0
  %v196 = vsel %vm43, %v189, 0
  %v199 = vsel %vm43, %v190, 0
  %v202 = vsel %vm43, %v191, 0
  %204 = vmatprep.subr.bf16.mxu0 %v196
  %205 = vmatpush1.bf16.msra.mxu0 %v193
  %206 = vmatprep.subr.bf16.mxu0 0
  %207 = vmatpush1.bf16.msra.mxu0 0
  %208 = vmatprep.subr.bf16.mxu0 0
  %209 = vmatpush1.bf16.msra.mxu0 0
  %210 = vmatprep.subr.bf16.mxu0 0
  %211 = vmatpush1.bf16.msra.mxu0 0
  %212 = vmatprep.subr.bf16.mxu0 0
  %213 = vmatpush1.bf16.msra.mxu0 0
  %214 = vmatprep.subr.bf16.mxu0 0
  %215 = vmatpush1.bf16.msra.mxu0 0
  %216 = vmatprep.subr.bf16.mxu0 0
  %217 = vmatpush1.bf16.msra.mxu0 0
  %218 = vmatprep.subr.bf16.mxu0 0
  %219 = vmatpush1.bf16.msra.mxu0 0
  %220 = vmatprep.subr.bf16.mxu0 0
  %221 = vmatpush1.bf16.msra.mxu0 0
  %222 = vmatprep.subr.bf16.mxu0 0
  %223 = vmatpush1.bf16.msra.mxu0 0
  %224 = vmatprep.subr.bf16.mxu0 0
  %225 = vmatpush1.bf16.msra.mxu0 0
  %226 = vmatprep.subr.bf16.mxu0 0
  %227 = vmatpush1.bf16.msra.mxu0 0
  %228 = vmatprep.subr.bf16.mxu0 0
  %229 = vmatpush1.bf16.msra.mxu0 0
  %230 = vmatprep.subr.bf16.mxu0 0
  %231 = vmatpush1.bf16.msra.mxu0 0
  %232 = vmatprep.subr.bf16.mxu0 0
  %233 = vmatpush1.bf16.msra.mxu0 0
  %234 = vmatprep.subr.bf16.mxu0 0
  %235 = vmatpush1.bf16.msra.mxu0 0
  %236 = vmatprep.mubr.bf16.mxu0 0
  %237 = vmatmul.mubr.bf16.gmra.mrb[0].mxu0 %v41
  %v238 = vpop.f32.mrb[0].mxu0
  %v239 = vadd.f32 0.0, %v238
  %v240 = vpop.f32.mrb[0].mxu0
  %v241 = vadd.f32 0.0, %v240
  %v242 = vpop.f32.mrb[0].mxu0
  %v243 = vpop.f32.mrb[0].mxu0
  %244 = vdwg.mxu0
  %245 = vmatprep.subr.bf16.mxu0 %v202
  %246 = vmatpush1.bf16.msra.mxu0 %v199
  %247 = vmatprep.subr.bf16.mxu0 0
  %248 = vmatpush1.bf16.msra.mxu0 0
  %249 = vmatprep.subr.bf16.mxu0 0
  %250 = vmatpush1.bf16.msra.mxu0 0
  %251 = vmatprep.subr.bf16.mxu0 0
  %252 = vmatpush1.bf16.msra.mxu0 0
  %253 = vmatprep.subr.bf16.mxu0 0
  %254 = vmatpush1.bf16.msra.mxu0 0
  %255 = vmatprep.subr.bf16.mxu0 0
  %256 = vmatpush1.bf16.msra.mxu0 0
  %257 = vmatprep.subr.bf16.mxu0 0
  %258 = vmatpush1.bf16.msra.mxu0 0
  %259 = vmatprep.subr.bf16.mxu0 0
  %260 = vmatpush1.bf16.msra.mxu0 0
  %261 = vmatprep.subr.bf16.mxu0 0
  %262 = vmatpush1.bf16.msra.mxu0 0
  %263 = vmatprep.subr.bf16.mxu0 0
  %264 = vmatpush1.bf16.msra.mxu0 0
  %265 = vmatprep.subr.bf16.mxu0 0
  %266 = vmatpush1.bf16.msra.mxu0 0
  %267 = vmatprep.subr.bf16.mxu0 0
  %268 = vmatpush1.bf16.msra.mxu0 0
  %269 = vmatprep.subr.bf16.mxu0 0
  %270 = vmatpush1.bf16.msra.mxu0 0
  %271 = vmatprep.subr.bf16.mxu0 0
  %272 = vmatpush1.bf16.msra.mxu0 0
  %273 = vmatprep.subr.bf16.mxu0 0
  %274 = vmatpush1.bf16.msra.mxu0 0
  %275 = vmatprep.subr.bf16.mxu0 0
  %276 = vmatpush1.bf16.msra.mxu0 0
  %277 = vmatprep.mubr.bf16.mxu0 0
  %278 = vmatmul.mubr.bf16.gmra.mrb[0].mxu0 %v41
  %v279 = vpop.f32.mrb[0].mxu0
  %v280 = vadd.f32 0.0, %v279
  %v281 = vpop.f32.mrb[0].mxu0
  %v282 = vadd.f32 0.0, %v281
  %v283 = vpop.f32.mrb[0].mxu0
  %v284 = vpop.f32.mrb[0].mxu0
  %285 = vdwg.mxu0
  %v286 = vpack.c.bf16 %v239, %v239
  %v287 = vpack.c.bf16 %v241, %v241
  %v288 = vpack.c.bf16 %v280, %v280
  %v289 = vpack.c.bf16 %v282, %v282
  %v294 = vcombine.low %v286, %v287
  %v295 = vcombine.low %v288, %v289
  %v297 = vunpack.c.l.s4 1983009808
  %v298 = vunpack.c.0.s8 %v297
  %v299 = vlaneseq
  %v300 = vshrl.u32 %v299, 7
  %v301 = vsub.s32 %v298, %v300
  %v302 = vrot.slane %v294, %v301
  %v304 = vunpack.c.l.s4 1983009808
  %v305 = vunpack.c.0.s8 %v304
  %v306 = vlaneseq
  %v307 = vshrl.u32 %v306, 7
  %v308 = vsub.s32 %v305, %v307
  %v309 = vrot.slane %v295, %v308
  %v310 = vcombine.low %v302, %v309
  %s312 = scalar_lea.vmem %s2, 8
  %313 = vst [vmem:[%s312] sm:$0xff] %v310
  // Predicated region
  $region10: #{deeplabv3plus_gru_forward.42} parent=0 // pred_check
    _
  $region11: #{deeplabv3plus_gru_forward.42} parent=0 // pred_check_branch
    %315 = sbr.rel (0) target = $region13
  $region12: #{deeplabv3plus_gru_forward.42} parent=0 // pred_region
    _
  $region13: #{deeplabv3plus_gru_forward.42} parent=0 // pred_fallthru
    _
  // Predicated region
  $region14: #{deeplabv3plus_gru_forward.42} parent=0 // pred_check
    _
  $region15: #{deeplabv3plus_gru_forward.42} parent=0 // pred_check_branch
    %317 = sbr.rel (0) target = $region17
  $region16: #{deeplabv3plus_gru_forward.42} parent=0 // pred_region
    _
  $region17: #{deeplabv3plus_gru_forward.42} parent=0 // pred_fallthru
    _

// kernel: deeplabv3plus_gru_forward.43
$region0: #{deeplabv3plus_gru_forward.43}
  #allocation0 [shape = 'u32[]', space=smem, size = 0x4, offset = 0x4, fixed_abs, tag = 'smem constant byte address 0x4 - core index']
  #allocation1 [shape = 'u32[144,128]{1,0:T(1,128)}', space=vmem, size = 0x12000, scoped, tag = 'internal scratch']
  %s0 = inlined_call_operand.vmem [shape: bf16[4,2], index: 0, kind: input, shape index: {}]
  %s1 = inlined_call_operand.vmem [shape: bf16[8,2,256], index: 1, kind: input, shape index: {}]
  %s2 = inlined_call_operand.vmem [shape: bf16[8,4,256], index: 2, kind: output, shape index: {}]
  %s3 = sld [smem:[#allocation0]]
  $region18: #{deeplabv3plus_gru_forward.43} parent=0
    _
  %s5 = ssub.s32 1, %s3
  %s6 = scalar_select 0, %s5, %s3
  // Predicated region
  $region2: #{deeplabv3plus_gru_forward.43} parent=0 // pred_check
    _
  $region3: #{deeplabv3plus_gru_forward.43} parent=0 // pred_check_branch
    %8 = sbr.rel (0) target = $region5
  $region4: #{deeplabv3plus_gru_forward.43} parent=0 // pred_region
    _
  $region5: #{deeplabv3plus_gru_forward.43} parent=0 // pred_fallthru
    _
  // Predicated region
  $region6: #{deeplabv3plus_gru_forward.43} parent=0 // pred_check
    _
  $region7: #{deeplabv3plus_gru_forward.43} parent=0 // pred_check_branch
    %10 = sbr.rel (0) target = $region9
  $region8: #{deeplabv3plus_gru_forward.43} parent=0 // pred_region
    _
  $region9: #{deeplabv3plus_gru_forward.43} parent=0 // pred_fallthru
    _
  %v12 = vld [vmem:[%s0] sm:$0x3]
  %v13 = vld [vmem:[%s1] sm:$0x3]
  %v16 = vunpack.c.l.s4 1966171168
  %v17 = vunpack.c.0.s8 %v16
  %v18 = vlaneseq
  %v19 = vshrl.u32 %v18, 7
  %v20 = vsub.s32 %v17, %v19
  %v21 = vrot.slane %v13, %v20
  %v22 = vcombine.high %v21, %v21
  %v24 = vunpack.c.l.s4 1966171168
  %v25 = vunpack.c.0.s8 %v24
  %v26 = vlaneseq
  %v27 = vshrl.u32 %v26, 7
  %v28 = vsub.s32 %v25, %v27
  %v29 = vrot.slane %v21, %v28
  %v31 = vunpack.c.l.s4 1966171168
  %v32 = vunpack.c.0.s8 %v31
  %v33 = vlaneseq
  %v34 = vshrl.u32 %v33, 7
  %v35 = vsub.s32 %v32, %v34
  %v36 = vrot.slane %v22, %v35
  %vm37 = vcmask 15360
  %v39 = vsel %vm37, %v12, 0
  %vm41 = vcmask 1040384
  %v43 = vsel %vm41, %v29, 0
  %v46 = vsel %vm41, %v36, 0
  %48 = vmatprep.subr.bf16.mxu0 %v46
  %49 = vmatpush1.bf16.msra.mxu0 %v43
  %50 = vmatprep.subr.bf16.mxu0 0
  %51 = vmatpush1.bf16.msra.mxu0 0
  %52 = vmatprep.subr.bf16.mxu0 0
  %53 = vmatpush1.bf16.msra.mxu0 0
  %54 = vmatprep.subr.bf16.mxu0 0
  %55 = vmatpush1.bf16.msra.mxu0 0
  %56 = vmatprep.subr.bf16.mxu0 0
  %57 = vmatpush1.bf16.msra.mxu0 0
  %58 = vmatprep.subr.bf16.mxu0 0
  %59 = vmatpush1.bf16.msra.mxu0 0
  %60 = vmatprep.subr.bf16.mxu0 0
  %61 = vmatpush1.bf16.msra.mxu0 0
  %62 = vmatprep.subr.bf16.mxu0 0
  %63 = vmatpush1.bf16.msra.mxu0 0
  %64 = vmatprep.subr.bf16.mxu0 0
  %65 = vmatpush1.bf16.msra.mxu0 0
  %66 = vmatprep.subr.bf16.mxu0 0
  %67 = vmatpush1.bf16.msra.mxu0 0
  %68 = vmatprep.subr.bf16.mxu0 0
  %69 = vmatpush1.bf16.msra.mxu0 0
  %70 = vmatprep.subr.bf16.mxu0 0
  %71 = vmatpush1.bf16.msra.mxu0 0
  %72 = vmatprep.subr.bf16.mxu0 0
  %73 = vmatpush1.bf16.msra.mxu0 0
  %74 = vmatprep.subr.bf16.mxu0 0
  %75 = vmatpush1.bf16.msra.mxu0 0
  %76 = vmatprep.subr.bf16.mxu0 0
  %77 = vmatpush1.bf16.msra.mxu0 0
  %78 = vmatprep.subr.bf16.mxu0 0
  %79 = vmatpush1.bf16.msra.mxu0 0
  %80 = vmatprep.mubr.bf16.mxu0 0
  %81 = vmatmul.mubr.bf16.gmra.mrb[0].mxu0 %v39
  %v82 = vpop.f32.mrb[0].mxu0
  %v83 = vadd.f32 0.0, %v82
  %v84 = vpop.f32.mrb[0].mxu0
  %v85 = vadd.f32 0.0, %v84
  %v86 = vpop.f32.mrb[0].mxu0
  %v87 = vpop.f32.mrb[0].mxu0
  %88 = vdwg.mxu0
  %v89 = vpack.c.bf16 %v83, %v83
  %v90 = vpack.c.bf16 %v85, %v85
  %v93 = vcombine.low %v89, %v90
  %v95 = vunpack.c.l.s4 1983009808
  %v96 = vunpack.c.0.s8 %v95
  %v97 = vlaneseq
  %v98 = vshrl.u32 %v97, 7
  %v99 = vsub.s32 %v96, %v98
  %v100 = vrot.slane %v93, %v99
  %102 = vst [vmem:[%s2] sm:$0xf] %v100
  %s103 = scalar_lea.vmem %s1, 2
  %v104 = vld [vmem:[%s103] sm:$0x3]
  %v107 = vunpack.c.l.s4 1966171168
  %v108 = vunpack.c.0.s8 %v107
  %v109 = vlaneseq
  %v110 = vshrl.u32 %v109, 7
  %v111 = vsub.s32 %v108, %v110
  %v112 = vrot.slane %v104, %v111
  %v113 = vcombine.high %v112, %v112
  %v115 = vunpack.c.l.s4 1966171168
  %v116 = vunpack.c.0.s8 %v115
  %v117 = vlaneseq
  %v118 = vshrl.u32 %v117, 7
  %v119 = vsub.s32 %v116, %v118
  %v120 = vrot.slane %v112, %v119
  %v122 = vunpack.c.l.s4 1966171168
  %v123 = vunpack.c.0.s8 %v122
  %v124 = vlaneseq
  %v125 = vshrl.u32 %v124, 7
  %v126 = vsub.s32 %v123, %v125
  %v127 = vrot.slane %v113, %v126
  %v129 = vsel %vm41, %v120, 0
  %v132 = vsel %vm41, %v127, 0
  %134 = vmatprep.subr.bf16.mxu0 %v132
  %135 = vmatpush1.bf16.msra.mxu0 %v129
  %136 = vmatprep.subr.bf16.mxu0 0
  %137 = vmatpush1.bf16.msra.mxu0 0
  %138 = vmatprep.subr.bf16.mxu0 0
  %139 = vmatpush1.bf16.msra.mxu0 0
  %140 = vmatprep.subr.bf16.mxu0 0
  %141 = vmatpush1.bf16.msra.mxu0 0
  %142 = vmatprep.subr.bf16.mxu0 0
  %143 = vmatpush1.bf16.msra.mxu0 0
  %144 = vmatprep.subr.bf16.mxu0 0
  %145 = vmatpush1.bf16.msra.mxu0 0
  %146 = vmatprep.subr.bf16.mxu0 0
  %147 = vmatpush1.bf16.msra.mxu0 0
  %148 = vmatprep.subr.bf16.mxu0 0
  %149 = vmatpush1.bf16.msra.mxu0 0
  %150 = vmatprep.subr.bf16.mxu0 0
  %151 = vmatpush1.bf16.msra.mxu0 0
  %152 = vmatprep.subr.bf16.mxu0 0
  %153 = vmatpush1.bf16.msra.mxu0 0
  %154 = vmatprep.subr.bf16.mxu0 0
  %155 = vmatpush1.bf16.msra.mxu0 0
  %156 = vmatprep.subr.bf16.mxu0 0
  %157 = vmatpush1.bf16.msra.mxu0 0
  %158 = vmatprep.subr.bf16.mxu0 0
  %159 = vmatpush1.bf16.msra.mxu0 0
  %160 = vmatprep.subr.bf16.mxu0 0
  %161 = vmatpush1.bf16.msra.mxu0 0
  %162 = vmatprep.subr.bf16.mxu0 0
  %163 = vmatpush1.bf16.msra.mxu0 0
  %164 = vmatprep.subr.bf16.mxu0 0
  %165 = vmatpush1.bf16.msra.mxu0 0
  %166 = vmatprep.mubr.bf16.mxu0 0
  %167 = vmatmul.mubr.bf16.gmra.mrb[0].mxu0 %v39
  %v168 = vpop.f32.mrb[0].mxu0
  %v169 = vadd.f32 0.0, %v168
  %v170 = vpop.f32.mrb[0].mxu0
  %v171 = vadd.f32 0.0, %v170
  %v172 = vpop.f32.mrb[0].mxu0
  %v173 = vpop.f32.mrb[0].mxu0
  %174 = vdwg.mxu0
  %v175 = vpack.c.bf16 %v169, %v169
  %v176 = vpack.c.bf16 %v171, %v171
  %v179 = vcombine.low %v175, %v176
  %v181 = vunpack.c.l.s4 1983009808
  %v182 = vunpack.c.0.s8 %v181
  %v183 = vlaneseq
  %v184 = vshrl.u32 %v183, 7
  %v185 = vsub.s32 %v182, %v184
  %v186 = vrot.slane %v179, %v185
  %s188 = scalar_lea.vmem %s2, 4
  %189 = vst [vmem:[%s188] sm:$0xf] %v186
  %s190 = scalar_lea.vmem %s1, 4
  %v191 = vld [vmem:[%s190] sm:$0x3]
  %v194 = vunpack.c.l.s4 1966171168
  %v195 = vunpack.c.0.s8 %v194
  %v196 = vlaneseq
  %v197 = vshrl.u32 %v196, 7
  %v198 = vsub.s32 %v195, %v197
  %v199 = vrot.slane %v191, %v198
  %v200 = vcombine.high %v199, %v199
  %v202 = vunpack.c.l.s4 1966171168
  %v203 = vunpack.c.0.s8 %v202
  %v204 = vlaneseq
  %v205 = vshrl.u32 %v204, 7
  %v206 = vsub.s32 %v203, %v205
  %v207 = vrot.slane %v199, %v206
  %v209 = vunpack.c.l.s4 1966171168
  %v210 = vunpack.c.0.s8 %v209
  %v211 = vlaneseq
  %v212 = vshrl.u32 %v211, 7
  %v213 = vsub.s32 %v210, %v212
  %v214 = vrot.slane %v200, %v213
  %v216 = vsel %vm41, %v207, 0
  %v219 = vsel %vm41, %v214, 0
  %221 = vmatprep.subr.bf16.mxu0 %v219
  %222 = vmatpush1.bf16.msra.mxu0 %v216
  %223 = vmatprep.subr.bf16.mxu0 0
  %224 = vmatpush1.bf16.msra.mxu0 0
  %225 = vmatprep.subr.bf16.mxu0 0
  %226 = vmatpush1.bf16.msra.mxu0 0
  %227 = vmatprep.subr.bf16.mxu0 0
  %228 = vmatpush1.bf16.msra.mxu0 0
  %229 = vmatprep.subr.bf16.mxu0 0
  %230 = vmatpush1.bf16.msra.mxu0 0
  %231 = vmatprep.subr.bf16.mxu0 0
  %232 = vmatpush1.bf16.msra.mxu0 0
  %233 = vmatprep.subr.bf16.mxu0 0
  %234 = vmatpush1.bf16.msra.mxu0 0
  %235 = vmatprep.subr.bf16.mxu0 0
  %236 = vmatpush1.bf16.msra.mxu0 0
  %237 = vmatprep.subr.bf16.mxu0 0
  %238 = vmatpush1.bf16.msra.mxu0 0
  %239 = vmatprep.subr.bf16.mxu0 0
  %240 = vmatpush1.bf16.msra.mxu0 0
  %241 = vmatprep.subr.bf16.mxu0 0
  %242 = vmatpush1.bf16.msra.mxu0 0
  %243 = vmatprep.subr.bf16.mxu0 0
  %244 = vmatpush1.bf16.msra.mxu0 0
  %245 = vmatprep.subr.bf16.mxu0 0
  %246 = vmatpush1.bf16.msra.mxu0 0
  %247 = vmatprep.subr.bf16.mxu0 0
  %248 = vmatpush1.bf16.msra.mxu0 0
  %249 = vmatprep.subr.bf16.mxu0 0
  %250 = vmatpush1.bf16.msra.mxu0 0
  %251 = vmatprep.subr.bf16.mxu0 0
  %252 = vmatpush1.bf16.msra.mxu0 0
  %253 = vmatprep.mubr.bf16.mxu0 0
  %254 = vmatmul.mubr.bf16.gmra.mrb[0].mxu0 %v39
  %v255 = vpop.f32.mrb[0].mxu0
  %v256 = vadd.f32 0.0, %v255
  %v257 = vpop.f32.mrb[0].mxu0
  %v258 = vadd.f32 0.0, %v257
  %v259 = vpop.f32.mrb[0].mxu0
  %v260 = vpop.f32.mrb[0].mxu0
  %261 = vdwg.mxu0
  %v262 = vpack.c.bf16 %v256, %v256
  %v263 = vpack.c.bf16 %v258, %v258
  %v266 = vcombine.low %v262, %v263
  %v268 = vunpack.c.l.s4 1983009808
  %v269 = vunpack.c.0.s8 %v268
  %v270 = vlaneseq
  %v271 = vshrl.u32 %v270, 7
  %v272 = vsub.s32 %v269, %v271
  %v273 = vrot.slane %v266, %v272
  %s275 = scalar_lea.vmem %s2, 8
  %276 = vst [vmem:[%s275] sm:$0xf] %v273
  %s277 = scalar_lea.vmem %s1, 6
  %v278 = vld [vmem:[%s277] sm:$0x3]
  %v281 = vunpack.c.l.s4 1966171168
  %v282 = vunpack.c.0.s8 %v281
  %v283 = vlaneseq
  %v284 = vshrl.u32 %v283, 7
  %v285 = vsub.s32 %v282, %v284
  %v286 = vrot.slane %v278, %v285
  %v287 = vcombine.high %v286, %v286
  %v289 = vunpack.c.l.s4 1966171168
  %v290 = vunpack.c.0.s8 %v289
  %v291 = vlaneseq
  %v292 = vshrl.u32 %v291, 7
  %v293 = vsub.s32 %v290, %v292
  %v294 = vrot.slane %v286, %v293
  %v296 = vunpack.c.l.s4 1966171168
  %v297 = vunpack.c.0.s8 %v296
  %v298 = vlaneseq
  %v299 = vshrl.u32 %v298, 7
  %v300 = vsub.s32 %v297, %v299
  %v301 = vrot.slane %v287, %v300
  %v303 = vsel %vm41, %v294, 0
  %v306 = vsel %vm41, %v301, 0
  %308 = vmatprep.subr.bf16.mxu0 %v306
  %309 = vmatpush1.bf16.msra.mxu0 %v303
  %310 = vmatprep.subr.bf16.mxu0 0
  %311 = vmatpush1.bf16.msra.mxu0 0
  %312 = vmatprep.subr.bf16.mxu0 0
  %313 = vmatpush1.bf16.msra.mxu0 0
  %314 = vmatprep.subr.bf16.mxu0 0
  %315 = vmatpush1.bf16.msra.mxu0 0
  %316 = vmatprep.subr.bf16.mxu0 0
  %317 = vmatpush1.bf16.msra.mxu0 0
  %318 = vmatprep.subr.bf16.mxu0 0
  %319 = vmatpush1.bf16.msra.mxu0 0
  %320 = vmatprep.subr.bf16.mxu0 0
  %321 = vmatpush1.bf16.msra.mxu0 0
  %322 = vmatprep.subr.bf16.mxu0 0
  %323 = vmatpush1.bf16.msra.mxu0 0
  %324 = vmatprep.subr.bf16.mxu0 0
  %325 = vmatpush1.bf16.msra.mxu0 0
  %326 = vmatprep.subr.bf16.mxu0 0
  %327 = vmatpush1.bf16.msra.mxu0 0
  %328 = vmatprep.subr.bf16.mxu0 0
  %329 = vmatpush1.bf16.msra.mxu0 0
  %330 = vmatprep.subr.bf16.mxu0 0
  %331 = vmatpush1.bf16.msra.mxu0 0
  %332 = vmatprep.subr.bf16.mxu0 0
  %333 = vmatpush1.bf16.msra.mxu0 0
  %334 = vmatprep.subr.bf16.mxu0 0
  %335 = vmatpush1.bf16.msra.mxu0 0
  %336 = vmatprep.subr.bf16.mxu0 0
  %337 = vmatpush1.bf16.msra.mxu0 0
  %338 = vmatprep.subr.bf16.mxu0 0
  %339 = vmatpush1.bf16.msra.mxu0 0
  %340 = vmatprep.mubr.bf16.mxu0 0
  %341 = vmatmul.mubr.bf16.gmra.mrb[0].mxu0 %v39
  %v342 = vpop.f32.mrb[0].mxu0
  %v343 = vadd.f32 0.0, %v342
  %v344 = vpop.f32.mrb[0].mxu0
  %v345 = vadd.f32 0.0, %v344
  %v346 = vpop.f32.mrb[0].mxu0
  %v347 = vpop.f32.mrb[0].mxu0
  %348 = vdwg.mxu0
  %v349 = vpack.c.bf16 %v343, %v343
  %v350 = vpack.c.bf16 %v345, %v345
  %v353 = vcombine.low %v349, %v350
  %v355 = vunpack.c.l.s4 1983009808
  %v356 = vunpack.c.0.s8 %v355
  %v357 = vlaneseq
  %v358 = vshrl.u32 %v357, 7
  %v359 = vsub.s32 %v356, %v358
  %v360 = vrot.slane %v353, %v359
  %s362 = scalar_lea.vmem %s2, 12
  %363 = vst [vmem:[%s362] sm:$0xf] %v360
  %s364 = scalar_lea.vmem %s1, 8
  %v365 = vld [vmem:[%s364] sm:$0x3]
  %v368 = vunpack.c.l.s4 1966171168
  %v369 = vunpack.c.0.s8 %v368
  %v370 = vlaneseq
  %v371 = vshrl.u32 %v370, 7
  %v372 = vsub.s32 %v369, %v371
  %v373 = vrot.slane %v365, %v372
  %v374 = vcombine.high %v373, %v373
  %v376 = vunpack.c.l.s4 1966171168
  %v377 = vunpack.c.0.s8 %v376
  %v378 = vlaneseq
  %v379 = vshrl.u32 %v378, 7
  %v380 = vsub.s32 %v377, %v379
  %v381 = vrot.slane %v373, %v380
  %v383 = vunpack.c.l.s4 1966171168
  %v384 = vunpack.c.0.s8 %v383
  %v385 = vlaneseq
  %v386 = vshrl.u32 %v385, 7
  %v387 = vsub.s32 %v384, %v386
  %v388 = vrot.slane %v374, %v387
  %v390 = vsel %vm41, %v381, 0
  %v393 = vsel %vm41, %v388, 0
  %395 = vmatprep.subr.bf16.mxu0 %v393
  %396 = vmatpush1.bf16.msra.mxu0 %v390
  %397 = vmatprep.subr.bf16.mxu0 0
  %398 = vmatpush1.bf16.msra.mxu0 0
  %399 = vmatprep.subr.bf16.mxu0 0
  %400 = vmatpush1.bf16.msra.mxu0 0
  %401 = vmatprep.subr.bf16.mxu0 0
  %402 = vmatpush1.bf16.msra.mxu0 0
  %403 = vmatprep.subr.bf16.mxu0 0
  %404 = vmatpush1.bf16.msra.mxu0 0
  %405 = vmatprep.subr.bf16.mxu0 0
  %406 = vmatpush1.bf16.msra.mxu0 0
  %407 = vmatprep.subr.bf16.mxu0 0
  %408 = vmatpush1.bf16.msra.mxu0 0
  %409 = vmatprep.subr.bf16.mxu0 0
  %410 = vmatpush1.bf16.msra.mxu0 0
  %411 = vmatprep.subr.bf16.mxu0 0
  %412 = vmatpush1.bf16.msra.mxu0 0
  %413 = vmatprep.subr.bf16.mxu0 0
  %414 = vmatpush1.bf16.msra.mxu0 0
  %415 = vmatprep.subr.bf16.mxu0 0
  %416 = vmatpush1.bf16.msra.mxu0 0
  %417 = vmatprep.subr.bf16.mxu0 0
  %418 = vmatpush1.bf16.msra.mxu0 0
  %419 = vmatprep.subr.bf16.mxu0 0
  %420 = vmatpush1.bf16.msra.mxu0 0
  %421 = vmatprep.subr.bf16.mxu0 0
  %422 = vmatpush1.bf16.msra.mxu0 0
  %423 = vmatprep.subr.bf16.mxu0 0
  %424 = vmatpush1.bf16.msra.mxu0 0
  %425 = vmatprep.subr.bf16.mxu0 0
  %426 = vmatpush1.bf16.msra.mxu0 0
  %427 = vmatprep.mubr.bf16.mxu0 0
  %428 = vmatmul.mubr.bf16.gmra.mrb[0].mxu0 %v39
  %v429 = vpop.f32.mrb[0].mxu0
  %v430 = vadd.f32 0.0, %v429
  %v431 = vpop.f32.mrb[0].mxu0
  %v432 = vadd.f32 0.0, %v431
  %v433 = vpop.f32.mrb[0].mxu0
  %v434 = vpop.f32.mrb[0].mxu0
  %435 = vdwg.mxu0
  %v436 = vpack.c.bf16 %v430, %v430
  %v437 = vpack.c.bf16 %v432, %v432
  %v440 = vcombine.low %v436, %v437
  %v442 = vunpack.c.l.s4 1983009808
  %v443 = vunpack.c.0.s8 %v442
  %v444 = vlaneseq
  %v445 = vshrl.u32 %v444, 7
  %v446 = vsub.s32 %v443, %v445
  %v447 = vrot.slane %v440, %v446
  %s449 = scalar_lea.vmem %s2, 16
  %450 = vst [vmem:[%s449] sm:$0xf] %v447
  %s451 = scalar_lea.vmem %s1, 10
  %v452 = vld [vmem:[%s451] sm:$0x3]
  %v455 = vunpack.c.l.s4 1966171168
  %v456 = vunpack.c.0.s8 %v455
  %v457 = vlaneseq
  %v458 = vshrl.u32 %v457, 7
  %v459 = vsub.s32 %v456, %v458
  %v460 = vrot.slane %v452, %v459
  %v461 = vcombine.high %v460, %v460
  %v463 = vunpack.c.l.s4 1966171168
  %v464 = vunpack.c.0.s8 %v463
  %v465 = vlaneseq
  %v466 = vshrl.u32 %v465, 7
  %v467 = vsub.s32 %v464, %v466
  %v468 = vrot.slane %v460, %v467
  %v470 = vunpack.c.l.s4 1966171168
  %v471 = vunpack.c.0.s8 %v470
  %v472 = vlaneseq
  %v473 = vshrl.u32 %v472, 7
  %v474 = vsub.s32 %v471, %v473
  %v475 = vrot.slane %v461, %v474
  %v477 = vsel %vm41, %v468, 0
  %v480 = vsel %vm41, %v475, 0
  %482 = vmatprep.subr.bf16.mxu0 %v480
  %483 = vmatpush1.bf16.msra.mxu0 %v477
  %484 = vmatprep.subr.bf16.mxu0 0
  %485 = vmatpush1.bf16.msra.mxu0 0
  %486 = vmatprep.subr.bf16.mxu0 0
  %487 = vmatpush1.bf16.msra.mxu0 0
  %488 = vmatprep.subr.bf16.mxu0 0
  %489 = vmatpush1.bf16.msra.mxu0 0
  %490 = vmatprep.subr.bf16.mxu0 0
  %491 = vmatpush1.bf16.msra.mxu0 0
  %492 = vmatprep.subr.bf16.mxu0 0
  %493 = vmatpush1.bf16.msra.mxu0 0
  %494 = vmatprep.subr.bf16.mxu0 0
  %495 = vmatpush1.bf16.msra.mxu0 0
  %496 = vmatprep.subr.bf16.mxu0 0
  %497 = vmatpush1.bf16.msra.mxu0 0
  %498 = vmatprep.subr.bf16.mxu0 0
  %499 = vmatpush1.bf16.msra.mxu0 0
  %500 = vmatprep.subr.bf16.mxu0 0
  %501 = vmatpush1.bf16.msra.mxu0 0
  %502 = vmatprep.subr.bf16.mxu0 0
  %503 = vmatpush1.bf16.msra.mxu0 0
  %504 = vmatprep.subr.bf16.mxu0 0
  %505 = vmatpush1.bf16.msra.mxu0 0
  %506 = vmatprep.subr.bf16.mxu0 0
  %507 = vmatpush1.bf16.msra.mxu0 0
  %508 = vmatprep.subr.bf16.mxu0 0
  %509 = vmatpush1.bf16.msra.mxu0 0
  %510 = vmatprep.subr.bf16.mxu0 0
  %511 = vmatpush1.bf16.msra.mxu0 0
  %512 = vmatprep.subr.bf16.mxu0 0
  %513 = vmatpush1.bf16.msra.mxu0 0
  %514 = vmatprep.mubr.bf16.mxu0 0
  %515 = vmatmul.mubr.bf16.gmra.mrb[0].mxu0 %v39
  %v516 = vpop.f32.mrb[0].mxu0
  %v517 = vadd.f32 0.0, %v516
  %v518 = vpop.f32.mrb[0].mxu0
  %v519 = vadd.f32 0.0, %v518
  %v520 = vpop.f32.mrb[0].mxu0
  %v521 = vpop.f32.mrb[0].mxu0
  %522 = vdwg.mxu0
  %v523 = vpack.c.bf16 %v517, %v517
  %v524 = vpack.c.bf16 %v519, %v519
  %v527 = vcombine.low %v523, %v524
  %v529 = vunpack.c.l.s4 1983009808
  %v530 = vunpack.c.0.s8 %v529
  %v531 = vlaneseq
  %v532 = vshrl.u32 %v531, 7
  %v533 = vsub.s32 %v530, %v532
  %v534 = vrot.slane %v527, %v533
  %s536 = scalar_lea.vmem %s2, 20
  %537 = vst [vmem:[%s536] sm:$0xf] %v534
  %s538 = scalar_lea.vmem %s1, 12
  %v539 = vld [vmem:[%s538] sm:$0x3]
  %v542 = vunpack.c.l.s4 1966171168
  %v543 = vunpack.c.0.s8 %v542
  %v544 = vlaneseq
  %v545 = vshrl.u32 %v544, 7
  %v546 = vsub.s32 %v543, %v545
  %v547 = vrot.slane %v539, %v546
  %v548 = vcombine.high %v547, %v547
  %v550 = vunpack.c.l.s4 1966171168
  %v551 = vunpack.c.0.s8 %v550
  %v552 = vlaneseq
  %v553 = vshrl.u32 %v552, 7
  %v554 = vsub.s32 %v551, %v553
  %v555 = vrot.slane %v547, %v554
  %v557 = vunpack.c.l.s4 1966171168
  %v558 = vunpack.c.0.s8 %v557
  %v559 = vlaneseq
  %v560 = vshrl.u32 %v559, 7
  %v561 = vsub.s32 %v558, %v560
  %v562 = vrot.slane %v548, %v561
  %v564 = vsel %vm41, %v555, 0
  %v567 = vsel %vm41, %v562, 0
  %569 = vmatprep.subr.bf16.mxu0 %v567
  %570 = vmatpush1.bf16.msra.mxu0 %v564
  %571 = vmatprep.subr.bf16.mxu0 0
  %572 = vmatpush1.bf16.msra.mxu0 0
  %573 = vmatprep.subr.bf16.mxu0 0
  %574 = vmatpush1.bf16.msra.mxu0 0
  %575 = vmatprep.subr.bf16.mxu0 0
  %576 = vmatpush1.bf16.msra.mxu0 0
  %577 = vmatprep.subr.bf16.mxu0 0
  %578 = vmatpush1.bf16.msra.mxu0 0
  %579 = vmatprep.subr.bf16.mxu0 0
  %580 = vmatpush1.bf16.msra.mxu0 0
  %581 = vmatprep.subr.bf16.mxu0 0
  %582 = vmatpush1.bf16.msra.mxu0 0
  %583 = vmatprep.subr.bf16.mxu0 0
  %584 = vmatpush1.bf16.msra.mxu0 0
  %585 = vmatprep.subr.bf16.mxu0 0
  %586 = vmatpush1.bf16.msra.mxu0 0
  %587 = vmatprep.subr.bf16.mxu0 0
  %588 = vmatpush1.bf16.msra.mxu0 0
  %589 = vmatprep.subr.bf16.mxu0 0
  %590 = vmatpush1.bf16.msra.mxu0 0
  %591 = vmatprep.subr.bf16.mxu0 0
  %592 = vmatpush1.bf16.msra.mxu0 0
  %593 = vmatprep.subr.bf16.mxu0 0
  %594 = vmatpush1.bf16.msra.mxu0 0
  %595 = vmatprep.subr.bf16.mxu0 0
  %596 = vmatpush1.bf16.msra.mxu0 0
  %597 = vmatprep.subr.bf16.mxu0 0
  %598 = vmatpush1.bf16.msra.mxu0 0
  %599 = vmatprep.subr.bf16.mxu0 0
  %600 = vmatpush1.bf16.msra.mxu0 0
  %601 = vmatprep.mubr.bf16.mxu0 0
  %602 = vmatmul.mubr.bf16.gmra.mrb[0].mxu0 %v39
  %v603 = vpop.f32.mrb[0].mxu0
  %v604 = vadd.f32 0.0, %v603
  %v605 = vpop.f32.mrb[0].mxu0
  %v606 = vadd.f32 0.0, %v605
  %v607 = vpop.f32.mrb[0].mxu0
  %v608 = vpop.f32.mrb[0].mxu0
  %609 = vdwg.mxu0
  %v610 = vpack.c.bf16 %v604, %v604
  %v611 = vpack.c.bf16 %v606, %v606
  %v614 = vcombine.low %v610, %v611
  %v616 = vunpack.c.l.s4 1983009808
  %v617 = vunpack.c.0.s8 %v616
  %v618 = vlaneseq
  %v619 = vshrl.u32 %v618, 7
  %v620 = vsub.s32 %v617, %v619
  %v621 = vrot.slane %v614, %v620
  %s623 = scalar_lea.vmem %s2, 24
  %624 = vst [vmem:[%s623] sm:$0xf] %v621
  %s625 = scalar_lea.vmem %s1, 14
  %v626 = vld [vmem:[%s625] sm:$0x3]
  %v629 = vunpack.c.l.s4 1966171168
  %v630 = vunpack.c.0.s8 %v629
  %v631 = vlaneseq
  %v632 = vshrl.u32 %v631, 7
  %v633 = vsub.s32 %v630, %v632
  %v634 = vrot.slane %v626, %v633
  %v635 = vcombine.high %v634, %v634
  %v637 = vunpack.c.l.s4 1966171168
  %v638 = vunpack.c.0.s8 %v637
  %v639 = vlaneseq
  %v640 = vshrl.u32 %v639, 7
  %v641 = vsub.s32 %v638, %v640
  %v642 = vrot.slane %v634, %v641
  %v644 = vunpack.c.l.s4 1966171168
  %v645 = vunpack.c.0.s8 %v644
  %v646 = vlaneseq
  %v647 = vshrl.u32 %v646, 7
  %v648 = vsub.s32 %v645, %v647
  %v649 = vrot.slane %v635, %v648
  %v651 = vsel %vm41, %v642, 0
  %v654 = vsel %vm41, %v649, 0
  %656 = vmatprep.subr.bf16.mxu0 %v654
  %657 = vmatpush1.bf16.msra.mxu0 %v651
  %658 = vmatprep.subr.bf16.mxu0 0
  %659 = vmatpush1.bf16.msra.mxu0 0
  %660 = vmatprep.subr.bf16.mxu0 0
  %661 = vmatpush1.bf16.msra.mxu0 0
  %662 = vmatprep.subr.bf16.mxu0 0
  %663 = vmatpush1.bf16.msra.mxu0 0
  %664 = vmatprep.subr.bf16.mxu0 0
  %665 = vmatpush1.bf16.msra.mxu0 0
  %666 = vmatprep.subr.bf16.mxu0 0
  %667 = vmatpush1.bf16.msra.mxu0 0
  %668 = vmatprep.subr.bf16.mxu0 0
  %669 = vmatpush1.bf16.msra.mxu0 0
  %670 = vmatprep.subr.bf16.mxu0 0
  %671 = vmatpush1.bf16.msra.mxu0 0
  %672 = vmatprep.subr.bf16.mxu0 0
  %673 = vmatpush1.bf16.msra.mxu0 0
  %674 = vmatprep.subr.bf16.mxu0 0
  %675 = vmatpush1.bf16.msra.mxu0 0
  %676 = vmatprep.subr.bf16.mxu0 0
  %677 = vmatpush1.bf16.msra.mxu0 0
  %678 = vmatprep.subr.bf16.mxu0 0
  %679 = vmatpush1.bf16.msra.mxu0 0
  %680 = vmatprep.subr.bf16.mxu0 0
  %681 = vmatpush1.bf16.msra.mxu0 0
  %682 = vmatprep.subr.bf16.mxu0 0
  %683 = vmatpush1.bf16.msra.mxu0 0
  %684 = vmatprep.subr.bf16.mxu0 0
  %685 = vmatpush1.bf16.msra.mxu0 0
  %686 = vmatprep.subr.bf16.mxu0 0
  %687 = vmatpush1.bf16.msra.mxu0 0
  %688 = vmatprep.mubr.bf16.mxu0 0
  %689 = vmatmul.mubr.bf16.gmra.mrb[0].mxu0 %v39
  %v690 = vpop.f32.mrb[0].mxu0
  %v691 = vadd.f32 0.0, %v690
  %v692 = vpop.f32.mrb[0].mxu0
  %v693 = vadd.f32 0.0, %v692
  %v694 = vpop.f32.mrb[0].mxu0
  %v695 = vpop.f32.mrb[0].mxu0
  %696 = vdwg.mxu0
  %v697 = vpack.c.bf16 %v691, %v691
  %v698 = vpack.c.bf16 %v693, %v693
  %v701 = vcombine.low %v697, %v698
  %v703 = vunpack.c.l.s4 1983009808
  %v704 = vunpack.c.0.s8 %v703
  %v705 = vlaneseq
  %v706 = vshrl.u32 %v705, 7
  %v707 = vsub.s32 %v704, %v706
  %v708 = vrot.slane %v701, %v707
  %s710 = scalar_lea.vmem %s2, 28
  %711 = vst [vmem:[%s710] sm:$0xf] %v708
  // Predicated region
  $region10: #{deeplabv3plus_gru_forward.43} parent=0 // pred_check
    _
  $region11: #{deeplabv3plus_gru_forward.43} parent=0 // pred_check_branch
    %713 = sbr.rel (0) target = $region13
  $region12: #{deeplabv3plus_gru_forward.43} parent=0 // pred_region
    _
  $region13: #{deeplabv3plus_gru_forward.43} parent=0 // pred_fallthru
    _
  // Predicated region
  $region14: #{deeplabv3plus_gru_forward.43} parent=0 // pred_check
    _
  $region15: #{deeplabv3plus_gru_forward.43} parent=0 // pred_check_branch
    %715 = sbr.rel (0) target = $region17
  $region16: #{deeplabv3plus_gru_forward.43} parent=0 // pred_region
    _
  $region17: #{deeplabv3plus_gru_forward.43} parent=0 // pred_fallthru
    _

// kernel: deeplabv3plus_gru_forward.41
$region0: #{deeplabv3plus_gru_forward.41}
  #allocation0 [shape = 'u32[]', space=smem, size = 0x4, offset = 0x4, fixed_abs, tag = 'smem constant byte address 0x4 - core index']
  #allocation1 [shape = 'u32[144,128]{1,0:T(1,128)}', space=vmem, size = 0x12000, scoped, tag = 'internal scratch']
  #allocation2 [shape = 'f32[32,128]{1,0:T(8,128)}', space=vmem, size = 0x4000, scoped, tag = 'scratch operand']
  %s0 = inlined_call_operand.vmem [shape: bf16[32,128], index: 0, kind: input, shape index: {}]
  %s1 = inlined_call_operand.vmem [shape: bf16[128,128], index: 1, kind: input, shape index: {}]
  %s2 = inlined_call_operand.vmem [shape: f32[1,128], index: 2, kind: input, shape index: {}]
  %s3 = inlined_call_operand.vmem [shape: bf16[32,128], index: 3, kind: output, shape index: {}]
  %s4 = sld [smem:[#allocation0]]
  $region30: #{deeplabv3plus_gru_forward.41} parent=0
    _
  %s6 = ssub.s32 1, %s4
  %s7 = scalar_select 0, %s6, %s4
  // Predicated region
  $region2: #{deeplabv3plus_gru_forward.41} parent=0 // pred_check
    _
  $region3: #{deeplabv3plus_gru_forward.41} parent=0 // pred_check_branch
    %9 = sbr.rel (0) target = $region5
  $region4: #{deeplabv3plus_gru_forward.41} parent=0 // pred_region
    _
  $region5: #{deeplabv3plus_gru_forward.41} parent=0 // pred_fallthru
    _
  // Predicated region
  $region6: #{deeplabv3plus_gru_forward.41} parent=0 // pred_check
    _
  $region7: #{deeplabv3plus_gru_forward.41} parent=0 // pred_check_branch
    %11 = sbr.rel (0) target = $region9
  $region8: #{deeplabv3plus_gru_forward.41} parent=0 // pred_region
    _
  $region9: #{deeplabv3plus_gru_forward.41} parent=0 // pred_fallthru
    _
  // Predicated region
  $region10: #{deeplabv3plus_gru_forward.41} parent=0 // pred_check
    _
  $region11: #{deeplabv3plus_gru_forward.41} parent=0 // pred_check_branch
    %13 = sbr.rel (0) target = $region13
  $region12: #{deeplabv3plus_gru_forward.41} parent=0 // pred_region
    _
  $region13: #{deeplabv3plus_gru_forward.41} parent=0 // pred_fallthru
    _
  %p15 = scmp.eq.s32.totalorder 0, 0
  // Predicated region
  $region14: #{deeplabv3plus_gru_forward.41} parent=0 // pred_check
    %p16 = pneg %p15
  $region15: #{deeplabv3plus_gru_forward.41} parent=0 // pred_check_branch
    %18 = sbr.rel (%p16) target = $region17
  $region16: #{deeplabv3plus_gru_forward.41} parent=0 // pred_region
    %19 = vst [vmem:[#allocation2] sm:$0xff] 0.0
    %20 = vst [vmem:[#allocation2 + $0x8] sm:$0xff] 0.0
    %21 = vst [vmem:[#allocation2 + $0x10] sm:$0xff] 0.0
    %22 = vst [vmem:[#allocation2 + $0x18] sm:$0xff] 0.0
  $region17: #{deeplabv3plus_gru_forward.41} parent=0 // pred_fallthru
    _
  %v23 = vld [vmem:[#allocation2] sm:$0xff]
  %v24 = vld [vmem:[#allocation2 + $0x8] sm:$0xff]
  %v25 = vld [vmem:[#allocation2 + $0x10] sm:$0xff]
  %v26 = vld [vmem:[#allocation2 + $0x18] sm:$0xff]
  %v27 = vld [vmem:[%s0] sm:$0xf]
  %v28 = vld [vmem:[%s0 + $0x4] sm:$0xf]
  %v29 = vld [vmem:[%s0 + $0x8] sm:$0xf]
  %v30 = vld [vmem:[%s0 + $0xc] sm:$0xf]
  %v31 = vld [vmem:[%s1] sm:$0xf]
  %v32 = vld [vmem:[%s1 + $0x4] sm:$0xf]
  %v33 = vld [vmem:[%s1 + $0x8] sm:$0xf]
  %v34 = vld [vmem:[%s1 + $0xc] sm:$0xf]
  %v35 = vld [vmem:[%s1 + $0x10] sm:$0xf]
  %v36 = vld [vmem:[%s1 + $0x14] sm:$0xf]
  %v37 = vld [vmem:[%s1 + $0x18] sm:$0xf]
  %v38 = vld [vmem:[%s1 + $0x1c] sm:$0xf]
  %v39 = vld [vmem:[%s1 + $0x20] sm:$0xf]
  %v40 = vld [vmem:[%s1 + $0x24] sm:$0xf]
  %v41 = vld [vmem:[%s1 + $0x28] sm:$0xf]
  %v42 = vld [vmem:[%s1 + $0x2c] sm:$0xf]
  %v43 = vld [vmem:[%s1 + $0x30] sm:$0xf]
  %v44 = vld [vmem:[%s1 + $0x34] sm:$0xf]
  %v45 = vld [vmem:[%s1 + $0x38] sm:$0xf]
  %v46 = vld [vmem:[%s1 + $0x3c] sm:$0xf]
  %v51 = vunpack.c.l.b16 %v27
  %v52 = vunpack.c.l.b16 %v28
  %v53 = vunpack.c.l.b16 %v29
  %v54 = vunpack.c.l.b16 %v30
  %v55 = vpack.c.b16 %v52, %v51
  %v56 = vpack.c.b16 %v54, %v53
  %v75 = vunpack.c.l.b16 %v31
  %v76 = vunpack.c.l.b16 %v32
  %v77 = vunpack.c.l.b16 %v33
  %v78 = vunpack.c.l.b16 %v34
  %v79 = vunpack.c.l.b16 %v35
  %v80 = vunpack.c.l.b16 %v36
  %v81 = vunpack.c.l.b16 %v37
  %v82 = vunpack.c.l.b16 %v38
  %v83 = vunpack.c.l.b16 %v39
  %v84 = vunpack.c.l.b16 %v40
  %v85 = vunpack.c.l.b16 %v41
  %v86 = vunpack.c.l.b16 %v42
  %v87 = vunpack.c.l.b16 %v43
  %v88 = vunpack.c.l.b16 %v44
  %v89 = vunpack.c.l.b16 %v45
  %v90 = vunpack.c.l.b16 %v46
  %v91 = vpack.c.b16 %v76, %v75
  %v92 = vpack.c.b16 %v78, %v77
  %v93 = vpack.c.b16 %v80, %v79
  %v94 = vpack.c.b16 %v82, %v81
  %v95 = vpack.c.b16 %v84, %v83
  %v96 = vpack.c.b16 %v86, %v85
  %v97 = vpack.c.b16 %v88, %v87
  %v98 = vpack.c.b16 %v90, %v89
  %107 = vmatprep.subr.bf16.mxu0 0
  %108 = vmatpush1.bf16.msra.mxu0 %v91
  %109 = vmatprep.subr.bf16.mxu0 0
  %110 = vmatpush1.bf16.msra.mxu0 %v92
  %111 = vmatprep.subr.bf16.mxu0 0
  %112 = vmatpush1.bf16.msra.mxu0 %v93
  %113 = vmatprep.subr.bf16.mxu0 0
  %114 = vmatpush1.bf16.msra.mxu0 %v94
  %115 = vmatprep.subr.bf16.mxu0 0
  %116 = vmatpush1.bf16.msra.mxu0 %v95
  %117 = vmatprep.subr.bf16.mxu0 0
  %118 = vmatpush1.bf16.msra.mxu0 %v96
  %119 = vmatprep.subr.bf16.mxu0 0
  %120 = vmatpush1.bf16.msra.mxu0 %v97
  %121 = vmatprep.subr.bf16.mxu0 0
  %122 = vmatpush1.bf16.msra.mxu0 %v98
  %123 = vmatprep.subr.bf16.mxu0 0
  %124 = vmatpush1.bf16.msra.mxu0 0
  %125 = vmatprep.subr.bf16.mxu0 0
  %126 = vmatpush1.bf16.msra.mxu0 0
  %127 = vmatprep.subr.bf16.mxu0 0
  %128 = vmatpush1.bf16.msra.mxu0 0
  %129 = vmatprep.subr.bf16.mxu0 0
  %130 = vmatpush1.bf16.msra.mxu0 0
  %131 = vmatprep.subr.bf16.mxu0 0
  %132 = vmatpush1.bf16.msra.mxu0 0
  %133 = vmatprep.subr.bf16.mxu0 0
  %134 = vmatpush1.bf16.msra.mxu0 0
  %135 = vmatprep.subr.bf16.mxu0 0
  %136 = vmatpush1.bf16.msra.mxu0 0
  %137 = vmatprep.subr.bf16.mxu0 0
  %138 = vmatpush1.bf16.msra.mxu0 0
  %139 = vmatprep.mubr.bf16.mxu0 0
  %140 = vmatmul.mubr.bf16.gmra.mrb[0].mxu0 %v55
  %v141 = vpop.f32.mrb[0].mxu0
  %v142 = vadd.f32 0.0, %v141
  %v143 = vpop.f32.mrb[0].mxu0
  %v144 = vpop.f32.mrb[0].mxu0
  %v145 = vadd.f32 0.0, %v144
  %v146 = vpop.f32.mrb[0].mxu0
  %147 = vmatprep.mubr.bf16.mxu0 0
  %148 = vmatmul.mubr.bf16.gmra.mrb[0].mxu0 %v56
  %v149 = vpop.f32.mrb[0].mxu0
  %v150 = vadd.f32 0.0, %v149
  %v151 = vpop.f32.mrb[0].mxu0
  %v152 = vpop.f32.mrb[0].mxu0
  %v153 = vadd.f32 0.0, %v152
  %v154 = vpop.f32.mrb[0].mxu0
  %155 = vdwg.mxu0
  %v156 = vadd.f32 %v23, %v142
  %v157 = vadd.f32 %v24, %v145
  %v158 = vadd.f32 %v25, %v150
  %v159 = vadd.f32 %v26, %v153
  %160 = vst [vmem:[#allocation2] sm:$0xff] %v156
  %161 = vst [vmem:[#allocation2 + $0x8] sm:$0xff] %v157
  %162 = vst [vmem:[#allocation2 + $0x10] sm:$0xff] %v158
  %163 = vst [vmem:[#allocation2 + $0x18] sm:$0xff] %v159
  // Predicated region
  $region18: #{deeplabv3plus_gru_forward.41} parent=0 // pred_check
    %p164 = pneg %p15
  $region19: #{deeplabv3plus_gru_forward.41} parent=0 // pred_check_branch
    %166 = sbr.rel (%p164) target = $region21
  $region20: #{deeplabv3plus_gru_forward.41} parent=0 // pred_region
    %v167 = vld [vmem:[#allocation2] sm:$0xff]
    %v168 = vld [vmem:[#allocation2 + $0x8] sm:$0xff]
    %v169 = vld [vmem:[#allocation2 + $0x10] sm:$0xff]
    %v170 = vld [vmem:[#allocation2 + $0x18] sm:$0xff]
    %v171 = vld [vmem:[%s2] sm:$0x1]
    %v173 = vlaneseq
    %v174 = vshrl.u32 %v173, 7
    %v175 = vsub.s32 0, %v174
    %v176 = vrot.slane %v171, %v175
    %v178 = vadd.f32 %v167, %v176
    %v179 = vadd.f32 %v168, %v176
    %v180 = vadd.f32 %v169, %v176
    %v181 = vadd.f32 %v170, %v176
    %v182 = vmax.f32 %v178, 0.0
    %v183 = vmax.f32 %v179, 0.0
    %v184 = vmax.f32 %v180, 0.0
    %v185 = vmax.f32 %v181, 0.0
    %v186 = vpack.c.bf16 %v183, %v182
    %v187 = vpack.c.bf16 %v185, %v184
    %v190 = vunpack.c.l.b16 %v186
    %v191 = vunpack.c.h.b16 %v186
    %v192 = vunpack.c.l.b16 %v187
    %v193 = vunpack.c.h.b16 %v187
    %v194 = vpack.c.b16 %v190, %v190
    %v195 = vpack.c.b16 %v191, %v191
    %v196 = vpack.c.b16 %v192, %v192
    %v197 = vpack.c.b16 %v193, %v193
    %202 = vst [vmem:[%s3] sm:$0xf] %v194
    %203 = vst [vmem:[%s3 + $0x4] sm:$0xf] %v195
    %204 = vst [vmem:[%s3 + $0x8] sm:$0xf] %v196
    %205 = vst [vmem:[%s3 + $0xc] sm:$0xf] %v197
  $region21: #{deeplabv3plus_gru_forward.41} parent=0 // pred_fallthru
    _
  // Predicated region
  $region22: #{deeplabv3plus_gru_forward.41} parent=0 // pred_check
    _
  $region23: #{deeplabv3plus_gru_forward.41} parent=0 // pred_check_branch
    %207 = sbr.rel (0) target = $region25
  $region24: #{deeplabv3plus_gru_forward.41} parent=0 // pred_region
    _
  $region25: #{deeplabv3plus_gru_forward.41} parent=0 // pred_fallthru
    _
  // Predicated region
  $region26: #{deeplabv3plus_gru_forward.41} parent=0 // pred_check
    _
  $region27: #{deeplabv3plus_gru_forward.41} parent=0 // pred_check_branch
    %209 = sbr.rel (0) target = $region29
  $region28: #{deeplabv3plus_gru_forward.41} parent=0 // pred_region
    _
  $region29: #{deeplabv3plus_gru_forward.41} parent=0 // pred_fallthru
    _

// kernel: deeplabv3plus_gru_forward.44
$region0: #{deeplabv3plus_gru_forward.44}
  #allocation0 [shape = 'u32[]', space=smem, size = 0x4, offset = 0x4, fixed_abs, tag = 'smem constant byte address 0x4 - core index']
  #allocation1 [shape = 'u32[144,128]{1,0:T(1,128)}', space=vmem, size = 0x12000, scoped, tag = 'internal scratch']
  #allocation2 [shape = 'f32[32,256]{1,0:T(8,128)}', space=vmem, size = 0x8000, scoped, tag = 'scratch operand']
  %s0 = inlined_call_operand.vmem [shape: bf16[32,3072], index: 0, kind: input, shape index: {}]
  %s1 = inlined_call_operand.vmem [shape: bf16[3072,256], index: 1, kind: input, shape index: {}]
  %s2 = inlined_call_operand.vmem [shape: f32[1,256], index: 2, kind: input, shape index: {}]
  %s3 = inlined_call_operand.vmem [shape: bf16[32,256], index: 3, kind: output, shape index: {}]
  %s4 = sld [smem:[#allocation0]]
  $region76: #{deeplabv3plus_gru_forward.44} parent=0
    _
  %s6 = ssub.s32 1, %s4
  %s7 = scalar_select 0, %s6, %s4
  $region1: #{deeplabv3plus_gru_forward.44} parent=0
    #allocation3 [shape = 'u8[65536]{0}', space=vmem, size = 0x10000, scoped, tag = 'input window, operand 0']
    loop: start=0, step=1, limit=8
    $region2: #{deeplabv3plus_gru_forward.44} parent=1 // loop_pre_header
      _
    $region3: #{deeplabv3plus_gru_forward.44} parent=1 // loop_header
      %s9 = sphi 0, %s13
      %p10 = scmp.ge.s32.totalorder %s9, 8
      %s16 = sphi 0, %s35
      %s17 = sphi 0, %s31
      %s18 = sphi 0, %s27
      %s19 = sphi 0, %s16
      %s20 = sphi 0, %s17
      %s21 = sphi 0, %s18
      %s22 = sphi 0, %s19
      %s23 = sphi 0, %s20
      %s24 = sphi 0, %s21
      %s40 = sphi 0, %s42
      %s43 = sphi 0, %s40
      %s44 = sphi 0, %s43
      %s60 = sphi 0, %s44
      %s68 = sphi 0, %s70
      %s71 = sphi 0, %s68
      %s72 = sphi 0, %s71
      %s88 = sphi 0, %s72
      %s94 = sphi 0, %s96
      %s97 = sphi 0, %s94
      %s98 = sphi 0, %s97
      %s114 = sphi 0, %s98
      %s122 = sphi 0, %s124
      %s125 = sphi 0, %s122
      %s126 = sphi 0, %s125
      %s142 = sphi 0, %s126
    $region4: #{deeplabv3plus_gru_forward.44} parent=1 // loop_header_branch
      %12 = sbr.rel (%p10) target = $region8
    $region5: #{deeplabv3plus_gru_forward.44} parent=1 // loop_body
      %s14 = ssub.s32 %s9, 1
      %s15 = ssub.s32 %s9, 2
      %s25 = sadd.s32 1, %s18
      %p26 = scmp.ge.s32.totalorder %s25, 6
      %s27 = scalar_select %p26, 0, %s25
      %s28 = sadd.s32 1, %s17
      %s29 = scalar_select %p26, %s28, %s17
      %p30 = scmp.ge.s32.totalorder %s29, 1
      %s31 = scalar_select %p30, 0, %s29
      %s32 = sadd.s32 1, %s16
      %s33 = scalar_select %p30, %s32, %s16
      %p34 = scmp.ge.s32.totalorder %s33, 1
      %s35 = scalar_select %p34, 0, %s33
      %s36 = ssub.s32 %s16, %s35
      %s37 = ssub.s32 %s18, %s27
      %s38 = sor.u32 %s36, %s37
      %p39 = scmp.eq.s32.totalorder %s38, 0
      %s41 = sadd.s32 %s40, 1
      %s42 = scalar_select %p39, %s40, %s41
      %p45 = pneg %p39
      %p46 = scmp.eq.s32.totalorder %s9, 5
      %p47 = por %p45, %p46
      %p48 = scmp.ne.s32.totalorder %s40, %s43
      %p49 = scmp.eq.s32.totalorder %s9, 0
      %p50 = por %p48, %p49
      %p51 = scmp.ne.s32.totalorder %s40, %s43
      %p52 = scmp.eq.s32.totalorder %s14, 5
      %p53 = por %p51, %p52
      %p54 = scmp.ne.s32.totalorder %s43, %s44
      %p55 = scmp.eq.s32.totalorder %s14, 0
      %p56 = por %p54, %p55
      %p57 = scmp.ne.s32.totalorder %s43, %s44
      %p58 = scmp.eq.s32.totalorder %s15, 5
      %p59 = por %p57, %p58
      %p61 = scmp.ne.s32.totalorder %s44, %s60
      %p62 = scmp.eq.s32.totalorder %s15, 0
      %p63 = por %p61, %p62
      %s64 = ssub.s32 %s18, %s27
      %s65 = ssub.s32 %s17, %s31
      %s66 = sor.u32 %s64, %s65
      %p67 = scmp.eq.s32.totalorder %s66, 0
      %s69 = sadd.s32 %s68, 1
      %s70 = scalar_select %p67, %s68, %s69
      %p73 = pneg %p67
      %p74 = scmp.eq.s32.totalorder %s9, 5
      %p75 = por %p73, %p74
      %p76 = scmp.ne.s32.totalorder %s68, %s71
      %p77 = scmp.eq.s32.totalorder %s9, 0
      %p78 = por %p76, %p77
      %p79 = scmp.ne.s32.totalorder %s68, %s71
      %p80 = scmp.eq.s32.totalorder %s14, 5
      %p81 = por %p79, %p80
      %p82 = scmp.ne.s32.totalorder %s71, %s72
      %p83 = scmp.eq.s32.totalorder %s14, 0
      %p84 = por %p82, %p83
      %p85 = scmp.ne.s32.totalorder %s71, %s72
      %p86 = scmp.eq.s32.totalorder %s15, 5
      %p87 = por %p85, %p86
      %p89 = scmp.ne.s32.totalorder %s72, %s88
      %p90 = scmp.eq.s32.totalorder %s15, 0
      %p91 = por %p89, %p90
      %s92 = ssub.s32 %s17, %s31
      %p93 = scmp.eq.s32.totalorder %s92, 0
      %s95 = sadd.s32 %s94, 1
      %s96 = scalar_select %p93, %s94, %s95
      %p99 = pneg %p93
      %p100 = scmp.eq.s32.totalorder %s9, 5
      %p101 = por %p99, %p100
      %p102 = scmp.ne.s32.totalorder %s94, %s97
      %p103 = scmp.eq.s32.totalorder %s9, 0
      %p104 = por %p102, %p103
      %p105 = scmp.ne.s32.totalorder %s94, %s97
      %p106 = scmp.eq.s32.totalorder %s14, 5
      %p107 = por %p105, %p106
      %p108 = scmp.ne.s32.totalorder %s97, %s98
      %p109 = scmp.eq.s32.totalorder %s14, 0
      %p110 = por %p108, %p109
      %p111 = scmp.ne.s32.totalorder %s97, %s98
      %p112 = scmp.eq.s32.totalorder %s15, 5
      %p113 = por %p111, %p112
      %p115 = scmp.ne.s32.totalorder %s98, %s114
      %p116 = scmp.eq.s32.totalorder %s15, 0
      %p117 = por %p115, %p116
      %s118 = ssub.s32 %s16, %s35
      %s119 = ssub.s32 %s17, %s31
      %s120 = sor.u32 %s118, %s119
      %p121 = scmp.eq.s32.totalorder %s120, 0
      %s123 = sadd.s32 %s122, 1
      %s124 = scalar_select %p121, %s122, %s123
      %p127 = pneg %p121
      %p128 = scmp.eq.s32.totalorder %s9, 5
      %p129 = por %p127, %p128
      %p130 = scmp.ne.s32.totalorder %s122, %s125
      %p131 = scmp.eq.s32.totalorder %s9, 0
      %p132 = por %p130, %p131
      %p133 = scmp.ne.s32.totalorder %s122, %s125
      %p134 = scmp.eq.s32.totalorder %s14, 5
      %p135 = por %p133, %p134
      %p136 = scmp.ne.s32.totalorder %s125, %s126
      %p137 = scmp.eq.s32.totalorder %s14, 0
      %p138 = por %p136, %p137
      %p139 = scmp.ne.s32.totalorder %s125, %s126
      %p140 = scmp.eq.s32.totalorder %s15, 5
      %p141 = por %p139, %p140
      %p143 = scmp.ne.s32.totalorder %s126, %s142
      %p144 = scmp.eq.s32.totalorder %s15, 0
      %p145 = por %p143, %p144
      %p146 = scmp.le.s32.totalorder 1, %s9
      %p147 = scmp.lt.s32.totalorder %s9, 7
      %p148 = pnand %p146, %p147
      %p149 = pneg %p148
      // Predicated region
      $region9: #{deeplabv3plus_gru_forward.44} parent=5 // pred_check
        _
      $region10: #{deeplabv3plus_gru_forward.44} parent=5 // pred_check_branch
        %151 = sbr.rel (%p148) target = $region12
      $region11: #{deeplabv3plus_gru_forward.44} parent=5 // pred_region
        %s152 = ssub.s32 %s9, 1
        // Predicated region
        $region13: #{deeplabv3plus_gru_forward.44} parent=11 // pred_check
          %p153 = pneg %p110
        $region14: #{deeplabv3plus_gru_forward.44} parent=11 // pred_check_branch
          %155 = sbr.rel (%p153) target = $region16
        $region15: #{deeplabv3plus_gru_forward.44} parent=11 // pred_region
          %s156 = smul.u32 2, %s20
          %p157 = scmp.lt.s32.totalorder %s156, 1
          %s158 = scalar_select %p157, %s156, 1
          %s159 = scalar_lea.vmem %s2, %s158
          %s160 = smul.u32 2, %s20
        $region16: #{deeplabv3plus_gru_forward.44} parent=11 // pred_fallthru
          _
      $region12: #{deeplabv3plus_gru_forward.44} parent=5 // pred_fallthru
        _
      %p161 = scmp.lt.s32.totalorder %s9, 6
      // Predicated region
      $region17: #{deeplabv3plus_gru_forward.44} parent=5 // pred_check
        %p162 = pneg %p161
      $region18: #{deeplabv3plus_gru_forward.44} parent=5 // pred_check_branch
        %164 = sbr.rel (%p162) target = $region20
      $region19: #{deeplabv3plus_gru_forward.44} parent=5 // pred_region
        // Predicated region
        $region21: #{deeplabv3plus_gru_forward.44} parent=19 // pred_check
          %p165 = pneg %p50
        $region22: #{deeplabv3plus_gru_forward.44} parent=19 // pred_check_branch
          %167 = sbr.rel (%p165) target = $region24
        $region23: #{deeplabv3plus_gru_forward.44} parent=19 // pred_region
          %s168 = sand.u32 %s40, 1
          %s169 = sand.u32 %s40, 1
          %s170 = smul.addr %s169, 64
          %s171 = scalar_lea.vmem [#allocation3], %s170
          %s172 = smul.u32 4, %s16
          %s173 = smul.u32 4, %s18
          %s174 = smul.addr %s172, 24
          %s175 = sadd.s32 %s173, %s174
          %s176 = smul.addr %s175, 4
          %s177 = scalar_lea.vmem %s0, %s176
          // Predicated region
          $region25: #{deeplabv3plus_gru_forward.44} parent=23 // pred_check
            _
          $region26: #{deeplabv3plus_gru_forward.44} parent=23 // pred_check_branch
            %179 = sbr.rel (0) target = $region28
          $region27: #{deeplabv3plus_gru_forward.44} parent=23 // pred_region
            // Predicated region
            $region29: #{deeplabv3plus_gru_forward.44} parent=27 // pred_check
              _
            $region30: #{deeplabv3plus_gru_forward.44} parent=27 // pred_check_branch
              %181 = sbr.rel (0) target = $region32
            $region31: #{deeplabv3plus_gru_forward.44} parent=27 // pred_region
              loop: start=0, step=1, limit=1
              $region33: #{deeplabv3plus_gru_forward.44} parent=31 // loop_pre_header
                _
              $region34: #{deeplabv3plus_gru_forward.44} parent=31 // loop_header
                %s183 = sphi 0, %s187
                %p184 = scmp.ge.s32.totalorder %s183, 1
                %s188 = sphi %s177, %s177
                %s189 = sphi %s171, %s171
              $region35: #{deeplabv3plus_gru_forward.44} parent=31 // loop_header_branch
                %186 = sbr.rel (%p184) target = $region39
              $region36: #{deeplabv3plus_gru_forward.44} parent=31 // loop_body
                %v190 = vld [vmem:[%s188] sm:$0xff]
                %191 = vst [vmem:[%s189] sm:$0xff] %v190
                %v192 = vld [vmem:[%s188 + $0x8] sm:$0xff]
                %193 = vst [vmem:[%s189 + $0x8] sm:$0xff] %v192
                %v194 = vld [vmem:[%s188 + $0x60] sm:$0xff]
                %195 = vst [vmem:[%s189 + $0x10] sm:$0xff] %v194
                %v196 = vld [vmem:[%s188 + $0x68] sm:$0xff]
                %197 = vst [vmem:[%s189 + $0x18] sm:$0xff] %v196
                %v198 = vld [vmem:[%s188 + $0xc0] sm:$0xff]
                %199 = vst [vmem:[%s189 + $0x20] sm:$0xff] %v198
                %v200 = vld [vmem:[%s188 + $0xc8] sm:$0xff]
                %201 = vst [vmem:[%s189 + $0x28] sm:$0xff] %v200
                %v202 = vld [vmem:[%s188 + $0x120] sm:$0xff]
                %203 = vst [vmem:[%s189 + $0x30] sm:$0xff] %v202
                %v204 = vld [vmem:[%s188 + $0x128] sm:$0xff]
                %205 = vst [vmem:[%s189 + $0x38] sm:$0xff] %v204
              $region37: #{deeplabv3plus_gru_forward.44} parent=31 // loop_footer
                %s187 = sadd.s32 1, %s183
              $region38: #{deeplabv3plus_gru_forward.44} parent=31 // loop_footer_branch
                %182 = sbr.rel target = $region34
              $region39: #{deeplabv3plus_gru_forward.44} parent=31 // loop_exit
                _
            $region32: #{deeplabv3plus_gru_forward.44} parent=27 // pred_fallthru
              _
            // Predicated region
            $region40: #{deeplabv3plus_gru_forward.44} parent=27 // pred_check
              _
            $region41: #{deeplabv3plus_gru_forward.44} parent=27 // pred_check_branch
              %207 = sbr.rel target = $region43
            $region42: #{deeplabv3plus_gru_forward.44} parent=27 // pred_region
              _
            $region43: #{deeplabv3plus_gru_forward.44} parent=27 // pred_fallthru
              _
          $region28: #{deeplabv3plus_gru_forward.44} parent=23 // pred_fallthru
            _
          %208 = vnop
        $region24: #{deeplabv3plus_gru_forward.44} parent=19 // pred_fallthru
          _
        // Predicated region
        $region44: #{deeplabv3plus_gru_forward.44} parent=19 // pred_check
          %p209 = pneg %p78
        $region45: #{deeplabv3plus_gru_forward.44} parent=19 // pred_check_branch
          %211 = sbr.rel (%p209) target = $region47
        $region46: #{deeplabv3plus_gru_forward.44} parent=19 // pred_region
          %s212 = smul.u32 64, %s18
          %s213 = smul.u32 2, %s17
          %p214 = scmp.lt.s32.totalorder %s212, 383
          %s215 = scalar_select %p214, %s212, 383
          %p216 = scmp.lt.s32.totalorder %s213, 1
          %s217 = scalar_select %p216, %s213, 1
          %s218 = smul.addr %s215, 2
          %s219 = sadd.s32 %s217, %s218
          %s220 = smul.addr %s219, 4
          %s221 = scalar_lea.vmem %s1, %s220
          %s222 = smul.u32 64, %s18
          %s223 = smul.u32 2, %s17
        $region47: #{deeplabv3plus_gru_forward.44} parent=19 // pred_fallthru
          _
      $region20: #{deeplabv3plus_gru_forward.44} parent=5 // pred_fallthru
        _
      %p224 = scmp.le.s32.totalorder 1, %s9
      %p225 = scmp.lt.s32.totalorder %s9, 7
      %p226 = pnand %p224, %p225
      %p227 = pneg %p226
      // Predicated region
      $region48: #{deeplabv3plus_gru_forward.44} parent=5 // pred_check
        _
      $region49: #{deeplabv3plus_gru_forward.44} parent=5 // pred_check_branch
        %229 = sbr.rel (%p226) target = $region51
      $region50: #{deeplabv3plus_gru_forward.44} parent=5 // pred_region
        %s230 = ssub.s32 %s9, 1
        %s231 = sand.u32 %s43, 1
        %s232 = sand.u32 %s43, 1
        %s233 = smul.addr %s232, 64
        %s234 = scalar_lea.vmem [#allocation3], %s233
        // Predicated region
        $region52: #{deeplabv3plus_gru_forward.44} parent=50 // pred_check
          %p235 = pneg %p56
        $region53: #{deeplabv3plus_gru_forward.44} parent=50 // pred_check_branch
          %237 = sbr.rel (%p235) target = $region55
        $region54: #{deeplabv3plus_gru_forward.44} parent=50 // pred_region
          _
        $region55: #{deeplabv3plus_gru_forward.44} parent=50 // pred_fallthru
          _
        %s238 = sand.u32 %s43, 1
        %s239 = sand.u32 %s43, 1
        %s240 = smul.addr %s239, 64
        %s241 = scalar_lea.vmem [#allocation3], %s240
        %p242 = pneg %p56
        %p243 = pneg %p53
        %s244 = smul.u32 64, %s21
        %s245 = smul.u32 2, %s20
        %p246 = scmp.lt.s32.totalorder %s244, 383
        %s247 = scalar_select %p246, %s244, 383
        %p248 = scmp.lt.s32.totalorder %s245, 1
        %s249 = scalar_select %p248, %s245, 1
        %s250 = smul.addr %s247, 2
        %s251 = sadd.s32 %s249, %s250
        %s252 = smul.addr %s251, 4
        %s253 = scalar_lea.vmem %s1, %s252
        %p254 = pneg %p84
        %p255 = pneg %p81
        %s256 = smul.u32 2, %s20
        %p257 = scmp.lt.s32.totalorder %s256, 1
        %s258 = scalar_select %p257, %s256, 1
        %s259 = scalar_lea.vmem %s2, %s258
        %p260 = pneg %p110
        %p261 = pneg %p107
        %p262 = pneg %p138
        %p263 = pneg %p135
        %s264 = smul.u32 4, %s19
        %s265 = smul.u32 2, %s20
        %p266 = scmp.lt.s32.totalorder %s264, 3
        %s267 = scalar_select %p266, %s264, 3
        %p268 = scmp.lt.s32.totalorder %s265, 1
        %s269 = scalar_select %p268, %s265, 1
        %s270 = smul.addr %s267, 2
        %s271 = sadd.s32 %s269, %s270
        %s272 = smul.addr %s271, 4
        %s273 = scalar_lea.vmem %s3, %s272
        %s274 = smul.u32 4, %s19
        %s275 = smul.u32 4, %s21
        %s276 = smul.u32 64, %s21
        %s277 = smul.u32 2, %s20
        %p278 = scmp.lt.s32.totalorder %s276, 383
        %s279 = scalar_select %p278, %s276, 383
        %p280 = scmp.lt.s32.totalorder %s277, 1
        %s281 = scalar_select %p280, %s277, 1
        %s282 = smul.addr %s279, 2
        %s283 = sadd.s32 %s281, %s282
        %s284 = smul.addr %s283, 4
        %s285 = scalar_lea.vmem %s1, %s284
        %s286 = smul.u32 64, %s21
        %s287 = smul.u32 2, %s20
        %s288 = smul.u32 2, %s20
        %p289 = scmp.lt.s32.totalorder %s288, 1
        %s290 = scalar_select %p289, %s288, 1
        %s291 = scalar_lea.vmem %s2, %s290
        %s292 = smul.u32 2, %s20
        %s293 = smul.u32 4, %s19
        %s294 = smul.u32 2, %s20
        %p295 = scmp.lt.s32.totalorder %s293, 3
        %s296 = scalar_select %p295, %s293, 3
        %p297 = scmp.lt.s32.totalorder %s294, 1
        %s298 = scalar_select %p297, %s294, 1
        %s299 = smul.addr %s296, 2
        %s300 = sadd.s32 %s298, %s299
        %s301 = smul.addr %s300, 4
        %s302 = scalar_lea.vmem %s3, %s301
        %s303 = smul.u32 4, %s19
        %s304 = smul.u32 2, %s20
        %p305 = scmp.eq.s32.totalorder %s21, 0
        // Predicated region
        $region56: #{deeplabv3plus_gru_forward.44} parent=50 // pred_check
          %p306 = pneg %p305
        $region57: #{deeplabv3plus_gru_forward.44} parent=50 // pred_check_branch
          %308 = sbr.rel (%p306) target = $region59
        $region58: #{deeplabv3plus_gru_forward.44} parent=50 // pred_region
          %309 = vst [vmem:[#allocation2] sm:$0xff] 0.0
          %310 = vst [vmem:[#allocation2 + $0x8] sm:$0xff] 0.0
          %311 = vst [vmem:[#allocation2 + $0x10] sm:$0xff] 0.0
          %312 = vst [vmem:[#allocation2 + $0x18] sm:$0xff] 0.0
          %313 = vst [vmem:[#allocation2 + $0x20] sm:$0xff] 0.0
          %314 = vst [vmem:[#allocation2 + $0x28] sm:$0xff] 0.0
          %315 = vst [vmem:[#allocation2 + $0x30] sm:$0xff] 0.0
          %316 = vst [vmem:[#allocation2 + $0x38] sm:$0xff] 0.0
        $region59: #{deeplabv3plus_gru_forward.44} parent=50 // pred_fallthru
          _
        %v317 = vld [vmem:[#allocation2] sm:$0xff]
        %v318 = vld [vmem:[#allocation2 + $0x8] sm:$0xff]
        %v319 = vld [vmem:[#allocation2 + $0x10] sm:$0xff]
        %v320 = vld [vmem:[#allocation2 + $0x18] sm:$0xff]
        %v321 = vld [vmem:[#allocation2 + $0x20] sm:$0xff]
        %v322 = vld [vmem:[#allocation2 + $0x28] sm:$0xff]
        %v323 = vld [vmem:[#allocation2 + $0x30] sm:$0xff]
        %v324 = vld [vmem:[#allocation2 + $0x38] sm:$0xff]
        %v325 = vld [vmem:[%s234] sm:$0xff]
        %v326 = vld [vmem:[%s234 + $0x8] sm:$0xff]
        %v327 = vld [vmem:[%s234 + $0x10] sm:$0xff]
        %v328 = vld [vmem:[%s234 + $0x18] sm:$0xff]
        %v329 = vld [vmem:[%s234 + $0x20] sm:$0xff]
        %v330 = vld [vmem:[%s234 + $0x28] sm:$0xff]
        %v331 = vld [vmem:[%s234 + $0x30] sm:$0xff]
        %v332 = vld [vmem:[%s234 + $0x38] sm:$0xff]
        %v333 = vld [vmem:[%s285] sm:$0xff]
        %v334 = vld [vmem:[%s285 + $0x8] sm:$0xff]
        %v335 = vld [vmem:[%s285 + $0x10] sm:$0xff]
        %v336 = vld [vmem:[%s285 + $0x18] sm:$0xff]
        %v337 = vld [vmem:[%s285 + $0x20] sm:$0xff]
        %v338 = vld [vmem:[%s285 + $0x28] sm:$0xff]
        %v339 = vld [vmem:[%s285 + $0x30] sm:$0xff]
        %v340 = vld [vmem:[%s285 + $0x38] sm:$0xff]
        %v341 = vld [vmem:[%s285 + $0x40] sm:$0xff]
        %v342 = vld [vmem:[%s285 + $0x48] sm:$0xff]
        %v343 = vld [vmem:[%s285 + $0x50] sm:$0xff]
        %v344 = vld [vmem:[%s285 + $0x58] sm:$0xff]
        %v345 = vld [vmem:[%s285 + $0x60] sm:$0xff]
        %v346 = vld [vmem:[%s285 + $0x68] sm:$0xff]
        %v347 = vld [vmem:[%s285 + $0x70] sm:$0xff]
        %v348 = vld [vmem:[%s285 + $0x78] sm:$0xff]
        %v349 = vld [vmem:[%s285 + $0x80] sm:$0xff]
        %v350 = vld [vmem:[%s285 + $0x88] sm:$0xff]
        %v351 = vld [vmem:[%s285 + $0x90] sm:$0xff]
        %v352 = vld [vmem:[%s285 + $0x98] sm:$0xff]
        %v353 = vld [vmem:[%s285 + $0xa0] sm:$0xff]
        %v354 = vld [vmem:[%s285 + $0xa8] sm:$0xff]
        %v355 = vld [vmem:[%s285 + $0xb0] sm:$0xff]
        %v356 = vld [vmem:[%s285 + $0xb8] sm:$0xff]
        %v357 = vld [vmem:[%s285 + $0xc0] sm:$0xff]
        %v358 = vld [vmem:[%s285 + $0xc8] sm:$0xff]
        %v359 = vld [vmem:[%s285 + $0xd0] sm:$0xff]
        %v360 = vld [vmem:[%s285 + $0xd8] sm:$0xff]
        %v361 = vld [vmem:[%s285 + $0xe0] sm:$0xff]
        %v362 = vld [vmem:[%s285 + $0xe8] sm:$0xff]
        %v363 = vld [vmem:[%s285 + $0xf0] sm:$0xff]
        %v364 = vld [vmem:[%s285 + $0xf8] sm:$0xff]
        %v365 = vld [vmem:[%s285 + $0x100] sm:$0xff]
        %v366 = vld [vmem:[%s285 + $0x108] sm:$0xff]
        %v367 = vld [vmem:[%s285 + $0x110] sm:$0xff]
        %v368 = vld [vmem:[%s285 + $0x118] sm:$0xff]
        %v369 = vld [vmem:[%s285 + $0x120] sm:$0xff]
        %v370 = vld [vmem:[%s285 + $0x128] sm:$0xff]
        %v371 = vld [vmem:[%s285 + $0x130] sm:$0xff]
        %v372 = vld [vmem:[%s285 + $0x138] sm:$0xff]
        %v373 = vld [vmem:[%s285 + $0x140] sm:$0xff]
        %v374 = vld [vmem:[%s285 + $0x148] sm:$0xff]
        %v375 = vld [vmem:[%s285 + $0x150] sm:$0xff]
        %v376 = vld [vmem:[%s285 + $0x158] sm:$0xff]
        %v377 = vld [vmem:[%s285 + $0x160] sm:$0xff]
        %v378 = vld [vmem:[%s285 + $0x168] sm:$0xff]
        %v379 = vld [vmem:[%s285 + $0x170] sm:$0xff]
        %v380 = vld [vmem:[%s285 + $0x178] sm:$0xff]
        %v381 = vld [vmem:[%s285 + $0x180] sm:$0xff]
        %v382 = vld [vmem:[%s285 + $0x188] sm:$0xff]
        %v383 = vld [vmem:[%s285 + $0x190] sm:$0xff]
        %v384 = vld [vmem:[%s285 + $0x198] sm:$0xff]
        %v385 = vld [vmem:[%s285 + $0x1a0] sm:$0xff]
        %v386 = vld [vmem:[%s285 + $0x1a8] sm:$0xff]
        %v387 = vld [vmem:[%s285 + $0x1b0] sm:$0xff]
        %v388 = vld [vmem:[%s285 + $0x1b8] sm:$0xff]
        %v389 = vld [vmem:[%s285 + $0x1c0] sm:$0xff]
        %v390 = vld [vmem:[%s285 + $0x1c8] sm:$0xff]
        %v391 = vld [vmem:[%s285 + $0x1d0] sm:$0xff]
        %v392 = vld [vmem:[%s285 + $0x1d8] sm:$0xff]
        %v393 = vld [vmem:[%s285 + $0x1e0] sm:$0xff]
        %v394 = vld [vmem:[%s285 + $0x1e8] sm:$0xff]
        %v395 = vld [vmem:[%s285 + $0x1f0] sm:$0xff]
        %v396 = vld [vmem:[%s285 + $0x1f8] sm:$0xff]
        %v405 = vunpack.c.l.b16 %v325
        %v406 = vunpack.c.h.b16 %v325
        %v407 = vunpack.c.l.b16 %v326
        %v408 = vunpack.c.h.b16 %v326
        %v409 = vunpack.c.l.b16 %v327
        %v410 = vunpack.c.h.b16 %v327
        %v411 = vunpack.c.l.b16 %v328
        %v412 = vunpack.c.h.b16 %v328
        %v413 = vunpack.c.l.b16 %v329
        %v414 = vunpack.c.h.b16 %v329
        %v415 = vunpack.c.l.b16 %v330
        %v416 = vunpack.c.h.b16 %v330
        %v417 = vunpack.c.l.b16 %v331
        %v418 = vunpack.c.h.b16 %v331
        %v419 = vunpack.c.l.b16 %v332
        %v420 = vunpack.c.h.b16 %v332
        %v421 = vpack.c.b16 %v409, %v405
        %v422 = vpack.c.b16 %v410, %v406
        %v423 = vpack.c.b16 %v411, %v407
        %v424 = vpack.c.b16 %v412, %v408
        %v425 = vpack.c.b16 %v417, %v413
        %v426 = vpack.c.b16 %v418, %v414
        %v427 = vpack.c.b16 %v419, %v415
        %v428 = vpack.c.b16 %v420, %v416
        %v501 = vunpack.c.l.b16 %v333
        %v502 = vunpack.c.h.b16 %v333
        %v503 = vunpack.c.l.b16 %v334
        %v504 = vunpack.c.h.b16 %v334
        %v505 = vunpack.c.l.b16 %v335
        %v506 = vunpack.c.h.b16 %v335
        %v507 = vunpack.c.l.b16 %v336
        %v508 = vunpack.c.h.b16 %v336
        %v509 = vunpack.c.l.b16 %v337
        %v510 = vunpack.c.h.b16 %v337
        %v511 = vunpack.c.l.b16 %v338
        %v512 = vunpack.c.h.b16 %v338
        %v513 = vunpack.c.l.b16 %v339
        %v514 = vunpack.c.h.b16 %v339
        %v515 = vunpack.c.l.b16 %v340
        %v516 = vunpack.c.h.b16 %v340
        %v517 = vunpack.c.l.b16 %v341
        %v518 = vunpack.c.h.b16 %v341
        %v519 = vunpack.c.l.b16 %v342
        %v520 = vunpack.c.h.b16 %v342
        %v521 = vunpack.c.l.b16 %v343
        %v522 = vunpack.c.h.b16 %v343
        %v523 = vunpack.c.l.b16 %v344
        %v524 = vunpack.c.h.b16 %v344
        %v525 = vunpack.c.l.b16 %v345
        %v526 = vunpack.c.h.b16 %v345
        %v527 = vunpack.c.l.b16 %v346
        %v528 = vunpack.c.h.b16 %v346
        %v529 = vunpack.c.l.b16 %v347
        %v530 = vunpack.c.h.b16 %v347
        %v531 = vunpack.c.l.b16 %v348
        %v532 = vunpack.c.h.b16 %v348
        %v533 = vunpack.c.l.b16 %v349
        %v534 = vunpack.c.h.b16 %v349
        %v535 = vunpack.c.l.b16 %v350
        %v536 = vunpack.c.h.b16 %v350
        %v537 = vunpack.c.l.b16 %v351
        %v538 = vunpack.c.h.b16 %v351
        %v539 = vunpack.c.l.b16 %v352
        %v540 = vunpack.c.h.b16 %v352
        %v541 = vunpack.c.l.b16 %v353
        %v542 = vunpack.c.h.b16 %v353
        %v543 = vunpack.c.l.b16 %v354
        %v544 = vunpack.c.h.b16 %v354
        %v545 = vunpack.c.l.b16 %v355
        %v546 = vunpack.c.h.b16 %v355
        %v547 = vunpack.c.l.b16 %v356
        %v548 = vunpack.c.h.b16 %v356
        %v549 = vunpack.c.l.b16 %v357
        %v550 = vunpack.c.h.b16 %v357
        %v551 = vunpack.c.l.b16 %v358
        %v552 = vunpack.c.h.b16 %v358
        %v553 = vunpack.c.l.b16 %v359
        %v554 = vunpack.c.h.b16 %v359
        %v555 = vunpack.c.l.b16 %v360
        %v556 = vunpack.c.h.b16 %v360
        %v557 = vunpack.c.l.b16 %v361
        %v558 = vunpack.c.h.b16 %v361
        %v559 = vunpack.c.l.b16 %v362
        %v560 = vunpack.c.h.b16 %v362
        %v561 = vunpack.c.l.b16 %v363
        %v562 = vunpack.c.h.b16 %v363
        %v563 = vunpack.c.l.b16 %v364
        %v564 = vunpack.c.h.b16 %v364
        %v565 = vunpack.c.l.b16 %v365
        %v566 = vunpack.c.h.b16 %v365
        %v567 = vunpack.c.l.b16 %v366
        %v568 = vunpack.c.h.b16 %v366
        %v569 = vunpack.c.l.b16 %v367
        %v570 = vunpack.c.h.b16 %v367
        %v571 = vunpack.c.l.b16 %v368
        %v572 = vunpack.c.h.b16 %v368
        %v573 = vunpack.c.l.b16 %v369
        %v574 = vunpack.c.h.b16 %v369
        %v575 = vunpack.c.l.b16 %v370
        %v576 = vunpack.c.h.b16 %v370
        %v577 = vunpack.c.l.b16 %v371
        %v578 = vunpack.c.h.b16 %v371
        %v579 = vunpack.c.l.b16 %v372
        %v580 = vunpack.c.h.b16 %v372
        %v581 = vunpack.c.l.b16 %v373
        %v582 = vunpack.c.h.b16 %v373
        %v583 = vunpack.c.l.b16 %v374
        %v584 = vunpack.c.h.b16 %v374
        %v585 = vunpack.c.l.b16 %v375
        %v586 = vunpack.c.h.b16 %v375
        %v587 = vunpack.c.l.b16 %v376
        %v588 = vunpack.c.h.b16 %v376
        %v589 = vunpack.c.l.b16 %v377
        %v590 = vunpack.c.h.b16 %v377
        %v591 = vunpack.c.l.b16 %v378
        %v592 = vunpack.c.h.b16 %v378
        %v593 = vunpack.c.l.b16 %v379
        %v594 = vunpack.c.h.b16 %v379
        %v595 = vunpack.c.l.b16 %v380
        %v596 = vunpack.c.h.b16 %v380
        %v597 = vunpack.c.l.b16 %v381
        %v598 = vunpack.c.h.b16 %v381
        %v599 = vunpack.c.l.b16 %v382
        %v600 = vunpack.c.h.b16 %v382
        %v601 = vunpack.c.l.b16 %v383
        %v602 = vunpack.c.h.b16 %v383
        %v603 = vunpack.c.l.b16 %v384
        %v604 = vunpack.c.h.b16 %v384
        %v605 = vunpack.c.l.b16 %v385
        %v606 = vunpack.c.h.b16 %v385
        %v607 = vunpack.c.l.b16 %v386
        %v608 = vunpack.c.h.b16 %v386
        %v609 = vunpack.c.l.b16 %v387
        %v610 = vunpack.c.h.b16 %v387
        %v611 = vunpack.c.l.b16 %v388
        %v612 = vunpack.c.h.b16 %v388
        %v613 = vunpack.c.l.b16 %v389
        %v614 = vunpack.c.h.b16 %v389
        %v615 = vunpack.c.l.b16 %v390
        %v616 = vunpack.c.h.b16 %v390
        %v617 = vunpack.c.l.b16 %v391
        %v618 = vunpack.c.h.b16 %v391
        %v619 = vunpack.c.l.b16 %v392
        %v620 = vunpack.c.h.b16 %v392
        %v621 = vunpack.c.l.b16 %v393
        %v622 = vunpack.c.h.b16 %v393
        %v623 = vunpack.c.l.b16 %v394
        %v624 = vunpack.c.h.b16 %v394
        %v625 = vunpack.c.l.b16 %v395
        %v626 = vunpack.c.h.b16 %v395
        %v627 = vunpack.c.l.b16 %v396
        %v628 = vunpack.c.h.b16 %v396
        %v629 = vpack.c.b16 %v503, %v501
        %v630 = vpack.c.b16 %v504, %v502
        %v631 = vpack.c.b16 %v507, %v505
        %v632 = vpack.c.b16 %v508, %v506
        %v633 = vpack.c.b16 %v511, %v509
        %v634 = vpack.c.b16 %v512, %v510
        %v635 = vpack.c.b16 %v515, %v513
        %v636 = vpack.c.b16 %v516, %v514
        %v637 = vpack.c.b16 %v519, %v517
        %v638 = vpack.c.b16 %v520, %v518
        %v639 = vpack.c.b16 %v523, %v521
        %v640 = vpack.c.b16 %v524, %v522
        %v641 = vpack.c.b16 %v527, %v525
        %v642 = vpack.c.b16 %v528, %v526
        %v643 = vpack.c.b16 %v531, %v529
        %v644 = vpack.c.b16 %v532, %v530
        %v645 = vpack.c.b16 %v535, %v533
        %v646 = vpack.c.b16 %v536, %v534
        %v647 = vpack.c.b16 %v539, %v537
        %v648 = vpack.c.b16 %v540, %v538
        %v649 = vpack.c.b16 %v543, %v541
        %v650 = vpack.c.b16 %v544, %v542
        %v651 = vpack.c.b16 %v547, %v545
        %v652 = vpack.c.b16 %v548, %v546
        %v653 = vpack.c.b16 %v551, %v549
        %v654 = vpack.c.b16 %v552, %v550
        %v655 = vpack.c.b16 %v555, %v553
        %v656 = vpack.c.b16 %v556, %v554
        %v657 = vpack.c.b16 %v559, %v557
        %v658 = vpack.c.b16 %v560, %v558
        %v659 = vpack.c.b16 %v563, %v561
        %v660 = vpack.c.b16 %v564, %v562
        %v661 = vpack.c.b16 %v567, %v565
        %v662 = vpack.c.b16 %v568, %v566
        %v663 = vpack.c.b16 %v571, %v569
        %v664 = vpack.c.b16 %v572, %v570
        %v665 = vpack.c.b16 %v575, %v573
        %v666 = vpack.c.b16 %v576, %v574
        %v667 = vpack.c.b16 %v579, %v577
        %v668 = vpack.c.b16 %v580, %v578
        %v669 = vpack.c.b16 %v583, %v581
        %v670 = vpack.c.b16 %v584, %v582
        %v671 = vpack.c.b16 %v587, %v585
        %v672 = vpack.c.b16 %v588, %v586
        %v673 = vpack.c.b16 %v591, %v589
        %v674 = vpack.c.b16 %v592, %v590
        %v675 = vpack.c.b16 %v595, %v593
        %v676 = vpack.c.b16 %v596, %v594
        %v677 = vpack.c.b16 %v599, %v597
        %v678 = vpack.c.b16 %v600, %v598
        %v679 = vpack.c.b16 %v603, %v601
        %v680 = vpack.c.b16 %v604, %v602
        %v681 = vpack.c.b16 %v607, %v605
        %v682 = vpack.c.b16 %v608, %v606
        %v683 = vpack.c.b16 %v611, %v609
        %v684 = vpack.c.b16 %v612, %v610
        %v685 = vpack.c.b16 %v615, %v613
        %v686 = vpack.c.b16 %v616, %v614
        %v687 = vpack.c.b16 %v619, %v617
        %v688 = vpack.c.b16 %v620, %v618
        %v689 = vpack.c.b16 %v623, %v621
        %v690 = vpack.c.b16 %v624, %v622
        %v691 = vpack.c.b16 %v627, %v625
        %v692 = vpack.c.b16 %v628, %v626
        %757 = vmatprep.subr.bf16.mxu0 %v630
        %758 = vmatpush1.bf16.msra.mxu0 %v629
        %759 = vmatprep.subr.bf16.mxu0 %v632
        %760 = vmatpush1.bf16.msra.mxu0 %v631
        %761 = vmatprep.subr.bf16.mxu0 %v634
        %762 = vmatpush1.bf16.msra.mxu0 %v633
        %763 = vmatprep.subr.bf16.mxu0 %v636
        %764 = vmatpush1.bf16.msra.mxu0 %v635
        %765 = vmatprep.subr.bf16.mxu0 %v638
        %766 = vmatpush1.bf16.msra.mxu0 %v637
        %767 = vmatprep.subr.bf16.mxu0 %v640
        %768 = vmatpush1.bf16.msra.mxu0 %v639
        %769 = vmatprep.subr.bf16.mxu0 %v642
        %770 = vmatpush1.bf16.msra.mxu0 %v641
        %771 = vmatprep.subr.bf16.mxu0 %v644
        %772 = vmatpush1.bf16.msra.mxu0 %v643
        %773 = vmatprep.subr.bf16.mxu0 %v646
        %774 = vmatpush1.bf16.msra.mxu0 %v645
        %775 = vmatprep.subr.bf16.mxu0 %v648
        %776 = vmatpush1.bf16.msra.mxu0 %v647
        %777 = vmatprep.subr.bf16.mxu0 %v650
        %778 = vmatpush1.bf16.msra.mxu0 %v649
        %779 = vmatprep.subr.bf16.mxu0 %v652
        %780 = vmatpush1.bf16.msra.mxu0 %v651
        %781 = vmatprep.subr.bf16.mxu0 %v654
        %782 = vmatpush1.bf16.msra.mxu0 %v653
        %783 = vmatprep.subr.bf16.mxu0 %v656
        %784 = vmatpush1.bf16.msra.mxu0 %v655
        %785 = vmatprep.subr.bf16.mxu0 %v658
        %786 = vmatpush1.bf16.msra.mxu0 %v657
        %787 = vmatprep.subr.bf16.mxu0 %v660
        %788 = vmatpush1.bf16.msra.mxu0 %v659
        %789 = vmatprep.mubr.bf16.mxu0 %v422
        %790 = vmatmul.mubr.bf16.gmra.mrb[0].mxu0 %v421
        %v791 = vpop.f32.mrb[0].mxu0
        %v792 = vadd.f32 0.0, %v791
        %v793 = vpop.f32.mrb[0].mxu0
        %v794 = vadd.f32 0.0, %v793
        %v795 = vpop.f32.mrb[0].mxu0
        %v796 = vadd.f32 0.0, %v795
        %v797 = vpop.f32.mrb[0].mxu0
        %v798 = vadd.f32 0.0, %v797
        %799 = vmatprep.mubr.bf16.mxu0 %v426
        %800 = vmatmul.mubr.bf16.gmra.mrb[0].mxu0 %v425
        %v801 = vpop.f32.mrb[0].mxu0
        %v802 = vadd.f32 0.0, %v801
        %v803 = vpop.f32.mrb[0].mxu0
        %v804 = vadd.f32 0.0, %v803
        %v805 = vpop.f32.mrb[0].mxu0
        %v806 = vadd.f32 0.0, %v805
        %v807 = vpop.f32.mrb[0].mxu0
        %v808 = vadd.f32 0.0, %v807
        %809 = vdwg.mxu0
        %810 = vmatprep.subr.bf16.mxu0 %v662
        %811 = vmatpush1.bf16.msra.mxu0 %v661
        %812 = vmatprep.subr.bf16.mxu0 %v664
        %813 = vmatpush1.bf16.msra.mxu0 %v663
        %814 = vmatprep.subr.bf16.mxu0 %v666
        %815 = vmatpush1.bf16.msra.mxu0 %v665
        %816 = vmatprep.subr.bf16.mxu0 %v668
        %817 = vmatpush1.bf16.msra.mxu0 %v667
        %818 = vmatprep.subr.bf16.mxu0 %v670
        %819 = vmatpush1.bf16.msra.mxu0 %v669
        %820 = vmatprep.subr.bf16.mxu0 %v672
        %821 = vmatpush1.bf16.msra.mxu0 %v671
        %822 = vmatprep.subr.bf16.mxu0 %v674
        %823 = vmatpush1.bf16.msra.mxu0 %v673
        %824 = vmatprep.subr.bf16.mxu0 %v676
        %825 = vmatpush1.bf16.msra.mxu0 %v675
        %826 = vmatprep.subr.bf16.mxu0 %v678
        %827 = vmatpush1.bf16.msra.mxu0 %v677
        %828 = vmatprep.subr.bf16.mxu0 %v680
        %829 = vmatpush1.bf16.msra.mxu0 %v679
        %830 = vmatprep.subr.bf16.mxu0 %v682
        %831 = vmatpush1.bf16.msra.mxu0 %v681
        %832 = vmatprep.subr.bf16.mxu0 %v684
        %833 = vmatpush1.bf16.msra.mxu0 %v683
        %834 = vmatprep.subr.bf16.mxu0 %v686
        %835 = vmatpush1.bf16.msra.mxu0 %v685
        %836 = vmatprep.subr.bf16.mxu0 %v688
        %837 = vmatpush1.bf16.msra.mxu0 %v687
        %838 = vmatprep.subr.bf16.mxu0 %v690
        %839 = vmatpush1.bf16.msra.mxu0 %v689
        %840 = vmatprep.subr.bf16.mxu0 %v692
        %841 = vmatpush1.bf16.msra.mxu0 %v691
        %842 = vmatprep.mubr.bf16.mxu0 %v424
        %843 = vmatmul.mubr.bf16.gmra.mrb[0].mxu0 %v423
        %v844 = vpop.f32.mrb[0].mxu0
        %v845 = vadd.f32 %v792, %v844
        %v846 = vpop.f32.mrb[0].mxu0
        %v847 = vadd.f32 %v794, %v846
        %v848 = vpop.f32.mrb[0].mxu0
        %v849 = vadd.f32 %v796, %v848
        %v850 = vpop.f32.mrb[0].mxu0
        %v851 = vadd.f32 %v798, %v850
        %852 = vmatprep.mubr.bf16.mxu0 %v428
        %853 = vmatmul.mubr.bf16.gmra.mrb[0].mxu0 %v427
        %v854 = vpop.f32.mrb[0].mxu0
        %v855 = vadd.f32 %v802, %v854
        %v856 = vpop.f32.mrb[0].mxu0
        %v857 = vadd.f32 %v804, %v856
        %v858 = vpop.f32.mrb[0].mxu0
        %v859 = vadd.f32 %v806, %v858
        %v860 = vpop.f32.mrb[0].mxu0
        %v861 = vadd.f32 %v808, %v860
        %862 = vdwg.mxu0
        %v863 = vadd.f32 %v317, %v845
        %v864 = vadd.f32 %v318, %v847
        %v865 = vadd.f32 %v319, %v849
        %v866 = vadd.f32 %v320, %v851
        %v867 = vadd.f32 %v321, %v855
        %v868 = vadd.f32 %v322, %v857
        %v869 = vadd.f32 %v323, %v859
        %v870 = vadd.f32 %v324, %v861
        %871 = vst [vmem:[#allocation2] sm:$0xff] %v863
        %872 = vst [vmem:[#allocation2 + $0x8] sm:$0xff] %v864
        %873 = vst [vmem:[#allocation2 + $0x10] sm:$0xff] %v865
        %874 = vst [vmem:[#allocation2 + $0x18] sm:$0xff] %v866
        %875 = vst [vmem:[#allocation2 + $0x20] sm:$0xff] %v867
        %876 = vst [vmem:[#allocation2 + $0x28] sm:$0xff] %v868
        %877 = vst [vmem:[#allocation2 + $0x30] sm:$0xff] %v869
        %878 = vst [vmem:[#allocation2 + $0x38] sm:$0xff] %v870
        %p879 = scmp.eq.s32.totalorder %s21, 5
        // Predicated region
        $region60: #{deeplabv3plus_gru_forward.44} parent=50 // pred_check
          %p880 = pneg %p879
        $region61: #{deeplabv3plus_gru_forward.44} parent=50 // pred_check_branch
          %882 = sbr.rel (%p880) target = $region63
        $region62: #{deeplabv3plus_gru_forward.44} parent=50 // pred_region
          %v883 = vld [vmem:[#allocation2] sm:$0xff]
          %v884 = vld [vmem:[#allocation2 + $0x8] sm:$0xff]
          %v885 = vld [vmem:[#allocation2 + $0x10] sm:$0xff]
          %v886 = vld [vmem:[#allocation2 + $0x18] sm:$0xff]
          %v887 = vld [vmem:[#allocation2 + $0x20] sm:$0xff]
          %v888 = vld [vmem:[#allocation2 + $0x28] sm:$0xff]
          %v889 = vld [vmem:[#allocation2 + $0x30] sm:$0xff]
          %v890 = vld [vmem:[#allocation2 + $0x38] sm:$0xff]
          %v891 = vld [vmem:[%s291] sm:$0x3]
          %v893 = vlaneseq
          %v894 = vshrl.u32 %v893, 7
          %v895 = vsub.s32 0, %v894
          %v896 = vrot.slane %v891, %v895
          %v897 = vlaneseq
          %v898 = vshrl.u32 %v897, 7
          %v899 = vsub.s32 1, %v898
          %v900 = vrot.slane %v891, %v899
          %v903 = vadd.f32 %v883, %v896
          %v904 = vadd.f32 %v884, %v900
          %v905 = vadd.f32 %v885, %v896
          %v906 = vadd.f32 %v886, %v900
          %v907 = vadd.f32 %v887, %v896
          %v908 = vadd.f32 %v888, %v900
          %v909 = vadd.f32 %v889, %v896
          %v910 = vadd.f32 %v890, %v900
          %v911 = vmax.f32 %v903, 0.0
          %v912 = vmax.f32 %v904, 0.0
          %v913 = vmax.f32 %v905, 0.0
          %v914 = vmax.f32 %v906, 0.0
          %v915 = vmax.f32 %v907, 0.0
          %v916 = vmax.f32 %v908, 0.0
          %v917 = vmax.f32 %v909, 0.0
          %v918 = vmax.f32 %v910, 0.0
          %v919 = vpack.c.bf16 %v913, %v911
          %v920 = vpack.c.bf16 %v914, %v912
          %v921 = vpack.c.bf16 %v917, %v915
          %v922 = vpack.c.bf16 %v918, %v916
          %v927 = vunpack.c.l.b16 %v919
          %v928 = vunpack.c.l.b16 %v920
          %v929 = vunpack.c.h.b16 %v919
          %v930 = vunpack.c.h.b16 %v920
          %v931 = vunpack.c.l.b16 %v921
          %v932 = vunpack.c.l.b16 %v922
          %v933 = vunpack.c.h.b16 %v921
          %v934 = vunpack.c.h.b16 %v922
          %v935 = vpack.c.b16 %v928, %v927
          %v936 = vpack.c.b16 %v930, %v929
          %v937 = vpack.c.b16 %v932, %v931
          %v938 = vpack.c.b16 %v934, %v933
          %943 = vst [vmem:[%s302] sm:$0xff] %v935
          %944 = vst [vmem:[%s302 + $0x8] sm:$0xff] %v936
          %945 = vst [vmem:[%s302 + $0x10] sm:$0xff] %v937
          %946 = vst [vmem:[%s302 + $0x18] sm:$0xff] %v938
        $region63: #{deeplabv3plus_gru_forward.44} parent=50 // pred_fallthru
          _
        %s947 = smul.u32 4, %s19
        %s948 = smul.u32 2, %s20
        %p949 = scmp.lt.s32.totalorder %s947, 3
        %s950 = scalar_select %p949, %s947, 3
        %p951 = scmp.lt.s32.totalorder %s948, 1
        %s952 = scalar_select %p951, %s948, 1
        %s953 = smul.addr %s950, 2
        %s954 = sadd.s32 %s952, %s953
        %s955 = smul.addr %s954, 4
        %s956 = scalar_lea.vmem %s3, %s955
        // Predicated region
        $region64: #{deeplabv3plus_gru_forward.44} parent=50 // pred_check
          %p957 = pneg %p135
        $region65: #{deeplabv3plus_gru_forward.44} parent=50 // pred_check_branch
          %959 = sbr.rel (%p957) target = $region67
        $region66: #{deeplabv3plus_gru_forward.44} parent=50 // pred_region
          %s960 = smul.u32 4, %s19
          %s961 = smul.u32 2, %s20
        $region67: #{deeplabv3plus_gru_forward.44} parent=50 // pred_fallthru
          _
        // Predicated region
        $region68: #{deeplabv3plus_gru_forward.44} parent=50 // pred_check
          %p962 = pneg %p135
        $region69: #{deeplabv3plus_gru_forward.44} parent=50 // pred_check_branch
          %964 = sbr.rel (%p962) target = $region71
        $region70: #{deeplabv3plus_gru_forward.44} parent=50 // pred_region
          %s965 = smul.u32 4, %s19
          %s966 = smul.u32 2, %s20
          %p967 = scmp.lt.s32.totalorder %s965, 3
          %s968 = scalar_select %p967, %s965, 3
          %p969 = scmp.lt.s32.totalorder %s966, 1
          %s970 = scalar_select %p969, %s966, 1
          %s971 = smul.addr %s968, 2
          %s972 = sadd.s32 %s970, %s971
          %s973 = smul.addr %s972, 4
          %s974 = scalar_lea.vmem %s3, %s973
        $region71: #{deeplabv3plus_gru_forward.44} parent=50 // pred_fallthru
          _
      $region51: #{deeplabv3plus_gru_forward.44} parent=5 // pred_fallthru
        _
      %p975 = scmp.le.s32.totalorder 2, %s9
      // Predicated region
      $region72: #{deeplabv3plus_gru_forward.44} parent=5 // pred_check
        %p976 = pneg %p975
      $region73: #{deeplabv3plus_gru_forward.44} parent=5 // pred_check_branch
        %978 = sbr.rel (%p976) target = $region75
      $region74: #{deeplabv3plus_gru_forward.44} parent=5 // pred_region
        %s979 = ssub.s32 %s9, 2
      $region75: #{deeplabv3plus_gru_forward.44} parent=5 // pred_fallthru
        _
    $region6: #{deeplabv3plus_gru_forward.44} parent=1 // loop_footer
      %s13 = sadd.s32 1, %s9
    $region7: #{deeplabv3plus_gru_forward.44} parent=1 // loop_footer_branch
      %8 = sbr.rel target = $region3
    $region8: #{deeplabv3plus_gru_forward.44} parent=1 // loop_exit
      _

// kernel: deeplabv3plus_gru_forward.45
$region0: #{deeplabv3plus_gru_forward.45}
  #allocation0 [shape = 'u32[]', space=smem, size = 0x4, offset = 0x4, fixed_abs, tag = 'smem constant byte address 0x4 - core index']
  #allocation1 [shape = 'u32[144,128]{1,0:T(1,128)}', space=vmem, size = 0x12000, scoped, tag = 'internal scratch']
  #allocation2 [shape = 'f32[32,128]{1,0:T(8,128)}', space=vmem, size = 0x4000, scoped, tag = 'scratch operand']
  %s0 = inlined_call_operand.vmem [shape: bf16[32,256], index: 0, kind: input, shape index: {}]
  %s1 = inlined_call_operand.vmem [shape: bf16[256,128], index: 1, kind: input, shape index: {}]
  %s2 = inlined_call_operand.vmem [shape: f32[1,128], index: 2, kind: input, shape index: {}]
  %s3 = inlined_call_operand.vmem [shape: bf16[32,128], index: 3, kind: output, shape index: {}]
  %s4 = sld [smem:[#allocation0]]
  $region30: #{deeplabv3plus_gru_forward.45} parent=0
    _
  %s6 = ssub.s32 1, %s4
  %s7 = scalar_select 0, %s6, %s4
  // Predicated region
  $region2: #{deeplabv3plus_gru_forward.45} parent=0 // pred_check
    _
  $region3: #{deeplabv3plus_gru_forward.45} parent=0 // pred_check_branch
    %9 = sbr.rel (0) target = $region5
  $region4: #{deeplabv3plus_gru_forward.45} parent=0 // pred_region
    _
  $region5: #{deeplabv3plus_gru_forward.45} parent=0 // pred_fallthru
    _
  // Predicated region
  $region6: #{deeplabv3plus_gru_forward.45} parent=0 // pred_check
    _
  $region7: #{deeplabv3plus_gru_forward.45} parent=0 // pred_check_branch
    %11 = sbr.rel (0) target = $region9
  $region8: #{deeplabv3plus_gru_forward.45} parent=0 // pred_region
    _
  $region9: #{deeplabv3plus_gru_forward.45} parent=0 // pred_fallthru
    _
  // Predicated region
  $region10: #{deeplabv3plus_gru_forward.45} parent=0 // pred_check
    _
  $region11: #{deeplabv3plus_gru_forward.45} parent=0 // pred_check_branch
    %13 = sbr.rel (0) target = $region13
  $region12: #{deeplabv3plus_gru_forward.45} parent=0 // pred_region
    _
  $region13: #{deeplabv3plus_gru_forward.45} parent=0 // pred_fallthru
    _
  %p15 = scmp.eq.s32.totalorder 0, 0
  // Predicated region
  $region14: #{deeplabv3plus_gru_forward.45} parent=0 // pred_check
    %p16 = pneg %p15
  $region15: #{deeplabv3plus_gru_forward.45} parent=0 // pred_check_branch
    %18 = sbr.rel (%p16) target = $region17
  $region16: #{deeplabv3plus_gru_forward.45} parent=0 // pred_region
    %19 = vst [vmem:[#allocation2] sm:$0xff] 0.0
    %20 = vst [vmem:[#allocation2 + $0x8] sm:$0xff] 0.0
    %21 = vst [vmem:[#allocation2 + $0x10] sm:$0xff] 0.0
    %22 = vst [vmem:[#allocation2 + $0x18] sm:$0xff] 0.0
  $region17: #{deeplabv3plus_gru_forward.45} parent=0 // pred_fallthru
    _
  %v23 = vld [vmem:[#allocation2] sm:$0xff]
  %v24 = vld [vmem:[#allocation2 + $0x8] sm:$0xff]
  %v25 = vld [vmem:[#allocation2 + $0x10] sm:$0xff]
  %v26 = vld [vmem:[#allocation2 + $0x18] sm:$0xff]
  %v27 = vld [vmem:[%s0] sm:$0xff]
  %v28 = vld [vmem:[%s0 + $0x8] sm:$0xff]
  %v29 = vld [vmem:[%s0 + $0x10] sm:$0xff]
  %v30 = vld [vmem:[%s0 + $0x18] sm:$0xff]
  %v31 = vld [vmem:[%s1] sm:$0xf]
  %v32 = vld [vmem:[%s1 + $0x4] sm:$0xf]
  %v33 = vld [vmem:[%s1 + $0x8] sm:$0xf]
  %v34 = vld [vmem:[%s1 + $0xc] sm:$0xf]
  %v35 = vld [vmem:[%s1 + $0x10] sm:$0xf]
  %v36 = vld [vmem:[%s1 + $0x14] sm:$0xf]
  %v37 = vld [vmem:[%s1 + $0x18] sm:$0xf]
  %v38 = vld [vmem:[%s1 + $0x1c] sm:$0xf]
  %v39 = vld [vmem:[%s1 + $0x20] sm:$0xf]
  %v40 = vld [vmem:[%s1 + $0x24] sm:$0xf]
  %v41 = vld [vmem:[%s1 + $0x28] sm:$0xf]
  %v42 = vld [vmem:[%s1 + $0x2c] sm:$0xf]
  %v43 = vld [vmem:[%s1 + $0x30] sm:$0xf]
  %v44 = vld [vmem:[%s1 + $0x34] sm:$0xf]
  %v45 = vld [vmem:[%s1 + $0x38] sm:$0xf]
  %v46 = vld [vmem:[%s1 + $0x3c] sm:$0xf]
  %v47 = vld [vmem:[%s1 + $0x40] sm:$0xf]
  %v48 = vld [vmem:[%s1 + $0x44] sm:$0xf]
  %v49 = vld [vmem:[%s1 + $0x48] sm:$0xf]
  %v50 = vld [vmem:[%s1 + $0x4c] sm:$0xf]
  %v51 = vld [vmem:[%s1 + $0x50] sm:$0xf]
  %v52 = vld [vmem:[%s1 + $0x54] sm:$0xf]
  %v53 = vld [vmem:[%s1 + $0x58] sm:$0xf]
  %v54 = vld [vmem:[%s1 + $0x5c] sm:$0xf]
  %v55 = vld [vmem:[%s1 + $0x60] sm:$0xf]
  %v56 = vld [vmem:[%s1 + $0x64] sm:$0xf]
  %v57 = vld [vmem:[%s1 + $0x68] sm:$0xf]
  %v58 = vld [vmem:[%s1 + $0x6c] sm:$0xf]
  %v59 = vld [vmem:[%s1 + $0x70] sm:$0xf]
  %v60 = vld [vmem:[%s1 + $0x74] sm:$0xf]
  %v61 = vld [vmem:[%s1 + $0x78] sm:$0xf]
  %v62 = vld [vmem:[%s1 + $0x7c] sm:$0xf]
  %v67 = vunpack.c.l.b16 %v27
  %v68 = vunpack.c.h.b16 %v27
  %v69 = vunpack.c.l.b16 %v28
  %v70 = vunpack.c.h.b16 %v28
  %v71 = vunpack.c.l.b16 %v29
  %v72 = vunpack.c.h.b16 %v29
  %v73 = vunpack.c.l.b16 %v30
  %v74 = vunpack.c.h.b16 %v30
  %v75 = vpack.c.b16 %v69, %v67
  %v76 = vpack.c.b16 %v70, %v68
  %v77 = vpack.c.b16 %v73, %v71
  %v78 = vpack.c.b16 %v74, %v72
  %v115 = vunpack.c.l.b16 %v31
  %v116 = vunpack.c.l.b16 %v32
  %v117 = vunpack.c.l.b16 %v33
  %v118 = vunpack.c.l.b16 %v34
  %v119 = vunpack.c.l.b16 %v35
  %v120 = vunpack.c.l.b16 %v36
  %v121 = vunpack.c.l.b16 %v37
  %v122 = vunpack.c.l.b16 %v38
  %v123 = vunpack.c.l.b16 %v39
  %v124 = vunpack.c.l.b16 %v40
  %v125 = vunpack.c.l.b16 %v41
  %v126 = vunpack.c.l.b16 %v42
  %v127 = vunpack.c.l.b16 %v43
  %v128 = vunpack.c.l.b16 %v44
  %v129 = vunpack.c.l.b16 %v45
  %v130 = vunpack.c.l.b16 %v46
  %v131 = vunpack.c.l.b16 %v47
  %v132 = vunpack.c.l.b16 %v48
  %v133 = vunpack.c.l.b16 %v49
  %v134 = vunpack.c.l.b16 %v50
  %v135 = vunpack.c.l.b16 %v51
  %v136 = vunpack.c.l.b16 %v52
  %v137 = vunpack.c.l.b16 %v53
  %v138 = vunpack.c.l.b16 %v54
  %v139 = vunpack.c.l.b16 %v55
  %v140 = vunpack.c.l.b16 %v56
  %v141 = vunpack.c.l.b16 %v57
  %v142 = vunpack.c.l.b16 %v58
  %v143 = vunpack.c.l.b16 %v59
  %v144 = vunpack.c.l.b16 %v60
  %v145 = vunpack.c.l.b16 %v61
  %v146 = vunpack.c.l.b16 %v62
  %v147 = vpack.c.b16 %v116, %v115
  %v148 = vpack.c.b16 %v118, %v117
  %v149 = vpack.c.b16 %v120, %v119
  %v150 = vpack.c.b16 %v122, %v121
  %v151 = vpack.c.b16 %v124, %v123
  %v152 = vpack.c.b16 %v126, %v125
  %v153 = vpack.c.b16 %v128, %v127
  %v154 = vpack.c.b16 %v130, %v129
  %v155 = vpack.c.b16 %v132, %v131
  %v156 = vpack.c.b16 %v134, %v133
  %v157 = vpack.c.b16 %v136, %v135
  %v158 = vpack.c.b16 %v138, %v137
  %v159 = vpack.c.b16 %v140, %v139
  %v160 = vpack.c.b16 %v142, %v141
  %v161 = vpack.c.b16 %v144, %v143
  %v162 = vpack.c.b16 %v146, %v145
  %179 = vmatprep.subr.bf16.mxu0 0
  %180 = vmatpush1.bf16.msra.mxu0 %v147
  %181 = vmatprep.subr.bf16.mxu0 0
  %182 = vmatpush1.bf16.msra.mxu0 %v148
  %183 = vmatprep.subr.bf16.mxu0 0
  %184 = vmatpush1.bf16.msra.mxu0 %v149
  %185 = vmatprep.subr.bf16.mxu0 0
  %186 = vmatpush1.bf16.msra.mxu0 %v150
  %187 = vmatprep.subr.bf16.mxu0 0
  %188 = vmatpush1.bf16.msra.mxu0 %v151
  %189 = vmatprep.subr.bf16.mxu0 0
  %190 = vmatpush1.bf16.msra.mxu0 %v152
  %191 = vmatprep.subr.bf16.mxu0 0
  %192 = vmatpush1.bf16.msra.mxu0 %v153
  %193 = vmatprep.subr.bf16.mxu0 0
  %194 = vmatpush1.bf16.msra.mxu0 %v154
  %195 = vmatprep.subr.bf16.mxu0 0
  %196 = vmatpush1.bf16.msra.mxu0 %v155
  %197 = vmatprep.subr.bf16.mxu0 0
  %198 = vmatpush1.bf16.msra.mxu0 %v156
  %199 = vmatprep.subr.bf16.mxu0 0
  %200 = vmatpush1.bf16.msra.mxu0 %v157
  %201 = vmatprep.subr.bf16.mxu0 0
  %202 = vmatpush1.bf16.msra.mxu0 %v158
  %203 = vmatprep.subr.bf16.mxu0 0
  %204 = vmatpush1.bf16.msra.mxu0 %v159
  %205 = vmatprep.subr.bf16.mxu0 0
  %206 = vmatpush1.bf16.msra.mxu0 %v160
  %207 = vmatprep.subr.bf16.mxu0 0
  %208 = vmatpush1.bf16.msra.mxu0 %v161
  %209 = vmatprep.subr.bf16.mxu0 0
  %210 = vmatpush1.bf16.msra.mxu0 %v162
  %211 = vmatprep.mubr.bf16.mxu0 %v76
  %212 = vmatmul.mubr.bf16.gmra.mrb[0].mxu0 %v75
  %v213 = vpop.f32.mrb[0].mxu0
  %v214 = vadd.f32 0.0, %v213
  %v215 = vpop.f32.mrb[0].mxu0
  %v216 = vpop.f32.mrb[0].mxu0
  %v217 = vadd.f32 0.0, %v216
  %v218 = vpop.f32.mrb[0].mxu0
  %219 = vmatprep.mubr.bf16.mxu0 %v78
  %220 = vmatmul.mubr.bf16.gmra.mrb[0].mxu0 %v77
  %v221 = vpop.f32.mrb[0].mxu0
  %v222 = vadd.f32 0.0, %v221
  %v223 = vpop.f32.mrb[0].mxu0
  %v224 = vpop.f32.mrb[0].mxu0
  %v225 = vadd.f32 0.0, %v224
  %v226 = vpop.f32.mrb[0].mxu0
  %227 = vdwg.mxu0
  %v228 = vadd.f32 %v23, %v214
  %v229 = vadd.f32 %v24, %v217
  %v230 = vadd.f32 %v25, %v222
  %v231 = vadd.f32 %v26, %v225
  %232 = vst [vmem:[#allocation2] sm:$0xff] %v228
  %233 = vst [vmem:[#allocation2 + $0x8] sm:$0xff] %v229
  %234 = vst [vmem:[#allocation2 + $0x10] sm:$0xff] %v230
  %235 = vst [vmem:[#allocation2 + $0x18] sm:$0xff] %v231
  // Predicated region
  $region18: #{deeplabv3plus_gru_forward.45} parent=0 // pred_check
    %p236 = pneg %p15
  $region19: #{deeplabv3plus_gru_forward.45} parent=0 // pred_check_branch
    %238 = sbr.rel (%p236) target = $region21
  $region20: #{deeplabv3plus_gru_forward.45} parent=0 // pred_region
    %v239 = vld [vmem:[#allocation2] sm:$0xff]
    %v240 = vld [vmem:[#allocation2 + $0x8] sm:$0xff]
    %v241 = vld [vmem:[#allocation2 + $0x10] sm:$0xff]
    %v242 = vld [vmem:[#allocation2 + $0x18] sm:$0xff]
    %v243 = vld [vmem:[%s2] sm:$0x1]
    %v245 = vlaneseq
    %v246 = vshrl.u32 %v245, 7
    %v247 = vsub.s32 0, %v246
    %v248 = vrot.slane %v243, %v247
    %v250 = vadd.f32 %v239, %v248
    %v251 = vadd.f32 %v240, %v248
    %v252 = vadd.f32 %v241, %v248
    %v253 = vadd.f32 %v242, %v248
    %v254 = vpack.c.bf16 %v251, %v250
    %v255 = vpack.c.bf16 %v253, %v252
    %v258 = vunpack.c.l.b16 %v254
    %v259 = vunpack.c.h.b16 %v254
    %v260 = vunpack.c.l.b16 %v255
    %v261 = vunpack.c.h.b16 %v255
    %v262 = vpack.c.b16 %v258, %v258
    %v263 = vpack.c.b16 %v259, %v259
    %v264 = vpack.c.b16 %v260, %v260
    %v265 = vpack.c.b16 %v261, %v261
    %270 = vst [vmem:[%s3] sm:$0xf] %v262
    %271 = vst [vmem:[%s3 + $0x4] sm:$0xf] %v263
    %272 = vst [vmem:[%s3 + $0x8] sm:$0xf] %v264
    %273 = vst [vmem:[%s3 + $0xc] sm:$0xf] %v265
  $region21: #{deeplabv3plus_gru_forward.45} parent=0 // pred_fallthru
    _
  // Predicated region
  $region22: #{deeplabv3plus_gru_forward.45} parent=0 // pred_check
    _
  $region23: #{deeplabv3plus_gru_forward.45} parent=0 // pred_check_branch
    %275 = sbr.rel (0) target = $region25
  $region24: #{deeplabv3plus_gru_forward.45} parent=0 // pred_region
    _
  $region25: #{deeplabv3plus_gru_forward.45} parent=0 // pred_fallthru
    _
  // Predicated region
  $region26: #{deeplabv3plus_gru_forward.45} parent=0 // pred_check
    _
  $region27: #{deeplabv3plus_gru_forward.45} parent=0 // pred_check_branch
    %277 = sbr.rel (0) target = $region29
  $region28: #{deeplabv3plus_gru_forward.45} parent=0 // pred_region
    _
  $region29: #{deeplabv3plus_gru_forward.45} parent=0 // pred_fallthru
    _

// kernel: deeplabv3plus_gru_forward.46
$region0: #{deeplabv3plus_gru_forward.46}
  #allocation0 [shape = 'u32[]', space=smem, size = 0x4, offset = 0x4, fixed_abs, tag = 'smem constant byte address 0x4 - core index']
  #allocation1 [shape = 'u32[144,128]{1,0:T(1,128)}', space=vmem, size = 0x12000, scoped, tag = 'internal scratch']
  %s0 = inlined_call_operand.vmem [shape: bf16[16,4], index: 0, kind: input, shape index: {}]
  %s1 = inlined_call_operand.vmem [shape: bf16[2,4,8], index: 1, kind: input, shape index: {}]
  %s2 = inlined_call_operand.vmem [shape: bf16[2,16,8], index: 2, kind: output, shape index: {}]
  %s3 = sld [smem:[#allocation0]]
  $region18: #{deeplabv3plus_gru_forward.46} parent=0
    _
  %s5 = ssub.s32 1, %s3
  %s6 = scalar_select 0, %s5, %s3
  // Predicated region
  $region2: #{deeplabv3plus_gru_forward.46} parent=0 // pred_check
    _
  $region3: #{deeplabv3plus_gru_forward.46} parent=0 // pred_check_branch
    %8 = sbr.rel (0) target = $region5
  $region4: #{deeplabv3plus_gru_forward.46} parent=0 // pred_region
    _
  $region5: #{deeplabv3plus_gru_forward.46} parent=0 // pred_fallthru
    _
  // Predicated region
  $region6: #{deeplabv3plus_gru_forward.46} parent=0 // pred_check
    _
  $region7: #{deeplabv3plus_gru_forward.46} parent=0 // pred_check_branch
    %10 = sbr.rel (0) target = $region9
  $region8: #{deeplabv3plus_gru_forward.46} parent=0 // pred_region
    _
  $region9: #{deeplabv3plus_gru_forward.46} parent=0 // pred_fallthru
    _
  %v12 = vld [vmem:[%s0] sm:$0xf]
  %v13 = vld [vmem:[%s0 + $0x4] sm:$0xf]
  %v14 = vld [vmem:[%s1] sm:$0x3]
  %v17 = vunpack.c.l.b16 %v12
  %v18 = vunpack.c.l.b16 %v13
  %v19 = vpack.c.b16 %v18, %v17
  %vm20 = vcmask 31744
  %v22 = vsel %vm20, %v19, 0
  %vm24 = vcmask 1041408
  %v26 = vsel %vm24, %v14, 0
  %28 = vmatprep.subr.bf16.mxu0 0
  %29 = vmatpush1.bf16.msra.mxu0 %v26
  %30 = vmatprep.subr.bf16.mxu0 0
  %31 = vmatpush1.bf16.msra.mxu0 0
  %32 = vmatprep.subr.bf16.mxu0 0
  %33 = vmatpush1.bf16.msra.mxu0 0
  %34 = vmatprep.subr.bf16.mxu0 0
  %35 = vmatpush1.bf16.msra.mxu0 0
  %36 = vmatprep.subr.bf16.mxu0 0
  %37 = vmatpush1.bf16.msra.mxu0 0
  %38 = vmatprep.subr.bf16.mxu0 0
  %39 = vmatpush1.bf16.msra.mxu0 0
  %40 = vmatprep.subr.bf16.mxu0 0
  %41 = vmatpush1.bf16.msra.mxu0 0
  %42 = vmatprep.subr.bf16.mxu0 0
  %43 = vmatpush1.bf16.msra.mxu0 0
  %44 = vmatprep.subr.bf16.mxu0 0
  %45 = vmatpush1.bf16.msra.mxu0 0
  %46 = vmatprep.subr.bf16.mxu0 0
  %47 = vmatpush1.bf16.msra.mxu0 0
  %48 = vmatprep.subr.bf16.mxu0 0
  %49 = vmatpush1.bf16.msra.mxu0 0
  %50 = vmatprep.subr.bf16.mxu0 0
  %51 = vmatpush1.bf16.msra.mxu0 0
  %52 = vmatprep.subr.bf16.mxu0 0
  %53 = vmatpush1.bf16.msra.mxu0 0
  %54 = vmatprep.subr.bf16.mxu0 0
  %55 = vmatpush1.bf16.msra.mxu0 0
  %56 = vmatprep.subr.bf16.mxu0 0
  %57 = vmatpush1.bf16.msra.mxu0 0
  %58 = vmatprep.subr.bf16.mxu0 0
  %59 = vmatpush1.bf16.msra.mxu0 0
  %60 = vmatprep.mubr.bf16.mxu0 0
  %61 = vmatmul.mubr.bf16.gmra.mrb[0].mxu0 %v22
  %v62 = vpop.f32.mrb[0].mxu0
  %v63 = vadd.f32 0.0, %v62
  %v64 = vpop.f32.mrb[0].mxu0
  %v65 = vpop.f32.mrb[0].mxu0
  %v66 = vadd.f32 0.0, %v65
  %v67 = vpop.f32.mrb[0].mxu0
  %68 = vdwg.mxu0
  %v69 = vpack.c.bf16 %v66, %v63
  %v71 = vunpack.c.l.b16 %v69
  %v72 = vunpack.c.h.b16 %v69
  %v73 = vpack.c.b16 %v71, %v71
  %v74 = vpack.c.b16 %v72, %v72
  %vm77 = vcmask 60416
  %78 = vst.msk [vmem:[%s2] sm:$0xf] %vm77, %v73
  %79 = vst.msk [vmem:[%s2 + $0x4] sm:$0xf] %vm77, %v74
  %s80 = scalar_lea.vmem %s1, 2
  %v81 = vld [vmem:[%s80] sm:$0x3]
  %v83 = vsel %vm24, %v81, 0
  %85 = vmatprep.subr.bf16.mxu0 0
  %86 = vmatpush1.bf16.msra.mxu0 %v83
  %87 = vmatprep.subr.bf16.mxu0 0
  %88 = vmatpush1.bf16.msra.mxu0 0
  %89 = vmatprep.subr.bf16.mxu0 0
  %90 = vmatpush1.bf16.msra.mxu0 0
  %91 = vmatprep.subr.bf16.mxu0 0
  %92 = vmatpush1.bf16.msra.mxu0 0
  %93 = vmatprep.subr.bf16.mxu0 0
  %94 = vmatpush1.bf16.msra.mxu0 0
  %95 = vmatprep.subr.bf16.mxu0 0
  %96 = vmatpush1.bf16.msra.mxu0 0
  %97 = vmatprep.subr.bf16.mxu0 0
  %98 = vmatpush1.bf16.msra.mxu0 0
  %99 = vmatprep.subr.bf16.mxu0 0
  %100 = vmatpush1.bf16.msra.mxu0 0
  %101 = vmatprep.subr.bf16.mxu0 0
  %102 = vmatpush1.bf16.msra.mxu0 0
  %103 = vmatprep.subr.bf16.mxu0 0
  %104 = vmatpush1.bf16.msra.mxu0 0
  %105 = vmatprep.subr.bf16.mxu0 0
  %106 = vmatpush1.bf16.msra.mxu0 0
  %107 = vmatprep.subr.bf16.mxu0 0
  %108 = vmatpush1.bf16.msra.mxu0 0
  %109 = vmatprep.subr.bf16.mxu0 0
  %110 = vmatpush1.bf16.msra.mxu0 0
  %111 = vmatprep.subr.bf16.mxu0 0
  %112 = vmatpush1.bf16.msra.mxu0 0
  %113 = vmatprep.subr.bf16.mxu0 0
  %114 = vmatpush1.bf16.msra.mxu0 0
  %115 = vmatprep.subr.bf16.mxu0 0
  %116 = vmatpush1.bf16.msra.mxu0 0
  %117 = vmatprep.mubr.bf16.mxu0 0
  %118 = vmatmul.mubr.bf16.gmra.mrb[0].mxu0 %v22
  %v119 = vpop.f32.mrb[0].mxu0
  %v120 = vadd.f32 0.0, %v119
  %v121 = vpop.f32.mrb[0].mxu0
  %v122 = vpop.f32.mrb[0].mxu0
  %v123 = vadd.f32 0.0, %v122
  %v124 = vpop.f32.mrb[0].mxu0
  %125 = vdwg.mxu0
  %v126 = vpack.c.bf16 %v123, %v120
  %v128 = vunpack.c.l.b16 %v126
  %v129 = vunpack.c.h.b16 %v126
  %v130 = vpack.c.b16 %v128, %v128
  %v131 = vpack.c.b16 %v129, %v129
  %s134 = scalar_lea.vmem %s2, 8
  %135 = vst.msk [vmem:[%s134] sm:$0xf] %vm77, %v130
  %136 = vst.msk [vmem:[%s134 + $0x4] sm:$0xf] %vm77, %v131
  // Predicated region
  $region10: #{deeplabv3plus_gru_forward.46} parent=0 // pred_check
    _
  $region11: #{deeplabv3plus_gru_forward.46} parent=0 // pred_check_branch
    %138 = sbr.rel (0) target = $region13
  $region12: #{deeplabv3plus_gru_forward.46} parent=0 // pred_region
    _
  $region13: #{deeplabv3plus_gru_forward.46} parent=0 // pred_fallthru
    _
  // Predicated region
  $region14: #{deeplabv3plus_gru_forward.46} parent=0 // pred_check
    _
  $region15: #{deeplabv3plus_gru_forward.46} parent=0 // pred_check_branch
    %140 = sbr.rel (0) target = $region17
  $region16: #{deeplabv3plus_gru_forward.46} parent=0 // pred_region
    _
  $region17: #{deeplabv3plus_gru_forward.46} parent=0 // pred_fallthru
    _

// kernel: deeplabv3plus_gru_forward.47
$region0: #{deeplabv3plus_gru_forward.47}
  #allocation0 [shape = 'u32[]', space=smem, size = 0x4, offset = 0x4, fixed_abs, tag = 'smem constant byte address 0x4 - core index']
  #allocation1 [shape = 'u32[144,128]{1,0:T(1,128)}', space=vmem, size = 0x12000, scoped, tag = 'internal scratch']
  %s0 = inlined_call_operand.vmem [shape: bf16[16,4], index: 0, kind: input, shape index: {}]
  %s1 = inlined_call_operand.vmem [shape: bf16[32,4,2], index: 1, kind: input, shape index: {}]
  %s2 = inlined_call_operand.vmem [shape: bf16[32,16,2], index: 2, kind: output, shape index: {}]
  %s3 = sld [smem:[#allocation0]]
  $region41: #{deeplabv3plus_gru_forward.47} parent=0
    _
  %s5 = ssub.s32 1, %s3
  %s6 = scalar_select 0, %s5, %s3
  loop: start=0, step=1, limit=6
  $region2: #{deeplabv3plus_gru_forward.47} parent=0 // loop_pre_header
    _
  $region3: #{deeplabv3plus_gru_forward.47} parent=0 // loop_header
    %s8 = sphi 0, %s12
    %p9 = scmp.ge.s32.totalorder %s8, 6
    %s15 = sphi 0, %s27
    %s16 = sphi 0, %s23
    %s17 = sphi 0, %s15
    %s18 = sphi 0, %s16
    %s19 = sphi 0, %s17
    %s20 = sphi 0, %s18
    %s28 = sphi 0, %s28
    %s30 = sphi 0, %s28
    %s31 = sphi 0, %s30
    %s45 = sphi 0, %s31
    %s53 = sphi 0, %s55
    %s56 = sphi 0, %s53
    %s57 = sphi 0, %s56
    %s73 = sphi 0, %s57
    %s81 = sphi 0, %s83
    %s84 = sphi 0, %s81
    %s85 = sphi 0, %s84
    %s101 = sphi 0, %s85
  $region4: #{deeplabv3plus_gru_forward.47} parent=0 // loop_header_branch
    %11 = sbr.rel (%p9) target = $region8
  $region5: #{deeplabv3plus_gru_forward.47} parent=0 // loop_body
    %s13 = ssub.s32 %s8, 1
    %s14 = ssub.s32 %s8, 2
    %s21 = sadd.s32 1, %s16
    %p22 = scmp.ge.s32.totalorder %s21, 1
    %s23 = scalar_select %p22, 0, %s21
    %s24 = sadd.s32 1, %s15
    %s25 = scalar_select %p22, %s24, %s15
    %p26 = scmp.ge.s32.totalorder %s25, 4
    %s27 = scalar_select %p26, 0, %s25
    %s29 = sadd.s32 %s28, 1
    %p32 = scmp.eq.s32.totalorder %s8, 3
    %p33 = scmp.ne.s32.totalorder %s28, %s30
    %p34 = scmp.eq.s32.totalorder %s8, 0
    %p35 = por %p33, %p34
    %p36 = scmp.ne.s32.totalorder %s28, %s30
    %p37 = scmp.eq.s32.totalorder %s13, 3
    %p38 = por %p36, %p37
    %p39 = scmp.ne.s32.totalorder %s30, %s31
    %p40 = scmp.eq.s32.totalorder %s13, 0
    %p41 = por %p39, %p40
    %p42 = scmp.ne.s32.totalorder %s30, %s31
    %p43 = scmp.eq.s32.totalorder %s14, 3
    %p44 = por %p42, %p43
    %p46 = scmp.ne.s32.totalorder %s31, %s45
    %p47 = scmp.eq.s32.totalorder %s14, 0
    %p48 = por %p46, %p47
    %s49 = ssub.s32 %s15, %s27
    %s50 = ssub.s32 %s16, %s23
    %s51 = sor.u32 %s49, %s50
    %p52 = scmp.eq.s32.totalorder %s51, 0
    %s54 = sadd.s32 %s53, 1
    %s55 = scalar_select %p52, %s53, %s54
    %p58 = pneg %p52
    %p59 = scmp.eq.s32.totalorder %s8, 3
    %p60 = por %p58, %p59
    %p61 = scmp.ne.s32.totalorder %s53, %s56
    %p62 = scmp.eq.s32.totalorder %s8, 0
    %p63 = por %p61, %p62
    %p64 = scmp.ne.s32.totalorder %s53, %s56
    %p65 = scmp.eq.s32.totalorder %s13, 3
    %p66 = por %p64, %p65
    %p67 = scmp.ne.s32.totalorder %s56, %s57
    %p68 = scmp.eq.s32.totalorder %s13, 0
    %p69 = por %p67, %p68
    %p70 = scmp.ne.s32.totalorder %s56, %s57
    %p71 = scmp.eq.s32.totalorder %s14, 3
    %p72 = por %p70, %p71
    %p74 = scmp.ne.s32.totalorder %s57, %s73
    %p75 = scmp.eq.s32.totalorder %s14, 0
    %p76 = por %p74, %p75
    %s77 = ssub.s32 %s15, %s27
    %s78 = ssub.s32 %s16, %s23
    %s79 = sor.u32 %s77, %s78
    %p80 = scmp.eq.s32.totalorder %s79, 0
    %s82 = sadd.s32 %s81, 1
    %s83 = scalar_select %p80, %s81, %s82
    %p86 = pneg %p80
    %p87 = scmp.eq.s32.totalorder %s8, 3
    %p88 = por %p86, %p87
    %p89 = scmp.ne.s32.totalorder %s81, %s84
    %p90 = scmp.eq.s32.totalorder %s8, 0
    %p91 = por %p89, %p90
    %p92 = scmp.ne.s32.totalorder %s81, %s84
    %p93 = scmp.eq.s32.totalorder %s13, 3
    %p94 = por %p92, %p93
    %p95 = scmp.ne.s32.totalorder %s84, %s85
    %p96 = scmp.eq.s32.totalorder %s13, 0
    %p97 = por %p95, %p96
    %p98 = scmp.ne.s32.totalorder %s84, %s85
    %p99 = scmp.eq.s32.totalorder %s14, 3
    %p100 = por %p98, %p99
    %p102 = scmp.ne.s32.totalorder %s85, %s101
    %p103 = scmp.eq.s32.totalorder %s14, 0
    %p104 = por %p102, %p103
    %p105 = scmp.le.s32.totalorder 1, %s8
    %p106 = scmp.lt.s32.totalorder %s8, 5
    %p107 = pnand %p105, %p106
    %p108 = pneg %p107
    // Predicated region
    $region9: #{deeplabv3plus_gru_forward.47} parent=5 // pred_check
      _
    $region10: #{deeplabv3plus_gru_forward.47} parent=5 // pred_check_branch
      %110 = sbr.rel (%p107) target = $region12
    $region11: #{deeplabv3plus_gru_forward.47} parent=5 // pred_region
      %s111 = ssub.s32 %s8, 1
      // Predicated region
      $region13: #{deeplabv3plus_gru_forward.47} parent=11 // pred_check
        %p112 = pneg %p41
      $region14: #{deeplabv3plus_gru_forward.47} parent=11 // pred_check_branch
        %114 = sbr.rel (%p112) target = $region16
      $region15: #{deeplabv3plus_gru_forward.47} parent=11 // pred_region
        _
      $region16: #{deeplabv3plus_gru_forward.47} parent=11 // pred_fallthru
        _
    $region12: #{deeplabv3plus_gru_forward.47} parent=5 // pred_fallthru
      _
    %p115 = scmp.lt.s32.totalorder %s8, 4
    // Predicated region
    $region17: #{deeplabv3plus_gru_forward.47} parent=5 // pred_check
      %p116 = pneg %p115
    $region18: #{deeplabv3plus_gru_forward.47} parent=5 // pred_check_branch
      %118 = sbr.rel (%p116) target = $region20
    $region19: #{deeplabv3plus_gru_forward.47} parent=5 // pred_region
      // Predicated region
      $region21: #{deeplabv3plus_gru_forward.47} parent=19 // pred_check
        %p119 = pneg %p63
      $region22: #{deeplabv3plus_gru_forward.47} parent=19 // pred_check_branch
        %121 = sbr.rel (%p119) target = $region24
      $region23: #{deeplabv3plus_gru_forward.47} parent=19 // pred_region
        %s122 = smul.u32 8, %s15
        %p123 = scmp.lt.s32.totalorder %s122, 31
        %s124 = scalar_select %p123, %s122, 31
        %p125 = scmp.lt.s32.totalorder %s16, 0
        %s126 = scalar_select %p125, %s16, 0
        %s127 = sadd.s32 %s126, %s124
        %s128 = smul.addr %s127, 2
        %s129 = scalar_lea.vmem %s1, %s128
        %s130 = smul.u32 8, %s15
      $region24: #{deeplabv3plus_gru_forward.47} parent=19 // pred_fallthru
        _
    $region20: #{deeplabv3plus_gru_forward.47} parent=5 // pred_fallthru
      _
    %p131 = scmp.le.s32.totalorder 1, %s8
    %p132 = scmp.lt.s32.totalorder %s8, 5
    %p133 = pnand %p131, %p132
    %p134 = pneg %p133
    // Predicated region
    $region25: #{deeplabv3plus_gru_forward.47} parent=5 // pred_check
      _
    $region26: #{deeplabv3plus_gru_forward.47} parent=5 // pred_check_branch
      %136 = sbr.rel (%p133) target = $region28
    $region27: #{deeplabv3plus_gru_forward.47} parent=5 // pred_region
      %s137 = ssub.s32 %s8, 1
      %p138 = pneg %p41
      %p139 = pneg %p38
      %s140 = smul.u32 8, %s17
      %p141 = scmp.lt.s32.totalorder %s140, 31
      %s142 = scalar_select %p141, %s140, 31
      %p143 = scmp.lt.s32.totalorder %s18, 0
      %s144 = scalar_select %p143, %s18, 0
      %s145 = sadd.s32 %s144, %s142
      %s146 = smul.addr %s145, 2
      %s147 = scalar_lea.vmem %s1, %s146
      %p148 = pneg %p69
      %p149 = pneg %p66
      %p150 = pneg %p97
      %p151 = pneg %p94
      %s152 = smul.u32 8, %s17
      %p153 = scmp.lt.s32.totalorder %s152, 31
      %s154 = scalar_select %p153, %s152, 31
      %p155 = scmp.lt.s32.totalorder %s18, 0
      %s156 = scalar_select %p155, %s18, 0
      %s157 = smul.addr %s154, 2
      %s158 = sadd.s32 %s156, %s157
      %s159 = smul.addr %s158, 4
      %s160 = scalar_lea.vmem %s2, %s159
      %s161 = smul.u32 8, %s17
      %p162 = scmp.lt.s32.totalorder %s161, 31
      %s163 = scalar_select %p162, %s161, 31
      %p164 = scmp.lt.s32.totalorder %s18, 0
      %s165 = scalar_select %p164, %s18, 0
      %s166 = sadd.s32 %s165, %s163
      %s167 = smul.addr %s166, 2
      %s168 = scalar_lea.vmem %s1, %s167
      %s169 = smul.u32 8, %s17
      %s170 = smul.u32 8, %s17
      %p171 = scmp.lt.s32.totalorder %s170, 31
      %s172 = scalar_select %p171, %s170, 31
      %p173 = scmp.lt.s32.totalorder %s18, 0
      %s174 = scalar_select %p173, %s18, 0
      %s175 = smul.addr %s172, 2
      %s176 = sadd.s32 %s174, %s175
      %s177 = smul.addr %s176, 4
      %s178 = scalar_lea.vmem %s2, %s177
      %s179 = smul.u32 8, %s17
      %v181 = vld [vmem:[%s0] sm:$0xf]
      %v182 = vld [vmem:[%s0 + $0x4] sm:$0xf]
      %v183 = vld [vmem:[%s168] sm:$0x3]
      %v186 = vunpack.c.l.b16 %v181
      %v187 = vunpack.c.l.b16 %v182
      %v188 = vpack.c.b16 %v187, %v186
      %vm189 = vcmask 31744
      %v191 = vsel %vm189, %v188, 0
      %vm193 = vcmask 1041408
      %v195 = vsel %vm193, %v183, 0
      %197 = vmatprep.subr.bf16.mxu0 0
      %198 = vmatpush1.bf16.msra.mxu0 %v195
      %199 = vmatprep.subr.bf16.mxu0 0
      %200 = vmatpush1.bf16.msra.mxu0 0
      %201 = vmatprep.subr.bf16.mxu0 0
      %202 = vmatpush1.bf16.msra.mxu0 0
      %203 = vmatprep.subr.bf16.mxu0 0
      %204 = vmatpush1.bf16.msra.mxu0 0
      %205 = vmatprep.subr.bf16.mxu0 0
      %206 = vmatpush1.bf16.msra.mxu0 0
      %207 = vmatprep.subr.bf16.mxu0 0
      %208 = vmatpush1.bf16.msra.mxu0 0
      %209 = vmatprep.subr.bf16.mxu0 0
      %210 = vmatpush1.bf16.msra.mxu0 0
      %211 = vmatprep.subr.bf16.mxu0 0
      %212 = vmatpush1.bf16.msra.mxu0 0
      %213 = vmatprep.subr.bf16.mxu0 0
      %214 = vmatpush1.bf16.msra.mxu0 0
      %215 = vmatprep.subr.bf16.mxu0 0
      %216 = vmatpush1.bf16.msra.mxu0 0
      %217 = vmatprep.subr.bf16.mxu0 0
      %218 = vmatpush1.bf16.msra.mxu0 0
      %219 = vmatprep.subr.bf16.mxu0 0
      %220 = vmatpush1.bf16.msra.mxu0 0
      %221 = vmatprep.subr.bf16.mxu0 0
      %222 = vmatpush1.bf16.msra.mxu0 0
      %223 = vmatprep.subr.bf16.mxu0 0
      %224 = vmatpush1.bf16.msra.mxu0 0
      %225 = vmatprep.subr.bf16.mxu0 0
      %226 = vmatpush1.bf16.msra.mxu0 0
      %227 = vmatprep.subr.bf16.mxu0 0
      %228 = vmatpush1.bf16.msra.mxu0 0
      %229 = vmatprep.mubr.bf16.mxu0 0
      %230 = vmatmul.mubr.bf16.gmra.mrb[0].mxu0 %v191
      %v231 = vpop.f32.mrb[0].mxu0
      %v232 = vadd.f32 0.0, %v231
      %v233 = vpop.f32.mrb[0].mxu0
      %v234 = vpop.f32.mrb[0].mxu0
      %v235 = vadd.f32 0.0, %v234
      %v236 = vpop.f32.mrb[0].mxu0
      %237 = vdwg.mxu0
      %v238 = vpack.c.bf16 %v235, %v232
      %v240 = vunpack.c.l.b16 %v238
      %v241 = vunpack.c.h.b16 %v238
      %v242 = vpack.c.b16 %v240, %v240
      %v243 = vpack.c.b16 %v241, %v241
      %vm246 = vcmask 11264
      %247 = vst.msk [vmem:[%s178] sm:$0xf] %vm246, %v242
      %248 = vst.msk [vmem:[%s178 + $0x4] sm:$0xf] %vm246, %v243
      %s249 = scalar_lea.vmem %s168, 2
      %v250 = vld [vmem:[%s249] sm:$0x3]
      %v252 = vsel %vm193, %v250, 0
      %254 = vmatprep.subr.bf16.mxu0 0
      %255 = vmatpush1.bf16.msra.mxu0 %v252
      %256 = vmatprep.subr.bf16.mxu0 0
      %257 = vmatpush1.bf16.msra.mxu0 0
      %258 = vmatprep.subr.bf16.mxu0 0
      %259 = vmatpush1.bf16.msra.mxu0 0
      %260 = vmatprep.subr.bf16.mxu0 0
      %261 = vmatpush1.bf16.msra.mxu0 0
      %262 = vmatprep.subr.bf16.mxu0 0
      %263 = vmatpush1.bf16.msra.mxu0 0
      %264 = vmatprep.subr.bf16.mxu0 0
      %265 = vmatpush1.bf16.msra.mxu0 0
      %266 = vmatprep.subr.bf16.mxu0 0
      %267 = vmatpush1.bf16.msra.mxu0 0
      %268 = vmatprep.subr.bf16.mxu0 0
      %269 = vmatpush1.bf16.msra.mxu0 0
      %270 = vmatprep.subr.bf16.mxu0 0
      %271 = vmatpush1.bf16.msra.mxu0 0
      %272 = vmatprep.subr.bf16.mxu0 0
      %273 = vmatpush1.bf16.msra.mxu0 0
      %274 = vmatprep.subr.bf16.mxu0 0
      %275 = vmatpush1.bf16.msra.mxu0 0
      %276 = vmatprep.subr.bf16.mxu0 0
      %277 = vmatpush1.bf16.msra.mxu0 0
      %278 = vmatprep.subr.bf16.mxu0 0
      %279 = vmatpush1.bf16.msra.mxu0 0
      %280 = vmatprep.subr.bf16.mxu0 0
      %281 = vmatpush1.bf16.msra.mxu0 0
      %282 = vmatprep.subr.bf16.mxu0 0
      %283 = vmatpush1.bf16.msra.mxu0 0
      %284 = vmatprep.subr.bf16.mxu0 0
      %285 = vmatpush1.bf16.msra.mxu0 0
      %286 = vmatprep.mubr.bf16.mxu0 0
      %287 = vmatmul.mubr.bf16.gmra.mrb[0].mxu0 %v191
      %v288 = vpop.f32.mrb[0].mxu0
      %v289 = vadd.f32 0.0, %v288
      %v290 = vpop.f32.mrb[0].mxu0
      %v291 = vpop.f32.mrb[0].mxu0
      %v292 = vadd.f32 0.0, %v291
      %v293 = vpop.f32.mrb[0].mxu0
      %294 = vdwg.mxu0
      %v295 = vpack.c.bf16 %v292, %v289
      %v297 = vunpack.c.l.b16 %v295
      %v298 = vunpack.c.h.b16 %v295
      %v299 = vpack.c.b16 %v297, %v297
      %v300 = vpack.c.b16 %v298, %v298
      %s303 = scalar_lea.vmem %s178, 8
      %304 = vst.msk [vmem:[%s303] sm:$0xf] %vm246, %v299
      %305 = vst.msk [vmem:[%s303 + $0x4] sm:$0xf] %vm246, %v300
      %s306 = scalar_lea.vmem %s168, 4
      %v307 = vld [vmem:[%s306] sm:$0x3]
      %v309 = vsel %vm193, %v307, 0
      %311 = vmatprep.subr.bf16.mxu0 0
      %312 = vmatpush1.bf16.msra.mxu0 %v309
      %313 = vmatprep.subr.bf16.mxu0 0
      %314 = vmatpush1.bf16.msra.mxu0 0
      %315 = vmatprep.subr.bf16.mxu0 0
      %316 = vmatpush1.bf16.msra.mxu0 0
      %317 = vmatprep.subr.bf16.mxu0 0
      %318 = vmatpush1.bf16.msra.mxu0 0
      %319 = vmatprep.subr.bf16.mxu0 0
      %320 = vmatpush1.bf16.msra.mxu0 0
      %321 = vmatprep.subr.bf16.mxu0 0
      %322 = vmatpush1.bf16.msra.mxu0 0
      %323 = vmatprep.subr.bf16.mxu0 0
      %324 = vmatpush1.bf16.msra.mxu0 0
      %325 = vmatprep.subr.bf16.mxu0 0
      %326 = vmatpush1.bf16.msra.mxu0 0
      %327 = vmatprep.subr.bf16.mxu0 0
      %328 = vmatpush1.bf16.msra.mxu0 0
      %329 = vmatprep.subr.bf16.mxu0 0
      %330 = vmatpush1.bf16.msra.mxu0 0
      %331 = vmatprep.subr.bf16.mxu0 0
      %332 = vmatpush1.bf16.msra.mxu0 0
      %333 = vmatprep.subr.bf16.mxu0 0
      %334 = vmatpush1.bf16.msra.mxu0 0
      %335 = vmatprep.subr.bf16.mxu0 0
      %336 = vmatpush1.bf16.msra.mxu0 0
      %337 = vmatprep.subr.bf16.mxu0 0
      %338 = vmatpush1.bf16.msra.mxu0 0
      %339 = vmatprep.subr.bf16.mxu0 0
      %340 = vmatpush1.bf16.msra.mxu0 0
      %341 = vmatprep.subr.bf16.mxu0 0
      %342 = vmatpush1.bf16.msra.mxu0 0
      %343 = vmatprep.mubr.bf16.mxu0 0
      %344 = vmatmul.mubr.bf16.gmra.mrb[0].mxu0 %v191
      %v345 = vpop.f32.mrb[0].mxu0
      %v346 = vadd.f32 0.0, %v345
      %v347 = vpop.f32.mrb[0].mxu0
      %v348 = vpop.f32.mrb[0].mxu0
      %v349 = vadd.f32 0.0, %v348
      %v350 = vpop.f32.mrb[0].mxu0
      %351 = vdwg.mxu0
      %v352 = vpack.c.bf16 %v349, %v346
      %v354 = vunpack.c.l.b16 %v352
      %v355 = vunpack.c.h.b16 %v352
      %v356 = vpack.c.b16 %v354, %v354
      %v357 = vpack.c.b16 %v355, %v355
      %s360 = scalar_lea.vmem %s178, 16
      %361 = vst.msk [vmem:[%s360] sm:$0xf] %vm246, %v356
      %362 = vst.msk [vmem:[%s360 + $0x4] sm:$0xf] %vm246, %v357
      %s363 = scalar_lea.vmem %s168, 6
      %v364 = vld [vmem:[%s363] sm:$0x3]
      %v366 = vsel %vm193, %v364, 0
      %368 = vmatprep.subr.bf16.mxu0 0
      %369 = vmatpush1.bf16.msra.mxu0 %v366
      %370 = vmatprep.subr.bf16.mxu0 0
      %371 = vmatpush1.bf16.msra.mxu0 0
      %372 = vmatprep.subr.bf16.mxu0 0
      %373 = vmatpush1.bf16.msra.mxu0 0
      %374 = vmatprep.subr.bf16.mxu0 0
      %375 = vmatpush1.bf16.msra.mxu0 0
      %376 = vmatprep.subr.bf16.mxu0 0
      %377 = vmatpush1.bf16.msra.mxu0 0
      %378 = vmatprep.subr.bf16.mxu0 0
      %379 = vmatpush1.bf16.msra.mxu0 0
      %380 = vmatprep.subr.bf16.mxu0 0
      %381 = vmatpush1.bf16.msra.mxu0 0
      %382 = vmatprep.subr.bf16.mxu0 0
      %383 = vmatpush1.bf16.msra.mxu0 0
      %384 = vmatprep.subr.bf16.mxu0 0
      %385 = vmatpush1.bf16.msra.mxu0 0
      %386 = vmatprep.subr.bf16.mxu0 0
      %387 = vmatpush1.bf16.msra.mxu0 0
      %388 = vmatprep.subr.bf16.mxu0 0
      %389 = vmatpush1.bf16.msra.mxu0 0
      %390 = vmatprep.subr.bf16.mxu0 0
      %391 = vmatpush1.bf16.msra.mxu0 0
      %392 = vmatprep.subr.bf16.mxu0 0
      %393 = vmatpush1.bf16.msra.mxu0 0
      %394 = vmatprep.subr.bf16.mxu0 0
      %395 = vmatpush1.bf16.msra.mxu0 0
      %396 = vmatprep.subr.bf16.mxu0 0
      %397 = vmatpush1.bf16.msra.mxu0 0
      %398 = vmatprep.subr.bf16.mxu0 0
      %399 = vmatpush1.bf16.msra.mxu0 0
      %400 = vmatprep.mubr.bf16.mxu0 0
      %401 = vmatmul.mubr.bf16.gmra.mrb[0].mxu0 %v191
      %v402 = vpop.f32.mrb[0].mxu0
      %v403 = vadd.f32 0.0, %v402
      %v404 = vpop.f32.mrb[0].mxu0
      %v405 = vpop.f32.mrb[0].mxu0
      %v406 = vadd.f32 0.0, %v405
      %v407 = vpop.f32.mrb[0].mxu0
      %408 = vdwg.mxu0
      %v409 = vpack.c.bf16 %v406, %v403
      %v411 = vunpack.c.l.b16 %v409
      %v412 = vunpack.c.h.b16 %v409
      %v413 = vpack.c.b16 %v411, %v411
      %v414 = vpack.c.b16 %v412, %v412
      %s417 = scalar_lea.vmem %s178, 24
      %418 = vst.msk [vmem:[%s417] sm:$0xf] %vm246, %v413
      %419 = vst.msk [vmem:[%s417 + $0x4] sm:$0xf] %vm246, %v414
      %s420 = scalar_lea.vmem %s168, 8
      %v421 = vld [vmem:[%s420] sm:$0x3]
      %v423 = vsel %vm193, %v421, 0
      %425 = vmatprep.subr.bf16.mxu0 0
      %426 = vmatpush1.bf16.msra.mxu0 %v423
      %427 = vmatprep.subr.bf16.mxu0 0
      %428 = vmatpush1.bf16.msra.mxu0 0
      %429 = vmatprep.subr.bf16.mxu0 0
      %430 = vmatpush1.bf16.msra.mxu0 0
      %431 = vmatprep.subr.bf16.mxu0 0
      %432 = vmatpush1.bf16.msra.mxu0 0
      %433 = vmatprep.subr.bf16.mxu0 0
      %434 = vmatpush1.bf16.msra.mxu0 0
      %435 = vmatprep.subr.bf16.mxu0 0
      %436 = vmatpush1.bf16.msra.mxu0 0
      %437 = vmatprep.subr.bf16.mxu0 0
      %438 = vmatpush1.bf16.msra.mxu0 0
      %439 = vmatprep.subr.bf16.mxu0 0
      %440 = vmatpush1.bf16.msra.mxu0 0
      %441 = vmatprep.subr.bf16.mxu0 0
      %442 = vmatpush1.bf16.msra.mxu0 0
      %443 = vmatprep.subr.bf16.mxu0 0
      %444 = vmatpush1.bf16.msra.mxu0 0
      %445 = vmatprep.subr.bf16.mxu0 0
      %446 = vmatpush1.bf16.msra.mxu0 0
      %447 = vmatprep.subr.bf16.mxu0 0
      %448 = vmatpush1.bf16.msra.mxu0 0
      %449 = vmatprep.subr.bf16.mxu0 0
      %450 = vmatpush1.bf16.msra.mxu0 0
      %451 = vmatprep.subr.bf16.mxu0 0
      %452 = vmatpush1.bf16.msra.mxu0 0
      %453 = vmatprep.subr.bf16.mxu0 0
      %454 = vmatpush1.bf16.msra.mxu0 0
      %455 = vmatprep.subr.bf16.mxu0 0
      %456 = vmatpush1.bf16.msra.mxu0 0
      %457 = vmatprep.mubr.bf16.mxu0 0
      %458 = vmatmul.mubr.bf16.gmra.mrb[0].mxu0 %v191
      %v459 = vpop.f32.mrb[0].mxu0
      %v460 = vadd.f32 0.0, %v459
      %v461 = vpop.f32.mrb[0].mxu0
      %v462 = vpop.f32.mrb[0].mxu0
      %v463 = vadd.f32 0.0, %v462
      %v464 = vpop.f32.mrb[0].mxu0
      %465 = vdwg.mxu0
      %v466 = vpack.c.bf16 %v463, %v460
      %v468 = vunpack.c.l.b16 %v466
      %v469 = vunpack.c.h.b16 %v466
      %v470 = vpack.c.b16 %v468, %v468
      %v471 = vpack.c.b16 %v469, %v469
      %s474 = scalar_lea.vmem %s178, 32
      %475 = vst.msk [vmem:[%s474] sm:$0xf] %vm246, %v470
      %476 = vst.msk [vmem:[%s474 + $0x4] sm:$0xf] %vm246, %v471
      %s477 = scalar_lea.vmem %s168, 10
      %v478 = vld [vmem:[%s477] sm:$0x3]
      %v480 = vsel %vm193, %v478, 0
      %482 = vmatprep.subr.bf16.mxu0 0
      %483 = vmatpush1.bf16.msra.mxu0 %v480
      %484 = vmatprep.subr.bf16.mxu0 0
      %485 = vmatpush1.bf16.msra.mxu0 0
      %486 = vmatprep.subr.bf16.mxu0 0
      %487 = vmatpush1.bf16.msra.mxu0 0
      %488 = vmatprep.subr.bf16.mxu0 0
      %489 = vmatpush1.bf16.msra.mxu0 0
      %490 = vmatprep.subr.bf16.mxu0 0
      %491 = vmatpush1.bf16.msra.mxu0 0
      %492 = vmatprep.subr.bf16.mxu0 0
      %493 = vmatpush1.bf16.msra.mxu0 0
      %494 = vmatprep.subr.bf16.mxu0 0
      %495 = vmatpush1.bf16.msra.mxu0 0
      %496 = vmatprep.subr.bf16.mxu0 0
      %497 = vmatpush1.bf16.msra.mxu0 0
      %498 = vmatprep.subr.bf16.mxu0 0
      %499 = vmatpush1.bf16.msra.mxu0 0
      %500 = vmatprep.subr.bf16.mxu0 0
      %501 = vmatpush1.bf16.msra.mxu0 0
      %502 = vmatprep.subr.bf16.mxu0 0
      %503 = vmatpush1.bf16.msra.mxu0 0
      %504 = vmatprep.subr.bf16.mxu0 0
      %505 = vmatpush1.bf16.msra.mxu0 0
      %506 = vmatprep.subr.bf16.mxu0 0
      %507 = vmatpush1.bf16.msra.mxu0 0
      %508 = vmatprep.subr.bf16.mxu0 0
      %509 = vmatpush1.bf16.msra.mxu0 0
      %510 = vmatprep.subr.bf16.mxu0 0
      %511 = vmatpush1.bf16.msra.mxu0 0
      %512 = vmatprep.subr.bf16.mxu0 0
      %513 = vmatpush1.bf16.msra.mxu0 0
      %514 = vmatprep.mubr.bf16.mxu0 0
      %515 = vmatmul.mubr.bf16.gmra.mrb[0].mxu0 %v191
      %v516 = vpop.f32.mrb[0].mxu0
      %v517 = vadd.f32 0.0, %v516
      %v518 = vpop.f32.mrb[0].mxu0
      %v519 = vpop.f32.mrb[0].mxu0
      %v520 = vadd.f32 0.0, %v519
      %v521 = vpop.f32.mrb[0].mxu0
      %522 = vdwg.mxu0
      %v523 = vpack.c.bf16 %v520, %v517
      %v525 = vunpack.c.l.b16 %v523
      %v526 = vunpack.c.h.b16 %v523
      %v527 = vpack.c.b16 %v525, %v525
      %v528 = vpack.c.b16 %v526, %v526
      %s531 = scalar_lea.vmem %s178, 40
      %532 = vst.msk [vmem:[%s531] sm:$0xf] %vm246, %v527
      %533 = vst.msk [vmem:[%s531 + $0x4] sm:$0xf] %vm246, %v528
      %s534 = scalar_lea.vmem %s168, 12
      %v535 = vld [vmem:[%s534] sm:$0x3]
      %v537 = vsel %vm193, %v535, 0
      %539 = vmatprep.subr.bf16.mxu0 0
      %540 = vmatpush1.bf16.msra.mxu0 %v537
      %541 = vmatprep.subr.bf16.mxu0 0
      %542 = vmatpush1.bf16.msra.mxu0 0
      %543 = vmatprep.subr.bf16.mxu0 0
      %544 = vmatpush1.bf16.msra.mxu0 0
      %545 = vmatprep.subr.bf16.mxu0 0
      %546 = vmatpush1.bf16.msra.mxu0 0
      %547 = vmatprep.subr.bf16.mxu0 0
      %548 = vmatpush1.bf16.msra.mxu0 0
      %549 = vmatprep.subr.bf16.mxu0 0
      %550 = vmatpush1.bf16.msra.mxu0 0
      %551 = vmatprep.subr.bf16.mxu0 0
      %552 = vmatpush1.bf16.msra.mxu0 0
      %553 = vmatprep.subr.bf16.mxu0 0
      %554 = vmatpush1.bf16.msra.mxu0 0
      %555 = vmatprep.subr.bf16.mxu0 0
      %556 = vmatpush1.bf16.msra.mxu0 0
      %557 = vmatprep.subr.bf16.mxu0 0
      %558 = vmatpush1.bf16.msra.mxu0 0
      %559 = vmatprep.subr.bf16.mxu0 0
      %560 = vmatpush1.bf16.msra.mxu0 0
      %561 = vmatprep.subr.bf16.mxu0 0
      %562 = vmatpush1.bf16.msra.mxu0 0
      %563 = vmatprep.subr.bf16.mxu0 0
      %564 = vmatpush1.bf16.msra.mxu0 0
      %565 = vmatprep.subr.bf16.mxu0 0
      %566 = vmatpush1.bf16.msra.mxu0 0
      %567 = vmatprep.subr.bf16.mxu0 0
      %568 = vmatpush1.bf16.msra.mxu0 0
      %569 = vmatprep.subr.bf16.mxu0 0
      %570 = vmatpush1.bf16.msra.mxu0 0
      %571 = vmatprep.mubr.bf16.mxu0 0
      %572 = vmatmul.mubr.bf16.gmra.mrb[0].mxu0 %v191
      %v573 = vpop.f32.mrb[0].mxu0
      %v574 = vadd.f32 0.0, %v573
      %v575 = vpop.f32.mrb[0].mxu0
      %v576 = vpop.f32.mrb[0].mxu0
      %v577 = vadd.f32 0.0, %v576
      %v578 = vpop.f32.mrb[0].mxu0
      %579 = vdwg.mxu0
      %v580 = vpack.c.bf16 %v577, %v574
      %v582 = vunpack.c.l.b16 %v580
      %v583 = vunpack.c.h.b16 %v580
      %v584 = vpack.c.b16 %v582, %v582
      %v585 = vpack.c.b16 %v583, %v583
      %s588 = scalar_lea.vmem %s178, 48
      %589 = vst.msk [vmem:[%s588] sm:$0xf] %vm246, %v584
      %590 = vst.msk [vmem:[%s588 + $0x4] sm:$0xf] %vm246, %v585
      %s591 = scalar_lea.vmem %s168, 14
      %v592 = vld [vmem:[%s591] sm:$0x3]
      %v594 = vsel %vm193, %v592, 0
      %596 = vmatprep.subr.bf16.mxu0 0
      %597 = vmatpush1.bf16.msra.mxu0 %v594
      %598 = vmatprep.subr.bf16.mxu0 0
      %599 = vmatpush1.bf16.msra.mxu0 0
      %600 = vmatprep.subr.bf16.mxu0 0
      %601 = vmatpush1.bf16.msra.mxu0 0
      %602 = vmatprep.subr.bf16.mxu0 0
      %603 = vmatpush1.bf16.msra.mxu0 0
      %604 = vmatprep.subr.bf16.mxu0 0
      %605 = vmatpush1.bf16.msra.mxu0 0
      %606 = vmatprep.subr.bf16.mxu0 0
      %607 = vmatpush1.bf16.msra.mxu0 0
      %608 = vmatprep.subr.bf16.mxu0 0
      %609 = vmatpush1.bf16.msra.mxu0 0
      %610 = vmatprep.subr.bf16.mxu0 0
      %611 = vmatpush1.bf16.msra.mxu0 0
      %612 = vmatprep.subr.bf16.mxu0 0
      %613 = vmatpush1.bf16.msra.mxu0 0
      %614 = vmatprep.subr.bf16.mxu0 0
      %615 = vmatpush1.bf16.msra.mxu0 0
      %616 = vmatprep.subr.bf16.mxu0 0
      %617 = vmatpush1.bf16.msra.mxu0 0
      %618 = vmatprep.subr.bf16.mxu0 0
      %619 = vmatpush1.bf16.msra.mxu0 0
      %620 = vmatprep.subr.bf16.mxu0 0
      %621 = vmatpush1.bf16.msra.mxu0 0
      %622 = vmatprep.subr.bf16.mxu0 0
      %623 = vmatpush1.bf16.msra.mxu0 0
      %624 = vmatprep.subr.bf16.mxu0 0
      %625 = vmatpush1.bf16.msra.mxu0 0
      %626 = vmatprep.subr.bf16.mxu0 0
      %627 = vmatpush1.bf16.msra.mxu0 0
      %628 = vmatprep.mubr.bf16.mxu0 0
      %629 = vmatmul.mubr.bf16.gmra.mrb[0].mxu0 %v191
      %v630 = vpop.f32.mrb[0].mxu0
      %v631 = vadd.f32 0.0, %v630
      %v632 = vpop.f32.mrb[0].mxu0
      %v633 = vpop.f32.mrb[0].mxu0
      %v634 = vadd.f32 0.0, %v633
      %v635 = vpop.f32.mrb[0].mxu0
      %636 = vdwg.mxu0
      %v637 = vpack.c.bf16 %v634, %v631
      %v639 = vunpack.c.l.b16 %v637
      %v640 = vunpack.c.h.b16 %v637
      %v641 = vpack.c.b16 %v639, %v639
      %v642 = vpack.c.b16 %v640, %v640
      %s645 = scalar_lea.vmem %s178, 56
      %646 = vst.msk [vmem:[%s645] sm:$0xf] %vm246, %v641
      %647 = vst.msk [vmem:[%s645 + $0x4] sm:$0xf] %vm246, %v642
      %s648 = smul.u32 8, %s17
      %p649 = scmp.lt.s32.totalorder %s648, 31
      %s650 = scalar_select %p649, %s648, 31
      %p651 = scmp.lt.s32.totalorder %s18, 0
      %s652 = scalar_select %p651, %s18, 0
      %s653 = smul.addr %s650, 2
      %s654 = sadd.s32 %s652, %s653
      %s655 = smul.addr %s654, 4
      %s656 = scalar_lea.vmem %s2, %s655
      // Predicated region
      $region29: #{deeplabv3plus_gru_forward.47} parent=27 // pred_check
        %p657 = pneg %p94
      $region30: #{deeplabv3plus_gru_forward.47} parent=27 // pred_check_branch
        %659 = sbr.rel (%p657) target = $region32
      $region31: #{deeplabv3plus_gru_forward.47} parent=27 // pred_region
        %s660 = smul.u32 8, %s17
      $region32: #{deeplabv3plus_gru_forward.47} parent=27 // pred_fallthru
        _
    $region28: #{deeplabv3plus_gru_forward.47} parent=5 // pred_fallthru
      _
    %p661 = scmp.le.s32.totalorder 2, %s8
    // Predicated region
    $region33: #{deeplabv3plus_gru_forward.47} parent=5 // pred_check
      %p662 = pneg %p661
    $region34: #{deeplabv3plus_gru_forward.47} parent=5 // pred_check_branch
      %664 = sbr.rel (%p662) target = $region36
    $region35: #{deeplabv3plus_gru_forward.47} parent=5 // pred_region
      %s665 = ssub.s32 %s8, 2
      // Predicated region
      $region37: #{deeplabv3plus_gru_forward.47} parent=35 // pred_check
        %p666 = pneg %p100
      $region38: #{deeplabv3plus_gru_forward.47} parent=35 // pred_check_branch
        %668 = sbr.rel (%p666) target = $region40
      $region39: #{deeplabv3plus_gru_forward.47} parent=35 // pred_region
        %s669 = smul.u32 8, %s19
        %p670 = scmp.lt.s32.totalorder %s669, 31
        %s671 = scalar_select %p670, %s669, 31
        %p672 = scmp.lt.s32.totalorder %s20, 0
        %s673 = scalar_select %p672, %s20, 0
        %s674 = smul.addr %s671, 2
        %s675 = sadd.s32 %s673, %s674
        %s676 = smul.addr %s675, 4
        %s677 = scalar_lea.vmem %s2, %s676
      $region40: #{deeplabv3plus_gru_forward.47} parent=35 // pred_fallthru
        _
    $region36: #{deeplabv3plus_gru_forward.47} parent=5 // pred_fallthru
      _
  $region6: #{deeplabv3plus_gru_forward.47} parent=0 // loop_footer
    %s12 = sadd.s32 1, %s8
  $region7: #{deeplabv3plus_gru_forward.47} parent=0 // loop_footer_branch
    %7 = sbr.rel target = $region3
  $region8: #{deeplabv3plus_gru_forward.47} parent=0 // loop_exit
    _

// kernel: deeplabv3plus_gru_forward.49
$region0: #{deeplabv3plus_gru_forward.49}
  #allocation0 [shape = 'u32[]', space=smem, size = 0x4, offset = 0x4, fixed_abs, tag = 'smem constant byte address 0x4 - core index']
  #allocation1 [shape = 'u32[144,128]{1,0:T(1,128)}', space=vmem, size = 0x12000, scoped, tag = 'internal scratch']
  %s0 = inlined_call_operand.vmem [shape: bf16[32,32], index: 0, kind: input, shape index: {}]
  %s1 = inlined_call_operand.vmem [shape: bf16[32,32], index: 1, kind: input, shape index: {}]
  %s2 = inlined_call_operand.vmem [shape: bf16[32,32], index: 2, kind: output, shape index: {}]
  %s3 = sld [smem:[#allocation0]]
  $region18: #{deeplabv3plus_gru_forward.49} parent=0
    _
  %s5 = ssub.s32 1, %s3
  %s6 = scalar_select 0, %s5, %s3
  // Predicated region
  $region2: #{deeplabv3plus_gru_forward.49} parent=0 // pred_check
    _
  $region3: #{deeplabv3plus_gru_forward.49} parent=0 // pred_check_branch
    %8 = sbr.rel (0) target = $region5
  $region4: #{deeplabv3plus_gru_forward.49} parent=0 // pred_region
    _
  $region5: #{deeplabv3plus_gru_forward.49} parent=0 // pred_fallthru
    _
  // Predicated region
  $region6: #{deeplabv3plus_gru_forward.49} parent=0 // pred_check
    _
  $region7: #{deeplabv3plus_gru_forward.49} parent=0 // pred_check_branch
    %10 = sbr.rel (0) target = $region9
  $region8: #{deeplabv3plus_gru_forward.49} parent=0 // pred_region
    _
  $region9: #{deeplabv3plus_gru_forward.49} parent=0 // pred_fallthru
    _
  %v11 = vld [vmem:[%s0] sm:$0xf]
  %v12 = vld [vmem:[%s0 + $0x4] sm:$0xf]
  %v13 = vld [vmem:[%s0 + $0x8] sm:$0xf]
  %v14 = vld [vmem:[%s0 + $0xc] sm:$0xf]
  %v15 = vunpack.c.l.bf16 %v11
  %v16 = vunpack.c.l.bf16 %v12
  %v17 = vunpack.c.l.bf16 %v13
  %v18 = vunpack.c.l.bf16 %v14
  %v19 = vxor.u32 %v15, 2147483648
  %v20 = vxor.u32 %v16, 2147483648
  %v21 = vxor.u32 %v17, 2147483648
  %v22 = vxor.u32 %v18, 2147483648
  %v23 = vmul.f32 %v19, 1.442695
  %v24 = vpow.pop %v23
  %v25 = vmul.f32 %v20, 1.442695
  %v26 = vpow.pop %v25
  %v27 = vmul.f32 %v21, 1.442695
  %v28 = vpow.pop %v27
  %v29 = vmul.f32 %v22, 1.442695
  %v30 = vpow.pop %v29
  %v31 = vadd.f32 %v24, 1.0
  %v32 = vadd.f32 %v26, 1.0
  %v33 = vadd.f32 %v28, 1.0
  %v34 = vadd.f32 %v30, 1.0
  %v35 = vrcp.pop %v31
  %v36 = vmul.f32 1.0, %v35
  %v37 = vrcp.pop %v32
  %v38 = vmul.f32 1.0, %v37
  %v39 = vrcp.pop %v33
  %v40 = vmul.f32 1.0, %v39
  %v41 = vrcp.pop %v34
  %v42 = vmul.f32 1.0, %v41
  %v43 = vld [vmem:[%s1] sm:$0xf]
  %v44 = vld [vmem:[%s1 + $0x4] sm:$0xf]
  %v45 = vld [vmem:[%s1 + $0x8] sm:$0xf]
  %v46 = vld [vmem:[%s1 + $0xc] sm:$0xf]
  %v47 = vunpack.c.l.bf16 %v43
  %v48 = vunpack.c.l.bf16 %v44
  %v49 = vunpack.c.l.bf16 %v45
  %v50 = vunpack.c.l.bf16 %v46
  %v51 = vmul.f32 %v36, %v47
  %v52 = vmul.f32 %v38, %v48
  %v53 = vmul.f32 %v40, %v49
  %v54 = vmul.f32 %v42, %v50
  %v55 = vpack.c.bf16 %v52, %v51
  %v56 = vpack.c.bf16 %v54, %v53
  %v59 = vunpack.c.l.b16 %v55
  %v60 = vunpack.c.h.b16 %v55
  %v61 = vunpack.c.l.b16 %v56
  %v62 = vunpack.c.h.b16 %v56
  %v63 = vpack.c.b16 %v59, %v59
  %v64 = vpack.c.b16 %v60, %v60
  %v65 = vpack.c.b16 %v61, %v61
  %v66 = vpack.c.b16 %v62, %v62
  %vm71 = vcmask 257024
  %72 = vst.msk [vmem:[%s2] sm:$0xf] %vm71, %v63
  %73 = vst.msk [vmem:[%s2 + $0x4] sm:$0xf] %vm71, %v64
  %74 = vst.msk [vmem:[%s2 + $0x8] sm:$0xf] %vm71, %v65
  %75 = vst.msk [vmem:[%s2 + $0xc] sm:$0xf] %vm71, %v66
  // Predicated region
  $region10: #{deeplabv3plus_gru_forward.49} parent=0 // pred_check
    _
  $region11: #{deeplabv3plus_gru_forward.49} parent=0 // pred_check_branch
    %77 = sbr.rel (0) target = $region13
  $region12: #{deeplabv3plus_gru_forward.49} parent=0 // pred_region
    _
  $region13: #{deeplabv3plus_gru_forward.49} parent=0 // pred_fallthru
    _
  // Predicated region
  $region14: #{deeplabv3plus_gru_forward.49} parent=0 // pred_check
    _
  $region15: #{deeplabv3plus_gru_forward.49} parent=0 // pred_check_branch
    %79 = sbr.rel (0) target = $region17
  $region16: #{deeplabv3plus_gru_forward.49} parent=0 // pred_region
    _
  $region17: #{deeplabv3plus_gru_forward.49} parent=0 // pred_fallthru
    _

// kernel: deeplabv3plus_gru_forward.48
$region0: #{deeplabv3plus_gru_forward.48}
  #allocation0 [shape = 'u32[]', space=smem, size = 0x4, offset = 0x4, fixed_abs, tag = 'smem constant byte address 0x4 - core index']
  #allocation1 [shape = 'u32[144,128]{1,0:T(1,128)}', space=vmem, size = 0x12000, scoped, tag = 'internal scratch']
  #allocation2 [shape = 'f32[512,128]{1,0:T(8,128)}', space=vmem, size = 0x40000, scoped, tag = 'scratch operand']
  %s0 = inlined_call_operand.vmem [shape: bf16[512,128], index: 0, kind: input, shape index: {}]
  %s1 = inlined_call_operand.vmem [shape: bf16[128,128], index: 1, kind: input, shape index: {}]
  %s2 = inlined_call_operand.vmem [shape: f32[1,128], index: 2, kind: input, shape index: {}]
  %s3 = inlined_call_operand.vmem [shape: bf16[512,128], index: 3, kind: output, shape index: {}]
  %s4 = sld [smem:[#allocation0]]
  $region30: #{deeplabv3plus_gru_forward.48} parent=0
    _
  %s6 = ssub.s32 1, %s4
  %s7 = scalar_select 0, %s6, %s4
  // Predicated region
  $region2: #{deeplabv3plus_gru_forward.48} parent=0 // pred_check
    _
  $region3: #{deeplabv3plus_gru_forward.48} parent=0 // pred_check_branch
    %9 = sbr.rel (0) target = $region5
  $region4: #{deeplabv3plus_gru_forward.48} parent=0 // pred_region
    _
  $region5: #{deeplabv3plus_gru_forward.48} parent=0 // pred_fallthru
    _
  // Predicated region
  $region6: #{deeplabv3plus_gru_forward.48} parent=0 // pred_check
    _
  $region7: #{deeplabv3plus_gru_forward.48} parent=0 // pred_check_branch
    %11 = sbr.rel (0) target = $region9
  $region8: #{deeplabv3plus_gru_forward.48} parent=0 // pred_region
    _
  $region9: #{deeplabv3plus_gru_forward.48} parent=0 // pred_fallthru
    _
  // Predicated region
  $region10: #{deeplabv3plus_gru_forward.48} parent=0 // pred_check
    _
  $region11: #{deeplabv3plus_gru_forward.48} parent=0 // pred_check_branch
    %13 = sbr.rel (0) target = $region13
  $region12: #{deeplabv3plus_gru_forward.48} parent=0 // pred_region
    _
  $region13: #{deeplabv3plus_gru_forward.48} parent=0 // pred_fallthru
    _
  %p15 = scmp.eq.s32.totalorder 0, 0
  // Predicated region
  $region14: #{deeplabv3plus_gru_forward.48} parent=0 // pred_check
    %p16 = pneg %p15
  $region15: #{deeplabv3plus_gru_forward.48} parent=0 // pred_check_branch
    %18 = sbr.rel (%p16) target = $region17
  $region16: #{deeplabv3plus_gru_forward.48} parent=0 // pred_region
    %19 = vst [vmem:[#allocation2] sm:$0xff] 0.0
    %20 = vst [vmem:[#allocation2 + $0x8] sm:$0xff] 0.0
    %21 = vst [vmem:[#allocation2 + $0x10] sm:$0xff] 0.0
    %22 = vst [vmem:[#allocation2 + $0x18] sm:$0xff] 0.0
    %23 = vst [vmem:[#allocation2 + $0x20] sm:$0xff] 0.0
    %24 = vst [vmem:[#allocation2 + $0x28] sm:$0xff] 0.0
    %25 = vst [vmem:[#allocation2 + $0x30] sm:$0xff] 0.0
    %26 = vst [vmem:[#allocation2 + $0x38] sm:$0xff] 0.0
    %27 = vst [vmem:[#allocation2 + $0x40] sm:$0xff] 0.0
    %28 = vst [vmem:[#allocation2 + $0x48] sm:$0xff] 0.0
    %29 = vst [vmem:[#allocation2 + $0x50] sm:$0xff] 0.0
    %30 = vst [vmem:[#allocation2 + $0x58] sm:$0xff] 0.0
    %31 = vst [vmem:[#allocation2 + $0x60] sm:$0xff] 0.0
    %32 = vst [vmem:[#allocation2 + $0x68] sm:$0xff] 0.0
    %33 = vst [vmem:[#allocation2 + $0x70] sm:$0xff] 0.0
    %34 = vst [vmem:[#allocation2 + $0x78] sm:$0xff] 0.0
    %35 = vst [vmem:[#allocation2 + $0x80] sm:$0xff] 0.0
    %36 = vst [vmem:[#allocation2 + $0x88] sm:$0xff] 0.0
    %37 = vst [vmem:[#allocation2 + $0x90] sm:$0xff] 0.0
    %38 = vst [vmem:[#allocation2 + $0x98] sm:$0xff] 0.0
    %39 = vst [vmem:[#allocation2 + $0xa0] sm:$0xff] 0.0
    %40 = vst [vmem:[#allocation2 + $0xa8] sm:$0xff] 0.0
    %41 = vst [vmem:[#allocation2 + $0xb0] sm:$0xff] 0.0
    %42 = vst [vmem:[#allocation2 + $0xb8] sm:$0xff] 0.0
    %43 = vst [vmem:[#allocation2 + $0xc0] sm:$0xff] 0.0
    %44 = vst [vmem:[#allocation2 + $0xc8] sm:$0xff] 0.0
    %45 = vst [vmem:[#allocation2 + $0xd0] sm:$0xff] 0.0
    %46 = vst [vmem:[#allocation2 + $0xd8] sm:$0xff] 0.0
    %47 = vst [vmem:[#allocation2 + $0xe0] sm:$0xff] 0.0
    %48 = vst [vmem:[#allocation2 + $0xe8] sm:$0xff] 0.0
    %49 = vst [vmem:[#allocation2 + $0xf0] sm:$0xff] 0.0
    %50 = vst [vmem:[#allocation2 + $0xf8] sm:$0xff] 0.0
    %51 = vst [vmem:[#allocation2 + $0x100] sm:$0xff] 0.0
    %52 = vst [vmem:[#allocation2 + $0x108] sm:$0xff] 0.0
    %53 = vst [vmem:[#allocation2 + $0x110] sm:$0xff] 0.0
    %54 = vst [vmem:[#allocation2 + $0x118] sm:$0xff] 0.0
    %55 = vst [vmem:[#allocation2 + $0x120] sm:$0xff] 0.0
    %56 = vst [vmem:[#allocation2 + $0x128] sm:$0xff] 0.0
    %57 = vst [vmem:[#allocation2 + $0x130] sm:$0xff] 0.0
    %58 = vst [vmem:[#allocation2 + $0x138] sm:$0xff] 0.0
    %59 = vst [vmem:[#allocation2 + $0x140] sm:$0xff] 0.0
    %60 = vst [vmem:[#allocation2 + $0x148] sm:$0xff] 0.0
    %61 = vst [vmem:[#allocation2 + $0x150] sm:$0xff] 0.0
    %62 = vst [vmem:[#allocation2 + $0x158] sm:$0xff] 0.0
    %63 = vst [vmem:[#allocation2 + $0x160] sm:$0xff] 0.0
    %64 = vst [vmem:[#allocation2 + $0x168] sm:$0xff] 0.0
    %65 = vst [vmem:[#allocation2 + $0x170] sm:$0xff] 0.0
    %66 = vst [vmem:[#allocation2 + $0x178] sm:$0xff] 0.0
    %67 = vst [vmem:[#allocation2 + $0x180] sm:$0xff] 0.0
    %68 = vst [vmem:[#allocation2 + $0x188] sm:$0xff] 0.0
    %69 = vst [vmem:[#allocation2 + $0x190] sm:$0xff] 0.0
    %70 = vst [vmem:[#allocation2 + $0x198] sm:$0xff] 0.0
    %71 = vst [vmem:[#allocation2 + $0x1a0] sm:$0xff] 0.0
    %72 = vst [vmem:[#allocation2 + $0x1a8] sm:$0xff] 0.0
    %73 = vst [vmem:[#allocation2 + $0x1b0] sm:$0xff] 0.0
    %74 = vst [vmem:[#allocation2 + $0x1b8] sm:$0xff] 0.0
    %75 = vst [vmem:[#allocation2 + $0x1c0] sm:$0xff] 0.0
    %76 = vst [vmem:[#allocation2 + $0x1c8] sm:$0xff] 0.0
    %77 = vst [vmem:[#allocation2 + $0x1d0] sm:$0xff] 0.0
    %78 = vst [vmem:[#allocation2 + $0x1d8] sm:$0xff] 0.0
    %79 = vst [vmem:[#allocation2 + $0x1e0] sm:$0xff] 0.0
    %80 = vst [vmem:[#allocation2 + $0x1e8] sm:$0xff] 0.0
    %81 = vst [vmem:[#allocation2 + $0x1f0] sm:$0xff] 0.0
    %82 = vst [vmem:[#allocation2 + $0x1f8] sm:$0xff] 0.0
  $region17: #{deeplabv3plus_gru_forward.48} parent=0 // pred_fallthru
    _
  %v83 = vld [vmem:[#allocation2] sm:$0xff]
  %v84 = vld [vmem:[#allocation2 + $0x8] sm:$0xff]
  %v85 = vld [vmem:[#allocation2 + $0x10] sm:$0xff]
  %v86 = vld [vmem:[#allocation2 + $0x18] sm:$0xff]
  %v87 = vld [vmem:[#allocation2 + $0x20] sm:$0xff]
  %v88 = vld [vmem:[#allocation2 + $0x28] sm:$0xff]
  %v89 = vld [vmem:[#allocation2 + $0x30] sm:$0xff]
  %v90 = vld [vmem:[#allocation2 + $0x38] sm:$0xff]
  %v91 = vld [vmem:[#allocation2 + $0x40] sm:$0xff]
  %v92 = vld [vmem:[#allocation2 + $0x48] sm:$0xff]
  %v93 = vld [vmem:[#allocation2 + $0x50] sm:$0xff]
  %v94 = vld [vmem:[#allocation2 + $0x58] sm:$0xff]
  %v95 = vld [vmem:[#allocation2 + $0x60] sm:$0xff]
  %v96 = vld [vmem:[#allocation2 + $0x68] sm:$0xff]
  %v97 = vld [vmem:[#allocation2 + $0x70] sm:$0xff]
  %v98 = vld [vmem:[#allocation2 + $0x78] sm:$0xff]
  %v99 = vld [vmem:[#allocation2 + $0x80] sm:$0xff]
  %v100 = vld [vmem:[#allocation2 + $0x88] sm:$0xff]
  %v101 = vld [vmem:[#allocation2 + $0x90] sm:$0xff]
  %v102 = vld [vmem:[#allocation2 + $0x98] sm:$0xff]
  %v103 = vld [vmem:[#allocation2 + $0xa0] sm:$0xff]
  %v104 = vld [vmem:[#allocation2 + $0xa8] sm:$0xff]
  %v105 = vld [vmem:[#allocation2 + $0xb0] sm:$0xff]
  %v106 = vld [vmem:[#allocation2 + $0xb8] sm:$0xff]
  %v107 = vld [vmem:[#allocation2 + $0xc0] sm:$0xff]
  %v108 = vld [vmem:[#allocation2 + $0xc8] sm:$0xff]
  %v109 = vld [vmem:[#allocation2 + $0xd0] sm:$0xff]
  %v110 = vld [vmem:[#allocation2 + $0xd8] sm:$0xff]
  %v111 = vld [vmem:[#allocation2 + $0xe0] sm:$0xff]
  %v112 = vld [vmem:[#allocation2 + $0xe8] sm:$0xff]
  %v113 = vld [vmem:[#allocation2 + $0xf0] sm:$0xff]
  %v114 = vld [vmem:[#allocation2 + $0xf8] sm:$0xff]
  %v115 = vld [vmem:[#allocation2 + $0x100] sm:$0xff]
  %v116 = vld [vmem:[#allocation2 + $0x108] sm:$0xff]
  %v117 = vld [vmem:[#allocation2 + $0x110] sm:$0xff]
  %v118 = vld [vmem:[#allocation2 + $0x118] sm:$0xff]
  %v119 = vld [vmem:[#allocation2 + $0x120] sm:$0xff]
  %v120 = vld [vmem:[#allocation2 + $0x128] sm:$0xff]
  %v121 = vld [vmem:[#allocation2 + $0x130] sm:$0xff]
  %v122 = vld [vmem:[#allocation2 + $0x138] sm:$0xff]
  %v123 = vld [vmem:[#allocation2 + $0x140] sm:$0xff]
  %v124 = vld [vmem:[#allocation2 + $0x148] sm:$0xff]
  %v125 = vld [vmem:[#allocation2 + $0x150] sm:$0xff]
  %v126 = vld [vmem:[#allocation2 + $0x158] sm:$0xff]
  %v127 = vld [vmem:[#allocation2 + $0x160] sm:$0xff]
  %v128 = vld [vmem:[#allocation2 + $0x168] sm:$0xff]
  %v129 = vld [vmem:[#allocation2 + $0x170] sm:$0xff]
  %v130 = vld [vmem:[#allocation2 + $0x178] sm:$0xff]
  %v131 = vld [vmem:[#allocation2 + $0x180] sm:$0xff]
  %v132 = vld [vmem:[#allocation2 + $0x188] sm:$0xff]
  %v133 = vld [vmem:[#allocation2 + $0x190] sm:$0xff]
  %v134 = vld [vmem:[#allocation2 + $0x198] sm:$0xff]
  %v135 = vld [vmem:[#allocation2 + $0x1a0] sm:$0xff]
  %v136 = vld [vmem:[#allocation2 + $0x1a8] sm:$0xff]
  %v137 = vld [vmem:[#allocation2 + $0x1b0] sm:$0xff]
  %v138 = vld [vmem:[#allocation2 + $0x1b8] sm:$0xff]
  %v139 = vld [vmem:[#allocation2 + $0x1c0] sm:$0xff]
  %v140 = vld [vmem:[#allocation2 + $0x1c8] sm:$0xff]
  %v141 = vld [vmem:[#allocation2 + $0x1d0] sm:$0xff]
  %v142 = vld [vmem:[#allocation2 + $0x1d8] sm:$0xff]
  %v143 = vld [vmem:[#allocation2 + $0x1e0] sm:$0xff]
  %v144 = vld [vmem:[#allocation2 + $0x1e8] sm:$0xff]
  %v145 = vld [vmem:[#allocation2 + $0x1f0] sm:$0xff]
  %v146 = vld [vmem:[#allocation2 + $0x1f8] sm:$0xff]
  %v147 = vld [vmem:[%s0] sm:$0xf]
  %v148 = vld [vmem:[%s0 + $0x4] sm:$0xf]
  %v149 = vld [vmem:[%s0 + $0x8] sm:$0xf]
  %v150 = vld [vmem:[%s0 + $0xc] sm:$0xf]
  %v151 = vld [vmem:[%s0 + $0x10] sm:$0xf]
  %v152 = vld [vmem:[%s0 + $0x14] sm:$0xf]
  %v153 = vld [vmem:[%s0 + $0x18] sm:$0xf]
  %v154 = vld [vmem:[%s0 + $0x1c] sm:$0xf]
  %v155 = vld [vmem:[%s0 + $0x20] sm:$0xf]
  %v156 = vld [vmem:[%s0 + $0x24] sm:$0xf]
  %v157 = vld [vmem:[%s0 + $0x28] sm:$0xf]
  %v158 = vld [vmem:[%s0 + $0x2c] sm:$0xf]
  %v159 = vld [vmem:[%s0 + $0x30] sm:$0xf]
  %v160 = vld [vmem:[%s0 + $0x34] sm:$0xf]
  %v161 = vld [vmem:[%s0 + $0x38] sm:$0xf]
  %v162 = vld [vmem:[%s0 + $0x3c] sm:$0xf]
  %v163 = vld [vmem:[%s0 + $0x40] sm:$0xf]
  %v164 = vld [vmem:[%s0 + $0x44] sm:$0xf]
  %v165 = vld [vmem:[%s0 + $0x48] sm:$0xf]
  %v166 = vld [vmem:[%s0 + $0x4c] sm:$0xf]
  %v167 = vld [vmem:[%s0 + $0x50] sm:$0xf]
  %v168 = vld [vmem:[%s0 + $0x54] sm:$0xf]
  %v169 = vld [vmem:[%s0 + $0x58] sm:$0xf]
  %v170 = vld [vmem:[%s0 + $0x5c] sm:$0xf]
  %v171 = vld [vmem:[%s0 + $0x60] sm:$0xf]
  %v172 = vld [vmem:[%s0 + $0x64] sm:$0xf]
  %v173 = vld [vmem:[%s0 + $0x68] sm:$0xf]
  %v174 = vld [vmem:[%s0 + $0x6c] sm:$0xf]
  %v175 = vld [vmem:[%s0 + $0x70] sm:$0xf]
  %v176 = vld [vmem:[%s0 + $0x74] sm:$0xf]
  %v177 = vld [vmem:[%s0 + $0x78] sm:$0xf]
  %v178 = vld [vmem:[%s0 + $0x7c] sm:$0xf]
  %v179 = vld [vmem:[%s0 + $0x80] sm:$0xf]
  %v180 = vld [vmem:[%s0 + $0x84] sm:$0xf]
  %v181 = vld [vmem:[%s0 + $0x88] sm:$0xf]
  %v182 = vld [vmem:[%s0 + $0x8c] sm:$0xf]
  %v183 = vld [vmem:[%s0 + $0x90] sm:$0xf]
  %v184 = vld [vmem:[%s0 + $0x94] sm:$0xf]
  %v185 = vld [vmem:[%s0 + $0x98] sm:$0xf]
  %v186 = vld [vmem:[%s0 + $0x9c] sm:$0xf]
  %v187 = vld [vmem:[%s0 + $0xa0] sm:$0xf]
  %v188 = vld [vmem:[%s0 + $0xa4] sm:$0xf]
  %v189 = vld [vmem:[%s0 + $0xa8] sm:$0xf]
  %v190 = vld [vmem:[%s0 + $0xac] sm:$0xf]
  %v191 = vld [vmem:[%s0 + $0xb0] sm:$0xf]
  %v192 = vld [vmem:[%s0 + $0xb4] sm:$0xf]
  %v193 = vld [vmem:[%s0 + $0xb8] sm:$0xf]
  %v194 = vld [vmem:[%s0 + $0xbc] sm:$0xf]
  %v195 = vld [vmem:[%s0 + $0xc0] sm:$0xf]
  %v196 = vld [vmem:[%s0 + $0xc4] sm:$0xf]
  %v197 = vld [vmem:[%s0 + $0xc8] sm:$0xf]
  %v198 = vld [vmem:[%s0 + $0xcc] sm:$0xf]
  %v199 = vld [vmem:[%s0 + $0xd0] sm:$0xf]
  %v200 = vld [vmem:[%s0 + $0xd4] sm:$0xf]
  %v201 = vld [vmem:[%s0 + $0xd8] sm:$0xf]
  %v202 = vld [vmem:[%s0 + $0xdc] sm:$0xf]
  %v203 = vld [vmem:[%s0 + $0xe0] sm:$0xf]
  %v204 = vld [vmem:[%s0 + $0xe4] sm:$0xf]
  %v205 = vld [vmem:[%s0 + $0xe8] sm:$0xf]
  %v206 = vld [vmem:[%s0 + $0xec] sm:$0xf]
  %v207 = vld [vmem:[%s0 + $0xf0] sm:$0xf]
  %v208 = vld [vmem:[%s0 + $0xf4] sm:$0xf]
  %v209 = vld [vmem:[%s0 + $0xf8] sm:$0xf]
  %v210 = vld [vmem:[%s0 + $0xfc] sm:$0xf]
  %v211 = vld [vmem:[%s1] sm:$0xf]
  %v212 = vld [vmem:[%s1 + $0x4] sm:$0xf]
  %v213 = vld [vmem:[%s1 + $0x8] sm:$0xf]
  %v214 = vld [vmem:[%s1 + $0xc] sm:$0xf]
  %v215 = vld [vmem:[%s1 + $0x10] sm:$0xf]
  %v216 = vld [vmem:[%s1 + $0x14] sm:$0xf]
  %v217 = vld [vmem:[%s1 + $0x18] sm:$0xf]
  %v218 = vld [vmem:[%s1 + $0x1c] sm:$0xf]
  %v219 = vld [vmem:[%s1 + $0x20] sm:$0xf]
  %v220 = vld [vmem:[%s1 + $0x24] sm:$0xf]
  %v221 = vld [vmem:[%s1 + $0x28] sm:$0xf]
  %v222 = vld [vmem:[%s1 + $0x2c] sm:$0xf]
  %v223 = vld [vmem:[%s1 + $0x30] sm:$0xf]
  %v224 = vld [vmem:[%s1 + $0x34] sm:$0xf]
  %v225 = vld [vmem:[%s1 + $0x38] sm:$0xf]
  %v226 = vld [vmem:[%s1 + $0x3c] sm:$0xf]
  %v291 = vunpack.c.l.b16 %v147
  %v292 = vunpack.c.l.b16 %v148
  %v293 = vunpack.c.l.b16 %v149
  %v294 = vunpack.c.l.b16 %v150
  %v295 = vunpack.c.l.b16 %v151
  %v296 = vunpack.c.l.b16 %v152
  %v297 = vunpack.c.l.b16 %v153
  %v298 = vunpack.c.l.b16 %v154
  %v299 = vunpack.c.l.b16 %v155
  %v300 = vunpack.c.l.b16 %v156
  %v301 = vunpack.c.l.b16 %v157
  %v302 = vunpack.c.l.b16 %v158
  %v303 = vunpack.c.l.b16 %v159
  %v304 = vunpack.c.l.b16 %v160
  %v305 = vunpack.c.l.b16 %v161
  %v306 = vunpack.c.l.b16 %v162
  %v307 = vunpack.c.l.b16 %v163
  %v308 = vunpack.c.l.b16 %v164
  %v309 = vunpack.c.l.b16 %v165
  %v310 = vunpack.c.l.b16 %v166
  %v311 = vunpack.c.l.b16 %v167
  %v312 = vunpack.c.l.b16 %v168
  %v313 = vunpack.c.l.b16 %v169
  %v314 = vunpack.c.l.b16 %v170
  %v315 = vunpack.c.l.b16 %v171
  %v316 = vunpack.c.l.b16 %v172
  %v317 = vunpack.c.l.b16 %v173
  %v318 = vunpack.c.l.b16 %v174
  %v319 = vunpack.c.l.b16 %v175
  %v320 = vunpack.c.l.b16 %v176
  %v321 = vunpack.c.l.b16 %v177
  %v322 = vunpack.c.l.b16 %v178
  %v323 = vunpack.c.l.b16 %v179
  %v324 = vunpack.c.l.b16 %v180
  %v325 = vunpack.c.l.b16 %v181
  %v326 = vunpack.c.l.b16 %v182
  %v327 = vunpack.c.l.b16 %v183
  %v328 = vunpack.c.l.b16 %v184
  %v329 = vunpack.c.l.b16 %v185
  %v330 = vunpack.c.l.b16 %v186
  %v331 = vunpack.c.l.b16 %v187
  %v332 = vunpack.c.l.b16 %v188
  %v333 = vunpack.c.l.b16 %v189
  %v334 = vunpack.c.l.b16 %v190
  %v335 = vunpack.c.l.b16 %v191
  %v336 = vunpack.c.l.b16 %v192
  %v337 = vunpack.c.l.b16 %v193
  %v338 = vunpack.c.l.b16 %v194
  %v339 = vunpack.c.l.b16 %v195
  %v340 = vunpack.c.l.b16 %v196
  %v341 = vunpack.c.l.b16 %v197
  %v342 = vunpack.c.l.b16 %v198
  %v343 = vunpack.c.l.b16 %v199
  %v344 = vunpack.c.l.b16 %v200
  %v345 = vunpack.c.l.b16 %v201
  %v346 = vunpack.c.l.b16 %v202
  %v347 = vunpack.c.l.b16 %v203
  %v348 = vunpack.c.l.b16 %v204
  %v349 = vunpack.c.l.b16 %v205
  %v350 = vunpack.c.l.b16 %v206
  %v351 = vunpack.c.l.b16 %v207
  %v352 = vunpack.c.l.b16 %v208
  %v353 = vunpack.c.l.b16 %v209
  %v354 = vunpack.c.l.b16 %v210
  %v355 = vpack.c.b16 %v292, %v291
  %v356 = vpack.c.b16 %v294, %v293
  %v357 = vpack.c.b16 %v296, %v295
  %v358 = vpack.c.b16 %v298, %v297
  %v359 = vpack.c.b16 %v300, %v299
  %v360 = vpack.c.b16 %v302, %v301
  %v361 = vpack.c.b16 %v304, %v303
  %v362 = vpack.c.b16 %v306, %v305
  %v363 = vpack.c.b16 %v308, %v307
  %v364 = vpack.c.b16 %v310, %v309
  %v365 = vpack.c.b16 %v312, %v311
  %v366 = vpack.c.b16 %v314, %v313
  %v367 = vpack.c.b16 %v316, %v315
  %v368 = vpack.c.b16 %v318, %v317
  %v369 = vpack.c.b16 %v320, %v319
  %v370 = vpack.c.b16 %v322, %v321
  %v371 = vpack.c.b16 %v324, %v323
  %v372 = vpack.c.b16 %v326, %v325
  %v373 = vpack.c.b16 %v328, %v327
  %v374 = vpack.c.b16 %v330, %v329
  %v375 = vpack.c.b16 %v332, %v331
  %v376 = vpack.c.b16 %v334, %v333
  %v377 = vpack.c.b16 %v336, %v335
  %v378 = vpack.c.b16 %v338, %v337
  %v379 = vpack.c.b16 %v340, %v339
  %v380 = vpack.c.b16 %v342, %v341
  %v381 = vpack.c.b16 %v344, %v343
  %v382 = vpack.c.b16 %v346, %v345
  %v383 = vpack.c.b16 %v348, %v347
  %v384 = vpack.c.b16 %v350, %v349
  %v385 = vpack.c.b16 %v352, %v351
  %v386 = vpack.c.b16 %v354, %v353
  %v435 = vunpack.c.l.b16 %v211
  %v436 = vunpack.c.l.b16 %v212
  %v437 = vunpack.c.l.b16 %v213
  %v438 = vunpack.c.l.b16 %v214
  %v439 = vunpack.c.l.b16 %v215
  %v440 = vunpack.c.l.b16 %v216
  %v441 = vunpack.c.l.b16 %v217
  %v442 = vunpack.c.l.b16 %v218
  %v443 = vunpack.c.l.b16 %v219
  %v444 = vunpack.c.l.b16 %v220
  %v445 = vunpack.c.l.b16 %v221
  %v446 = vunpack.c.l.b16 %v222
  %v447 = vunpack.c.l.b16 %v223
  %v448 = vunpack.c.l.b16 %v224
  %v449 = vunpack.c.l.b16 %v225
  %v450 = vunpack.c.l.b16 %v226
  %v451 = vpack.c.b16 %v436, %v435
  %v452 = vpack.c.b16 %v438, %v437
  %v453 = vpack.c.b16 %v440, %v439
  %v454 = vpack.c.b16 %v442, %v441
  %v455 = vpack.c.b16 %v444, %v443
  %v456 = vpack.c.b16 %v446, %v445
  %v457 = vpack.c.b16 %v448, %v447
  %v458 = vpack.c.b16 %v450, %v449
  %467 = vmatprep.subr.bf16.mxu0 0
  %468 = vmatpush1.bf16.msra.mxu0 %v451
  %469 = vmatprep.subr.bf16.mxu0 0
  %470 = vmatpush1.bf16.msra.mxu0 %v452
  %471 = vmatprep.subr.bf16.mxu0 0
  %472 = vmatpush1.bf16.msra.mxu0 %v453
  %473 = vmatprep.subr.bf16.mxu0 0
  %474 = vmatpush1.bf16.msra.mxu0 %v454
  %475 = vmatprep.subr.bf16.mxu0 0
  %476 = vmatpush1.bf16.msra.mxu0 %v455
  %477 = vmatprep.subr.bf16.mxu0 0
  %478 = vmatpush1.bf16.msra.mxu0 %v456
  %479 = vmatprep.subr.bf16.mxu0 0
  %480 = vmatpush1.bf16.msra.mxu0 %v457
  %481 = vmatprep.subr.bf16.mxu0 0
  %482 = vmatpush1.bf16.msra.mxu0 %v458
  %483 = vmatprep.subr.bf16.mxu0 0
  %484 = vmatpush1.bf16.msra.mxu0 0
  %485 = vmatprep.subr.bf16.mxu0 0
  %486 = vmatpush1.bf16.msra.mxu0 0
  %487 = vmatprep.subr.bf16.mxu0 0
  %488 = vmatpush1.bf16.msra.mxu0 0
  %489 = vmatprep.subr.bf16.mxu0 0
  %490 = vmatpush1.bf16.msra.mxu0 0
  %491 = vmatprep.subr.bf16.mxu0 0
  %492 = vmatpush1.bf16.msra.mxu0 0
  %493 = vmatprep.subr.bf16.mxu0 0
  %494 = vmatpush1.bf16.msra.mxu0 0
  %495 = vmatprep.subr.bf16.mxu0 0
  %496 = vmatpush1.bf16.msra.mxu0 0
  %497 = vmatprep.subr.bf16.mxu0 0
  %498 = vmatpush1.bf16.msra.mxu0 0
  %499 = vmatprep.mubr.bf16.mxu0 0
  %500 = vmatmul.mubr.bf16.gmra.mrb[0].mxu0 %v355
  %v501 = vpop.f32.mrb[0].mxu0
  %v502 = vadd.f32 0.0, %v501
  %v503 = vpop.f32.mrb[0].mxu0
  %v504 = vpop.f32.mrb[0].mxu0
  %v505 = vadd.f32 0.0, %v504
  %v506 = vpop.f32.mrb[0].mxu0
  %507 = vmatprep.mubr.bf16.mxu0 0
  %508 = vmatmul.mubr.bf16.gmra.mrb[0].mxu0 %v356
  %v509 = vpop.f32.mrb[0].mxu0
  %v510 = vadd.f32 0.0, %v509
  %v511 = vpop.f32.mrb[0].mxu0
  %v512 = vpop.f32.mrb[0].mxu0
  %v513 = vadd.f32 0.0, %v512
  %v514 = vpop.f32.mrb[0].mxu0
  %515 = vmatprep.mubr.bf16.mxu0 0
  %516 = vmatmul.mubr.bf16.gmra.mrb[0].mxu0 %v357
  %v517 = vpop.f32.mrb[0].mxu0
  %v518 = vadd.f32 0.0, %v517
  %v519 = vpop.f32.mrb[0].mxu0
  %v520 = vpop.f32.mrb[0].mxu0
  %v521 = vadd.f32 0.0, %v520
  %v522 = vpop.f32.mrb[0].mxu0
  %523 = vmatprep.mubr.bf16.mxu0 0
  %524 = vmatmul.mubr.bf16.gmra.mrb[0].mxu0 %v358
  %v525 = vpop.f32.mrb[0].mxu0
  %v526 = vadd.f32 0.0, %v525
  %v527 = vpop.f32.mrb[0].mxu0
  %v528 = vpop.f32.mrb[0].mxu0
  %v529 = vadd.f32 0.0, %v528
  %v530 = vpop.f32.mrb[0].mxu0
  %531 = vmatprep.mubr.bf16.mxu0 0
  %532 = vmatmul.mubr.bf16.gmra.mrb[0].mxu0 %v359
  %v533 = vpop.f32.mrb[0].mxu0
  %v534 = vadd.f32 0.0, %v533
  %v535 = vpop.f32.mrb[0].mxu0
  %v536 = vpop.f32.mrb[0].mxu0
  %v537 = vadd.f32 0.0, %v536
  %v538 = vpop.f32.mrb[0].mxu0
  %539 = vmatprep.mubr.bf16.mxu0 0
  %540 = vmatmul.mubr.bf16.gmra.mrb[0].mxu0 %v360
  %v541 = vpop.f32.mrb[0].mxu0
  %v542 = vadd.f32 0.0, %v541
  %v543 = vpop.f32.mrb[0].mxu0
  %v544 = vpop.f32.mrb[0].mxu0
  %v545 = vadd.f32 0.0, %v544
  %v546 = vpop.f32.mrb[0].mxu0
  %547 = vmatprep.mubr.bf16.mxu0 0
  %548 = vmatmul.mubr.bf16.gmra.mrb[0].mxu0 %v361
  %v549 = vpop.f32.mrb[0].mxu0
  %v550 = vadd.f32 0.0, %v549
  %v551 = vpop.f32.mrb[0].mxu0
  %v552 = vpop.f32.mrb[0].mxu0
  %v553 = vadd.f32 0.0, %v552
  %v554 = vpop.f32.mrb[0].mxu0
  %555 = vmatprep.mubr.bf16.mxu0 0
  %556 = vmatmul.mubr.bf16.gmra.mrb[0].mxu0 %v362
  %v557 = vpop.f32.mrb[0].mxu0
  %v558 = vadd.f32 0.0, %v557
  %v559 = vpop.f32.mrb[0].mxu0
  %v560 = vpop.f32.mrb[0].mxu0
  %v561 = vadd.f32 0.0, %v560
  %v562 = vpop.f32.mrb[0].mxu0
  %563 = vmatprep.mubr.bf16.mxu0 0
  %564 = vmatmul.mubr.bf16.gmra.mrb[0].mxu0 %v363
  %v565 = vpop.f32.mrb[0].mxu0
  %v566 = vadd.f32 0.0, %v565
  %v567 = vpop.f32.mrb[0].mxu0
  %v568 = vpop.f32.mrb[0].mxu0
  %v569 = vadd.f32 0.0, %v568
  %v570 = vpop.f32.mrb[0].mxu0
  %571 = vmatprep.mubr.bf16.mxu0 0
  %572 = vmatmul.mubr.bf16.gmra.mrb[0].mxu0 %v364
  %v573 = vpop.f32.mrb[0].mxu0
  %v574 = vadd.f32 0.0, %v573
  %v575 = vpop.f32.mrb[0].mxu0
  %v576 = vpop.f32.mrb[0].mxu0
  %v577 = vadd.f32 0.0, %v576
  %v578 = vpop.f32.mrb[0].mxu0
  %579 = vmatprep.mubr.bf16.mxu0 0
  %580 = vmatmul.mubr.bf16.gmra.mrb[0].mxu0 %v365
  %v581 = vpop.f32.mrb[0].mxu0
  %v582 = vadd.f32 0.0, %v581
  %v583 = vpop.f32.mrb[0].mxu0
  %v584 = vpop.f32.mrb[0].mxu0
  %v585 = vadd.f32 0.0, %v584
  %v586 = vpop.f32.mrb[0].mxu0
  %587 = vmatprep.mubr.bf16.mxu0 0
  %588 = vmatmul.mubr.bf16.gmra.mrb[0].mxu0 %v366
  %v589 = vpop.f32.mrb[0].mxu0
  %v590 = vadd.f32 0.0, %v589
  %v591 = vpop.f32.mrb[0].mxu0
  %v592 = vpop.f32.mrb[0].mxu0
  %v593 = vadd.f32 0.0, %v592
  %v594 = vpop.f32.mrb[0].mxu0
  %595 = vmatprep.mubr.bf16.mxu0 0
  %596 = vmatmul.mubr.bf16.gmra.mrb[0].mxu0 %v367
  %v597 = vpop.f32.mrb[0].mxu0
  %v598 = vadd.f32 0.0, %v597
  %v599 = vpop.f32.mrb[0].mxu0
  %v600 = vpop.f32.mrb[0].mxu0
  %v601 = vadd.f32 0.0, %v600
  %v602 = vpop.f32.mrb[0].mxu0
  %603 = vmatprep.mubr.bf16.mxu0 0
  %604 = vmatmul.mubr.bf16.gmra.mrb[0].mxu0 %v368
  %v605 = vpop.f32.mrb[0].mxu0
  %v606 = vadd.f32 0.0, %v605
  %v607 = vpop.f32.mrb[0].mxu0
  %v608 = vpop.f32.mrb[0].mxu0
  %v609 = vadd.f32 0.0, %v608
  %v610 = vpop.f32.mrb[0].mxu0
  %611 = vmatprep.mubr.bf16.mxu0 0
  %612 = vmatmul.mubr.bf16.gmra.mrb[0].mxu0 %v369
  %v613 = vpop.f32.mrb[0].mxu0
  %v614 = vadd.f32 0.0, %v613
  %v615 = vpop.f32.mrb[0].mxu0
  %v616 = vpop.f32.mrb[0].mxu0
  %v617 = vadd.f32 0.0, %v616
  %v618 = vpop.f32.mrb[0].mxu0
  %619 = vmatprep.mubr.bf16.mxu0 0
  %620 = vmatmul.mubr.bf16.gmra.mrb[0].mxu0 %v370
  %v621 = vpop.f32.mrb[0].mxu0
  %v622 = vadd.f32 0.0, %v621
  %v623 = vpop.f32.mrb[0].mxu0
  %v624 = vpop.f32.mrb[0].mxu0
  %v625 = vadd.f32 0.0, %v624
  %v626 = vpop.f32.mrb[0].mxu0
  %627 = vmatprep.mubr.bf16.mxu0 0
  %628 = vmatmul.mubr.bf16.gmra.mrb[0].mxu0 %v371
  %v629 = vpop.f32.mrb[0].mxu0
  %v630 = vadd.f32 0.0, %v629
  %v631 = vpop.f32.mrb[0].mxu0
  %v632 = vpop.f32.mrb[0].mxu0
  %v633 = vadd.f32 0.0, %v632
  %v634 = vpop.f32.mrb[0].mxu0
  %635 = vmatprep.mubr.bf16.mxu0 0
  %636 = vmatmul.mubr.bf16.gmra.mrb[0].mxu0 %v372
  %v637 = vpop.f32.mrb[0].mxu0
  %v638 = vadd.f32 0.0, %v637
  %v639 = vpop.f32.mrb[0].mxu0
  %v640 = vpop.f32.mrb[0].mxu0
  %v641 = vadd.f32 0.0, %v640
  %v642 = vpop.f32.mrb[0].mxu0
  %643 = vmatprep.mubr.bf16.mxu0 0
  %644 = vmatmul.mubr.bf16.gmra.mrb[0].mxu0 %v373
  %v645 = vpop.f32.mrb[0].mxu0
  %v646 = vadd.f32 0.0, %v645
  %v647 = vpop.f32.mrb[0].mxu0
  %v648 = vpop.f32.mrb[0].mxu0
  %v649 = vadd.f32 0.0, %v648
  %v650 = vpop.f32.mrb[0].mxu0
  %651 = vmatprep.mubr.bf16.mxu0 0
  %652 = vmatmul.mubr.bf16.gmra.mrb[0].mxu0 %v374
  %v653 = vpop.f32.mrb[0].mxu0
  %v654 = vadd.f32 0.0, %v653
  %v655 = vpop.f32.mrb[0].mxu0
  %v656 = vpop.f32.mrb[0].mxu0
  %v657 = vadd.f32 0.0, %v656
  %v658 = vpop.f32.mrb[0].mxu0
  %659 = vmatprep.mubr.bf16.mxu0 0
  %660 = vmatmul.mubr.bf16.gmra.mrb[0].mxu0 %v375
  %v661 = vpop.f32.mrb[0].mxu0
  %v662 = vadd.f32 0.0, %v661
  %v663 = vpop.f32.mrb[0].mxu0
  %v664 = vpop.f32.mrb[0].mxu0
  %v665 = vadd.f32 0.0, %v664
  %v666 = vpop.f32.mrb[0].mxu0
  %667 = vmatprep.mubr.bf16.mxu0 0
  %668 = vmatmul.mubr.bf16.gmra.mrb[0].mxu0 %v376
  %v669 = vpop.f32.mrb[0].mxu0
  %v670 = vadd.f32 0.0, %v669
  %v671 = vpop.f32.mrb[0].mxu0
  %v672 = vpop.f32.mrb[0].mxu0
  %v673 = vadd.f32 0.0, %v672
  %v674 = vpop.f32.mrb[0].mxu0
  %675 = vmatprep.mubr.bf16.mxu0 0
  %676 = vmatmul.mubr.bf16.gmra.mrb[0].mxu0 %v377
  %v677 = vpop.f32.mrb[0].mxu0
  %v678 = vadd.f32 0.0, %v677
  %v679 = vpop.f32.mrb[0].mxu0
  %v680 = vpop.f32.mrb[0].mxu0
  %v681 = vadd.f32 0.0, %v680
  %v682 = vpop.f32.mrb[0].mxu0
  %683 = vmatprep.mubr.bf16.mxu0 0
  %684 = vmatmul.mubr.bf16.gmra.mrb[0].mxu0 %v378
  %v685 = vpop.f32.mrb[0].mxu0
  %v686 = vadd.f32 0.0, %v685
  %v687 = vpop.f32.mrb[0].mxu0
  %v688 = vpop.f32.mrb[0].mxu0
  %v689 = vadd.f32 0.0, %v688
  %v690 = vpop.f32.mrb[0].mxu0
  %691 = vmatprep.mubr.bf16.mxu0 0
  %692 = vmatmul.mubr.bf16.gmra.mrb[0].mxu0 %v379
  %v693 = vpop.f32.mrb[0].mxu0
  %v694 = vadd.f32 0.0, %v693
  %v695 = vpop.f32.mrb[0].mxu0
  %v696 = vpop.f32.mrb[0].mxu0
  %v697 = vadd.f32 0.0, %v696
  %v698 = vpop.f32.mrb[0].mxu0
  %699 = vmatprep.mubr.bf16.mxu0 0
  %700 = vmatmul.mubr.bf16.gmra.mrb[0].mxu0 %v380
  %v701 = vpop.f32.mrb[0].mxu0
  %v702 = vadd.f32 0.0, %v701
  %v703 = vpop.f32.mrb[0].mxu0
  %v704 = vpop.f32.mrb[0].mxu0
  %v705 = vadd.f32 0.0, %v704
  %v706 = vpop.f32.mrb[0].mxu0
  %707 = vmatprep.mubr.bf16.mxu0 0
  %708 = vmatmul.mubr.bf16.gmra.mrb[0].mxu0 %v381
  %v709 = vpop.f32.mrb[0].mxu0
  %v710 = vadd.f32 0.0, %v709
  %v711 = vpop.f32.mrb[0].mxu0
  %v712 = vpop.f32.mrb[0].mxu0
  %v713 = vadd.f32 0.0, %v712
  %v714 = vpop.f32.mrb[0].mxu0
  %715 = vmatprep.mubr.bf16.mxu0 0
  %716 = vmatmul.mubr.bf16.gmra.mrb[0].mxu0 %v382
  %v717 = vpop.f32.mrb[0].mxu0
  %v718 = vadd.f32 0.0, %v717
  %v719 = vpop.f32.mrb[0].mxu0
  %v720 = vpop.f32.mrb[0].mxu0
  %v721 = vadd.f32 0.0, %v720
  %v722 = vpop.f32.mrb[0].mxu0
  %723 = vmatprep.mubr.bf16.mxu0 0
  %724 = vmatmul.mubr.bf16.gmra.mrb[0].mxu0 %v383
  %v725 = vpop.f32.mrb[0].mxu0
  %v726 = vadd.f32 0.0, %v725
  %v727 = vpop.f32.mrb[0].mxu0
  %v728 = vpop.f32.mrb[0].mxu0
  %v729 = vadd.f32 0.0, %v728
  %v730 = vpop.f32.mrb[0].mxu0
  %731 = vmatprep.mubr.bf16.mxu0 0
  %732 = vmatmul.mubr.bf16.gmra.mrb[0].mxu0 %v384
  %v733 = vpop.f32.mrb[0].mxu0
  %v734 = vadd.f32 0.0, %v733
  %v735 = vpop.f32.mrb[0].mxu0
  %v736 = vpop.f32.mrb[0].mxu0
  %v737 = vadd.f32 0.0, %v736
  %v738 = vpop.f32.mrb[0].mxu0
  %739 = vmatprep.mubr.bf16.mxu0 0
  %740 = vmatmul.mubr.bf16.gmra.mrb[0].mxu0 %v385
  %v741 = vpop.f32.mrb[0].mxu0
  %v742 = vadd.f32 0.0, %v741
  %v743 = vpop.f32.mrb[0].mxu0
  %v744 = vpop.f32.mrb[0].mxu0
  %v745 = vadd.f32 0.0, %v744
  %v746 = vpop.f32.mrb[0].mxu0
  %747 = vmatprep.mubr.bf16.mxu0 0
  %748 = vmatmul.mubr.bf16.gmra.mrb[0].mxu0 %v386
  %v749 = vpop.f32.mrb[0].mxu0
  %v750 = vadd.f32 0.0, %v749
  %v751 = vpop.f32.mrb[0].mxu0
  %v752 = vpop.f32.mrb[0].mxu0
  %v753 = vadd.f32 0.0, %v752
  %v754 = vpop.f32.mrb[0].mxu0
  %755 = vdwg.mxu0
  %v756 = vadd.f32 %v83, %v502
  %v757 = vadd.f32 %v84, %v505
  %v758 = vadd.f32 %v85, %v510
  %v759 = vadd.f32 %v86, %v513
  %v760 = vadd.f32 %v87, %v518
  %v761 = vadd.f32 %v88, %v521
  %v762 = vadd.f32 %v89, %v526
  %v763 = vadd.f32 %v90, %v529
  %v764 = vadd.f32 %v91, %v534
  %v765 = vadd.f32 %v92, %v537
  %v766 = vadd.f32 %v93, %v542
  %v767 = vadd.f32 %v94, %v545
  %v768 = vadd.f32 %v95, %v550
  %v769 = vadd.f32 %v96, %v553
  %v770 = vadd.f32 %v97, %v558
  %v771 = vadd.f32 %v98, %v561
  %v772 = vadd.f32 %v99, %v566
  %v773 = vadd.f32 %v100, %v569
  %v774 = vadd.f32 %v101, %v574
  %v775 = vadd.f32 %v102, %v577
  %v776 = vadd.f32 %v103, %v582
  %v777 = vadd.f32 %v104, %v585
  %v778 = vadd.f32 %v105, %v590
  %v779 = vadd.f32 %v106, %v593
  %v780 = vadd.f32 %v107, %v598
  %v781 = vadd.f32 %v108, %v601
  %v782 = vadd.f32 %v109, %v606
  %v783 = vadd.f32 %v110, %v609
  %v784 = vadd.f32 %v111, %v614
  %v785 = vadd.f32 %v112, %v617
  %v786 = vadd.f32 %v113, %v622
  %v787 = vadd.f32 %v114, %v625
  %v788 = vadd.f32 %v115, %v630
  %v789 = vadd.f32 %v116, %v633
  %v790 = vadd.f32 %v117, %v638
  %v791 = vadd.f32 %v118, %v641
  %v792 = vadd.f32 %v119, %v646
  %v793 = vadd.f32 %v120, %v649
  %v794 = vadd.f32 %v121, %v654
  %v795 = vadd.f32 %v122, %v657
  %v796 = vadd.f32 %v123, %v662
  %v797 = vadd.f32 %v124, %v665
  %v798 = vadd.f32 %v125, %v670
  %v799 = vadd.f32 %v126, %v673
  %v800 = vadd.f32 %v127, %v678
  %v801 = vadd.f32 %v128, %v681
  %v802 = vadd.f32 %v129, %v686
  %v803 = vadd.f32 %v130, %v689
  %v804 = vadd.f32 %v131, %v694
  %v805 = vadd.f32 %v132, %v697
  %v806 = vadd.f32 %v133, %v702
  %v807 = vadd.f32 %v134, %v705
  %v808 = vadd.f32 %v135, %v710
  %v809 = vadd.f32 %v136, %v713
  %v810 = vadd.f32 %v137, %v718
  %v811 = vadd.f32 %v138, %v721
  %v812 = vadd.f32 %v139, %v726
  %v813 = vadd.f32 %v140, %v729
  %v814 = vadd.f32 %v141, %v734
  %v815 = vadd.f32 %v142, %v737
  %v816 = vadd.f32 %v143, %v742
  %v817 = vadd.f32 %v144, %v745
  %v818 = vadd.f32 %v145, %v750
  %v819 = vadd.f32 %v146, %v753
  %820 = vst [vmem:[#allocation2] sm:$0xff] %v756
  %821 = vst [vmem:[#allocation2 + $0x8] sm:$0xff] %v757
  %822 = vst [vmem:[#allocation2 + $0x10] sm:$0xff] %v758
  %823 = vst [vmem:[#allocation2 + $0x18] sm:$0xff] %v759
  %824 = vst [vmem:[#allocation2 + $0x20] sm:$0xff] %v760
  %825 = vst [vmem:[#allocation2 + $0x28] sm:$0xff] %v761
  %826 = vst [vmem:[#allocation2 + $0x30] sm:$0xff] %v762
  %827 = vst [vmem:[#allocation2 + $0x38] sm:$0xff] %v763
  %828 = vst [vmem:[#allocation2 + $0x40] sm:$0xff] %v764
  %829 = vst [vmem:[#allocation2 + $0x48] sm:$0xff] %v765
  %830 = vst [vmem:[#allocation2 + $0x50] sm:$0xff] %v766
  %831 = vst [vmem:[#allocation2 + $0x58] sm:$0xff] %v767
  %832 = vst [vmem:[#allocation2 + $0x60] sm:$0xff] %v768
  %833 = vst [vmem:[#allocation2 + $0x68] sm:$0xff] %v769
  %834 = vst [vmem:[#allocation2 + $0x70] sm:$0xff] %v770
  %835 = vst [vmem:[#allocation2 + $0x78] sm:$0xff] %v771
  %836 = vst [vmem:[#allocation2 + $0x80] sm:$0xff] %v772
  %837 = vst [vmem:[#allocation2 + $0x88] sm:$0xff] %v773
  %838 = vst [vmem:[#allocation2 + $0x90] sm:$0xff] %v774
  %839 = vst [vmem:[#allocation2 + $0x98] sm:$0xff] %v775
  %840 = vst [vmem:[#allocation2 + $0xa0] sm:$0xff] %v776
  %841 = vst [vmem:[#allocation2 + $0xa8] sm:$0xff] %v777
  %842 = vst [vmem:[#allocation2 + $0xb0] sm:$0xff] %v778
  %843 = vst [vmem:[#allocation2 + $0xb8] sm:$0xff] %v779
  %844 = vst [vmem:[#allocation2 + $0xc0] sm:$0xff] %v780
  %845 = vst [vmem:[#allocation2 + $0xc8] sm:$0xff] %v781
  %846 = vst [vmem:[#allocation2 + $0xd0] sm:$0xff] %v782
  %847 = vst [vmem:[#allocation2 + $0xd8] sm:$0xff] %v783
  %848 = vst [vmem:[#allocation2 + $0xe0] sm:$0xff] %v784
  %849 = vst [vmem:[#allocation2 + $0xe8] sm:$0xff] %v785
  %850 = vst [vmem:[#allocation2 + $0xf0] sm:$0xff] %v786
  %851 = vst [vmem:[#allocation2 + $0xf8] sm:$0xff] %v787
  %852 = vst [vmem:[#allocation2 + $0x100] sm:$0xff] %v788
  %853 = vst [vmem:[#allocation2 + $0x108] sm:$0xff] %v789
  %854 = vst [vmem:[#allocation2 + $0x110] sm:$0xff] %v790
  %855 = vst [vmem:[#allocation2 + $0x118] sm:$0xff] %v791
  %856 = vst [vmem:[#allocation2 + $0x120] sm:$0xff] %v792
  %857 = vst [vmem:[#allocation2 + $0x128] sm:$0xff] %v793
  %858 = vst [vmem:[#allocation2 + $0x130] sm:$0xff] %v794
  %859 = vst [vmem:[#allocation2 + $0x138] sm:$0xff] %v795
  %860 = vst [vmem:[#allocation2 + $0x140] sm:$0xff] %v796
  %861 = vst [vmem:[#allocation2 + $0x148] sm:$0xff] %v797
  %862 = vst [vmem:[#allocation2 + $0x150] sm:$0xff] %v798
  %863 = vst [vmem:[#allocation2 + $0x158] sm:$0xff] %v799
  %864 = vst [vmem:[#allocation2 + $0x160] sm:$0xff] %v800
  %865 = vst [vmem:[#allocation2 + $0x168] sm:$0xff] %v801
  %866 = vst [vmem:[#allocation2 + $0x170] sm:$0xff] %v802
  %867 = vst [vmem:[#allocation2 + $0x178] sm:$0xff] %v803
  %868 = vst [vmem:[#allocation2 + $0x180] sm:$0xff] %v804
  %869 = vst [vmem:[#allocation2 + $0x188] sm:$0xff] %v805
  %870 = vst [vmem:[#allocation2 + $0x190] sm:$0xff] %v806
  %871 = vst [vmem:[#allocation2 + $0x198] sm:$0xff] %v807
  %872 = vst [vmem:[#allocation2 + $0x1a0] sm:$0xff] %v808
  %873 = vst [vmem:[#allocation2 + $0x1a8] sm:$0xff] %v809
  %874 = vst [vmem:[#allocation2 + $0x1b0] sm:$0xff] %v810
  %875 = vst [vmem:[#allocation2 + $0x1b8] sm:$0xff] %v811
  %876 = vst [vmem:[#allocation2 + $0x1c0] sm:$0xff] %v812
  %877 = vst [vmem:[#allocation2 + $0x1c8] sm:$0xff] %v813
  %878 = vst [vmem:[#allocation2 + $0x1d0] sm:$0xff] %v814
  %879 = vst [vmem:[#allocation2 + $0x1d8] sm:$0xff] %v815
  %880 = vst [vmem:[#allocation2 + $0x1e0] sm:$0xff] %v816
  %881 = vst [vmem:[#allocation2 + $0x1e8] sm:$0xff] %v817
  %882 = vst [vmem:[#allocation2 + $0x1f0] sm:$0xff] %v818
  %883 = vst [vmem:[#allocation2 + $0x1f8] sm:$0xff] %v819
  // Predicated region
  $region18: #{deeplabv3plus_gru_forward.48} parent=0 // pred_check
    %p884 = pneg %p15
  $region19: #{deeplabv3plus_gru_forward.48} parent=0 // pred_check_branch
    %886 = sbr.rel (%p884) target = $region21
  $region20: #{deeplabv3plus_gru_forward.48} parent=0 // pred_region
    %v887 = vld [vmem:[#allocation2] sm:$0xff]
    %v888 = vld [vmem:[#allocation2 + $0x8] sm:$0xff]
    %v889 = vld [vmem:[#allocation2 + $0x10] sm:$0xff]
    %v890 = vld [vmem:[#allocation2 + $0x18] sm:$0xff]
    %v891 = vld [vmem:[#allocation2 + $0x20] sm:$0xff]
    %v892 = vld [vmem:[#allocation2 + $0x28] sm:$0xff]
    %v893 = vld [vmem:[#allocation2 + $0x30] sm:$0xff]
    %v894 = vld [vmem:[#allocation2 + $0x38] sm:$0xff]
    %v895 = vld [vmem:[#allocation2 + $0x40] sm:$0xff]
    %v896 = vld [vmem:[#allocation2 + $0x48] sm:$0xff]
    %v897 = vld [vmem:[#allocation2 + $0x50] sm:$0xff]
    %v898 = vld [vmem:[#allocation2 + $0x58] sm:$0xff]
    %v899 = vld [vmem:[#allocation2 + $0x60] sm:$0xff]
    %v900 = vld [vmem:[#allocation2 + $0x68] sm:$0xff]
    %v901 = vld [vmem:[#allocation2 + $0x70] sm:$0xff]
    %v902 = vld [vmem:[#allocation2 + $0x78] sm:$0xff]
    %v903 = vld [vmem:[#allocation2 + $0x80] sm:$0xff]
    %v904 = vld [vmem:[#allocation2 + $0x88] sm:$0xff]
    %v905 = vld [vmem:[#allocation2 + $0x90] sm:$0xff]
    %v906 = vld [vmem:[#allocation2 + $0x98] sm:$0xff]
    %v907 = vld [vmem:[#allocation2 + $0xa0] sm:$0xff]
    %v908 = vld [vmem:[#allocation2 + $0xa8] sm:$0xff]
    %v909 = vld [vmem:[#allocation2 + $0xb0] sm:$0xff]
    %v910 = vld [vmem:[#allocation2 + $0xb8] sm:$0xff]
    %v911 = vld [vmem:[#allocation2 + $0xc0] sm:$0xff]
    %v912 = vld [vmem:[#allocation2 + $0xc8] sm:$0xff]
    %v913 = vld [vmem:[#allocation2 + $0xd0] sm:$0xff]
    %v914 = vld [vmem:[#allocation2 + $0xd8] sm:$0xff]
    %v915 = vld [vmem:[#allocation2 + $0xe0] sm:$0xff]
    %v916 = vld [vmem:[#allocation2 + $0xe8] sm:$0xff]
    %v917 = vld [vmem:[#allocation2 + $0xf0] sm:$0xff]
    %v918 = vld [vmem:[#allocation2 + $0xf8] sm:$0xff]
    %v919 = vld [vmem:[#allocation2 + $0x100] sm:$0xff]
    %v920 = vld [vmem:[#allocation2 + $0x108] sm:$0xff]
    %v921 = vld [vmem:[#allocation2 + $0x110] sm:$0xff]
    %v922 = vld [vmem:[#allocation2 + $0x118] sm:$0xff]
    %v923 = vld [vmem:[#allocation2 + $0x120] sm:$0xff]
    %v924 = vld [vmem:[#allocation2 + $0x128] sm:$0xff]
    %v925 = vld [vmem:[#allocation2 + $0x130] sm:$0xff]
    %v926 = vld [vmem:[#allocation2 + $0x138] sm:$0xff]
    %v927 = vld [vmem:[#allocation2 + $0x140] sm:$0xff]
    %v928 = vld [vmem:[#allocation2 + $0x148] sm:$0xff]
    %v929 = vld [vmem:[#allocation2 + $0x150] sm:$0xff]
    %v930 = vld [vmem:[#allocation2 + $0x158] sm:$0xff]
    %v931 = vld [vmem:[#allocation2 + $0x160] sm:$0xff]
    %v932 = vld [vmem:[#allocation2 + $0x168] sm:$0xff]
    %v933 = vld [vmem:[#allocation2 + $0x170] sm:$0xff]
    %v934 = vld [vmem:[#allocation2 + $0x178] sm:$0xff]
    %v935 = vld [vmem:[#allocation2 + $0x180] sm:$0xff]
    %v936 = vld [vmem:[#allocation2 + $0x188] sm:$0xff]
    %v937 = vld [vmem:[#allocation2 + $0x190] sm:$0xff]
    %v938 = vld [vmem:[#allocation2 + $0x198] sm:$0xff]
    %v939 = vld [vmem:[#allocation2 + $0x1a0] sm:$0xff]
    %v940 = vld [vmem:[#allocation2 + $0x1a8] sm:$0xff]
    %v941 = vld [vmem:[#allocation2 + $0x1b0] sm:$0xff]
    %v942 = vld [vmem:[#allocation2 + $0x1b8] sm:$0xff]
    %v943 = vld [vmem:[#allocation2 + $0x1c0] sm:$0xff]
    %v944 = vld [vmem:[#allocation2 + $0x1c8] sm:$0xff]
    %v945 = vld [vmem:[#allocation2 + $0x1d0] sm:$0xff]
    %v946 = vld [vmem:[#allocation2 + $0x1d8] sm:$0xff]
    %v947 = vld [vmem:[#allocation2 + $0x1e0] sm:$0xff]
    %v948 = vld [vmem:[#allocation2 + $0x1e8] sm:$0xff]
    %v949 = vld [vmem:[#allocation2 + $0x1f0] sm:$0xff]
    %v950 = vld [vmem:[#allocation2 + $0x1f8] sm:$0xff]
    %v951 = vld [vmem:[%s2] sm:$0x1]
    %v953 = vlaneseq
    %v954 = vshrl.u32 %v953, 7
    %v955 = vsub.s32 0, %v954
    %v956 = vrot.slane %v951, %v955
    %v958 = vadd.f32 %v887, %v956
    %v959 = vadd.f32 %v888, %v956
    %v960 = vadd.f32 %v889, %v956
    %v961 = vadd.f32 %v890, %v956
    %v962 = vadd.f32 %v891, %v956
    %v963 = vadd.f32 %v892, %v956
    %v964 = vadd.f32 %v893, %v956
    %v965 = vadd.f32 %v894, %v956
    %v966 = vadd.f32 %v895, %v956
    %v967 = vadd.f32 %v896, %v956
    %v968 = vadd.f32 %v897, %v956
    %v969 = vadd.f32 %v898, %v956
    %v970 = vadd.f32 %v899, %v956
    %v971 = vadd.f32 %v900, %v956
    %v972 = vadd.f32 %v901, %v956
    %v973 = vadd.f32 %v902, %v956
    %v974 = vadd.f32 %v903, %v956
    %v975 = vadd.f32 %v904, %v956
    %v976 = vadd.f32 %v905, %v956
    %v977 = vadd.f32 %v906, %v956
    %v978 = vadd.f32 %v907, %v956
    %v979 = vadd.f32 %v908, %v956
    %v980 = vadd.f32 %v909, %v956
    %v981 = vadd.f32 %v910, %v956
    %v982 = vadd.f32 %v911, %v956
    %v983 = vadd.f32 %v912, %v956
    %v984 = vadd.f32 %v913, %v956
    %v985 = vadd.f32 %v914, %v956
    %v986 = vadd.f32 %v915, %v956
    %v987 = vadd.f32 %v916, %v956
    %v988 = vadd.f32 %v917, %v956
    %v989 = vadd.f32 %v918, %v956
    %v990 = vadd.f32 %v919, %v956
    %v991 = vadd.f32 %v920, %v956
    %v992 = vadd.f32 %v921, %v956
    %v993 = vadd.f32 %v922, %v956
    %v994 = vadd.f32 %v923, %v956
    %v995 = vadd.f32 %v924, %v956
    %v996 = vadd.f32 %v925, %v956
    %v997 = vadd.f32 %v926, %v956
    %v998 = vadd.f32 %v927, %v956
    %v999 = vadd.f32 %v928, %v956
    %v1000 = vadd.f32 %v929, %v956
    %v1001 = vadd.f32 %v930, %v956
    %v1002 = vadd.f32 %v931, %v956
    %v1003 = vadd.f32 %v932, %v956
    %v1004 = vadd.f32 %v933, %v956
    %v1005 = vadd.f32 %v934, %v956
    %v1006 = vadd.f32 %v935, %v956
    %v1007 = vadd.f32 %v936, %v956
    %v1008 = vadd.f32 %v937, %v956
    %v1009 = vadd.f32 %v938, %v956
    %v1010 = vadd.f32 %v939, %v956
    %v1011 = vadd.f32 %v940, %v956
    %v1012 = vadd.f32 %v941, %v956
    %v1013 = vadd.f32 %v942, %v956
    %v1014 = vadd.f32 %v943, %v956
    %v1015 = vadd.f32 %v944, %v956
    %v1016 = vadd.f32 %v945, %v956
    %v1017 = vadd.f32 %v946, %v956
    %v1018 = vadd.f32 %v947, %v956
    %v1019 = vadd.f32 %v948, %v956
    %v1020 = vadd.f32 %v949, %v956
    %v1021 = vadd.f32 %v950, %v956
    %v1022 = vpack.c.bf16 %v959, %v958
    %v1023 = vpack.c.bf16 %v961, %v960
    %v1024 = vpack.c.bf16 %v963, %v962
    %v1025 = vpack.c.bf16 %v965, %v964
    %v1026 = vpack.c.bf16 %v967, %v966
    %v1027 = vpack.c.bf16 %v969, %v968
    %v1028 = vpack.c.bf16 %v971, %v970
    %v1029 = vpack.c.bf16 %v973, %v972
    %v1030 = vpack.c.bf16 %v975, %v974
    %v1031 = vpack.c.bf16 %v977, %v976
    %v1032 = vpack.c.bf16 %v979, %v978
    %v1033 = vpack.c.bf16 %v981, %v980
    %v1034 = vpack.c.bf16 %v983, %v982
    %v1035 = vpack.c.bf16 %v985, %v984
    %v1036 = vpack.c.bf16 %v987, %v986
    %v1037 = vpack.c.bf16 %v989, %v988
    %v1038 = vpack.c.bf16 %v991, %v990
    %v1039 = vpack.c.bf16 %v993, %v992
    %v1040 = vpack.c.bf16 %v995, %v994
    %v1041 = vpack.c.bf16 %v997, %v996
    %v1042 = vpack.c.bf16 %v999, %v998
    %v1043 = vpack.c.bf16 %v1001, %v1000
    %v1044 = vpack.c.bf16 %v1003, %v1002
    %v1045 = vpack.c.bf16 %v1005, %v1004
    %v1046 = vpack.c.bf16 %v1007, %v1006
    %v1047 = vpack.c.bf16 %v1009, %v1008
    %v1048 = vpack.c.bf16 %v1011, %v1010
    %v1049 = vpack.c.bf16 %v1013, %v1012
    %v1050 = vpack.c.bf16 %v1015, %v1014
    %v1051 = vpack.c.bf16 %v1017, %v1016
    %v1052 = vpack.c.bf16 %v1019, %v1018
    %v1053 = vpack.c.bf16 %v1021, %v1020
    %v1086 = vunpack.c.l.b16 %v1022
    %v1087 = vunpack.c.h.b16 %v1022
    %v1088 = vunpack.c.l.b16 %v1023
    %v1089 = vunpack.c.h.b16 %v1023
    %v1090 = vunpack.c.l.b16 %v1024
    %v1091 = vunpack.c.h.b16 %v1024
    %v1092 = vunpack.c.l.b16 %v1025
    %v1093 = vunpack.c.h.b16 %v1025
    %v1094 = vunpack.c.l.b16 %v1026
    %v1095 = vunpack.c.h.b16 %v1026
    %v1096 = vunpack.c.l.b16 %v1027
    %v1097 = vunpack.c.h.b16 %v1027
    %v1098 = vunpack.c.l.b16 %v1028
    %v1099 = vunpack.c.h.b16 %v1028
    %v1100 = vunpack.c.l.b16 %v1029
    %v1101 = vunpack.c.h.b16 %v1029
    %v1102 = vunpack.c.l.b16 %v1030
    %v1103 = vunpack.c.h.b16 %v1030
    %v1104 = vunpack.c.l.b16 %v1031
    %v1105 = vunpack.c.h.b16 %v1031
    %v1106 = vunpack.c.l.b16 %v1032
    %v1107 = vunpack.c.h.b16 %v1032
    %v1108 = vunpack.c.l.b16 %v1033
    %v1109 = vunpack.c.h.b16 %v1033
    %v1110 = vunpack.c.l.b16 %v1034
    %v1111 = vunpack.c.h.b16 %v1034
    %v1112 = vunpack.c.l.b16 %v1035
    %v1113 = vunpack.c.h.b16 %v1035
    %v1114 = vunpack.c.l.b16 %v1036
    %v1115 = vunpack.c.h.b16 %v1036
    %v1116 = vunpack.c.l.b16 %v1037
    %v1117 = vunpack.c.h.b16 %v1037
    %v1118 = vunpack.c.l.b16 %v1038
    %v1119 = vunpack.c.h.b16 %v1038
    %v1120 = vunpack.c.l.b16 %v1039
    %v1121 = vunpack.c.h.b16 %v1039
    %v1122 = vunpack.c.l.b16 %v1040
    %v1123 = vunpack.c.h.b16 %v1040
    %v1124 = vunpack.c.l.b16 %v1041
    %v1125 = vunpack.c.h.b16 %v1041
    %v1126 = vunpack.c.l.b16 %v1042
    %v1127 = vunpack.c.h.b16 %v1042
    %v1128 = vunpack.c.l.b16 %v1043
    %v1129 = vunpack.c.h.b16 %v1043
    %v1130 = vunpack.c.l.b16 %v1044
    %v1131 = vunpack.c.h.b16 %v1044
    %v1132 = vunpack.c.l.b16 %v1045
    %v1133 = vunpack.c.h.b16 %v1045
    %v1134 = vunpack.c.l.b16 %v1046
    %v1135 = vunpack.c.h.b16 %v1046
    %v1136 = vunpack.c.l.b16 %v1047
    %v1137 = vunpack.c.h.b16 %v1047
    %v1138 = vunpack.c.l.b16 %v1048
    %v1139 = vunpack.c.h.b16 %v1048
    %v1140 = vunpack.c.l.b16 %v1049
    %v1141 = vunpack.c.h.b16 %v1049
    %v1142 = vunpack.c.l.b16 %v1050
    %v1143 = vunpack.c.h.b16 %v1050
    %v1144 = vunpack.c.l.b16 %v1051
    %v1145 = vunpack.c.h.b16 %v1051
    %v1146 = vunpack.c.l.b16 %v1052
    %v1147 = vunpack.c.h.b16 %v1052
    %v1148 = vunpack.c.l.b16 %v1053
    %v1149 = vunpack.c.h.b16 %v1053
    %v1150 = vpack.c.b16 %v1086, %v1086
    %v1151 = vpack.c.b16 %v1087, %v1087
    %v1152 = vpack.c.b16 %v1088, %v1088
    %v1153 = vpack.c.b16 %v1089, %v1089
    %v1154 = vpack.c.b16 %v1090, %v1090
    %v1155 = vpack.c.b16 %v1091, %v1091
    %v1156 = vpack.c.b16 %v1092, %v1092
    %v1157 = vpack.c.b16 %v1093, %v1093
    %v1158 = vpack.c.b16 %v1094, %v1094
    %v1159 = vpack.c.b16 %v1095, %v1095
    %v1160 = vpack.c.b16 %v1096, %v1096
    %v1161 = vpack.c.b16 %v1097, %v1097
    %v1162 = vpack.c.b16 %v1098, %v1098
    %v1163 = vpack.c.b16 %v1099, %v1099
    %v1164 = vpack.c.b16 %v1100, %v1100
    %v1165 = vpack.c.b16 %v1101, %v1101
    %v1166 = vpack.c.b16 %v1102, %v1102
    %v1167 = vpack.c.b16 %v1103, %v1103
    %v1168 = vpack.c.b16 %v1104, %v1104
    %v1169 = vpack.c.b16 %v1105, %v1105
    %v1170 = vpack.c.b16 %v1106, %v1106
    %v1171 = vpack.c.b16 %v1107, %v1107
    %v1172 = vpack.c.b16 %v1108, %v1108
    %v1173 = vpack.c.b16 %v1109, %v1109
    %v1174 = vpack.c.b16 %v1110, %v1110
    %v1175 = vpack.c.b16 %v1111, %v1111
    %v1176 = vpack.c.b16 %v1112, %v1112
    %v1177 = vpack.c.b16 %v1113, %v1113
    %v1178 = vpack.c.b16 %v1114, %v1114
    %v1179 = vpack.c.b16 %v1115, %v1115
    %v1180 = vpack.c.b16 %v1116, %v1116
    %v1181 = vpack.c.b16 %v1117, %v1117
    %v1182 = vpack.c.b16 %v1118, %v1118
    %v1183 = vpack.c.b16 %v1119, %v1119
    %v1184 = vpack.c.b16 %v1120, %v1120
    %v1185 = vpack.c.b16 %v1121, %v1121
    %v1186 = vpack.c.b16 %v1122, %v1122
    %v1187 = vpack.c.b16 %v1123, %v1123
    %v1188 = vpack.c.b16 %v1124, %v1124
    %v1189 = vpack.c.b16 %v1125, %v1125
    %v1190 = vpack.c.b16 %v1126, %v1126
    %v1191 = vpack.c.b16 %v1127, %v1127
    %v1192 = vpack.c.b16 %v1128, %v1128
    %v1193 = vpack.c.b16 %v1129, %v1129
    %v1194 = vpack.c.b16 %v1130, %v1130
    %v1195 = vpack.c.b16 %v1131, %v1131
    %v1196 = vpack.c.b16 %v1132, %v1132
    %v1197 = vpack.c.b16 %v1133, %v1133
    %v1198 = vpack.c.b16 %v1134, %v1134
    %v1199 = vpack.c.b16 %v1135, %v1135
    %v1200 = vpack.c.b16 %v1136, %v1136
    %v1201 = vpack.c.b16 %v1137, %v1137
    %v1202 = vpack.c.b16 %v1138, %v1138
    %v1203 = vpack.c.b16 %v1139, %v1139
    %v1204 = vpack.c.b16 %v1140, %v1140
    %v1205 = vpack.c.b16 %v1141, %v1141
    %v1206 = vpack.c.b16 %v1142, %v1142
    %v1207 = vpack.c.b16 %v1143, %v1143
    %v1208 = vpack.c.b16 %v1144, %v1144
    %v1209 = vpack.c.b16 %v1145, %v1145
    %v1210 = vpack.c.b16 %v1146, %v1146
    %v1211 = vpack.c.b16 %v1147, %v1147
    %v1212 = vpack.c.b16 %v1148, %v1148
    %v1213 = vpack.c.b16 %v1149, %v1149
    %1278 = vst [vmem:[%s3] sm:$0xf] %v1150
    %1279 = vst [vmem:[%s3 + $0x4] sm:$0xf] %v1151
    %1280 = vst [vmem:[%s3 + $0x8] sm:$0xf] %v1152
    %1281 = vst [vmem:[%s3 + $0xc] sm:$0xf] %v1153
    %1282 = vst [vmem:[%s3 + $0x10] sm:$0xf] %v1154
    %1283 = vst [vmem:[%s3 + $0x14] sm:$0xf] %v1155
    %1284 = vst [vmem:[%s3 + $0x18] sm:$0xf] %v1156
    %1285 = vst [vmem:[%s3 + $0x1c] sm:$0xf] %v1157
    %1286 = vst [vmem:[%s3 + $0x20] sm:$0xf] %v1158
    %1287 = vst [vmem:[%s3 + $0x24] sm:$0xf] %v1159
    %1288 = vst [vmem:[%s3 + $0x28] sm:$0xf] %v1160
    %1289 = vst [vmem:[%s3 + $0x2c] sm:$0xf] %v1161
    %1290 = vst [vmem:[%s3 + $0x30] sm:$0xf] %v1162
    %1291 = vst [vmem:[%s3 + $0x34] sm:$0xf] %v1163
    %1292 = vst [vmem:[%s3 + $0x38] sm:$0xf] %v1164
    %1293 = vst [vmem:[%s3 + $0x3c] sm:$0xf] %v1165
    %1294 = vst [vmem:[%s3 + $0x40] sm:$0xf] %v1166
    %1295 = vst [vmem:[%s3 + $0x44] sm:$0xf] %v1167
    %1296 = vst [vmem:[%s3 + $0x48] sm:$0xf] %v1168
    %1297 = vst [vmem:[%s3 + $0x4c] sm:$0xf] %v1169
    %1298 = vst [vmem:[%s3 + $0x50] sm:$0xf] %v1170
    %1299 = vst [vmem:[%s3 + $0x54] sm:$0xf] %v1171
    %1300 = vst [vmem:[%s3 + $0x58] sm:$0xf] %v1172
    %1301 = vst [vmem:[%s3 + $0x5c] sm:$0xf] %v1173
    %1302 = vst [vmem:[%s3 + $0x60] sm:$0xf] %v1174
    %1303 = vst [vmem:[%s3 + $0x64] sm:$0xf] %v1175
    %1304 = vst [vmem:[%s3 + $0x68] sm:$0xf] %v1176
    %1305 = vst [vmem:[%s3 + $0x6c] sm:$0xf] %v1177
    %1306 = vst [vmem:[%s3 + $0x70] sm:$0xf] %v1178
    %1307 = vst [vmem:[%s3 + $0x74] sm:$0xf] %v1179
    %1308 = vst [vmem:[%s3 + $0x78] sm:$0xf] %v1180
    %1309 = vst [vmem:[%s3 + $0x7c] sm:$0xf] %v1181
    %1310 = vst [vmem:[%s3 + $0x80] sm:$0xf] %v1182
    %1311 = vst [vmem:[%s3 + $0x84] sm:$0xf] %v1183
    %1312 = vst [vmem:[%s3 + $0x88] sm:$0xf] %v1184
    %1313 = vst [vmem:[%s3 + $0x8c] sm:$0xf] %v1185
    %1314 = vst [vmem:[%s3 + $0x90] sm:$0xf] %v1186
    %1315 = vst [vmem:[%s3 + $0x94] sm:$0xf] %v1187
    %1316 = vst [vmem:[%s3 + $0x98] sm:$0xf] %v1188
    %1317 = vst [vmem:[%s3 + $0x9c] sm:$0xf] %v1189
    %1318 = vst [vmem:[%s3 + $0xa0] sm:$0xf] %v1190
    %1319 = vst [vmem:[%s3 + $0xa4] sm:$0xf] %v1191
    %1320 = vst [vmem:[%s3 + $0xa8] sm:$0xf] %v1192
    %1321 = vst [vmem:[%s3 + $0xac] sm:$0xf] %v1193
    %1322 = vst [vmem:[%s3 + $0xb0] sm:$0xf] %v1194
    %1323 = vst [vmem:[%s3 + $0xb4] sm:$0xf] %v1195
    %1324 = vst [vmem:[%s3 + $0xb8] sm:$0xf] %v1196
    %1325 = vst [vmem:[%s3 + $0xbc] sm:$0xf] %v1197
    %1326 = vst [vmem:[%s3 + $0xc0] sm:$0xf] %v1198
    %1327 = vst [vmem:[%s3 + $0xc4] sm:$0xf] %v1199
    %1328 = vst [vmem:[%s3 + $0xc8] sm:$0xf] %v1200
    %1329 = vst [vmem:[%s3 + $0xcc] sm:$0xf] %v1201
    %1330 = vst [vmem:[%s3 + $0xd0] sm:$0xf] %v1202
    %1331 = vst [vmem:[%s3 + $0xd4] sm:$0xf] %v1203
    %1332 = vst [vmem:[%s3 + $0xd8] sm:$0xf] %v1204
    %1333 = vst [vmem:[%s3 + $0xdc] sm:$0xf] %v1205
    %1334 = vst [vmem:[%s3 + $0xe0] sm:$0xf] %v1206
    %1335 = vst [vmem:[%s3 + $0xe4] sm:$0xf] %v1207
    %1336 = vst [vmem:[%s3 + $0xe8] sm:$0xf] %v1208
    %1337 = vst [vmem:[%s3 + $0xec] sm:$0xf] %v1209
    %1338 = vst [vmem:[%s3 + $0xf0] sm:$0xf] %v1210
    %1339 = vst [vmem:[%s3 + $0xf4] sm:$0xf] %v1211
    %1340 = vst [vmem:[%s3 + $0xf8] sm:$0xf] %v1212
    %1341 = vst [vmem:[%s3 + $0xfc] sm:$0xf] %v1213
  $region21: #{deeplabv3plus_gru_forward.48} parent=0 // pred_fallthru
    _
  // Predicated region
  $region22: #{deeplabv3plus_gru_forward.48} parent=0 // pred_check
    _
  $region23: #{deeplabv3plus_gru_forward.48} parent=0 // pred_check_branch
    %1343 = sbr.rel (0) target = $region25
  $region24: #{deeplabv3plus_gru_forward.48} parent=0 // pred_region
    _
  $region25: #{deeplabv3plus_gru_forward.48} parent=0 // pred_fallthru
    _
  // Predicated region
  $region26: #{deeplabv3plus_gru_forward.48} parent=0 // pred_check
    _
  $region27: #{deeplabv3plus_gru_forward.48} parent=0 // pred_check_branch
    %1345 = sbr.rel (0) target = $region29
  $region28: #{deeplabv3plus_gru_forward.48} parent=0 // pred_region
    _
  $region29: #{deeplabv3plus_gru_forward.48} parent=0 // pred_fallthru
    _

// kernel: deeplabv3plus_gru_forward.51
$region0: #{deeplabv3plus_gru_forward.51}
  #allocation0 [shape = 'u32[]', space=smem, size = 0x4, offset = 0x4, fixed_abs, tag = 'smem constant byte address 0x4 - core index']
  #allocation1 [shape = 'u32[144,128]{1,0:T(1,128)}', space=vmem, size = 0x12000, scoped, tag = 'internal scratch']
  %s0 = inlined_call_operand.vmem [shape: bf16[32,32], index: 0, kind: input, shape index: {}]
  %s1 = inlined_call_operand.vmem [shape: bf16[32,32], index: 1, kind: input, shape index: {}]
  %s2 = inlined_call_operand.vmem [shape: bf16[32,32], index: 2, kind: input, shape index: {}]
  %s3 = inlined_call_operand.vmem [shape: bf16[32,32], index: 3, kind: output, shape index: {}]
  %s4 = sld [smem:[#allocation0]]
  $region22: #{deeplabv3plus_gru_forward.51} parent=0
    _
  %s6 = ssub.s32 1, %s4
  %s7 = scalar_select 0, %s6, %s4
  // Predicated region
  $region2: #{deeplabv3plus_gru_forward.51} parent=0 // pred_check
    _
  $region3: #{deeplabv3plus_gru_forward.51} parent=0 // pred_check_branch
    %9 = sbr.rel (0) target = $region5
  $region4: #{deeplabv3plus_gru_forward.51} parent=0 // pred_region
    _
  $region5: #{deeplabv3plus_gru_forward.51} parent=0 // pred_fallthru
    _
  // Predicated region
  $region6: #{deeplabv3plus_gru_forward.51} parent=0 // pred_check
    _
  $region7: #{deeplabv3plus_gru_forward.51} parent=0 // pred_check_branch
    %11 = sbr.rel (0) target = $region9
  $region8: #{deeplabv3plus_gru_forward.51} parent=0 // pred_region
    _
  $region9: #{deeplabv3plus_gru_forward.51} parent=0 // pred_fallthru
    _
  // Predicated region
  $region10: #{deeplabv3plus_gru_forward.51} parent=0 // pred_check
    _
  $region11: #{deeplabv3plus_gru_forward.51} parent=0 // pred_check_branch
    %13 = sbr.rel (0) target = $region13
  $region12: #{deeplabv3plus_gru_forward.51} parent=0 // pred_region
    _
  $region13: #{deeplabv3plus_gru_forward.51} parent=0 // pred_fallthru
    _
  %v14 = vld [vmem:[%s0] sm:$0xf]
  %v15 = vld [vmem:[%s0 + $0x4] sm:$0xf]
  %v16 = vld [vmem:[%s0 + $0x8] sm:$0xf]
  %v17 = vld [vmem:[%s0 + $0xc] sm:$0xf]
  %v18 = vunpack.c.l.bf16 %v14
  %v19 = vunpack.c.l.bf16 %v15
  %v20 = vunpack.c.l.bf16 %v16
  %v21 = vunpack.c.l.bf16 %v17
  %v22 = vxor.u32 %v18, 2147483648
  %v23 = vxor.u32 %v19, 2147483648
  %v24 = vxor.u32 %v20, 2147483648
  %v25 = vxor.u32 %v21, 2147483648
  %v26 = vmul.f32 %v22, 1.442695
  %v27 = vpow.pop %v26
  %v28 = vmul.f32 %v23, 1.442695
  %v29 = vpow.pop %v28
  %v30 = vmul.f32 %v24, 1.442695
  %v31 = vpow.pop %v30
  %v32 = vmul.f32 %v25, 1.442695
  %v33 = vpow.pop %v32
  %v34 = vadd.f32 %v27, 1.0
  %v35 = vadd.f32 %v29, 1.0
  %v36 = vadd.f32 %v31, 1.0
  %v37 = vadd.f32 %v33, 1.0
  %v38 = vrcp.pop %v34
  %v39 = vmul.f32 1.0, %v38
  %v40 = vrcp.pop %v35
  %v41 = vmul.f32 1.0, %v40
  %v42 = vrcp.pop %v36
  %v43 = vmul.f32 1.0, %v42
  %v44 = vrcp.pop %v37
  %v45 = vmul.f32 1.0, %v44
  %v46 = vld [vmem:[%s1] sm:$0xf]
  %v47 = vld [vmem:[%s1 + $0x4] sm:$0xf]
  %v48 = vld [vmem:[%s1 + $0x8] sm:$0xf]
  %v49 = vld [vmem:[%s1 + $0xc] sm:$0xf]
  %v50 = vunpack.c.l.bf16 %v46
  %v51 = vunpack.c.l.bf16 %v47
  %v52 = vunpack.c.l.bf16 %v48
  %v53 = vunpack.c.l.bf16 %v49
  %v54 = vld [vmem:[%s2] sm:$0xf]
  %v55 = vld [vmem:[%s2 + $0x4] sm:$0xf]
  %v56 = vld [vmem:[%s2 + $0x8] sm:$0xf]
  %v57 = vld [vmem:[%s2 + $0xc] sm:$0xf]
  %v58 = vunpack.c.l.bf16 %v54
  %v59 = vunpack.c.l.bf16 %v55
  %v60 = vunpack.c.l.bf16 %v56
  %v61 = vunpack.c.l.bf16 %v57
  %v62 = vtanh.pop %v58
  %v63 = vtanh.pop %v59
  %v64 = vtanh.pop %v60
  %v65 = vtanh.pop %v61
  %v66 = vsub.f32 1.0, %v39
  %v67 = vsub.f32 1.0, %v41
  %v68 = vsub.f32 1.0, %v43
  %v69 = vsub.f32 1.0, %v45
  %v70 = vmul.f32 %v66, %v50
  %v71 = vmul.f32 %v67, %v51
  %v72 = vmul.f32 %v68, %v52
  %v73 = vmul.f32 %v69, %v53
  %v74 = vmul.f32 %v39, %v62
  %v75 = vmul.f32 %v41, %v63
  %v76 = vmul.f32 %v43, %v64
  %v77 = vmul.f32 %v45, %v65
  %v78 = vadd.f32 %v70, %v74
  %v79 = vadd.f32 %v71, %v75
  %v80 = vadd.f32 %v72, %v76
  %v81 = vadd.f32 %v73, %v77
  %v82 = vpack.c.bf16 %v79, %v78
  %v83 = vpack.c.bf16 %v81, %v80
  %v86 = vunpack.c.l.b16 %v82
  %v87 = vunpack.c.h.b16 %v82
  %v88 = vunpack.c.l.b16 %v83
  %v89 = vunpack.c.h.b16 %v83
  %v90 = vpack.c.b16 %v86, %v86
  %v91 = vpack.c.b16 %v87, %v87
  %v92 = vpack.c.b16 %v88, %v88
  %v93 = vpack.c.b16 %v89, %v89
  %vm98 = vcmask 257024
  %99 = vst.msk [vmem:[%s3] sm:$0xf] %vm98, %v90
  %100 = vst.msk [vmem:[%s3 + $0x4] sm:$0xf] %vm98, %v91
  %101 = vst.msk [vmem:[%s3 + $0x8] sm:$0xf] %vm98, %v92
  %102 = vst.msk [vmem:[%s3 + $0xc] sm:$0xf] %vm98, %v93
  // Predicated region
  $region14: #{deeplabv3plus_gru_forward.51} parent=0 // pred_check
    _
  $region15: #{deeplabv3plus_gru_forward.51} parent=0 // pred_check_branch
    %104 = sbr.rel (0) target = $region17
  $region16: #{deeplabv3plus_gru_forward.51} parent=0 // pred_region
    _
  $region17: #{deeplabv3plus_gru_forward.51} parent=0 // pred_fallthru
    _
  // Predicated region
  $region18: #{deeplabv3plus_gru_forward.51} parent=0 // pred_check
    _
  $region19: #{deeplabv3plus_gru_forward.51} parent=0 // pred_check_branch
    %106 = sbr.rel (0) target = $region21
  $region20: #{deeplabv3plus_gru_forward.51} parent=0 // pred_region
    _
  $region21: #{deeplabv3plus_gru_forward.51} parent=0 // pred_fallthru
    _

</llo_original>
